<compile_context>
chip_gen: v5e
topology: v5e:2x2
jax: 0.10.0
libtpu: 0.0.40
codegen_flags: <defaults>
</compile_context>

<pallas_src>
import functools

import numpy as np
import jax
import jax.numpy as jnp
from jax.experimental import pallas as pl
from jax.experimental.pallas import tpu as pltpu

CUBIC_A = -0.75


def _cubic_w1(t):
    # bicubic kernel for |x| <= 1
    return ((CUBIC_A + 2.0) * t - (CUBIC_A + 3.0)) * t * t + 1.0


def _cubic_w2(t):
    # bicubic kernel for 1 < |x| < 2
    return ((CUBIC_A * t - 5.0 * CUBIC_A) * t + 8.0 * CUBIC_A) * t - 4.0 * CUBIC_A


def bicubic_matrix(in_size, out_size):
    """(out_size, in_size) matrix reproducing F.interpolate(mode='bicubic',
    align_corners=False) along one axis (PyTorch a=-0.75, border taps clamped)."""
    scale = in_size / out_size
    A = np.zeros((out_size, in_size), dtype=np.float64)
    for i in range(out_size):
        src = (i + 0.5) * scale - 0.5
        i0 = int(np.floor(src))
        t = src - i0
        coeffs = (_cubic_w2(t + 1.0), _cubic_w1(t), _cubic_w1(1.0 - t), _cubic_w2(2.0 - t))
        for k in range(4):
            idx = min(max(i0 - 1 + k, 0), in_size - 1)
            A[i, idx] += coeffs[k]
    return A


def _separable_resize(xv, awt, aht, *, c, h, wt, ht, precision):
    """xv: (C*H, W). Returns the bicubic-resized tensor laid out as (Ht*Wt, C)."""
    dt = xv.dtype
    # W-resize: (C*H, W) @ (W, Wt) -> (C*H, Wt)            axes (c, i, q)
    z = jnp.dot(xv, awt, preferred_element_type=jnp.float32, precision=precision).astype(dt)
    # relayout (c, i, q) -> (c, q, i): leading split + minor-dim swap + leading merge
    z = jnp.transpose(z.reshape(c, h, wt), (0, 2, 1)).reshape(c * wt, h)
    # H-resize: (C*Wt, H) @ (H, Ht) -> (C*Wt, Ht)           axes (c, q, p)
    z = jnp.dot(z, aht, preferred_element_type=jnp.float32, precision=precision).astype(dt)
    # relayout (c, q, p) -> (p, q, c): 2D transpose + leading split + minor swap + merge
    z = jnp.transpose(z.T.reshape(ht, c, wt), (0, 2, 1)).reshape(ht * wt, c)
    return z  # (Ht*Wt, C)


def upsample_proj_kernel(x_ref, wt_ref, awt_ref, aht_ref, o_ref, *, c, h, wt, ht, precision):
    r = _separable_resize(x_ref[...], awt_ref[...], aht_ref[...],
                          c=c, h=h, wt=wt, ht=ht, precision=precision)           # (Ht*Wt, C)
    # 1x1 projection with M = Ht*Wt rows on the MXU: (Ht*Wt, C) @ (C, Co) -> (Ht*Wt, Co)
    y = jnp.dot(r, wt_ref[...], preferred_element_type=jnp.float32, precision=precision)
    o_ref[...] = y.T.astype(o_ref.dtype)                                          # (Co, Ht*Wt) lane-dense


def upsample_id_kernel(x_ref, awt_ref, aht_ref, o_ref, *, c, h, wt, ht, precision):
    r = _separable_resize(x_ref[...], awt_ref[...], aht_ref[...],
                          c=c, h=h, wt=wt, ht=ht, precision=precision)            # (Ht*Wt, C)
    o_ref[...] = r.T.astype(o_ref.dtype)                                           # (C, Ht*Wt) lane-dense


def upsample(x, v=None, g=None, stride=2):
    """Pallas TPU forward of Upsample.

    x: (N, C, H, W). If v/g are None the projection is the identity (ch_in == ch_out);
    otherwise v: (Co, C, 1, 1), g: (Co, 1, 1, 1) are the weight_norm parameters of the
    bias-free 1x1 Conv2d. Returns (N, Co, H*stride, W*stride).
    """
    N, C, H, W = x.shape
    Ht, Wt = H * stride, W * stride
    dtype = x.dtype
    precision = jax.lax.Precision.HIGHEST if dtype == jnp.float32 else None

    # Separable bicubic matrices (PyTorch semantics), transposed for right-multiplication.
    awt = jnp.asarray(bicubic_matrix(W, Wt).T, dtype=dtype)   # (W, Wt)
    aht = jnp.asarray(bicubic_matrix(H, Ht).T, dtype=dtype)   # (H, Ht)

    x_flat = x.reshape(N, C * H, W)                           # contiguous reshape (free)

    x_spec = pl.BlockSpec((None, C * H, W), lambda n: (n, 0, 0))
    awt_spec = pl.BlockSpec((W, Wt), lambda n: (0, 0))        # grid-invariant: fetched once
    aht_spec = pl.BlockSpec((H, Ht), lambda n: (0, 0))
    cparams = pltpu.CompilerParams(dimension_semantics=("parallel",))  # v7x: shard batch over 2 TCs

    if v is None:
        Co = C                                                # identity proj: skip the matmul
        kern = functools.partial(upsample_id_kernel, c=C, h=H, wt=Wt, ht=Ht, precision=precision)
        operands = (x_flat, awt, aht)
        in_specs = [x_spec, awt_spec, aht_spec]
    else:
        Co = v.shape[0]
        vf = v.astype(jnp.float32).reshape(Co, C)
        # weight_norm (dim=0): w = g * v / ||v||_2 per output channel
        norm = jnp.sqrt(jnp.sum(vf * vf, axis=1, keepdims=True))
        w = (g.astype(jnp.float32).reshape(Co, 1) / norm) * vf           # (Co, C)
        w_t = w.T.astype(dtype)                                          # (C, Co)
        kern = functools.partial(upsample_proj_kernel, c=C, h=H, wt=Wt, ht=Ht, precision=precision)
        operands = (x_flat, w_t, awt, aht)
        in_specs = [x_spec, pl.BlockSpec((C, Co), lambda n: (0, 0)), awt_spec, aht_spec]

    out_flat = pl.pallas_call(
        kern,
        grid=(N,),
        in_specs=in_specs,
        out_specs=pl.BlockSpec((None, Co, Ht * Wt), lambda n: (n, 0, 0)),
        out_shape=jax.ShapeDtypeStruct((N, Co, Ht * Wt), dtype),
        compiler_params=cparams,
    )(*operands)

    return out_flat.reshape(N, Co, Ht, Wt)


if __name__ == "__main__":
    # Module config: Upsample(ch_in=4, ch_out=8, stride=2) on a 16x16 input, batch 2.
    N, Cin, Cout, H, W, stride = 2, 4, 8, 16, 16, 2

    key = jax.random.PRNGKey(0)
    kx, kv, kg = jax.random.split(key, 3)
    x = jax.random.normal(kx, (N, Cin, H, W), dtype=jnp.float32)
    v = jax.random.normal(kv, (Cout, Cin, 1, 1), dtype=jnp.float32) * 0.1
    g = jax.random.uniform(kg, (Cout, 1, 1, 1), dtype=jnp.float32, minval=0.5, maxval=1.5)

    out = jax.block_until_ready(upsample(x, v, g, stride=stride))
    assert out.shape == (N, Cout, H * stride, W * stride)

    # float64 numpy reference (projection-then-resize, exactly the PyTorch op order).
    xn = np.asarray(x, dtype=np.float64)
    vn = np.asarray(v, dtype=np.float64).reshape(Cout, Cin)
    gn = np.asarray(g, dtype=np.float64).reshape(Cout, 1)
    wn = gn / np.sqrt((vn * vn).sum(axis=1, keepdims=True)) * vn
    yn = np.einsum('oc,nchw->nohw', wn, xn)
    ah = bicubic_matrix(H, H * stride)
    aw = bicubic_matrix(W, W * stride)
    ref = np.einsum('ph,nohw,qw->nopq', ah, yn, aw)
    np.testing.assert_allclose(np.asarray(out), ref, rtol=1e-4, atol=1e-4)

    # Identity-projection branch (ch_in == ch_out -> proj is nn.Sequential()).
    out_id = jax.block_until_ready(upsample(x, None, None, stride=stride))
    ref_id = np.einsum('ph,nchw,qw->ncpq', ah, xn, aw)
    np.testing.assert_allclose(np.asarray(out_id), ref_id, rtol=1e-4, atol=1e-4)

    print("KERNEL_OK")
</pallas_src>

<mosaic_0001>
module attributes {stable_mosaic.version = 11 : i64} {
  func.func @upsample_proj_kernel(%arg0: i32, %arg1: memref<1x64x16xf32, #tpu.memory_space<vmem>>, %arg2: memref<4x8xf32, #tpu.memory_space<vmem>>, %arg3: memref<16x32xf32, #tpu.memory_space<vmem>>, %arg4: memref<16x32xf32, #tpu.memory_space<vmem>>, %arg5: memref<1x8x1024xf32, #tpu.memory_space<vmem>>) attributes {dimension_semantics = [#tpu.dimension_semantics<parallel>], iteration_bounds = array<i64: 2>, scalar_prefetch = 0 : i64, scratch_operands = 0 : i64, tpu.core_type = #tpu.core_type<tc>, window_params = [{transform_indices = @transform_0, window_bounds = array<i64: 1, 64, 16>}, {pipeline_mode = #tpu.pipeline_mode<synchronous>, transform_indices = @transform_1, window_bounds = array<i64: 4, 8>}, {pipeline_mode = #tpu.pipeline_mode<synchronous>, transform_indices = @transform_2, window_bounds = array<i64: 16, 32>}, {pipeline_mode = #tpu.pipeline_mode<synchronous>, transform_indices = @transform_3, window_bounds = array<i64: 16, 32>}, {transform_indices = @transform_4, window_bounds = array<i64: 1, 8, 1024>}]} {
    %c0 = arith.constant 0 : index
    %c0_0 = arith.constant 0 : index
    %c0_1 = arith.constant 0 : index
    %0 = vector.load %arg1[%c0, %c0_0, %c0_1] : memref<1x64x16xf32, #tpu.memory_space<vmem>>, vector<1x64x16xf32>
    %1 = vector.shape_cast %0 : vector<1x64x16xf32> to vector<64x16xf32>
    %c0_2 = arith.constant 0 : index
    %c0_3 = arith.constant 0 : index
    %2 = vector.load %arg3[%c0_2, %c0_3] : memref<16x32xf32, #tpu.memory_space<vmem>>, vector<16x32xf32>
    %c0_4 = arith.constant 0 : index
    %c0_5 = arith.constant 0 : index
    %3 = vector.load %arg4[%c0_4, %c0_5] : memref<16x32xf32, #tpu.memory_space<vmem>>, vector<16x32xf32>
    %cst = arith.constant dense<0.000000e+00> : vector<64x32xf32>
    %4 = tpu.matmul %1, %2, %cst {dimension_numbers = #tpu.dot_dimension_numbers<[1], [0], [0], [1], [0, 0, 1, 1], [], []>, precision = #tpu.contract_precision<fp32>} : vector<64x16xf32>, vector<16x32xf32>, vector<64x32xf32> -> vector<64x32xf32>
    %5 = vector.shape_cast %4 : vector<64x32xf32> to vector<4x16x32xf32>
    %6 = tpu.transpose %5, [0, 2, 1] : vector<4x16x32xf32> -> vector<4x32x16xf32>
    %7 = vector.shape_cast %6 : vector<4x32x16xf32> to vector<128x16xf32>
    %cst_6 = arith.constant dense<0.000000e+00> : vector<128x32xf32>
    %8 = tpu.matmul %7, %3, %cst_6 {dimension_numbers = #tpu.dot_dimension_numbers<[1], [0], [0], [1], [0, 0, 1, 1], [], []>, precision = #tpu.contract_precision<fp32>} : vector<128x16xf32>, vector<16x32xf32>, vector<128x32xf32> -> vector<128x32xf32>
    %9 = tpu.transpose %8, [1, 0] : vector<128x32xf32> -> vector<32x128xf32>
    %10 = vector.shape_cast %9 : vector<32x128xf32> to vector<32x4x32xf32>
    %11 = tpu.transpose %10, [0, 2, 1] : vector<32x4x32xf32> -> vector<32x32x4xf32>
    %12 = vector.shape_cast %11 : vector<32x32x4xf32> to vector<1024x4xf32>
    %c0_7 = arith.constant 0 : index
    %c0_8 = arith.constant 0 : index
    %13 = vector.load %arg2[%c0_7, %c0_8] : memref<4x8xf32, #tpu.memory_space<vmem>>, vector<4x8xf32>
    %cst_9 = arith.constant dense<0.000000e+00> : vector<1024x8xf32>
    %14 = tpu.matmul %12, %13, %cst_9 {dimension_numbers = #tpu.dot_dimension_numbers<[1], [0], [0], [1], [0, 0, 1, 1], [], []>, precision = #tpu.contract_precision<fp32>} : vector<1024x4xf32>, vector<4x8xf32>, vector<1024x8xf32> -> vector<1024x8xf32>
    %15 = tpu.transpose %14, [1, 0] : vector<1024x8xf32> -> vector<8x1024xf32>
    %c0_10 = arith.constant 0 : index
    %c0_11 = arith.constant 0 : index
    %c0_12 = arith.constant 0 : index
    %16 = vector.load %arg5[%c0_10, %c0_11, %c0_12] : memref<1x8x1024xf32, #tpu.memory_space<vmem>>, vector<1x8x1024xf32>
    %17 = vector.shape_cast %16 : vector<1x8x1024xf32> to vector<8x1024xf32>
    %18 = vector.shape_cast %15 : vector<8x1024xf32> to vector<1x8x1024xf32>
    tpu.vector_store %arg5[%c0_10, %c0_11, %c0_12], %18 {strides = array<i32>} : memref<1x8x1024xf32, #tpu.memory_space<vmem>>, vector<1x8x1024xf32>,
    return
  }
  func.func @transform_0(%arg0: i32) -> (i32, i32, i32) {
    %c0_i32 = arith.constant 0 : i32
    %c0_i32_0 = arith.constant 0 : i32
    %c0_i32_1 = arith.constant 0 : i32
    return %arg0, %c0_i32, %c0_i32_0 : i32, i32, i32
  }
  func.func @transform_1(%arg0: i32) -> (i32, i32) {
    %c0_i32 = arith.constant 0 : i32
    %c0_i32_0 = arith.constant 0 : i32
    %c0_i32_1 = arith.constant 0 : i32
    return %c0_i32, %c0_i32_0 : i32, i32
  }
  func.func @transform_2(%arg0: i32) -> (i32, i32) {
    %c0_i32 = arith.constant 0 : i32
    %c0_i32_0 = arith.constant 0 : i32
    %c0_i32_1 = arith.constant 0 : i32
    return %c0_i32, %c0_i32_0 : i32, i32
  }
  func.func @transform_3(%arg0: i32) -> (i32, i32) {
    %c0_i32 = arith.constant 0 : i32
    %c0_i32_0 = arith.constant 0 : i32
    %c0_i32_1 = arith.constant 0 : i32
    return %c0_i32, %c0_i32_0 : i32, i32
  }
  func.func @transform_4(%arg0: i32) -> (i32, i32, i32) {
    %c0_i32 = arith.constant 0 : i32
    %c0_i32_0 = arith.constant 0 : i32
    %c0_i32_1 = arith.constant 0 : i32
    return %arg0, %c0_i32, %c0_i32_0 : i32, i32, i32
  }
}

</mosaic_0001>

<llo_original>
// kernel: tpu_custom_call.1
$region0: #{tpu_custom_call.1}
  #allocation0 [shape = 'u32[]', space=smem, size = 0x4, offset = 0x4, fixed_abs, tag = 'smem constant byte address 0x4 - core index']
  #allocation1 [shape = 'u32[72,128]{1,0:T(1,128)}', space=vmem, size = 0x9000, scoped, tag = 'internal scratch']
  %s0 = inlined_call_operand.vmem [shape: f32[2,64,16], index: 0, kind: input, shape index: {}]
  %s1 = inlined_call_operand.vmem [shape: f32[4,8], index: 1, kind: input, shape index: {}]
  %s2 = inlined_call_operand.vmem [shape: f32[16,32], index: 2, kind: input, shape index: {}]
  %s3 = inlined_call_operand.vmem [shape: f32[16,32], index: 3, kind: input, shape index: {}]
  %s4 = inlined_call_operand.hbm [shape: f32[2,8,1024], index: 4, kind: output, shape index: {}]
  %s5 = sld [smem:[#allocation0]]
  $region49: #{tpu_custom_call.1} parent=0
    _
  %s7 = ssub.s32 1, %s5
  %s8 = scalar_select 0, %s7, %s5
  $region1: #{tpu_custom_call.1} parent=0
    #allocation2 [shape = 'u8[65536]{0}', space=vmem, size = 0x10000, scoped, tag = 'output window, operand 0']
    #allocation3 [shape = 's32[2]{0}', space=sflag, size = 0x8, scoped, tag = 'scoped memory for tpu_custom_call.1']
    %9 = vsyncpa [#allocation3], 0
    %s10 = scalar_lea.sflag [#allocation3], 1
    %11 = vsyncpa %s10, 0
    loop: start=0, step=1, limit=4
    $region2: #{tpu_custom_call.1} parent=1 // loop_pre_header
      _
    $region3: #{tpu_custom_call.1} parent=1 // loop_header
      %s13 = sphi 0, %s17
      %p14 = scmp.ge.s32.totalorder %s13, 4
      %s23 = sphi 0, %s25
      %s26 = sphi 0, %s23
      %s27 = sphi 0, %s26
      %s43 = sphi 0, %s27
      %s47 = sphi 0, %s47
      %s49 = sphi 0, %s47
      %s50 = sphi 0, %s49
      %s64 = sphi 0, %s50
      %s68 = sphi 0, %s68
      %s70 = sphi 0, %s68
      %s71 = sphi 0, %s70
      %s85 = sphi 0, %s71
      %s89 = sphi 0, %s89
      %s91 = sphi 0, %s89
      %s92 = sphi 0, %s91
      %s106 = sphi 0, %s92
      %s112 = sphi 0, %s114
      %s115 = sphi 0, %s112
      %s116 = sphi 0, %s115
      %s132 = sphi 0, %s116
    $region4: #{tpu_custom_call.1} parent=1 // loop_header_branch
      %16 = sbr.rel (%p14) target = $region8
    $region5: #{tpu_custom_call.1} parent=1 // loop_body
      %s18 = ssub.s32 %s13, 1
      %s19 = ssub.s32 %s13, 2
      %s20 = sadd.s32 %s13, 1
      %s21 = ssub.s32 %s13, %s20
      %p22 = scmp.eq.s32.totalorder %s21, 0
      %s24 = sadd.s32 %s23, 1
      %s25 = scalar_select %p22, %s23, %s24
      %p28 = pneg %p22
      %p29 = scmp.eq.s32.totalorder %s13, 1
      %p30 = por %p28, %p29
      %p31 = scmp.ne.s32.totalorder %s23, %s26
      %p32 = scmp.eq.s32.totalorder %s13, 0
      %p33 = por %p31, %p32
      %p34 = scmp.ne.s32.totalorder %s23, %s26
      %p35 = scmp.eq.s32.totalorder %s18, 1
      %p36 = por %p34, %p35
      %p37 = scmp.ne.s32.totalorder %s26, %s27
      %p38 = scmp.eq.s32.totalorder %s18, 0
      %p39 = por %p37, %p38
      %p40 = scmp.ne.s32.totalorder %s26, %s27
      %p41 = scmp.eq.s32.totalorder %s19, 1
      %p42 = por %p40, %p41
      %p44 = scmp.ne.s32.totalorder %s27, %s43
      %p45 = scmp.eq.s32.totalorder %s19, 0
      %p46 = por %p44, %p45
      %s48 = sadd.s32 %s47, 1
      %p51 = scmp.eq.s32.totalorder %s13, 1
      %p52 = scmp.ne.s32.totalorder %s47, %s49
      %p53 = scmp.eq.s32.totalorder %s13, 0
      %p54 = por %p52, %p53
      %p55 = scmp.ne.s32.totalorder %s47, %s49
      %p56 = scmp.eq.s32.totalorder %s18, 1
      %p57 = por %p55, %p56
      %p58 = scmp.ne.s32.totalorder %s49, %s50
      %p59 = scmp.eq.s32.totalorder %s18, 0
      %p60 = por %p58, %p59
      %p61 = scmp.ne.s32.totalorder %s49, %s50
      %p62 = scmp.eq.s32.totalorder %s19, 1
      %p63 = por %p61, %p62
      %p65 = scmp.ne.s32.totalorder %s50, %s64
      %p66 = scmp.eq.s32.totalorder %s19, 0
      %p67 = por %p65, %p66
      %s69 = sadd.s32 %s68, 1
      %p72 = scmp.eq.s32.totalorder %s13, 1
      %p73 = scmp.ne.s32.totalorder %s68, %s70
      %p74 = scmp.eq.s32.totalorder %s13, 0
      %p75 = por %p73, %p74
      %p76 = scmp.ne.s32.totalorder %s68, %s70
      %p77 = scmp.eq.s32.totalorder %s18, 1
      %p78 = por %p76, %p77
      %p79 = scmp.ne.s32.totalorder %s70, %s71
      %p80 = scmp.eq.s32.totalorder %s18, 0
      %p81 = por %p79, %p80
      %p82 = scmp.ne.s32.totalorder %s70, %s71
      %p83 = scmp.eq.s32.totalorder %s19, 1
      %p84 = por %p82, %p83
      %p86 = scmp.ne.s32.totalorder %s71, %s85
      %p87 = scmp.eq.s32.totalorder %s19, 0
      %p88 = por %p86, %p87
      %s90 = sadd.s32 %s89, 1
      %p93 = scmp.eq.s32.totalorder %s13, 1
      %p94 = scmp.ne.s32.totalorder %s89, %s91
      %p95 = scmp.eq.s32.totalorder %s13, 0
      %p96 = por %p94, %p95
      %p97 = scmp.ne.s32.totalorder %s89, %s91
      %p98 = scmp.eq.s32.totalorder %s18, 1
      %p99 = por %p97, %p98
      %p100 = scmp.ne.s32.totalorder %s91, %s92
      %p101 = scmp.eq.s32.totalorder %s18, 0
      %p102 = por %p100, %p101
      %p103 = scmp.ne.s32.totalorder %s91, %s92
      %p104 = scmp.eq.s32.totalorder %s19, 1
      %p105 = por %p103, %p104
      %p107 = scmp.ne.s32.totalorder %s92, %s106
      %p108 = scmp.eq.s32.totalorder %s19, 0
      %p109 = por %p107, %p108
      %s110 = ssub.s32 %s13, %s20
      %p111 = scmp.eq.s32.totalorder %s110, 0
      %s113 = sadd.s32 %s112, 1
      %s114 = scalar_select %p111, %s112, %s113
      %p117 = pneg %p111
      %p118 = scmp.eq.s32.totalorder %s13, 1
      %p119 = por %p117, %p118
      %p120 = scmp.ne.s32.totalorder %s112, %s115
      %p121 = scmp.eq.s32.totalorder %s13, 0
      %p122 = por %p120, %p121
      %p123 = scmp.ne.s32.totalorder %s112, %s115
      %p124 = scmp.eq.s32.totalorder %s18, 1
      %p125 = por %p123, %p124
      %p126 = scmp.ne.s32.totalorder %s115, %s116
      %p127 = scmp.eq.s32.totalorder %s18, 0
      %p128 = por %p126, %p127
      %p129 = scmp.ne.s32.totalorder %s115, %s116
      %p130 = scmp.eq.s32.totalorder %s19, 1
      %p131 = por %p129, %p130
      %p133 = scmp.ne.s32.totalorder %s116, %s132
      %p134 = scmp.eq.s32.totalorder %s19, 0
      %p135 = por %p133, %p134
      %p136 = scmp.le.s32.totalorder 1, %s13
      %p137 = scmp.lt.s32.totalorder %s13, 3
      %p138 = pnand %p136, %p137
      %p139 = pneg %p138
      // Predicated region
      $region9: #{tpu_custom_call.1} parent=5 // pred_check
        _
      $region10: #{tpu_custom_call.1} parent=5 // pred_check_branch
        %141 = sbr.rel (%p138) target = $region12
      $region11: #{tpu_custom_call.1} parent=5 // pred_region
        %s142 = ssub.s32 %s13, 1
        // Predicated region
        $region13: #{tpu_custom_call.1} parent=11 // pred_check
          %p143 = pneg %p60
        $region14: #{tpu_custom_call.1} parent=11 // pred_check_branch
          %145 = sbr.rel (%p143) target = $region16
        $region15: #{tpu_custom_call.1} parent=11 // pred_region
          _
        $region16: #{tpu_custom_call.1} parent=11 // pred_fallthru
          _
        // Predicated region
        $region17: #{tpu_custom_call.1} parent=11 // pred_check
          %p146 = pneg %p81
        $region18: #{tpu_custom_call.1} parent=11 // pred_check_branch
          %148 = sbr.rel (%p146) target = $region20
        $region19: #{tpu_custom_call.1} parent=11 // pred_region
          _
        $region20: #{tpu_custom_call.1} parent=11 // pred_fallthru
          _
        // Predicated region
        $region21: #{tpu_custom_call.1} parent=11 // pred_check
          %p149 = pneg %p102
        $region22: #{tpu_custom_call.1} parent=11 // pred_check_branch
          %151 = sbr.rel (%p149) target = $region24
        $region23: #{tpu_custom_call.1} parent=11 // pred_region
          _
        $region24: #{tpu_custom_call.1} parent=11 // pred_fallthru
          _
      $region12: #{tpu_custom_call.1} parent=5 // pred_fallthru
        _
      %p152 = scmp.lt.s32.totalorder %s13, 2
      // Predicated region
      $region25: #{tpu_custom_call.1} parent=5 // pred_check
        %p153 = pneg %p152
      $region26: #{tpu_custom_call.1} parent=5 // pred_check_branch
        %155 = sbr.rel (%p153) target = $region28
      $region27: #{tpu_custom_call.1} parent=5 // pred_region
        // Predicated region
        $region29: #{tpu_custom_call.1} parent=27 // pred_check
          %p156 = pneg %p33
        $region30: #{tpu_custom_call.1} parent=27 // pred_check_branch
          %158 = sbr.rel (%p156) target = $region32
        $region31: #{tpu_custom_call.1} parent=27 // pred_region
          %p159 = scmp.lt.s32.totalorder %s13, 1
          %s160 = scalar_select %p159, %s13, 1
          %s161 = smul.addr %s160, 8
          %s162 = smul.addr %s161, 8
          %s163 = scalar_lea.vmem %s0, %s162
        $region32: #{tpu_custom_call.1} parent=27 // pred_fallthru
          _
      $region28: #{tpu_custom_call.1} parent=5 // pred_fallthru
        _
      %p164 = scmp.le.s32.totalorder 1, %s13
      %p165 = scmp.lt.s32.totalorder %s13, 3
      %p166 = pnand %p164, %p165
      %p167 = pneg %p166
      // Predicated region
      $region33: #{tpu_custom_call.1} parent=5 // pred_check
        _
      $region34: #{tpu_custom_call.1} parent=5 // pred_check_branch
        %169 = sbr.rel (%p166) target = $region36
      $region35: #{tpu_custom_call.1} parent=5 // pred_region
        %s170 = ssub.s32 %s13, 1
        %p171 = scmp.lt.s32.totalorder %s18, 1
        %s172 = scalar_select %p171, %s18, 1
        %s173 = smul.addr %s172, 8
        %s174 = smul.addr %s173, 8
        %s175 = scalar_lea.vmem %s0, %s174
        %p176 = pneg %p39
        %p177 = pneg %p36
        %p178 = pneg %p60
        %p179 = pneg %p57
        %p180 = pneg %p81
        %p181 = pneg %p78
        %p182 = pneg %p102
        %p183 = pneg %p99
        %p184 = pneg %p128
        %p185 = pneg %p125
        %s186 = sand.u32 %s115, 1
        %s187 = scalar_lea.sflag [#allocation3], %s186
        %s188 = sand.u32 %s115, 1
        %s189 = smul.addr %s188, 64
        %s190 = scalar_lea.vmem [#allocation2], %s189
        %p191 = scmp.lt.s32.totalorder %s18, 1
        %s192 = scalar_select %p191, %s18, 1
        %s193 = smul.addr %s192, 8
        %s194 = smul.addr %s193, 8
        %s195 = scalar_lea.vmem %s0, %s194
        %v196 = vld [vmem:[%s195] sm:$0xff]
        %v197 = vld [vmem:[%s195 + $0x8] sm:$0xff]
        %v198 = vld [vmem:[%s195 + $0x10] sm:$0xff]
        %v199 = vld [vmem:[%s195 + $0x18] sm:$0xff]
        %v200 = vld [vmem:[%s195 + $0x20] sm:$0xff]
        %v201 = vld [vmem:[%s195 + $0x28] sm:$0xff]
        %v202 = vld [vmem:[%s195 + $0x30] sm:$0xff]
        %v203 = vld [vmem:[%s195 + $0x38] sm:$0xff]
        %v204 = vld [vmem:[%s2] sm:$0xff]
        %v205 = vld [vmem:[%s2 + $0x8] sm:$0xff]
        %v206 = vld [vmem:[%s3] sm:$0xff]
        %v207 = vld [vmem:[%s3 + $0x8] sm:$0xff]
        %vm208 = vcmask 130048
        %v210 = vsel %vm208, %v196, 0
        %v213 = vsel %vm208, %v197, 0
        %v216 = vsel %vm208, %v198, 0
        %v219 = vsel %vm208, %v199, 0
        %v222 = vsel %vm208, %v200, 0
        %v225 = vsel %vm208, %v201, 0
        %v228 = vsel %vm208, %v202, 0
        %v231 = vsel %vm208, %v203, 0
        %233 = vmatpush.msra.mxu0 0.0
        %234 = vmatpush.msra.mxu0 0.0
        %235 = vmatpush.msra.mxu0 0.0
        %236 = vmatpush.msra.mxu0 0.0
        %237 = vmatpush.msra.mxu0 0.0
        %238 = vmatpush.msra.mxu0 0.0
        %239 = vmatpush.msra.mxu0 0.0
        %240 = vmatpush.msra.mxu0 0.0
        %241 = vmatpush.msra.mxu0 0.0
        %242 = vmatpush.msra.mxu0 0.0
        %243 = vmatpush.msra.mxu0 0.0
        %244 = vmatpush.msra.mxu0 0.0
        %245 = vmatpush.msra.mxu0 0.0
        %246 = vmatpush.msra.mxu0 0.0
        %v247 = vand.u32 %v205, 4294901760
        %248 = vmatpush.msra.mxu0 %v247
        %v249 = vand.u32 %v204, 4294901760
        %250 = vmatpush.msra.mxu0 %v249
        %v251 = vand.u32 %v210, 4294901760
        %v252 = vsub.f32 %v210, %v251
        %v253 = vand.u32 %v252, 4294901760
        %v254 = vsub.f32 %v252, %v253
        %v255 = vand.u32 %v254, 4294901760
        %256 = vmatmul.f32.gmra.mxu0 %v255
        %v257 = vpop.f32.mrf.mxu0
        %v258 = vadd.f32 0.0, %v257
        %v259 = vand.u32 %v213, 4294901760
        %v260 = vsub.f32 %v213, %v259
        %v261 = vand.u32 %v260, 4294901760
        %v262 = vsub.f32 %v260, %v261
        %v263 = vand.u32 %v262, 4294901760
        %264 = vmatmul.f32.gmra.mxu0 %v263
        %v265 = vpop.f32.mrf.mxu0
        %v266 = vadd.f32 0.0, %v265
        %v267 = vand.u32 %v216, 4294901760
        %v268 = vsub.f32 %v216, %v267
        %v269 = vand.u32 %v268, 4294901760
        %v270 = vsub.f32 %v268, %v269
        %v271 = vand.u32 %v270, 4294901760
        %272 = vmatmul.f32.gmra.mxu0 %v271
        %v273 = vpop.f32.mrf.mxu0
        %v274 = vadd.f32 0.0, %v273
        %v275 = vand.u32 %v219, 4294901760
        %v276 = vsub.f32 %v219, %v275
        %v277 = vand.u32 %v276, 4294901760
        %v278 = vsub.f32 %v276, %v277
        %v279 = vand.u32 %v278, 4294901760
        %280 = vmatmul.f32.gmra.mxu0 %v279
        %v281 = vpop.f32.mrf.mxu0
        %v282 = vadd.f32 0.0, %v281
        %v283 = vand.u32 %v222, 4294901760
        %v284 = vsub.f32 %v222, %v283
        %v285 = vand.u32 %v284, 4294901760
        %v286 = vsub.f32 %v284, %v285
        %v287 = vand.u32 %v286, 4294901760
        %288 = vmatmul.f32.gmra.mxu0 %v287
        %v289 = vpop.f32.mrf.mxu0
        %v290 = vadd.f32 0.0, %v289
        %v291 = vand.u32 %v225, 4294901760
        %v292 = vsub.f32 %v225, %v291
        %v293 = vand.u32 %v292, 4294901760
        %v294 = vsub.f32 %v292, %v293
        %v295 = vand.u32 %v294, 4294901760
        %296 = vmatmul.f32.gmra.mxu0 %v295
        %v297 = vpop.f32.mrf.mxu0
        %v298 = vadd.f32 0.0, %v297
        %v299 = vand.u32 %v228, 4294901760
        %v300 = vsub.f32 %v228, %v299
        %v301 = vand.u32 %v300, 4294901760
        %v302 = vsub.f32 %v300, %v301
        %v303 = vand.u32 %v302, 4294901760
        %304 = vmatmul.f32.gmra.mxu0 %v303
        %v305 = vpop.f32.mrf.mxu0
        %v306 = vadd.f32 0.0, %v305
        %v307 = vand.u32 %v231, 4294901760
        %v308 = vsub.f32 %v231, %v307
        %v309 = vand.u32 %v308, 4294901760
        %v310 = vsub.f32 %v308, %v309
        %v311 = vand.u32 %v310, 4294901760
        %312 = vmatmul.f32.gmra.mxu0 %v311
        %v313 = vpop.f32.mrf.mxu0
        %v314 = vadd.f32 0.0, %v313
        %315 = vdwg.mxu0
        %316 = vmatpush.msra.mxu0 0.0
        %317 = vmatpush.msra.mxu0 0.0
        %318 = vmatpush.msra.mxu0 0.0
        %319 = vmatpush.msra.mxu0 0.0
        %320 = vmatpush.msra.mxu0 0.0
        %321 = vmatpush.msra.mxu0 0.0
        %322 = vmatpush.msra.mxu0 0.0
        %323 = vmatpush.msra.mxu0 0.0
        %324 = vmatpush.msra.mxu0 0.0
        %325 = vmatpush.msra.mxu0 0.0
        %326 = vmatpush.msra.mxu0 0.0
        %327 = vmatpush.msra.mxu0 0.0
        %328 = vmatpush.msra.mxu0 0.0
        %329 = vmatpush.msra.mxu0 0.0
        %v330 = vand.u32 %v205, 4294901760
        %v331 = vsub.f32 %v205, %v330
        %v332 = vand.u32 %v331, 4294901760
        %v333 = vsub.f32 %v331, %v332
        %v334 = vand.u32 %v333, 4294901760
        %335 = vmatpush.msra.mxu0 %v334
        %v336 = vand.u32 %v204, 4294901760
        %v337 = vsub.f32 %v204, %v336
        %v338 = vand.u32 %v337, 4294901760
        %v339 = vsub.f32 %v337, %v338
        %v340 = vand.u32 %v339, 4294901760
        %341 = vmatpush.msra.mxu0 %v340
        %v342 = vand.u32 %v210, 4294901760
        %343 = vmatmul.f32.gmra.mxu0 %v342
        %v344 = vpop.f32.mrf.mxu0
        %v345 = vadd.f32 %v258, %v344
        %v346 = vand.u32 %v213, 4294901760
        %347 = vmatmul.f32.gmra.mxu0 %v346
        %v348 = vpop.f32.mrf.mxu0
        %v349 = vadd.f32 %v266, %v348
        %v350 = vand.u32 %v216, 4294901760
        %351 = vmatmul.f32.gmra.mxu0 %v350
        %v352 = vpop.f32.mrf.mxu0
        %v353 = vadd.f32 %v274, %v352
        %v354 = vand.u32 %v219, 4294901760
        %355 = vmatmul.f32.gmra.mxu0 %v354
        %v356 = vpop.f32.mrf.mxu0
        %v357 = vadd.f32 %v282, %v356
        %v358 = vand.u32 %v222, 4294901760
        %359 = vmatmul.f32.gmra.mxu0 %v358
        %v360 = vpop.f32.mrf.mxu0
        %v361 = vadd.f32 %v290, %v360
        %v362 = vand.u32 %v225, 4294901760
        %363 = vmatmul.f32.gmra.mxu0 %v362
        %v364 = vpop.f32.mrf.mxu0
        %v365 = vadd.f32 %v298, %v364
        %v366 = vand.u32 %v228, 4294901760
        %367 = vmatmul.f32.gmra.mxu0 %v366
        %v368 = vpop.f32.mrf.mxu0
        %v369 = vadd.f32 %v306, %v368
        %v370 = vand.u32 %v231, 4294901760
        %371 = vmatmul.f32.gmra.mxu0 %v370
        %v372 = vpop.f32.mrf.mxu0
        %v373 = vadd.f32 %v314, %v372
        %374 = vdwg.mxu0
        %375 = vmatpush.msra.mxu0 0.0
        %376 = vmatpush.msra.mxu0 0.0
        %377 = vmatpush.msra.mxu0 0.0
        %378 = vmatpush.msra.mxu0 0.0
        %379 = vmatpush.msra.mxu0 0.0
        %380 = vmatpush.msra.mxu0 0.0
        %381 = vmatpush.msra.mxu0 0.0
        %382 = vmatpush.msra.mxu0 0.0
        %383 = vmatpush.msra.mxu0 0.0
        %384 = vmatpush.msra.mxu0 0.0
        %385 = vmatpush.msra.mxu0 0.0
        %386 = vmatpush.msra.mxu0 0.0
        %387 = vmatpush.msra.mxu0 0.0
        %388 = vmatpush.msra.mxu0 0.0
        %v389 = vand.u32 %v205, 4294901760
        %v390 = vsub.f32 %v205, %v389
        %391 = vmatpush.msra.mxu0 %v390
        %v392 = vand.u32 %v204, 4294901760
        %v393 = vsub.f32 %v204, %v392
        %394 = vmatpush.msra.mxu0 %v393
        %v395 = vand.u32 %v210, 4294901760
        %v396 = vsub.f32 %v210, %v395
        %397 = vmatmul.f32.gmra.mxu0 %v396
        %v398 = vpop.f32.mrf.mxu0
        %v399 = vadd.f32 %v345, %v398
        %v400 = vand.u32 %v213, 4294901760
        %v401 = vsub.f32 %v213, %v400
        %402 = vmatmul.f32.gmra.mxu0 %v401
        %v403 = vpop.f32.mrf.mxu0
        %v404 = vadd.f32 %v349, %v403
        %v405 = vand.u32 %v216, 4294901760
        %v406 = vsub.f32 %v216, %v405
        %407 = vmatmul.f32.gmra.mxu0 %v406
        %v408 = vpop.f32.mrf.mxu0
        %v409 = vadd.f32 %v353, %v408
        %v410 = vand.u32 %v219, 4294901760
        %v411 = vsub.f32 %v219, %v410
        %412 = vmatmul.f32.gmra.mxu0 %v411
        %v413 = vpop.f32.mrf.mxu0
        %v414 = vadd.f32 %v357, %v413
        %v415 = vand.u32 %v222, 4294901760
        %v416 = vsub.f32 %v222, %v415
        %417 = vmatmul.f32.gmra.mxu0 %v416
        %v418 = vpop.f32.mrf.mxu0
        %v419 = vadd.f32 %v361, %v418
        %v420 = vand.u32 %v225, 4294901760
        %v421 = vsub.f32 %v225, %v420
        %422 = vmatmul.f32.gmra.mxu0 %v421
        %v423 = vpop.f32.mrf.mxu0
        %v424 = vadd.f32 %v365, %v423
        %v425 = vand.u32 %v228, 4294901760
        %v426 = vsub.f32 %v228, %v425
        %427 = vmatmul.f32.gmra.mxu0 %v426
        %v428 = vpop.f32.mrf.mxu0
        %v429 = vadd.f32 %v369, %v428
        %v430 = vand.u32 %v231, 4294901760
        %v431 = vsub.f32 %v231, %v430
        %432 = vmatmul.f32.gmra.mxu0 %v431
        %v433 = vpop.f32.mrf.mxu0
        %v434 = vadd.f32 %v373, %v433
        %435 = vdwg.mxu0
        %436 = vmatpush.msra.mxu0 0.0
        %437 = vmatpush.msra.mxu0 0.0
        %438 = vmatpush.msra.mxu0 0.0
        %439 = vmatpush.msra.mxu0 0.0
        %440 = vmatpush.msra.mxu0 0.0
        %441 = vmatpush.msra.mxu0 0.0
        %442 = vmatpush.msra.mxu0 0.0
        %443 = vmatpush.msra.mxu0 0.0
        %444 = vmatpush.msra.mxu0 0.0
        %445 = vmatpush.msra.mxu0 0.0
        %446 = vmatpush.msra.mxu0 0.0
        %447 = vmatpush.msra.mxu0 0.0
        %448 = vmatpush.msra.mxu0 0.0
        %449 = vmatpush.msra.mxu0 0.0
        %v450 = vand.u32 %v205, 4294901760
        %451 = vmatpush.msra.mxu0 %v450
        %v452 = vand.u32 %v204, 4294901760
        %453 = vmatpush.msra.mxu0 %v452
        %v454 = vand.u32 %v210, 4294901760
        %v455 = vsub.f32 %v210, %v454
        %v456 = vand.u32 %v455, 4294901760
        %457 = vmatmul.f32.gmra.mxu0 %v456
        %v458 = vpop.f32.mrf.mxu0
        %v459 = vadd.f32 %v399, %v458
        %v460 = vand.u32 %v213, 4294901760
        %v461 = vsub.f32 %v213, %v460
        %v462 = vand.u32 %v461, 4294901760
        %463 = vmatmul.f32.gmra.mxu0 %v462
        %v464 = vpop.f32.mrf.mxu0
        %v465 = vadd.f32 %v404, %v464
        %v466 = vand.u32 %v216, 4294901760
        %v467 = vsub.f32 %v216, %v466
        %v468 = vand.u32 %v467, 4294901760
        %469 = vmatmul.f32.gmra.mxu0 %v468
        %v470 = vpop.f32.mrf.mxu0
        %v471 = vadd.f32 %v409, %v470
        %v472 = vand.u32 %v219, 4294901760
        %v473 = vsub.f32 %v219, %v472
        %v474 = vand.u32 %v473, 4294901760
        %475 = vmatmul.f32.gmra.mxu0 %v474
        %v476 = vpop.f32.mrf.mxu0
        %v477 = vadd.f32 %v414, %v476
        %v478 = vand.u32 %v222, 4294901760
        %v479 = vsub.f32 %v222, %v478
        %v480 = vand.u32 %v479, 4294901760
        %481 = vmatmul.f32.gmra.mxu0 %v480
        %v482 = vpop.f32.mrf.mxu0
        %v483 = vadd.f32 %v419, %v482
        %v484 = vand.u32 %v225, 4294901760
        %v485 = vsub.f32 %v225, %v484
        %v486 = vand.u32 %v485, 4294901760
        %487 = vmatmul.f32.gmra.mxu0 %v486
        %v488 = vpop.f32.mrf.mxu0
        %v489 = vadd.f32 %v424, %v488
        %v490 = vand.u32 %v228, 4294901760
        %v491 = vsub.f32 %v228, %v490
        %v492 = vand.u32 %v491, 4294901760
        %493 = vmatmul.f32.gmra.mxu0 %v492
        %v494 = vpop.f32.mrf.mxu0
        %v495 = vadd.f32 %v429, %v494
        %v496 = vand.u32 %v231, 4294901760
        %v497 = vsub.f32 %v231, %v496
        %v498 = vand.u32 %v497, 4294901760
        %499 = vmatmul.f32.gmra.mxu0 %v498
        %v500 = vpop.f32.mrf.mxu0
        %v501 = vadd.f32 %v434, %v500
        %502 = vdwg.mxu0
        %503 = vmatpush.msra.mxu0 0.0
        %504 = vmatpush.msra.mxu0 0.0
        %505 = vmatpush.msra.mxu0 0.0
        %506 = vmatpush.msra.mxu0 0.0
        %507 = vmatpush.msra.mxu0 0.0
        %508 = vmatpush.msra.mxu0 0.0
        %509 = vmatpush.msra.mxu0 0.0
        %510 = vmatpush.msra.mxu0 0.0
        %511 = vmatpush.msra.mxu0 0.0
        %512 = vmatpush.msra.mxu0 0.0
        %513 = vmatpush.msra.mxu0 0.0
        %514 = vmatpush.msra.mxu0 0.0
        %515 = vmatpush.msra.mxu0 0.0
        %516 = vmatpush.msra.mxu0 0.0
        %v517 = vand.u32 %v205, 4294901760
        %v518 = vsub.f32 %v205, %v517
        %v519 = vand.u32 %v518, 4294901760
        %520 = vmatpush.msra.mxu0 %v519
        %v521 = vand.u32 %v204, 4294901760
        %v522 = vsub.f32 %v204, %v521
        %v523 = vand.u32 %v522, 4294901760
        %524 = vmatpush.msra.mxu0 %v523
        %v525 = vand.u32 %v210, 4294901760
        %526 = vmatmul.f32.gmra.mxu0 %v525
        %v527 = vpop.f32.mrf.mxu0
        %v528 = vadd.f32 %v459, %v527
        %v529 = vand.u32 %v213, 4294901760
        %530 = vmatmul.f32.gmra.mxu0 %v529
        %v531 = vpop.f32.mrf.mxu0
        %v532 = vadd.f32 %v465, %v531
        %v533 = vand.u32 %v216, 4294901760
        %534 = vmatmul.f32.gmra.mxu0 %v533
        %v535 = vpop.f32.mrf.mxu0
        %v536 = vadd.f32 %v471, %v535
        %v537 = vand.u32 %v219, 4294901760
        %538 = vmatmul.f32.gmra.mxu0 %v537
        %v539 = vpop.f32.mrf.mxu0
        %v540 = vadd.f32 %v477, %v539
        %v541 = vand.u32 %v222, 4294901760
        %542 = vmatmul.f32.gmra.mxu0 %v541
        %v543 = vpop.f32.mrf.mxu0
        %v544 = vadd.f32 %v483, %v543
        %v545 = vand.u32 %v225, 4294901760
        %546 = vmatmul.f32.gmra.mxu0 %v545
        %v547 = vpop.f32.mrf.mxu0
        %v548 = vadd.f32 %v489, %v547
        %v549 = vand.u32 %v228, 4294901760
        %550 = vmatmul.f32.gmra.mxu0 %v549
        %v551 = vpop.f32.mrf.mxu0
        %v552 = vadd.f32 %v495, %v551
        %v553 = vand.u32 %v231, 4294901760
        %554 = vmatmul.f32.gmra.mxu0 %v553
        %v555 = vpop.f32.mrf.mxu0
        %v556 = vadd.f32 %v501, %v555
        %557 = vdwg.mxu0
        %558 = vmatpush.msra.mxu0 0.0
        %559 = vmatpush.msra.mxu0 0.0
        %560 = vmatpush.msra.mxu0 0.0
        %561 = vmatpush.msra.mxu0 0.0
        %562 = vmatpush.msra.mxu0 0.0
        %563 = vmatpush.msra.mxu0 0.0
        %564 = vmatpush.msra.mxu0 0.0
        %565 = vmatpush.msra.mxu0 0.0
        %566 = vmatpush.msra.mxu0 0.0
        %567 = vmatpush.msra.mxu0 0.0
        %568 = vmatpush.msra.mxu0 0.0
        %569 = vmatpush.msra.mxu0 0.0
        %570 = vmatpush.msra.mxu0 0.0
        %571 = vmatpush.msra.mxu0 0.0
        %v572 = vand.u32 %v205, 4294901760
        %573 = vmatpush.msra.mxu0 %v572
        %v574 = vand.u32 %v204, 4294901760
        %575 = vmatpush.msra.mxu0 %v574
        %v576 = vand.u32 %v210, 4294901760
        %577 = vmatmul.f32.gmra.mxu0 %v576
        %v578 = vpop.f32.mrf.mxu0
        %v579 = vadd.f32 %v528, %v578
        %v580 = vand.u32 %v213, 4294901760
        %581 = vmatmul.f32.gmra.mxu0 %v580
        %v582 = vpop.f32.mrf.mxu0
        %v583 = vadd.f32 %v532, %v582
        %v584 = vand.u32 %v216, 4294901760
        %585 = vmatmul.f32.gmra.mxu0 %v584
        %v586 = vpop.f32.mrf.mxu0
        %v587 = vadd.f32 %v536, %v586
        %v588 = vand.u32 %v219, 4294901760
        %589 = vmatmul.f32.gmra.mxu0 %v588
        %v590 = vpop.f32.mrf.mxu0
        %v591 = vadd.f32 %v540, %v590
        %v592 = vand.u32 %v222, 4294901760
        %593 = vmatmul.f32.gmra.mxu0 %v592
        %v594 = vpop.f32.mrf.mxu0
        %v595 = vadd.f32 %v544, %v594
        %v596 = vand.u32 %v225, 4294901760
        %597 = vmatmul.f32.gmra.mxu0 %v596
        %v598 = vpop.f32.mrf.mxu0
        %v599 = vadd.f32 %v548, %v598
        %v600 = vand.u32 %v228, 4294901760
        %601 = vmatmul.f32.gmra.mxu0 %v600
        %v602 = vpop.f32.mrf.mxu0
        %v603 = vadd.f32 %v552, %v602
        %v604 = vand.u32 %v231, 4294901760
        %605 = vmatmul.f32.gmra.mxu0 %v604
        %v606 = vpop.f32.mrf.mxu0
        %v607 = vadd.f32 %v556, %v606
        %608 = vdwg.mxu0
        %609 = vxpose.xlu0.b32.start [1/16] %v579, 128
        %610 = vxpose.xlu0.b32.cont [2/16] %v583, 128
        %611 = vxpose.xlu0.b32.cont [3/16] 0.0, 128
        %612 = vxpose.xlu0.b32.cont [4/16] 0.0, 128
        %613 = vxpose.xlu0.b32.cont [5/16] 0.0, 128
        %614 = vxpose.xlu0.b32.cont [6/16] 0.0, 128
        %615 = vxpose.xlu0.b32.cont [7/16] 0.0, 128
        %616 = vxpose.xlu0.b32.cont [8/16] 0.0, 128
        %617 = vxpose.xlu0.b32.cont [9/16] 0.0, 128
        %618 = vxpose.xlu0.b32.cont [10/16] 0.0, 128
        %619 = vxpose.xlu0.b32.cont [11/16] 0.0, 128
        %620 = vxpose.xlu0.b32.cont [12/16] 0.0, 128
        %621 = vxpose.xlu0.b32.cont [13/16] 0.0, 128
        %622 = vxpose.xlu0.b32.cont [14/16] 0.0, 128
        %623 = vxpose.xlu0.b32.cont [15/16] 0.0, 128
        %624 = vxpose.xlu0.b32.end [16/16] 0.0, 128
        %v625 = vpop.trf.xlu0
        %v626 = vpop.trf.xlu0
        %v627 = vpop.trf.xlu0
        %v628 = vpop.trf.xlu0
        %v629 = vpop.trf.xlu0
        %v630 = vpop.trf.xlu0
        %v631 = vpop.trf.xlu0
        %v632 = vpop.trf.xlu0
        %v633 = vpop.trf.xlu0
        %v634 = vpop.trf.xlu0
        %v635 = vpop.trf.xlu0
        %v636 = vpop.trf.xlu0
        %v637 = vpop.trf.xlu0
        %v638 = vpop.trf.xlu0
        %v639 = vpop.trf.xlu0
        %v640 = vpop.trf.xlu0
        %641 = vxpose.xlu0.b32.start [1/16] %v587, 128
        %642 = vxpose.xlu0.b32.cont [2/16] %v591, 128
        %643 = vxpose.xlu0.b32.cont [3/16] 0.0, 128
        %644 = vxpose.xlu0.b32.cont [4/16] 0.0, 128
        %645 = vxpose.xlu0.b32.cont [5/16] 0.0, 128
        %646 = vxpose.xlu0.b32.cont [6/16] 0.0, 128
        %647 = vxpose.xlu0.b32.cont [7/16] 0.0, 128
        %648 = vxpose.xlu0.b32.cont [8/16] 0.0, 128
        %649 = vxpose.xlu0.b32.cont [9/16] 0.0, 128
        %650 = vxpose.xlu0.b32.cont [10/16] 0.0, 128
        %651 = vxpose.xlu0.b32.cont [11/16] 0.0, 128
        %652 = vxpose.xlu0.b32.cont [12/16] 0.0, 128
        %653 = vxpose.xlu0.b32.cont [13/16] 0.0, 128
        %654 = vxpose.xlu0.b32.cont [14/16] 0.0, 128
        %655 = vxpose.xlu0.b32.cont [15/16] 0.0, 128
        %656 = vxpose.xlu0.b32.end [16/16] 0.0, 128
        %v657 = vpop.trf.xlu0
        %v658 = vpop.trf.xlu0
        %v659 = vpop.trf.xlu0
        %v660 = vpop.trf.xlu0
        %v661 = vpop.trf.xlu0
        %v662 = vpop.trf.xlu0
        %v663 = vpop.trf.xlu0
        %v664 = vpop.trf.xlu0
        %v665 = vpop.trf.xlu0
        %v666 = vpop.trf.xlu0
        %v667 = vpop.trf.xlu0
        %v668 = vpop.trf.xlu0
        %v669 = vpop.trf.xlu0
        %v670 = vpop.trf.xlu0
        %v671 = vpop.trf.xlu0
        %v672 = vpop.trf.xlu0
        %673 = vxpose.xlu0.b32.start [1/16] %v595, 128
        %674 = vxpose.xlu0.b32.cont [2/16] %v599, 128
        %675 = vxpose.xlu0.b32.cont [3/16] 0.0, 128
        %676 = vxpose.xlu0.b32.cont [4/16] 0.0, 128
        %677 = vxpose.xlu0.b32.cont [5/16] 0.0, 128
        %678 = vxpose.xlu0.b32.cont [6/16] 0.0, 128
        %679 = vxpose.xlu0.b32.cont [7/16] 0.0, 128
        %680 = vxpose.xlu0.b32.cont [8/16] 0.0, 128
        %681 = vxpose.xlu0.b32.cont [9/16] 0.0, 128
        %682 = vxpose.xlu0.b32.cont [10/16] 0.0, 128
        %683 = vxpose.xlu0.b32.cont [11/16] 0.0, 128
        %684 = vxpose.xlu0.b32.cont [12/16] 0.0, 128
        %685 = vxpose.xlu0.b32.cont [13/16] 0.0, 128
        %686 = vxpose.xlu0.b32.cont [14/16] 0.0, 128
        %687 = vxpose.xlu0.b32.cont [15/16] 0.0, 128
        %688 = vxpose.xlu0.b32.end [16/16] 0.0, 128
        %v689 = vpop.trf.xlu0
        %v690 = vpop.trf.xlu0
        %v691 = vpop.trf.xlu0
        %v692 = vpop.trf.xlu0
        %v693 = vpop.trf.xlu0
        %v694 = vpop.trf.xlu0
        %v695 = vpop.trf.xlu0
        %v696 = vpop.trf.xlu0
        %v697 = vpop.trf.xlu0
        %v698 = vpop.trf.xlu0
        %v699 = vpop.trf.xlu0
        %v700 = vpop.trf.xlu0
        %v701 = vpop.trf.xlu0
        %v702 = vpop.trf.xlu0
        %v703 = vpop.trf.xlu0
        %v704 = vpop.trf.xlu0
        %705 = vxpose.xlu0.b32.start [1/16] %v603, 128
        %706 = vxpose.xlu0.b32.cont [2/16] %v607, 128
        %707 = vxpose.xlu0.b32.cont [3/16] 0.0, 128
        %708 = vxpose.xlu0.b32.cont [4/16] 0.0, 128
        %709 = vxpose.xlu0.b32.cont [5/16] 0.0, 128
        %710 = vxpose.xlu0.b32.cont [6/16] 0.0, 128
        %711 = vxpose.xlu0.b32.cont [7/16] 0.0, 128
        %712 = vxpose.xlu0.b32.cont [8/16] 0.0, 128
        %713 = vxpose.xlu0.b32.cont [9/16] 0.0, 128
        %714 = vxpose.xlu0.b32.cont [10/16] 0.0, 128
        %715 = vxpose.xlu0.b32.cont [11/16] 0.0, 128
        %716 = vxpose.xlu0.b32.cont [12/16] 0.0, 128
        %717 = vxpose.xlu0.b32.cont [13/16] 0.0, 128
        %718 = vxpose.xlu0.b32.cont [14/16] 0.0, 128
        %719 = vxpose.xlu0.b32.cont [15/16] 0.0, 128
        %720 = vxpose.xlu0.b32.end [16/16] 0.0, 128
        %v721 = vpop.trf.xlu0
        %v722 = vpop.trf.xlu0
        %v723 = vpop.trf.xlu0
        %v724 = vpop.trf.xlu0
        %v725 = vpop.trf.xlu0
        %v726 = vpop.trf.xlu0
        %v727 = vpop.trf.xlu0
        %v728 = vpop.trf.xlu0
        %v729 = vpop.trf.xlu0
        %v730 = vpop.trf.xlu0
        %v731 = vpop.trf.xlu0
        %v732 = vpop.trf.xlu0
        %v733 = vpop.trf.xlu0
        %v734 = vpop.trf.xlu0
        %v735 = vpop.trf.xlu0
        %v736 = vpop.trf.xlu0
        %v738 = vsel %vm208, %v625, 0
        %v741 = vsel %vm208, %v626, 0
        %v744 = vsel %vm208, %v627, 0
        %v747 = vsel %vm208, %v628, 0
        %v750 = vsel %vm208, %v657, 0
        %v753 = vsel %vm208, %v658, 0
        %v756 = vsel %vm208, %v659, 0
        %v759 = vsel %vm208, %v660, 0
        %v762 = vsel %vm208, %v689, 0
        %v765 = vsel %vm208, %v690, 0
        %v768 = vsel %vm208, %v691, 0
        %v771 = vsel %vm208, %v692, 0
        %v774 = vsel %vm208, %v721, 0
        %v777 = vsel %vm208, %v722, 0
        %v780 = vsel %vm208, %v723, 0
        %v783 = vsel %vm208, %v724, 0
        %785 = vmatpush.msra.mxu0 0.0
        %786 = vmatpush.msra.mxu0 0.0
        %787 = vmatpush.msra.mxu0 0.0
        %788 = vmatpush.msra.mxu0 0.0
        %789 = vmatpush.msra.mxu0 0.0
        %790 = vmatpush.msra.mxu0 0.0
        %791 = vmatpush.msra.mxu0 0.0
        %792 = vmatpush.msra.mxu0 0.0
        %793 = vmatpush.msra.mxu0 0.0
        %794 = vmatpush.msra.mxu0 0.0
        %795 = vmatpush.msra.mxu0 0.0
        %796 = vmatpush.msra.mxu0 0.0
        %797 = vmatpush.msra.mxu0 0.0
        %798 = vmatpush.msra.mxu0 0.0
        %v799 = vand.u32 %v207, 4294901760
        %800 = vmatpush.msra.mxu0 %v799
        %v801 = vand.u32 %v206, 4294901760
        %802 = vmatpush.msra.mxu0 %v801
        %v803 = vand.u32 %v738, 4294901760
        %v804 = vsub.f32 %v738, %v803
        %v805 = vand.u32 %v804, 4294901760
        %v806 = vsub.f32 %v804, %v805
        %v807 = vand.u32 %v806, 4294901760
        %808 = vmatmul.f32.gmra.mxu0 %v807
        %v809 = vpop.f32.mrf.mxu0
        %v810 = vadd.f32 0.0, %v809
        %v811 = vand.u32 %v741, 4294901760
        %v812 = vsub.f32 %v741, %v811
        %v813 = vand.u32 %v812, 4294901760
        %v814 = vsub.f32 %v812, %v813
        %v815 = vand.u32 %v814, 4294901760
        %816 = vmatmul.f32.gmra.mxu0 %v815
        %v817 = vpop.f32.mrf.mxu0
        %v818 = vadd.f32 0.0, %v817
        %v819 = vand.u32 %v744, 4294901760
        %v820 = vsub.f32 %v744, %v819
        %v821 = vand.u32 %v820, 4294901760
        %v822 = vsub.f32 %v820, %v821
        %v823 = vand.u32 %v822, 4294901760
        %824 = vmatmul.f32.gmra.mxu0 %v823
        %v825 = vpop.f32.mrf.mxu0
        %v826 = vadd.f32 0.0, %v825
        %v827 = vand.u32 %v747, 4294901760
        %v828 = vsub.f32 %v747, %v827
        %v829 = vand.u32 %v828, 4294901760
        %v830 = vsub.f32 %v828, %v829
        %v831 = vand.u32 %v830, 4294901760
        %832 = vmatmul.f32.gmra.mxu0 %v831
        %v833 = vpop.f32.mrf.mxu0
        %v834 = vadd.f32 0.0, %v833
        %v835 = vand.u32 %v750, 4294901760
        %v836 = vsub.f32 %v750, %v835
        %v837 = vand.u32 %v836, 4294901760
        %v838 = vsub.f32 %v836, %v837
        %v839 = vand.u32 %v838, 4294901760
        %840 = vmatmul.f32.gmra.mxu0 %v839
        %v841 = vpop.f32.mrf.mxu0
        %v842 = vadd.f32 0.0, %v841
        %v843 = vand.u32 %v753, 4294901760
        %v844 = vsub.f32 %v753, %v843
        %v845 = vand.u32 %v844, 4294901760
        %v846 = vsub.f32 %v844, %v845
        %v847 = vand.u32 %v846, 4294901760
        %848 = vmatmul.f32.gmra.mxu0 %v847
        %v849 = vpop.f32.mrf.mxu0
        %v850 = vadd.f32 0.0, %v849
        %v851 = vand.u32 %v756, 4294901760
        %v852 = vsub.f32 %v756, %v851
        %v853 = vand.u32 %v852, 4294901760
        %v854 = vsub.f32 %v852, %v853
        %v855 = vand.u32 %v854, 4294901760
        %856 = vmatmul.f32.gmra.mxu0 %v855
        %v857 = vpop.f32.mrf.mxu0
        %v858 = vadd.f32 0.0, %v857
        %v859 = vand.u32 %v759, 4294901760
        %v860 = vsub.f32 %v759, %v859
        %v861 = vand.u32 %v860, 4294901760
        %v862 = vsub.f32 %v860, %v861
        %v863 = vand.u32 %v862, 4294901760
        %864 = vmatmul.f32.gmra.mxu0 %v863
        %v865 = vpop.f32.mrf.mxu0
        %v866 = vadd.f32 0.0, %v865
        %v867 = vand.u32 %v762, 4294901760
        %v868 = vsub.f32 %v762, %v867
        %v869 = vand.u32 %v868, 4294901760
        %v870 = vsub.f32 %v868, %v869
        %v871 = vand.u32 %v870, 4294901760
        %872 = vmatmul.f32.gmra.mxu0 %v871
        %v873 = vpop.f32.mrf.mxu0
        %v874 = vadd.f32 0.0, %v873
        %v875 = vand.u32 %v765, 4294901760
        %v876 = vsub.f32 %v765, %v875
        %v877 = vand.u32 %v876, 4294901760
        %v878 = vsub.f32 %v876, %v877
        %v879 = vand.u32 %v878, 4294901760
        %880 = vmatmul.f32.gmra.mxu0 %v879
        %v881 = vpop.f32.mrf.mxu0
        %v882 = vadd.f32 0.0, %v881
        %v883 = vand.u32 %v768, 4294901760
        %v884 = vsub.f32 %v768, %v883
        %v885 = vand.u32 %v884, 4294901760
        %v886 = vsub.f32 %v884, %v885
        %v887 = vand.u32 %v886, 4294901760
        %888 = vmatmul.f32.gmra.mxu0 %v887
        %v889 = vpop.f32.mrf.mxu0
        %v890 = vadd.f32 0.0, %v889
        %v891 = vand.u32 %v771, 4294901760
        %v892 = vsub.f32 %v771, %v891
        %v893 = vand.u32 %v892, 4294901760
        %v894 = vsub.f32 %v892, %v893
        %v895 = vand.u32 %v894, 4294901760
        %896 = vmatmul.f32.gmra.mxu0 %v895
        %v897 = vpop.f32.mrf.mxu0
        %v898 = vadd.f32 0.0, %v897
        %v899 = vand.u32 %v774, 4294901760
        %v900 = vsub.f32 %v774, %v899
        %v901 = vand.u32 %v900, 4294901760
        %v902 = vsub.f32 %v900, %v901
        %v903 = vand.u32 %v902, 4294901760
        %904 = vmatmul.f32.gmra.mxu0 %v903
        %v905 = vpop.f32.mrf.mxu0
        %v906 = vadd.f32 0.0, %v905
        %v907 = vand.u32 %v777, 4294901760
        %v908 = vsub.f32 %v777, %v907
        %v909 = vand.u32 %v908, 4294901760
        %v910 = vsub.f32 %v908, %v909
        %v911 = vand.u32 %v910, 4294901760
        %912 = vmatmul.f32.gmra.mxu0 %v911
        %v913 = vpop.f32.mrf.mxu0
        %v914 = vadd.f32 0.0, %v913
        %v915 = vand.u32 %v780, 4294901760
        %v916 = vsub.f32 %v780, %v915
        %v917 = vand.u32 %v916, 4294901760
        %v918 = vsub.f32 %v916, %v917
        %v919 = vand.u32 %v918, 4294901760
        %920 = vmatmul.f32.gmra.mxu0 %v919
        %v921 = vpop.f32.mrf.mxu0
        %v922 = vadd.f32 0.0, %v921
        %v923 = vand.u32 %v783, 4294901760
        %v924 = vsub.f32 %v783, %v923
        %v925 = vand.u32 %v924, 4294901760
        %v926 = vsub.f32 %v924, %v925
        %v927 = vand.u32 %v926, 4294901760
        %928 = vmatmul.f32.gmra.mxu0 %v927
        %v929 = vpop.f32.mrf.mxu0
        %v930 = vadd.f32 0.0, %v929
        %931 = vdwg.mxu0
        %932 = vmatpush.msra.mxu0 0.0
        %933 = vmatpush.msra.mxu0 0.0
        %934 = vmatpush.msra.mxu0 0.0
        %935 = vmatpush.msra.mxu0 0.0
        %936 = vmatpush.msra.mxu0 0.0
        %937 = vmatpush.msra.mxu0 0.0
        %938 = vmatpush.msra.mxu0 0.0
        %939 = vmatpush.msra.mxu0 0.0
        %940 = vmatpush.msra.mxu0 0.0
        %941 = vmatpush.msra.mxu0 0.0
        %942 = vmatpush.msra.mxu0 0.0
        %943 = vmatpush.msra.mxu0 0.0
        %944 = vmatpush.msra.mxu0 0.0
        %945 = vmatpush.msra.mxu0 0.0
        %v946 = vand.u32 %v207, 4294901760
        %v947 = vsub.f32 %v207, %v946
        %v948 = vand.u32 %v947, 4294901760
        %v949 = vsub.f32 %v947, %v948
        %v950 = vand.u32 %v949, 4294901760
        %951 = vmatpush.msra.mxu0 %v950
        %v952 = vand.u32 %v206, 4294901760
        %v953 = vsub.f32 %v206, %v952
        %v954 = vand.u32 %v953, 4294901760
        %v955 = vsub.f32 %v953, %v954
        %v956 = vand.u32 %v955, 4294901760
        %957 = vmatpush.msra.mxu0 %v956
        %v958 = vand.u32 %v738, 4294901760
        %959 = vmatmul.f32.gmra.mxu0 %v958
        %v960 = vpop.f32.mrf.mxu0
        %v961 = vadd.f32 %v810, %v960
        %v962 = vand.u32 %v741, 4294901760
        %963 = vmatmul.f32.gmra.mxu0 %v962
        %v964 = vpop.f32.mrf.mxu0
        %v965 = vadd.f32 %v818, %v964
        %v966 = vand.u32 %v744, 4294901760
        %967 = vmatmul.f32.gmra.mxu0 %v966
        %v968 = vpop.f32.mrf.mxu0
        %v969 = vadd.f32 %v826, %v968
        %v970 = vand.u32 %v747, 4294901760
        %971 = vmatmul.f32.gmra.mxu0 %v970
        %v972 = vpop.f32.mrf.mxu0
        %v973 = vadd.f32 %v834, %v972
        %v974 = vand.u32 %v750, 4294901760
        %975 = vmatmul.f32.gmra.mxu0 %v974
        %v976 = vpop.f32.mrf.mxu0
        %v977 = vadd.f32 %v842, %v976
        %v978 = vand.u32 %v753, 4294901760
        %979 = vmatmul.f32.gmra.mxu0 %v978
        %v980 = vpop.f32.mrf.mxu0
        %v981 = vadd.f32 %v850, %v980
        %v982 = vand.u32 %v756, 4294901760
        %983 = vmatmul.f32.gmra.mxu0 %v982
        %v984 = vpop.f32.mrf.mxu0
        %v985 = vadd.f32 %v858, %v984
        %v986 = vand.u32 %v759, 4294901760
        %987 = vmatmul.f32.gmra.mxu0 %v986
        %v988 = vpop.f32.mrf.mxu0
        %v989 = vadd.f32 %v866, %v988
        %v990 = vand.u32 %v762, 4294901760
        %991 = vmatmul.f32.gmra.mxu0 %v990
        %v992 = vpop.f32.mrf.mxu0
        %v993 = vadd.f32 %v874, %v992
        %v994 = vand.u32 %v765, 4294901760
        %995 = vmatmul.f32.gmra.mxu0 %v994
        %v996 = vpop.f32.mrf.mxu0
        %v997 = vadd.f32 %v882, %v996
        %v998 = vand.u32 %v768, 4294901760
        %999 = vmatmul.f32.gmra.mxu0 %v998
        %v1000 = vpop.f32.mrf.mxu0
        %v1001 = vadd.f32 %v890, %v1000
        %v1002 = vand.u32 %v771, 4294901760
        %1003 = vmatmul.f32.gmra.mxu0 %v1002
        %v1004 = vpop.f32.mrf.mxu0
        %v1005 = vadd.f32 %v898, %v1004
        %v1006 = vand.u32 %v774, 4294901760
        %1007 = vmatmul.f32.gmra.mxu0 %v1006
        %v1008 = vpop.f32.mrf.mxu0
        %v1009 = vadd.f32 %v906, %v1008
        %v1010 = vand.u32 %v777, 4294901760
        %1011 = vmatmul.f32.gmra.mxu0 %v1010
        %v1012 = vpop.f32.mrf.mxu0
        %v1013 = vadd.f32 %v914, %v1012
        %v1014 = vand.u32 %v780, 4294901760
        %1015 = vmatmul.f32.gmra.mxu0 %v1014
        %v1016 = vpop.f32.mrf.mxu0
        %v1017 = vadd.f32 %v922, %v1016
        %v1018 = vand.u32 %v783, 4294901760
        %1019 = vmatmul.f32.gmra.mxu0 %v1018
        %v1020 = vpop.f32.mrf.mxu0
        %v1021 = vadd.f32 %v930, %v1020
        %1022 = vdwg.mxu0
        %1023 = vmatpush.msra.mxu0 0.0
        %1024 = vmatpush.msra.mxu0 0.0
        %1025 = vmatpush.msra.mxu0 0.0
        %1026 = vmatpush.msra.mxu0 0.0
        %1027 = vmatpush.msra.mxu0 0.0
        %1028 = vmatpush.msra.mxu0 0.0
        %1029 = vmatpush.msra.mxu0 0.0
        %1030 = vmatpush.msra.mxu0 0.0
        %1031 = vmatpush.msra.mxu0 0.0
        %1032 = vmatpush.msra.mxu0 0.0
        %1033 = vmatpush.msra.mxu0 0.0
        %1034 = vmatpush.msra.mxu0 0.0
        %1035 = vmatpush.msra.mxu0 0.0
        %1036 = vmatpush.msra.mxu0 0.0
        %v1037 = vand.u32 %v207, 4294901760
        %v1038 = vsub.f32 %v207, %v1037
        %1039 = vmatpush.msra.mxu0 %v1038
        %v1040 = vand.u32 %v206, 4294901760
        %v1041 = vsub.f32 %v206, %v1040
        %1042 = vmatpush.msra.mxu0 %v1041
        %v1043 = vand.u32 %v738, 4294901760
        %v1044 = vsub.f32 %v738, %v1043
        %1045 = vmatmul.f32.gmra.mxu0 %v1044
        %v1046 = vpop.f32.mrf.mxu0
        %v1047 = vadd.f32 %v961, %v1046
        %v1048 = vand.u32 %v741, 4294901760
        %v1049 = vsub.f32 %v741, %v1048
        %1050 = vmatmul.f32.gmra.mxu0 %v1049
        %v1051 = vpop.f32.mrf.mxu0
        %v1052 = vadd.f32 %v965, %v1051
        %v1053 = vand.u32 %v744, 4294901760
        %v1054 = vsub.f32 %v744, %v1053
        %1055 = vmatmul.f32.gmra.mxu0 %v1054
        %v1056 = vpop.f32.mrf.mxu0
        %v1057 = vadd.f32 %v969, %v1056
        %v1058 = vand.u32 %v747, 4294901760
        %v1059 = vsub.f32 %v747, %v1058
        %1060 = vmatmul.f32.gmra.mxu0 %v1059
        %v1061 = vpop.f32.mrf.mxu0
        %v1062 = vadd.f32 %v973, %v1061
        %v1063 = vand.u32 %v750, 4294901760
        %v1064 = vsub.f32 %v750, %v1063
        %1065 = vmatmul.f32.gmra.mxu0 %v1064
        %v1066 = vpop.f32.mrf.mxu0
        %v1067 = vadd.f32 %v977, %v1066
        %v1068 = vand.u32 %v753, 4294901760
        %v1069 = vsub.f32 %v753, %v1068
        %1070 = vmatmul.f32.gmra.mxu0 %v1069
        %v1071 = vpop.f32.mrf.mxu0
        %v1072 = vadd.f32 %v981, %v1071
        %v1073 = vand.u32 %v756, 4294901760
        %v1074 = vsub.f32 %v756, %v1073
        %1075 = vmatmul.f32.gmra.mxu0 %v1074
        %v1076 = vpop.f32.mrf.mxu0
        %v1077 = vadd.f32 %v985, %v1076
        %v1078 = vand.u32 %v759, 4294901760
        %v1079 = vsub.f32 %v759, %v1078
        %1080 = vmatmul.f32.gmra.mxu0 %v1079
        %v1081 = vpop.f32.mrf.mxu0
        %v1082 = vadd.f32 %v989, %v1081
        %v1083 = vand.u32 %v762, 4294901760
        %v1084 = vsub.f32 %v762, %v1083
        %1085 = vmatmul.f32.gmra.mxu0 %v1084
        %v1086 = vpop.f32.mrf.mxu0
        %v1087 = vadd.f32 %v993, %v1086
        %v1088 = vand.u32 %v765, 4294901760
        %v1089 = vsub.f32 %v765, %v1088
        %1090 = vmatmul.f32.gmra.mxu0 %v1089
        %v1091 = vpop.f32.mrf.mxu0
        %v1092 = vadd.f32 %v997, %v1091
        %v1093 = vand.u32 %v768, 4294901760
        %v1094 = vsub.f32 %v768, %v1093
        %1095 = vmatmul.f32.gmra.mxu0 %v1094
        %v1096 = vpop.f32.mrf.mxu0
        %v1097 = vadd.f32 %v1001, %v1096
        %v1098 = vand.u32 %v771, 4294901760
        %v1099 = vsub.f32 %v771, %v1098
        %1100 = vmatmul.f32.gmra.mxu0 %v1099
        %v1101 = vpop.f32.mrf.mxu0
        %v1102 = vadd.f32 %v1005, %v1101
        %v1103 = vand.u32 %v774, 4294901760
        %v1104 = vsub.f32 %v774, %v1103
        %1105 = vmatmul.f32.gmra.mxu0 %v1104
        %v1106 = vpop.f32.mrf.mxu0
        %v1107 = vadd.f32 %v1009, %v1106
        %v1108 = vand.u32 %v777, 4294901760
        %v1109 = vsub.f32 %v777, %v1108
        %1110 = vmatmul.f32.gmra.mxu0 %v1109
        %v1111 = vpop.f32.mrf.mxu0
        %v1112 = vadd.f32 %v1013, %v1111
        %v1113 = vand.u32 %v780, 4294901760
        %v1114 = vsub.f32 %v780, %v1113
        %1115 = vmatmul.f32.gmra.mxu0 %v1114
        %v1116 = vpop.f32.mrf.mxu0
        %v1117 = vadd.f32 %v1017, %v1116
        %v1118 = vand.u32 %v783, 4294901760
        %v1119 = vsub.f32 %v783, %v1118
        %1120 = vmatmul.f32.gmra.mxu0 %v1119
        %v1121 = vpop.f32.mrf.mxu0
        %v1122 = vadd.f32 %v1021, %v1121
        %1123 = vdwg.mxu0
        %1124 = vmatpush.msra.mxu0 0.0
        %1125 = vmatpush.msra.mxu0 0.0
        %1126 = vmatpush.msra.mxu0 0.0
        %1127 = vmatpush.msra.mxu0 0.0
        %1128 = vmatpush.msra.mxu0 0.0
        %1129 = vmatpush.msra.mxu0 0.0
        %1130 = vmatpush.msra.mxu0 0.0
        %1131 = vmatpush.msra.mxu0 0.0
        %1132 = vmatpush.msra.mxu0 0.0
        %1133 = vmatpush.msra.mxu0 0.0
        %1134 = vmatpush.msra.mxu0 0.0
        %1135 = vmatpush.msra.mxu0 0.0
        %1136 = vmatpush.msra.mxu0 0.0
        %1137 = vmatpush.msra.mxu0 0.0
        %v1138 = vand.u32 %v207, 4294901760
        %1139 = vmatpush.msra.mxu0 %v1138
        %v1140 = vand.u32 %v206, 4294901760
        %1141 = vmatpush.msra.mxu0 %v1140
        %v1142 = vand.u32 %v738, 4294901760
        %v1143 = vsub.f32 %v738, %v1142
        %v1144 = vand.u32 %v1143, 4294901760
        %1145 = vmatmul.f32.gmra.mxu0 %v1144
        %v1146 = vpop.f32.mrf.mxu0
        %v1147 = vadd.f32 %v1047, %v1146
        %v1148 = vand.u32 %v741, 4294901760
        %v1149 = vsub.f32 %v741, %v1148
        %v1150 = vand.u32 %v1149, 4294901760
        %1151 = vmatmul.f32.gmra.mxu0 %v1150
        %v1152 = vpop.f32.mrf.mxu0
        %v1153 = vadd.f32 %v1052, %v1152
        %v1154 = vand.u32 %v744, 4294901760
        %v1155 = vsub.f32 %v744, %v1154
        %v1156 = vand.u32 %v1155, 4294901760
        %1157 = vmatmul.f32.gmra.mxu0 %v1156
        %v1158 = vpop.f32.mrf.mxu0
        %v1159 = vadd.f32 %v1057, %v1158
        %v1160 = vand.u32 %v747, 4294901760
        %v1161 = vsub.f32 %v747, %v1160
        %v1162 = vand.u32 %v1161, 4294901760
        %1163 = vmatmul.f32.gmra.mxu0 %v1162
        %v1164 = vpop.f32.mrf.mxu0
        %v1165 = vadd.f32 %v1062, %v1164
        %v1166 = vand.u32 %v750, 4294901760
        %v1167 = vsub.f32 %v750, %v1166
        %v1168 = vand.u32 %v1167, 4294901760
        %1169 = vmatmul.f32.gmra.mxu0 %v1168
        %v1170 = vpop.f32.mrf.mxu0
        %v1171 = vadd.f32 %v1067, %v1170
        %v1172 = vand.u32 %v753, 4294901760
        %v1173 = vsub.f32 %v753, %v1172
        %v1174 = vand.u32 %v1173, 4294901760
        %1175 = vmatmul.f32.gmra.mxu0 %v1174
        %v1176 = vpop.f32.mrf.mxu0
        %v1177 = vadd.f32 %v1072, %v1176
        %v1178 = vand.u32 %v756, 4294901760
        %v1179 = vsub.f32 %v756, %v1178
        %v1180 = vand.u32 %v1179, 4294901760
        %1181 = vmatmul.f32.gmra.mxu0 %v1180
        %v1182 = vpop.f32.mrf.mxu0
        %v1183 = vadd.f32 %v1077, %v1182
        %v1184 = vand.u32 %v759, 4294901760
        %v1185 = vsub.f32 %v759, %v1184
        %v1186 = vand.u32 %v1185, 4294901760
        %1187 = vmatmul.f32.gmra.mxu0 %v1186
        %v1188 = vpop.f32.mrf.mxu0
        %v1189 = vadd.f32 %v1082, %v1188
        %v1190 = vand.u32 %v762, 4294901760
        %v1191 = vsub.f32 %v762, %v1190
        %v1192 = vand.u32 %v1191, 4294901760
        %1193 = vmatmul.f32.gmra.mxu0 %v1192
        %v1194 = vpop.f32.mrf.mxu0
        %v1195 = vadd.f32 %v1087, %v1194
        %v1196 = vand.u32 %v765, 4294901760
        %v1197 = vsub.f32 %v765, %v1196
        %v1198 = vand.u32 %v1197, 4294901760
        %1199 = vmatmul.f32.gmra.mxu0 %v1198
        %v1200 = vpop.f32.mrf.mxu0
        %v1201 = vadd.f32 %v1092, %v1200
        %v1202 = vand.u32 %v768, 4294901760
        %v1203 = vsub.f32 %v768, %v1202
        %v1204 = vand.u32 %v1203, 4294901760
        %1205 = vmatmul.f32.gmra.mxu0 %v1204
        %v1206 = vpop.f32.mrf.mxu0
        %v1207 = vadd.f32 %v1097, %v1206
        %v1208 = vand.u32 %v771, 4294901760
        %v1209 = vsub.f32 %v771, %v1208
        %v1210 = vand.u32 %v1209, 4294901760
        %1211 = vmatmul.f32.gmra.mxu0 %v1210
        %v1212 = vpop.f32.mrf.mxu0
        %v1213 = vadd.f32 %v1102, %v1212
        %v1214 = vand.u32 %v774, 4294901760
        %v1215 = vsub.f32 %v774, %v1214
        %v1216 = vand.u32 %v1215, 4294901760
        %1217 = vmatmul.f32.gmra.mxu0 %v1216
        %v1218 = vpop.f32.mrf.mxu0
        %v1219 = vadd.f32 %v1107, %v1218
        %v1220 = vand.u32 %v777, 4294901760
        %v1221 = vsub.f32 %v777, %v1220
        %v1222 = vand.u32 %v1221, 4294901760
        %1223 = vmatmul.f32.gmra.mxu0 %v1222
        %v1224 = vpop.f32.mrf.mxu0
        %v1225 = vadd.f32 %v1112, %v1224
        %v1226 = vand.u32 %v780, 4294901760
        %v1227 = vsub.f32 %v780, %v1226
        %v1228 = vand.u32 %v1227, 4294901760
        %1229 = vmatmul.f32.gmra.mxu0 %v1228
        %v1230 = vpop.f32.mrf.mxu0
        %v1231 = vadd.f32 %v1117, %v1230
        %v1232 = vand.u32 %v783, 4294901760
        %v1233 = vsub.f32 %v783, %v1232
        %v1234 = vand.u32 %v1233, 4294901760
        %1235 = vmatmul.f32.gmra.mxu0 %v1234
        %v1236 = vpop.f32.mrf.mxu0
        %v1237 = vadd.f32 %v1122, %v1236
        %1238 = vdwg.mxu0
        %1239 = vmatpush.msra.mxu0 0.0
        %1240 = vmatpush.msra.mxu0 0.0
        %1241 = vmatpush.msra.mxu0 0.0
        %1242 = vmatpush.msra.mxu0 0.0
        %1243 = vmatpush.msra.mxu0 0.0
        %1244 = vmatpush.msra.mxu0 0.0
        %1245 = vmatpush.msra.mxu0 0.0
        %1246 = vmatpush.msra.mxu0 0.0
        %1247 = vmatpush.msra.mxu0 0.0
        %1248 = vmatpush.msra.mxu0 0.0
        %1249 = vmatpush.msra.mxu0 0.0
        %1250 = vmatpush.msra.mxu0 0.0
        %1251 = vmatpush.msra.mxu0 0.0
        %1252 = vmatpush.msra.mxu0 0.0
        %v1253 = vand.u32 %v207, 4294901760
        %v1254 = vsub.f32 %v207, %v1253
        %v1255 = vand.u32 %v1254, 4294901760
        %1256 = vmatpush.msra.mxu0 %v1255
        %v1257 = vand.u32 %v206, 4294901760
        %v1258 = vsub.f32 %v206, %v1257
        %v1259 = vand.u32 %v1258, 4294901760
        %1260 = vmatpush.msra.mxu0 %v1259
        %v1261 = vand.u32 %v738, 4294901760
        %1262 = vmatmul.f32.gmra.mxu0 %v1261
        %v1263 = vpop.f32.mrf.mxu0
        %v1264 = vadd.f32 %v1147, %v1263
        %v1265 = vand.u32 %v741, 4294901760
        %1266 = vmatmul.f32.gmra.mxu0 %v1265
        %v1267 = vpop.f32.mrf.mxu0
        %v1268 = vadd.f32 %v1153, %v1267
        %v1269 = vand.u32 %v744, 4294901760
        %1270 = vmatmul.f32.gmra.mxu0 %v1269
        %v1271 = vpop.f32.mrf.mxu0
        %v1272 = vadd.f32 %v1159, %v1271
        %v1273 = vand.u32 %v747, 4294901760
        %1274 = vmatmul.f32.gmra.mxu0 %v1273
        %v1275 = vpop.f32.mrf.mxu0
        %v1276 = vadd.f32 %v1165, %v1275
        %v1277 = vand.u32 %v750, 4294901760
        %1278 = vmatmul.f32.gmra.mxu0 %v1277
        %v1279 = vpop.f32.mrf.mxu0
        %v1280 = vadd.f32 %v1171, %v1279
        %v1281 = vand.u32 %v753, 4294901760
        %1282 = vmatmul.f32.gmra.mxu0 %v1281
        %v1283 = vpop.f32.mrf.mxu0
        %v1284 = vadd.f32 %v1177, %v1283
        %v1285 = vand.u32 %v756, 4294901760
        %1286 = vmatmul.f32.gmra.mxu0 %v1285
        %v1287 = vpop.f32.mrf.mxu0
        %v1288 = vadd.f32 %v1183, %v1287
        %v1289 = vand.u32 %v759, 4294901760
        %1290 = vmatmul.f32.gmra.mxu0 %v1289
        %v1291 = vpop.f32.mrf.mxu0
        %v1292 = vadd.f32 %v1189, %v1291
        %v1293 = vand.u32 %v762, 4294901760
        %1294 = vmatmul.f32.gmra.mxu0 %v1293
        %v1295 = vpop.f32.mrf.mxu0
        %v1296 = vadd.f32 %v1195, %v1295
        %v1297 = vand.u32 %v765, 4294901760
        %1298 = vmatmul.f32.gmra.mxu0 %v1297
        %v1299 = vpop.f32.mrf.mxu0
        %v1300 = vadd.f32 %v1201, %v1299
        %v1301 = vand.u32 %v768, 4294901760
        %1302 = vmatmul.f32.gmra.mxu0 %v1301
        %v1303 = vpop.f32.mrf.mxu0
        %v1304 = vadd.f32 %v1207, %v1303
        %v1305 = vand.u32 %v771, 4294901760
        %1306 = vmatmul.f32.gmra.mxu0 %v1305
        %v1307 = vpop.f32.mrf.mxu0
        %v1308 = vadd.f32 %v1213, %v1307
        %v1309 = vand.u32 %v774, 4294901760
        %1310 = vmatmul.f32.gmra.mxu0 %v1309
        %v1311 = vpop.f32.mrf.mxu0
        %v1312 = vadd.f32 %v1219, %v1311
        %v1313 = vand.u32 %v777, 4294901760
        %1314 = vmatmul.f32.gmra.mxu0 %v1313
        %v1315 = vpop.f32.mrf.mxu0
        %v1316 = vadd.f32 %v1225, %v1315
        %v1317 = vand.u32 %v780, 4294901760
        %1318 = vmatmul.f32.gmra.mxu0 %v1317
        %v1319 = vpop.f32.mrf.mxu0
        %v1320 = vadd.f32 %v1231, %v1319
        %v1321 = vand.u32 %v783, 4294901760
        %1322 = vmatmul.f32.gmra.mxu0 %v1321
        %v1323 = vpop.f32.mrf.mxu0
        %v1324 = vadd.f32 %v1237, %v1323
        %1325 = vdwg.mxu0
        %1326 = vmatpush.msra.mxu0 0.0
        %1327 = vmatpush.msra.mxu0 0.0
        %1328 = vmatpush.msra.mxu0 0.0
        %1329 = vmatpush.msra.mxu0 0.0
        %1330 = vmatpush.msra.mxu0 0.0
        %1331 = vmatpush.msra.mxu0 0.0
        %1332 = vmatpush.msra.mxu0 0.0
        %1333 = vmatpush.msra.mxu0 0.0
        %1334 = vmatpush.msra.mxu0 0.0
        %1335 = vmatpush.msra.mxu0 0.0
        %1336 = vmatpush.msra.mxu0 0.0
        %1337 = vmatpush.msra.mxu0 0.0
        %1338 = vmatpush.msra.mxu0 0.0
        %1339 = vmatpush.msra.mxu0 0.0
        %v1340 = vand.u32 %v207, 4294901760
        %1341 = vmatpush.msra.mxu0 %v1340
        %v1342 = vand.u32 %v206, 4294901760
        %1343 = vmatpush.msra.mxu0 %v1342
        %v1344 = vand.u32 %v738, 4294901760
        %1345 = vmatmul.f32.gmra.mxu0 %v1344
        %v1346 = vpop.f32.mrf.mxu0
        %v1347 = vadd.f32 %v1264, %v1346
        %v1348 = vand.u32 %v741, 4294901760
        %1349 = vmatmul.f32.gmra.mxu0 %v1348
        %v1350 = vpop.f32.mrf.mxu0
        %v1351 = vadd.f32 %v1268, %v1350
        %v1352 = vand.u32 %v744, 4294901760
        %1353 = vmatmul.f32.gmra.mxu0 %v1352
        %v1354 = vpop.f32.mrf.mxu0
        %v1355 = vadd.f32 %v1272, %v1354
        %v1356 = vand.u32 %v747, 4294901760
        %1357 = vmatmul.f32.gmra.mxu0 %v1356
        %v1358 = vpop.f32.mrf.mxu0
        %v1359 = vadd.f32 %v1276, %v1358
        %v1360 = vand.u32 %v750, 4294901760
        %1361 = vmatmul.f32.gmra.mxu0 %v1360
        %v1362 = vpop.f32.mrf.mxu0
        %v1363 = vadd.f32 %v1280, %v1362
        %v1364 = vand.u32 %v753, 4294901760
        %1365 = vmatmul.f32.gmra.mxu0 %v1364
        %v1366 = vpop.f32.mrf.mxu0
        %v1367 = vadd.f32 %v1284, %v1366
        %v1368 = vand.u32 %v756, 4294901760
        %1369 = vmatmul.f32.gmra.mxu0 %v1368
        %v1370 = vpop.f32.mrf.mxu0
        %v1371 = vadd.f32 %v1288, %v1370
        %v1372 = vand.u32 %v759, 4294901760
        %1373 = vmatmul.f32.gmra.mxu0 %v1372
        %v1374 = vpop.f32.mrf.mxu0
        %v1375 = vadd.f32 %v1292, %v1374
        %v1376 = vand.u32 %v762, 4294901760
        %1377 = vmatmul.f32.gmra.mxu0 %v1376
        %v1378 = vpop.f32.mrf.mxu0
        %v1379 = vadd.f32 %v1296, %v1378
        %v1380 = vand.u32 %v765, 4294901760
        %1381 = vmatmul.f32.gmra.mxu0 %v1380
        %v1382 = vpop.f32.mrf.mxu0
        %v1383 = vadd.f32 %v1300, %v1382
        %v1384 = vand.u32 %v768, 4294901760
        %1385 = vmatmul.f32.gmra.mxu0 %v1384
        %v1386 = vpop.f32.mrf.mxu0
        %v1387 = vadd.f32 %v1304, %v1386
        %v1388 = vand.u32 %v771, 4294901760
        %1389 = vmatmul.f32.gmra.mxu0 %v1388
        %v1390 = vpop.f32.mrf.mxu0
        %v1391 = vadd.f32 %v1308, %v1390
        %v1392 = vand.u32 %v774, 4294901760
        %1393 = vmatmul.f32.gmra.mxu0 %v1392
        %v1394 = vpop.f32.mrf.mxu0
        %v1395 = vadd.f32 %v1312, %v1394
        %v1396 = vand.u32 %v777, 4294901760
        %1397 = vmatmul.f32.gmra.mxu0 %v1396
        %v1398 = vpop.f32.mrf.mxu0
        %v1399 = vadd.f32 %v1316, %v1398
        %v1400 = vand.u32 %v780, 4294901760
        %1401 = vmatmul.f32.gmra.mxu0 %v1400
        %v1402 = vpop.f32.mrf.mxu0
        %v1403 = vadd.f32 %v1320, %v1402
        %v1404 = vand.u32 %v783, 4294901760
        %1405 = vmatmul.f32.gmra.mxu0 %v1404
        %v1406 = vpop.f32.mrf.mxu0
        %v1407 = vadd.f32 %v1324, %v1406
        %1408 = vdwg.mxu0
        %1409 = vxpose.xlu0.b32.start [1/16] %v1347, 128
        %1410 = vxpose.xlu0.b32.cont [2/16] %v1351, 128
        %1411 = vxpose.xlu0.b32.cont [3/16] %v1355, 128
        %1412 = vxpose.xlu0.b32.cont [4/16] %v1359, 128
        %1413 = vxpose.xlu0.b32.cont [5/16] %v1363, 128
        %1414 = vxpose.xlu0.b32.cont [6/16] %v1367, 128
        %1415 = vxpose.xlu0.b32.cont [7/16] %v1371, 128
        %1416 = vxpose.xlu0.b32.cont [8/16] %v1375, 128
        %1417 = vxpose.xlu0.b32.cont [9/16] %v1379, 128
        %1418 = vxpose.xlu0.b32.cont [10/16] %v1383, 128
        %1419 = vxpose.xlu0.b32.cont [11/16] %v1387, 128
        %1420 = vxpose.xlu0.b32.cont [12/16] %v1391, 128
        %1421 = vxpose.xlu0.b32.cont [13/16] %v1395, 128
        %1422 = vxpose.xlu0.b32.cont [14/16] %v1399, 128
        %1423 = vxpose.xlu0.b32.cont [15/16] %v1403, 128
        %1424 = vxpose.xlu0.b32.end [16/16] %v1407, 128
        %v1425 = vpop.trf.xlu0
        %v1426 = vpop.trf.xlu0
        %v1427 = vpop.trf.xlu0
        %v1428 = vpop.trf.xlu0
        %v1429 = vpop.trf.xlu0
        %v1430 = vpop.trf.xlu0
        %v1431 = vpop.trf.xlu0
        %v1432 = vpop.trf.xlu0
        %v1433 = vpop.trf.xlu0
        %v1434 = vpop.trf.xlu0
        %v1435 = vpop.trf.xlu0
        %v1436 = vpop.trf.xlu0
        %v1437 = vpop.trf.xlu0
        %v1438 = vpop.trf.xlu0
        %v1439 = vpop.trf.xlu0
        %v1440 = vpop.trf.xlu0
        %1445 = vrot.lane.b32.xlu0 %v1425, 96
        %v1446 = vpop.permute.xlu0 %1445
        %1447 = vrot.lane.b32.xlu0 %v1426, 96
        %v1448 = vpop.permute.xlu0 %1447
        %1449 = vrot.lane.b32.xlu0 %v1427, 96
        %v1450 = vpop.permute.xlu0 %1449
        %1451 = vrot.lane.b32.xlu0 %v1428, 96
        %v1452 = vpop.permute.xlu0 %1451
        %1457 = vrot.lane.b32.xlu0 %v1425, 64
        %v1458 = vpop.permute.xlu0 %1457
        %1459 = vrot.lane.b32.xlu0 %v1426, 64
        %v1460 = vpop.permute.xlu0 %1459
        %1461 = vrot.lane.b32.xlu0 %v1427, 64
        %v1462 = vpop.permute.xlu0 %1461
        %1463 = vrot.lane.b32.xlu0 %v1428, 64
        %v1464 = vpop.permute.xlu0 %1463
        %1469 = vrot.lane.b32.xlu0 %v1425, 32
        %v1470 = vpop.permute.xlu0 %1469
        %1471 = vrot.lane.b32.xlu0 %v1426, 32
        %v1472 = vpop.permute.xlu0 %1471
        %1473 = vrot.lane.b32.xlu0 %v1427, 32
        %v1474 = vpop.permute.xlu0 %1473
        %1475 = vrot.lane.b32.xlu0 %v1428, 32
        %v1476 = vpop.permute.xlu0 %1475
        %v1481 = vrot.slane %v1458, 4
        %vm1482 = vcmask 1047556
        %v1483 = vsel %vm1482, %v1481, %v1425
        %v1484 = vrot.slane %v1425, 4
        %v1485 = vsel %vm1482, %v1458, %v1484
        %v1487 = vunpack.c.l.s4 1983009808
        %v1488 = vunpack.c.0.s8 %v1487
        %v1489 = vperm.slane %v1483, %v1488
        %v1491 = vunpack.c.l.s4 1983009808
        %v1492 = vunpack.c.0.s8 %v1491
        %v1493 = vperm.slane %v1485, %v1492
        %v1494 = vrot.slane %v1470, 4
        %v1495 = vsel %vm1482, %v1494, %v1446
        %v1496 = vrot.slane %v1446, 4
        %v1497 = vsel %vm1482, %v1470, %v1496
        %v1499 = vunpack.c.l.s4 1983009808
        %v1500 = vunpack.c.0.s8 %v1499
        %v1501 = vperm.slane %v1495, %v1500
        %v1503 = vunpack.c.l.s4 1983009808
        %v1504 = vunpack.c.0.s8 %v1503
        %v1505 = vperm.slane %v1497, %v1504
        %v1506 = vrot.slane %v1501, 4
        %v1507 = vsel %vm1482, %v1506, %v1489
        %v1508 = vrot.slane %v1489, 4
        %v1509 = vsel %vm1482, %v1501, %v1508
        %v1511 = vunpack.c.l.s4 1934713408
        %v1512 = vunpack.c.0.s8 %v1511
        %v1513 = vperm.slane %v1507, %v1512
        %v1515 = vunpack.c.l.s4 1934713408
        %v1516 = vunpack.c.0.s8 %v1515
        %v1517 = vperm.slane %v1509, %v1516
        %v1518 = vrot.slane %v1505, 4
        %v1519 = vsel %vm1482, %v1518, %v1493
        %v1520 = vrot.slane %v1493, 4
        %v1521 = vsel %vm1482, %v1505, %v1520
        %v1523 = vunpack.c.l.s4 1934713408
        %v1524 = vunpack.c.0.s8 %v1523
        %v1525 = vperm.slane %v1519, %v1524
        %v1527 = vunpack.c.l.s4 1934713408
        %v1528 = vunpack.c.0.s8 %v1527
        %v1529 = vperm.slane %v1521, %v1528
        %v1530 = vrot.slane %v1513, 4
        %v1531 = vsel %vm1482, 0.0, %v1530
        %v1532 = vrot.slane %v1517, 4
        %v1533 = vsel %vm1482, 0.0, %v1532
        %v1534 = vrot.slane %v1525, 4
        %v1535 = vsel %vm1482, 0.0, %v1534
        %v1536 = vrot.slane %v1529, 4
        %v1537 = vsel %vm1482, 0.0, %v1536
        %v1538 = vrot.slane %v1460, 4
        %v1539 = vsel %vm1482, %v1538, %v1426
        %v1540 = vrot.slane %v1426, 4
        %v1541 = vsel %vm1482, %v1460, %v1540
        %v1543 = vunpack.c.l.s4 1983009808
        %v1544 = vunpack.c.0.s8 %v1543
        %v1545 = vperm.slane %v1539, %v1544
        %v1547 = vunpack.c.l.s4 1983009808
        %v1548 = vunpack.c.0.s8 %v1547
        %v1549 = vperm.slane %v1541, %v1548
        %v1550 = vrot.slane %v1472, 4
        %v1551 = vsel %vm1482, %v1550, %v1448
        %v1552 = vrot.slane %v1448, 4
        %v1553 = vsel %vm1482, %v1472, %v1552
        %v1555 = vunpack.c.l.s4 1983009808
        %v1556 = vunpack.c.0.s8 %v1555
        %v1557 = vperm.slane %v1551, %v1556
        %v1559 = vunpack.c.l.s4 1983009808
        %v1560 = vunpack.c.0.s8 %v1559
        %v1561 = vperm.slane %v1553, %v1560
        %v1562 = vrot.slane %v1557, 4
        %v1563 = vsel %vm1482, %v1562, %v1545
        %v1564 = vrot.slane %v1545, 4
        %v1565 = vsel %vm1482, %v1557, %v1564
        %v1567 = vunpack.c.l.s4 1934713408
        %v1568 = vunpack.c.0.s8 %v1567
        %v1569 = vperm.slane %v1563, %v1568
        %v1571 = vunpack.c.l.s4 1934713408
        %v1572 = vunpack.c.0.s8 %v1571
        %v1573 = vperm.slane %v1565, %v1572
        %v1574 = vrot.slane %v1561, 4
        %v1575 = vsel %vm1482, %v1574, %v1549
        %v1576 = vrot.slane %v1549, 4
        %v1577 = vsel %vm1482, %v1561, %v1576
        %v1579 = vunpack.c.l.s4 1934713408
        %v1580 = vunpack.c.0.s8 %v1579
        %v1581 = vperm.slane %v1575, %v1580
        %v1583 = vunpack.c.l.s4 1934713408
        %v1584 = vunpack.c.0.s8 %v1583
        %v1585 = vperm.slane %v1577, %v1584
        %v1586 = vrot.slane %v1569, 4
        %v1587 = vsel %vm1482, 0.0, %v1586
        %v1588 = vrot.slane %v1573, 4
        %v1589 = vsel %vm1482, 0.0, %v1588
        %v1590 = vrot.slane %v1581, 4
        %v1591 = vsel %vm1482, 0.0, %v1590
        %v1592 = vrot.slane %v1585, 4
        %v1593 = vsel %vm1482, 0.0, %v1592
        %v1594 = vrot.slane %v1462, 4
        %v1595 = vsel %vm1482, %v1594, %v1427
        %v1596 = vrot.slane %v1427, 4
        %v1597 = vsel %vm1482, %v1462, %v1596
        %v1599 = vunpack.c.l.s4 1983009808
        %v1600 = vunpack.c.0.s8 %v1599
        %v1601 = vperm.slane %v1595, %v1600
        %v1603 = vunpack.c.l.s4 1983009808
        %v1604 = vunpack.c.0.s8 %v1603
        %v1605 = vperm.slane %v1597, %v1604
        %v1606 = vrot.slane %v1474, 4
        %v1607 = vsel %vm1482, %v1606, %v1450
        %v1608 = vrot.slane %v1450, 4
        %v1609 = vsel %vm1482, %v1474, %v1608
        %v1611 = vunpack.c.l.s4 1983009808
        %v1612 = vunpack.c.0.s8 %v1611
        %v1613 = vperm.slane %v1607, %v1612
        %v1615 = vunpack.c.l.s4 1983009808
        %v1616 = vunpack.c.0.s8 %v1615
        %v1617 = vperm.slane %v1609, %v1616
        %v1618 = vrot.slane %v1613, 4
        %v1619 = vsel %vm1482, %v1618, %v1601
        %v1620 = vrot.slane %v1601, 4
        %v1621 = vsel %vm1482, %v1613, %v1620
        %v1623 = vunpack.c.l.s4 1934713408
        %v1624 = vunpack.c.0.s8 %v1623
        %v1625 = vperm.slane %v1619, %v1624
        %v1627 = vunpack.c.l.s4 1934713408
        %v1628 = vunpack.c.0.s8 %v1627
        %v1629 = vperm.slane %v1621, %v1628
        %v1630 = vrot.slane %v1617, 4
        %v1631 = vsel %vm1482, %v1630, %v1605
        %v1632 = vrot.slane %v1605, 4
        %v1633 = vsel %vm1482, %v1617, %v1632
        %v1635 = vunpack.c.l.s4 1934713408
        %v1636 = vunpack.c.0.s8 %v1635
        %v1637 = vperm.slane %v1631, %v1636
        %v1639 = vunpack.c.l.s4 1934713408
        %v1640 = vunpack.c.0.s8 %v1639
        %v1641 = vperm.slane %v1633, %v1640
        %v1642 = vrot.slane %v1625, 4
        %v1643 = vsel %vm1482, 0.0, %v1642
        %v1644 = vrot.slane %v1629, 4
        %v1645 = vsel %vm1482, 0.0, %v1644
        %v1646 = vrot.slane %v1637, 4
        %v1647 = vsel %vm1482, 0.0, %v1646
        %v1648 = vrot.slane %v1641, 4
        %v1649 = vsel %vm1482, 0.0, %v1648
        %v1650 = vrot.slane %v1464, 4
        %v1651 = vsel %vm1482, %v1650, %v1428
        %v1652 = vrot.slane %v1428, 4
        %v1653 = vsel %vm1482, %v1464, %v1652
        %v1655 = vunpack.c.l.s4 1983009808
        %v1656 = vunpack.c.0.s8 %v1655
        %v1657 = vperm.slane %v1651, %v1656
        %v1659 = vunpack.c.l.s4 1983009808
        %v1660 = vunpack.c.0.s8 %v1659
        %v1661 = vperm.slane %v1653, %v1660
        %v1662 = vrot.slane %v1476, 4
        %v1663 = vsel %vm1482, %v1662, %v1452
        %v1664 = vrot.slane %v1452, 4
        %v1665 = vsel %vm1482, %v1476, %v1664
        %v1667 = vunpack.c.l.s4 1983009808
        %v1668 = vunpack.c.0.s8 %v1667
        %v1669 = vperm.slane %v1663, %v1668
        %v1671 = vunpack.c.l.s4 1983009808
        %v1672 = vunpack.c.0.s8 %v1671
        %v1673 = vperm.slane %v1665, %v1672
        %v1674 = vrot.slane %v1669, 4
        %v1675 = vsel %vm1482, %v1674, %v1657
        %v1676 = vrot.slane %v1657, 4
        %v1677 = vsel %vm1482, %v1669, %v1676
        %v1679 = vunpack.c.l.s4 1934713408
        %v1680 = vunpack.c.0.s8 %v1679
        %v1681 = vperm.slane %v1675, %v1680
        %v1683 = vunpack.c.l.s4 1934713408
        %v1684 = vunpack.c.0.s8 %v1683
        %v1685 = vperm.slane %v1677, %v1684
        %v1686 = vrot.slane %v1673, 4
        %v1687 = vsel %vm1482, %v1686, %v1661
        %v1688 = vrot.slane %v1661, 4
        %v1689 = vsel %vm1482, %v1673, %v1688
        %v1691 = vunpack.c.l.s4 1934713408
        %v1692 = vunpack.c.0.s8 %v1691
        %v1693 = vperm.slane %v1687, %v1692
        %v1695 = vunpack.c.l.s4 1934713408
        %v1696 = vunpack.c.0.s8 %v1695
        %v1697 = vperm.slane %v1689, %v1696
        %v1698 = vrot.slane %v1681, 4
        %v1699 = vsel %vm1482, 0.0, %v1698
        %v1700 = vrot.slane %v1685, 4
        %v1701 = vsel %vm1482, 0.0, %v1700
        %v1702 = vrot.slane %v1693, 4
        %v1703 = vsel %vm1482, 0.0, %v1702
        %v1704 = vrot.slane %v1697, 4
        %v1705 = vsel %vm1482, 0.0, %v1704
        %1706 = vxpose.xlu0.b32.start [1/16] %v1513, 128
        %1707 = vxpose.xlu0.b32.cont [2/16] 0.0, 128
        %1708 = vxpose.xlu0.b32.cont [3/16] 0.0, 128
        %1709 = vxpose.xlu0.b32.cont [4/16] 0.0, 128
        %1710 = vxpose.xlu0.b32.cont [5/16] 0.0, 128
        %1711 = vxpose.xlu0.b32.cont [6/16] 0.0, 128
        %1712 = vxpose.xlu0.b32.cont [7/16] 0.0, 128
        %1713 = vxpose.xlu0.b32.cont [8/16] 0.0, 128
        %1714 = vxpose.xlu0.b32.cont [9/16] 0.0, 128
        %1715 = vxpose.xlu0.b32.cont [10/16] 0.0, 128
        %1716 = vxpose.xlu0.b32.cont [11/16] 0.0, 128
        %1717 = vxpose.xlu0.b32.cont [12/16] 0.0, 128
        %1718 = vxpose.xlu0.b32.cont [13/16] 0.0, 128
        %1719 = vxpose.xlu0.b32.cont [14/16] 0.0, 128
        %1720 = vxpose.xlu0.b32.cont [15/16] 0.0, 128
        %1721 = vxpose.xlu0.b32.end [16/16] 0.0, 128
        %v1722 = vpop.trf.xlu0
        %v1723 = vpop.trf.xlu0
        %v1724 = vpop.trf.xlu0
        %v1725 = vpop.trf.xlu0
        %v1726 = vpop.trf.xlu0
        %v1727 = vpop.trf.xlu0
        %v1728 = vpop.trf.xlu0
        %v1729 = vpop.trf.xlu0
        %v1730 = vpop.trf.xlu0
        %v1731 = vpop.trf.xlu0
        %v1732 = vpop.trf.xlu0
        %v1733 = vpop.trf.xlu0
        %v1734 = vpop.trf.xlu0
        %v1735 = vpop.trf.xlu0
        %v1736 = vpop.trf.xlu0
        %v1737 = vpop.trf.xlu0
        %1738 = vxpose.xlu0.b32.start [1/16] %v1531, 128
        %1739 = vxpose.xlu0.b32.cont [2/16] 0.0, 128
        %1740 = vxpose.xlu0.b32.cont [3/16] 0.0, 128
        %1741 = vxpose.xlu0.b32.cont [4/16] 0.0, 128
        %1742 = vxpose.xlu0.b32.cont [5/16] 0.0, 128
        %1743 = vxpose.xlu0.b32.cont [6/16] 0.0, 128
        %1744 = vxpose.xlu0.b32.cont [7/16] 0.0, 128
        %1745 = vxpose.xlu0.b32.cont [8/16] 0.0, 128
        %1746 = vxpose.xlu0.b32.cont [9/16] 0.0, 128
        %1747 = vxpose.xlu0.b32.cont [10/16] 0.0, 128
        %1748 = vxpose.xlu0.b32.cont [11/16] 0.0, 128
        %1749 = vxpose.xlu0.b32.cont [12/16] 0.0, 128
        %1750 = vxpose.xlu0.b32.cont [13/16] 0.0, 128
        %1751 = vxpose.xlu0.b32.cont [14/16] 0.0, 128
        %1752 = vxpose.xlu0.b32.cont [15/16] 0.0, 128
        %1753 = vxpose.xlu0.b32.end [16/16] 0.0, 128
        %v1754 = vpop.trf.xlu0
        %v1755 = vpop.trf.xlu0
        %v1756 = vpop.trf.xlu0
        %v1757 = vpop.trf.xlu0
        %v1758 = vpop.trf.xlu0
        %v1759 = vpop.trf.xlu0
        %v1760 = vpop.trf.xlu0
        %v1761 = vpop.trf.xlu0
        %v1762 = vpop.trf.xlu0
        %v1763 = vpop.trf.xlu0
        %v1764 = vpop.trf.xlu0
        %v1765 = vpop.trf.xlu0
        %v1766 = vpop.trf.xlu0
        %v1767 = vpop.trf.xlu0
        %v1768 = vpop.trf.xlu0
        %v1769 = vpop.trf.xlu0
        %1770 = vxpose.xlu0.b32.start [1/16] %v1517, 128
        %1771 = vxpose.xlu0.b32.cont [2/16] 0.0, 128
        %1772 = vxpose.xlu0.b32.cont [3/16] 0.0, 128
        %1773 = vxpose.xlu0.b32.cont [4/16] 0.0, 128
        %1774 = vxpose.xlu0.b32.cont [5/16] 0.0, 128
        %1775 = vxpose.xlu0.b32.cont [6/16] 0.0, 128
        %1776 = vxpose.xlu0.b32.cont [7/16] 0.0, 128
        %1777 = vxpose.xlu0.b32.cont [8/16] 0.0, 128
        %1778 = vxpose.xlu0.b32.cont [9/16] 0.0, 128
        %1779 = vxpose.xlu0.b32.cont [10/16] 0.0, 128
        %1780 = vxpose.xlu0.b32.cont [11/16] 0.0, 128
        %1781 = vxpose.xlu0.b32.cont [12/16] 0.0, 128
        %1782 = vxpose.xlu0.b32.cont [13/16] 0.0, 128
        %1783 = vxpose.xlu0.b32.cont [14/16] 0.0, 128
        %1784 = vxpose.xlu0.b32.cont [15/16] 0.0, 128
        %1785 = vxpose.xlu0.b32.end [16/16] 0.0, 128
        %v1786 = vpop.trf.xlu0
        %v1787 = vpop.trf.xlu0
        %v1788 = vpop.trf.xlu0
        %v1789 = vpop.trf.xlu0
        %v1790 = vpop.trf.xlu0
        %v1791 = vpop.trf.xlu0
        %v1792 = vpop.trf.xlu0
        %v1793 = vpop.trf.xlu0
        %v1794 = vpop.trf.xlu0
        %v1795 = vpop.trf.xlu0
        %v1796 = vpop.trf.xlu0
        %v1797 = vpop.trf.xlu0
        %v1798 = vpop.trf.xlu0
        %v1799 = vpop.trf.xlu0
        %v1800 = vpop.trf.xlu0
        %v1801 = vpop.trf.xlu0
        %1802 = vxpose.xlu0.b32.start [1/16] %v1533, 128
        %1803 = vxpose.xlu0.b32.cont [2/16] 0.0, 128
        %1804 = vxpose.xlu0.b32.cont [3/16] 0.0, 128
        %1805 = vxpose.xlu0.b32.cont [4/16] 0.0, 128
        %1806 = vxpose.xlu0.b32.cont [5/16] 0.0, 128
        %1807 = vxpose.xlu0.b32.cont [6/16] 0.0, 128
        %1808 = vxpose.xlu0.b32.cont [7/16] 0.0, 128
        %1809 = vxpose.xlu0.b32.cont [8/16] 0.0, 128
        %1810 = vxpose.xlu0.b32.cont [9/16] 0.0, 128
        %1811 = vxpose.xlu0.b32.cont [10/16] 0.0, 128
        %1812 = vxpose.xlu0.b32.cont [11/16] 0.0, 128
        %1813 = vxpose.xlu0.b32.cont [12/16] 0.0, 128
        %1814 = vxpose.xlu0.b32.cont [13/16] 0.0, 128
        %1815 = vxpose.xlu0.b32.cont [14/16] 0.0, 128
        %1816 = vxpose.xlu0.b32.cont [15/16] 0.0, 128
        %1817 = vxpose.xlu0.b32.end [16/16] 0.0, 128
        %v1818 = vpop.trf.xlu0
        %v1819 = vpop.trf.xlu0
        %v1820 = vpop.trf.xlu0
        %v1821 = vpop.trf.xlu0
        %v1822 = vpop.trf.xlu0
        %v1823 = vpop.trf.xlu0
        %v1824 = vpop.trf.xlu0
        %v1825 = vpop.trf.xlu0
        %v1826 = vpop.trf.xlu0
        %v1827 = vpop.trf.xlu0
        %v1828 = vpop.trf.xlu0
        %v1829 = vpop.trf.xlu0
        %v1830 = vpop.trf.xlu0
        %v1831 = vpop.trf.xlu0
        %v1832 = vpop.trf.xlu0
        %v1833 = vpop.trf.xlu0
        %1834 = vxpose.xlu0.b32.start [1/16] %v1525, 128
        %1835 = vxpose.xlu0.b32.cont [2/16] 0.0, 128
        %1836 = vxpose.xlu0.b32.cont [3/16] 0.0, 128
        %1837 = vxpose.xlu0.b32.cont [4/16] 0.0, 128
        %1838 = vxpose.xlu0.b32.cont [5/16] 0.0, 128
        %1839 = vxpose.xlu0.b32.cont [6/16] 0.0, 128
        %1840 = vxpose.xlu0.b32.cont [7/16] 0.0, 128
        %1841 = vxpose.xlu0.b32.cont [8/16] 0.0, 128
        %1842 = vxpose.xlu0.b32.cont [9/16] 0.0, 128
        %1843 = vxpose.xlu0.b32.cont [10/16] 0.0, 128
        %1844 = vxpose.xlu0.b32.cont [11/16] 0.0, 128
        %1845 = vxpose.xlu0.b32.cont [12/16] 0.0, 128
        %1846 = vxpose.xlu0.b32.cont [13/16] 0.0, 128
        %1847 = vxpose.xlu0.b32.cont [14/16] 0.0, 128
        %1848 = vxpose.xlu0.b32.cont [15/16] 0.0, 128
        %1849 = vxpose.xlu0.b32.end [16/16] 0.0, 128
        %v1850 = vpop.trf.xlu0
        %v1851 = vpop.trf.xlu0
        %v1852 = vpop.trf.xlu0
        %v1853 = vpop.trf.xlu0
        %v1854 = vpop.trf.xlu0
        %v1855 = vpop.trf.xlu0
        %v1856 = vpop.trf.xlu0
        %v1857 = vpop.trf.xlu0
        %v1858 = vpop.trf.xlu0
        %v1859 = vpop.trf.xlu0
        %v1860 = vpop.trf.xlu0
        %v1861 = vpop.trf.xlu0
        %v1862 = vpop.trf.xlu0
        %v1863 = vpop.trf.xlu0
        %v1864 = vpop.trf.xlu0
        %v1865 = vpop.trf.xlu0
        %1866 = vxpose.xlu0.b32.start [1/16] %v1535, 128
        %1867 = vxpose.xlu0.b32.cont [2/16] 0.0, 128
        %1868 = vxpose.xlu0.b32.cont [3/16] 0.0, 128
        %1869 = vxpose.xlu0.b32.cont [4/16] 0.0, 128
        %1870 = vxpose.xlu0.b32.cont [5/16] 0.0, 128
        %1871 = vxpose.xlu0.b32.cont [6/16] 0.0, 128
        %1872 = vxpose.xlu0.b32.cont [7/16] 0.0, 128
        %1873 = vxpose.xlu0.b32.cont [8/16] 0.0, 128
        %1874 = vxpose.xlu0.b32.cont [9/16] 0.0, 128
        %1875 = vxpose.xlu0.b32.cont [10/16] 0.0, 128
        %1876 = vxpose.xlu0.b32.cont [11/16] 0.0, 128
        %1877 = vxpose.xlu0.b32.cont [12/16] 0.0, 128
        %1878 = vxpose.xlu0.b32.cont [13/16] 0.0, 128
        %1879 = vxpose.xlu0.b32.cont [14/16] 0.0, 128
        %1880 = vxpose.xlu0.b32.cont [15/16] 0.0, 128
        %1881 = vxpose.xlu0.b32.end [16/16] 0.0, 128
        %v1882 = vpop.trf.xlu0
        %v1883 = vpop.trf.xlu0
        %v1884 = vpop.trf.xlu0
        %v1885 = vpop.trf.xlu0
        %v1886 = vpop.trf.xlu0
        %v1887 = vpop.trf.xlu0
        %v1888 = vpop.trf.xlu0
        %v1889 = vpop.trf.xlu0
        %v1890 = vpop.trf.xlu0
        %v1891 = vpop.trf.xlu0
        %v1892 = vpop.trf.xlu0
        %v1893 = vpop.trf.xlu0
        %v1894 = vpop.trf.xlu0
        %v1895 = vpop.trf.xlu0
        %v1896 = vpop.trf.xlu0
        %v1897 = vpop.trf.xlu0
        %1898 = vxpose.xlu0.b32.start [1/16] %v1529, 128
        %1899 = vxpose.xlu0.b32.cont [2/16] 0.0, 128
        %1900 = vxpose.xlu0.b32.cont [3/16] 0.0, 128
        %1901 = vxpose.xlu0.b32.cont [4/16] 0.0, 128
        %1902 = vxpose.xlu0.b32.cont [5/16] 0.0, 128
        %1903 = vxpose.xlu0.b32.cont [6/16] 0.0, 128
        %1904 = vxpose.xlu0.b32.cont [7/16] 0.0, 128
        %1905 = vxpose.xlu0.b32.cont [8/16] 0.0, 128
        %1906 = vxpose.xlu0.b32.cont [9/16] 0.0, 128
        %1907 = vxpose.xlu0.b32.cont [10/16] 0.0, 128
        %1908 = vxpose.xlu0.b32.cont [11/16] 0.0, 128
        %1909 = vxpose.xlu0.b32.cont [12/16] 0.0, 128
        %1910 = vxpose.xlu0.b32.cont [13/16] 0.0, 128
        %1911 = vxpose.xlu0.b32.cont [14/16] 0.0, 128
        %1912 = vxpose.xlu0.b32.cont [15/16] 0.0, 128
        %1913 = vxpose.xlu0.b32.end [16/16] 0.0, 128
        %v1914 = vpop.trf.xlu0
        %v1915 = vpop.trf.xlu0
        %v1916 = vpop.trf.xlu0
        %v1917 = vpop.trf.xlu0
        %v1918 = vpop.trf.xlu0
        %v1919 = vpop.trf.xlu0
        %v1920 = vpop.trf.xlu0
        %v1921 = vpop.trf.xlu0
        %v1922 = vpop.trf.xlu0
        %v1923 = vpop.trf.xlu0
        %v1924 = vpop.trf.xlu0
        %v1925 = vpop.trf.xlu0
        %v1926 = vpop.trf.xlu0
        %v1927 = vpop.trf.xlu0
        %v1928 = vpop.trf.xlu0
        %v1929 = vpop.trf.xlu0
        %1930 = vxpose.xlu0.b32.start [1/16] %v1537, 128
        %1931 = vxpose.xlu0.b32.cont [2/16] 0.0, 128
        %1932 = vxpose.xlu0.b32.cont [3/16] 0.0, 128
        %1933 = vxpose.xlu0.b32.cont [4/16] 0.0, 128
        %1934 = vxpose.xlu0.b32.cont [5/16] 0.0, 128
        %1935 = vxpose.xlu0.b32.cont [6/16] 0.0, 128
        %1936 = vxpose.xlu0.b32.cont [7/16] 0.0, 128
        %1937 = vxpose.xlu0.b32.cont [8/16] 0.0, 128
        %1938 = vxpose.xlu0.b32.cont [9/16] 0.0, 128
        %1939 = vxpose.xlu0.b32.cont [10/16] 0.0, 128
        %1940 = vxpose.xlu0.b32.cont [11/16] 0.0, 128
        %1941 = vxpose.xlu0.b32.cont [12/16] 0.0, 128
        %1942 = vxpose.xlu0.b32.cont [13/16] 0.0, 128
        %1943 = vxpose.xlu0.b32.cont [14/16] 0.0, 128
        %1944 = vxpose.xlu0.b32.cont [15/16] 0.0, 128
        %1945 = vxpose.xlu0.b32.end [16/16] 0.0, 128
        %v1946 = vpop.trf.xlu0
        %v1947 = vpop.trf.xlu0
        %v1948 = vpop.trf.xlu0
        %v1949 = vpop.trf.xlu0
        %v1950 = vpop.trf.xlu0
        %v1951 = vpop.trf.xlu0
        %v1952 = vpop.trf.xlu0
        %v1953 = vpop.trf.xlu0
        %v1954 = vpop.trf.xlu0
        %v1955 = vpop.trf.xlu0
        %v1956 = vpop.trf.xlu0
        %v1957 = vpop.trf.xlu0
        %v1958 = vpop.trf.xlu0
        %v1959 = vpop.trf.xlu0
        %v1960 = vpop.trf.xlu0
        %v1961 = vpop.trf.xlu0
        %1962 = vxpose.xlu0.b32.start [1/16] %v1569, 128
        %1963 = vxpose.xlu0.b32.cont [2/16] 0.0, 128
        %1964 = vxpose.xlu0.b32.cont [3/16] 0.0, 128
        %1965 = vxpose.xlu0.b32.cont [4/16] 0.0, 128
        %1966 = vxpose.xlu0.b32.cont [5/16] 0.0, 128
        %1967 = vxpose.xlu0.b32.cont [6/16] 0.0, 128
        %1968 = vxpose.xlu0.b32.cont [7/16] 0.0, 128
        %1969 = vxpose.xlu0.b32.cont [8/16] 0.0, 128
        %1970 = vxpose.xlu0.b32.cont [9/16] 0.0, 128
        %1971 = vxpose.xlu0.b32.cont [10/16] 0.0, 128
        %1972 = vxpose.xlu0.b32.cont [11/16] 0.0, 128
        %1973 = vxpose.xlu0.b32.cont [12/16] 0.0, 128
        %1974 = vxpose.xlu0.b32.cont [13/16] 0.0, 128
        %1975 = vxpose.xlu0.b32.cont [14/16] 0.0, 128
        %1976 = vxpose.xlu0.b32.cont [15/16] 0.0, 128
        %1977 = vxpose.xlu0.b32.end [16/16] 0.0, 128
        %v1978 = vpop.trf.xlu0
        %v1979 = vpop.trf.xlu0
        %v1980 = vpop.trf.xlu0
        %v1981 = vpop.trf.xlu0
        %v1982 = vpop.trf.xlu0
        %v1983 = vpop.trf.xlu0
        %v1984 = vpop.trf.xlu0
        %v1985 = vpop.trf.xlu0
        %v1986 = vpop.trf.xlu0
        %v1987 = vpop.trf.xlu0
        %v1988 = vpop.trf.xlu0
        %v1989 = vpop.trf.xlu0
        %v1990 = vpop.trf.xlu0
        %v1991 = vpop.trf.xlu0
        %v1992 = vpop.trf.xlu0
        %v1993 = vpop.trf.xlu0
        %1994 = vxpose.xlu0.b32.start [1/16] %v1587, 128
        %1995 = vxpose.xlu0.b32.cont [2/16] 0.0, 128
        %1996 = vxpose.xlu0.b32.cont [3/16] 0.0, 128
        %1997 = vxpose.xlu0.b32.cont [4/16] 0.0, 128
        %1998 = vxpose.xlu0.b32.cont [5/16] 0.0, 128
        %1999 = vxpose.xlu0.b32.cont [6/16] 0.0, 128
        %2000 = vxpose.xlu0.b32.cont [7/16] 0.0, 128
        %2001 = vxpose.xlu0.b32.cont [8/16] 0.0, 128
        %2002 = vxpose.xlu0.b32.cont [9/16] 0.0, 128
        %2003 = vxpose.xlu0.b32.cont [10/16] 0.0, 128
        %2004 = vxpose.xlu0.b32.cont [11/16] 0.0, 128
        %2005 = vxpose.xlu0.b32.cont [12/16] 0.0, 128
        %2006 = vxpose.xlu0.b32.cont [13/16] 0.0, 128
        %2007 = vxpose.xlu0.b32.cont [14/16] 0.0, 128
        %2008 = vxpose.xlu0.b32.cont [15/16] 0.0, 128
        %2009 = vxpose.xlu0.b32.end [16/16] 0.0, 128
        %v2010 = vpop.trf.xlu0
        %v2011 = vpop.trf.xlu0
        %v2012 = vpop.trf.xlu0
        %v2013 = vpop.trf.xlu0
        %v2014 = vpop.trf.xlu0
        %v2015 = vpop.trf.xlu0
        %v2016 = vpop.trf.xlu0
        %v2017 = vpop.trf.xlu0
        %v2018 = vpop.trf.xlu0
        %v2019 = vpop.trf.xlu0
        %v2020 = vpop.trf.xlu0
        %v2021 = vpop.trf.xlu0
        %v2022 = vpop.trf.xlu0
        %v2023 = vpop.trf.xlu0
        %v2024 = vpop.trf.xlu0
        %v2025 = vpop.trf.xlu0
        %2026 = vxpose.xlu0.b32.start [1/16] %v1573, 128
        %2027 = vxpose.xlu0.b32.cont [2/16] 0.0, 128
        %2028 = vxpose.xlu0.b32.cont [3/16] 0.0, 128
        %2029 = vxpose.xlu0.b32.cont [4/16] 0.0, 128
        %2030 = vxpose.xlu0.b32.cont [5/16] 0.0, 128
        %2031 = vxpose.xlu0.b32.cont [6/16] 0.0, 128
        %2032 = vxpose.xlu0.b32.cont [7/16] 0.0, 128
        %2033 = vxpose.xlu0.b32.cont [8/16] 0.0, 128
        %2034 = vxpose.xlu0.b32.cont [9/16] 0.0, 128
        %2035 = vxpose.xlu0.b32.cont [10/16] 0.0, 128
        %2036 = vxpose.xlu0.b32.cont [11/16] 0.0, 128
        %2037 = vxpose.xlu0.b32.cont [12/16] 0.0, 128
        %2038 = vxpose.xlu0.b32.cont [13/16] 0.0, 128
        %2039 = vxpose.xlu0.b32.cont [14/16] 0.0, 128
        %2040 = vxpose.xlu0.b32.cont [15/16] 0.0, 128
        %2041 = vxpose.xlu0.b32.end [16/16] 0.0, 128
        %v2042 = vpop.trf.xlu0
        %v2043 = vpop.trf.xlu0
        %v2044 = vpop.trf.xlu0
        %v2045 = vpop.trf.xlu0
        %v2046 = vpop.trf.xlu0
        %v2047 = vpop.trf.xlu0
        %v2048 = vpop.trf.xlu0
        %v2049 = vpop.trf.xlu0
        %v2050 = vpop.trf.xlu0
        %v2051 = vpop.trf.xlu0
        %v2052 = vpop.trf.xlu0
        %v2053 = vpop.trf.xlu0
        %v2054 = vpop.trf.xlu0
        %v2055 = vpop.trf.xlu0
        %v2056 = vpop.trf.xlu0
        %v2057 = vpop.trf.xlu0
        %2058 = vxpose.xlu0.b32.start [1/16] %v1589, 128
        %2059 = vxpose.xlu0.b32.cont [2/16] 0.0, 128
        %2060 = vxpose.xlu0.b32.cont [3/16] 0.0, 128
        %2061 = vxpose.xlu0.b32.cont [4/16] 0.0, 128
        %2062 = vxpose.xlu0.b32.cont [5/16] 0.0, 128
        %2063 = vxpose.xlu0.b32.cont [6/16] 0.0, 128
        %2064 = vxpose.xlu0.b32.cont [7/16] 0.0, 128
        %2065 = vxpose.xlu0.b32.cont [8/16] 0.0, 128
        %2066 = vxpose.xlu0.b32.cont [9/16] 0.0, 128
        %2067 = vxpose.xlu0.b32.cont [10/16] 0.0, 128
        %2068 = vxpose.xlu0.b32.cont [11/16] 0.0, 128
        %2069 = vxpose.xlu0.b32.cont [12/16] 0.0, 128
        %2070 = vxpose.xlu0.b32.cont [13/16] 0.0, 128
        %2071 = vxpose.xlu0.b32.cont [14/16] 0.0, 128
        %2072 = vxpose.xlu0.b32.cont [15/16] 0.0, 128
        %2073 = vxpose.xlu0.b32.end [16/16] 0.0, 128
        %v2074 = vpop.trf.xlu0
        %v2075 = vpop.trf.xlu0
        %v2076 = vpop.trf.xlu0
        %v2077 = vpop.trf.xlu0
        %v2078 = vpop.trf.xlu0
        %v2079 = vpop.trf.xlu0
        %v2080 = vpop.trf.xlu0
        %v2081 = vpop.trf.xlu0
        %v2082 = vpop.trf.xlu0
        %v2083 = vpop.trf.xlu0
        %v2084 = vpop.trf.xlu0
        %v2085 = vpop.trf.xlu0
        %v2086 = vpop.trf.xlu0
        %v2087 = vpop.trf.xlu0
        %v2088 = vpop.trf.xlu0
        %v2089 = vpop.trf.xlu0
        %2090 = vxpose.xlu0.b32.start [1/16] %v1581, 128
        %2091 = vxpose.xlu0.b32.cont [2/16] 0.0, 128
        %2092 = vxpose.xlu0.b32.cont [3/16] 0.0, 128
        %2093 = vxpose.xlu0.b32.cont [4/16] 0.0, 128
        %2094 = vxpose.xlu0.b32.cont [5/16] 0.0, 128
        %2095 = vxpose.xlu0.b32.cont [6/16] 0.0, 128
        %2096 = vxpose.xlu0.b32.cont [7/16] 0.0, 128
        %2097 = vxpose.xlu0.b32.cont [8/16] 0.0, 128
        %2098 = vxpose.xlu0.b32.cont [9/16] 0.0, 128
        %2099 = vxpose.xlu0.b32.cont [10/16] 0.0, 128
        %2100 = vxpose.xlu0.b32.cont [11/16] 0.0, 128
        %2101 = vxpose.xlu0.b32.cont [12/16] 0.0, 128
        %2102 = vxpose.xlu0.b32.cont [13/16] 0.0, 128
        %2103 = vxpose.xlu0.b32.cont [14/16] 0.0, 128
        %2104 = vxpose.xlu0.b32.cont [15/16] 0.0, 128
        %2105 = vxpose.xlu0.b32.end [16/16] 0.0, 128
        %v2106 = vpop.trf.xlu0
        %v2107 = vpop.trf.xlu0
        %v2108 = vpop.trf.xlu0
        %v2109 = vpop.trf.xlu0
        %v2110 = vpop.trf.xlu0
        %v2111 = vpop.trf.xlu0
        %v2112 = vpop.trf.xlu0
        %v2113 = vpop.trf.xlu0
        %v2114 = vpop.trf.xlu0
        %v2115 = vpop.trf.xlu0
        %v2116 = vpop.trf.xlu0
        %v2117 = vpop.trf.xlu0
        %v2118 = vpop.trf.xlu0
        %v2119 = vpop.trf.xlu0
        %v2120 = vpop.trf.xlu0
        %v2121 = vpop.trf.xlu0
        %2122 = vxpose.xlu0.b32.start [1/16] %v1591, 128
        %2123 = vxpose.xlu0.b32.cont [2/16] 0.0, 128
        %2124 = vxpose.xlu0.b32.cont [3/16] 0.0, 128
        %2125 = vxpose.xlu0.b32.cont [4/16] 0.0, 128
        %2126 = vxpose.xlu0.b32.cont [5/16] 0.0, 128
        %2127 = vxpose.xlu0.b32.cont [6/16] 0.0, 128
        %2128 = vxpose.xlu0.b32.cont [7/16] 0.0, 128
        %2129 = vxpose.xlu0.b32.cont [8/16] 0.0, 128
        %2130 = vxpose.xlu0.b32.cont [9/16] 0.0, 128
        %2131 = vxpose.xlu0.b32.cont [10/16] 0.0, 128
        %2132 = vxpose.xlu0.b32.cont [11/16] 0.0, 128
        %2133 = vxpose.xlu0.b32.cont [12/16] 0.0, 128
        %2134 = vxpose.xlu0.b32.cont [13/16] 0.0, 128
        %2135 = vxpose.xlu0.b32.cont [14/16] 0.0, 128
        %2136 = vxpose.xlu0.b32.cont [15/16] 0.0, 128
        %2137 = vxpose.xlu0.b32.end [16/16] 0.0, 128
        %v2138 = vpop.trf.xlu0
        %v2139 = vpop.trf.xlu0
        %v2140 = vpop.trf.xlu0
        %v2141 = vpop.trf.xlu0
        %v2142 = vpop.trf.xlu0
        %v2143 = vpop.trf.xlu0
        %v2144 = vpop.trf.xlu0
        %v2145 = vpop.trf.xlu0
        %v2146 = vpop.trf.xlu0
        %v2147 = vpop.trf.xlu0
        %v2148 = vpop.trf.xlu0
        %v2149 = vpop.trf.xlu0
        %v2150 = vpop.trf.xlu0
        %v2151 = vpop.trf.xlu0
        %v2152 = vpop.trf.xlu0
        %v2153 = vpop.trf.xlu0
        %2154 = vxpose.xlu0.b32.start [1/16] %v1585, 128
        %2155 = vxpose.xlu0.b32.cont [2/16] 0.0, 128
        %2156 = vxpose.xlu0.b32.cont [3/16] 0.0, 128
        %2157 = vxpose.xlu0.b32.cont [4/16] 0.0, 128
        %2158 = vxpose.xlu0.b32.cont [5/16] 0.0, 128
        %2159 = vxpose.xlu0.b32.cont [6/16] 0.0, 128
        %2160 = vxpose.xlu0.b32.cont [7/16] 0.0, 128
        %2161 = vxpose.xlu0.b32.cont [8/16] 0.0, 128
        %2162 = vxpose.xlu0.b32.cont [9/16] 0.0, 128
        %2163 = vxpose.xlu0.b32.cont [10/16] 0.0, 128
        %2164 = vxpose.xlu0.b32.cont [11/16] 0.0, 128
        %2165 = vxpose.xlu0.b32.cont [12/16] 0.0, 128
        %2166 = vxpose.xlu0.b32.cont [13/16] 0.0, 128
        %2167 = vxpose.xlu0.b32.cont [14/16] 0.0, 128
        %2168 = vxpose.xlu0.b32.cont [15/16] 0.0, 128
        %2169 = vxpose.xlu0.b32.end [16/16] 0.0, 128
        %v2170 = vpop.trf.xlu0
        %v2171 = vpop.trf.xlu0
        %v2172 = vpop.trf.xlu0
        %v2173 = vpop.trf.xlu0
        %v2174 = vpop.trf.xlu0
        %v2175 = vpop.trf.xlu0
        %v2176 = vpop.trf.xlu0
        %v2177 = vpop.trf.xlu0
        %v2178 = vpop.trf.xlu0
        %v2179 = vpop.trf.xlu0
        %v2180 = vpop.trf.xlu0
        %v2181 = vpop.trf.xlu0
        %v2182 = vpop.trf.xlu0
        %v2183 = vpop.trf.xlu0
        %v2184 = vpop.trf.xlu0
        %v2185 = vpop.trf.xlu0
        %2186 = vxpose.xlu0.b32.start [1/16] %v1593, 128
        %2187 = vxpose.xlu0.b32.cont [2/16] 0.0, 128
        %2188 = vxpose.xlu0.b32.cont [3/16] 0.0, 128
        %2189 = vxpose.xlu0.b32.cont [4/16] 0.0, 128
        %2190 = vxpose.xlu0.b32.cont [5/16] 0.0, 128
        %2191 = vxpose.xlu0.b32.cont [6/16] 0.0, 128
        %2192 = vxpose.xlu0.b32.cont [7/16] 0.0, 128
        %2193 = vxpose.xlu0.b32.cont [8/16] 0.0, 128
        %2194 = vxpose.xlu0.b32.cont [9/16] 0.0, 128
        %2195 = vxpose.xlu0.b32.cont [10/16] 0.0, 128
        %2196 = vxpose.xlu0.b32.cont [11/16] 0.0, 128
        %2197 = vxpose.xlu0.b32.cont [12/16] 0.0, 128
        %2198 = vxpose.xlu0.b32.cont [13/16] 0.0, 128
        %2199 = vxpose.xlu0.b32.cont [14/16] 0.0, 128
        %2200 = vxpose.xlu0.b32.cont [15/16] 0.0, 128
        %2201 = vxpose.xlu0.b32.end [16/16] 0.0, 128
        %v2202 = vpop.trf.xlu0
        %v2203 = vpop.trf.xlu0
        %v2204 = vpop.trf.xlu0
        %v2205 = vpop.trf.xlu0
        %v2206 = vpop.trf.xlu0
        %v2207 = vpop.trf.xlu0
        %v2208 = vpop.trf.xlu0
        %v2209 = vpop.trf.xlu0
        %v2210 = vpop.trf.xlu0
        %v2211 = vpop.trf.xlu0
        %v2212 = vpop.trf.xlu0
        %v2213 = vpop.trf.xlu0
        %v2214 = vpop.trf.xlu0
        %v2215 = vpop.trf.xlu0
        %v2216 = vpop.trf.xlu0
        %v2217 = vpop.trf.xlu0
        %2218 = vxpose.xlu0.b32.start [1/16] %v1625, 128
        %2219 = vxpose.xlu0.b32.cont [2/16] 0.0, 128
        %2220 = vxpose.xlu0.b32.cont [3/16] 0.0, 128
        %2221 = vxpose.xlu0.b32.cont [4/16] 0.0, 128
        %2222 = vxpose.xlu0.b32.cont [5/16] 0.0, 128
        %2223 = vxpose.xlu0.b32.cont [6/16] 0.0, 128
        %2224 = vxpose.xlu0.b32.cont [7/16] 0.0, 128
        %2225 = vxpose.xlu0.b32.cont [8/16] 0.0, 128
        %2226 = vxpose.xlu0.b32.cont [9/16] 0.0, 128
        %2227 = vxpose.xlu0.b32.cont [10/16] 0.0, 128
        %2228 = vxpose.xlu0.b32.cont [11/16] 0.0, 128
        %2229 = vxpose.xlu0.b32.cont [12/16] 0.0, 128
        %2230 = vxpose.xlu0.b32.cont [13/16] 0.0, 128
        %2231 = vxpose.xlu0.b32.cont [14/16] 0.0, 128
        %2232 = vxpose.xlu0.b32.cont [15/16] 0.0, 128
        %2233 = vxpose.xlu0.b32.end [16/16] 0.0, 128
        %v2234 = vpop.trf.xlu0
        %v2235 = vpop.trf.xlu0
        %v2236 = vpop.trf.xlu0
        %v2237 = vpop.trf.xlu0
        %v2238 = vpop.trf.xlu0
        %v2239 = vpop.trf.xlu0
        %v2240 = vpop.trf.xlu0
        %v2241 = vpop.trf.xlu0
        %v2242 = vpop.trf.xlu0
        %v2243 = vpop.trf.xlu0
        %v2244 = vpop.trf.xlu0
        %v2245 = vpop.trf.xlu0
        %v2246 = vpop.trf.xlu0
        %v2247 = vpop.trf.xlu0
        %v2248 = vpop.trf.xlu0
        %v2249 = vpop.trf.xlu0
        %2250 = vxpose.xlu0.b32.start [1/16] %v1643, 128
        %2251 = vxpose.xlu0.b32.cont [2/16] 0.0, 128
        %2252 = vxpose.xlu0.b32.cont [3/16] 0.0, 128
        %2253 = vxpose.xlu0.b32.cont [4/16] 0.0, 128
        %2254 = vxpose.xlu0.b32.cont [5/16] 0.0, 128
        %2255 = vxpose.xlu0.b32.cont [6/16] 0.0, 128
        %2256 = vxpose.xlu0.b32.cont [7/16] 0.0, 128
        %2257 = vxpose.xlu0.b32.cont [8/16] 0.0, 128
        %2258 = vxpose.xlu0.b32.cont [9/16] 0.0, 128
        %2259 = vxpose.xlu0.b32.cont [10/16] 0.0, 128
        %2260 = vxpose.xlu0.b32.cont [11/16] 0.0, 128
        %2261 = vxpose.xlu0.b32.cont [12/16] 0.0, 128
        %2262 = vxpose.xlu0.b32.cont [13/16] 0.0, 128
        %2263 = vxpose.xlu0.b32.cont [14/16] 0.0, 128
        %2264 = vxpose.xlu0.b32.cont [15/16] 0.0, 128
        %2265 = vxpose.xlu0.b32.end [16/16] 0.0, 128
        %v2266 = vpop.trf.xlu0
        %v2267 = vpop.trf.xlu0
        %v2268 = vpop.trf.xlu0
        %v2269 = vpop.trf.xlu0
        %v2270 = vpop.trf.xlu0
        %v2271 = vpop.trf.xlu0
        %v2272 = vpop.trf.xlu0
        %v2273 = vpop.trf.xlu0
        %v2274 = vpop.trf.xlu0
        %v2275 = vpop.trf.xlu0
        %v2276 = vpop.trf.xlu0
        %v2277 = vpop.trf.xlu0
        %v2278 = vpop.trf.xlu0
        %v2279 = vpop.trf.xlu0
        %v2280 = vpop.trf.xlu0
        %v2281 = vpop.trf.xlu0
        %2282 = vxpose.xlu0.b32.start [1/16] %v1629, 128
        %2283 = vxpose.xlu0.b32.cont [2/16] 0.0, 128
        %2284 = vxpose.xlu0.b32.cont [3/16] 0.0, 128
        %2285 = vxpose.xlu0.b32.cont [4/16] 0.0, 128
        %2286 = vxpose.xlu0.b32.cont [5/16] 0.0, 128
        %2287 = vxpose.xlu0.b32.cont [6/16] 0.0, 128
        %2288 = vxpose.xlu0.b32.cont [7/16] 0.0, 128
        %2289 = vxpose.xlu0.b32.cont [8/16] 0.0, 128
        %2290 = vxpose.xlu0.b32.cont [9/16] 0.0, 128
        %2291 = vxpose.xlu0.b32.cont [10/16] 0.0, 128
        %2292 = vxpose.xlu0.b32.cont [11/16] 0.0, 128
        %2293 = vxpose.xlu0.b32.cont [12/16] 0.0, 128
        %2294 = vxpose.xlu0.b32.cont [13/16] 0.0, 128
        %2295 = vxpose.xlu0.b32.cont [14/16] 0.0, 128
        %2296 = vxpose.xlu0.b32.cont [15/16] 0.0, 128
        %2297 = vxpose.xlu0.b32.end [16/16] 0.0, 128
        %v2298 = vpop.trf.xlu0
        %v2299 = vpop.trf.xlu0
        %v2300 = vpop.trf.xlu0
        %v2301 = vpop.trf.xlu0
        %v2302 = vpop.trf.xlu0
        %v2303 = vpop.trf.xlu0
        %v2304 = vpop.trf.xlu0
        %v2305 = vpop.trf.xlu0
        %v2306 = vpop.trf.xlu0
        %v2307 = vpop.trf.xlu0
        %v2308 = vpop.trf.xlu0
        %v2309 = vpop.trf.xlu0
        %v2310 = vpop.trf.xlu0
        %v2311 = vpop.trf.xlu0
        %v2312 = vpop.trf.xlu0
        %v2313 = vpop.trf.xlu0
        %2314 = vxpose.xlu0.b32.start [1/16] %v1645, 128
        %2315 = vxpose.xlu0.b32.cont [2/16] 0.0, 128
        %2316 = vxpose.xlu0.b32.cont [3/16] 0.0, 128
        %2317 = vxpose.xlu0.b32.cont [4/16] 0.0, 128
        %2318 = vxpose.xlu0.b32.cont [5/16] 0.0, 128
        %2319 = vxpose.xlu0.b32.cont [6/16] 0.0, 128
        %2320 = vxpose.xlu0.b32.cont [7/16] 0.0, 128
        %2321 = vxpose.xlu0.b32.cont [8/16] 0.0, 128
        %2322 = vxpose.xlu0.b32.cont [9/16] 0.0, 128
        %2323 = vxpose.xlu0.b32.cont [10/16] 0.0, 128
        %2324 = vxpose.xlu0.b32.cont [11/16] 0.0, 128
        %2325 = vxpose.xlu0.b32.cont [12/16] 0.0, 128
        %2326 = vxpose.xlu0.b32.cont [13/16] 0.0, 128
        %2327 = vxpose.xlu0.b32.cont [14/16] 0.0, 128
        %2328 = vxpose.xlu0.b32.cont [15/16] 0.0, 128
        %2329 = vxpose.xlu0.b32.end [16/16] 0.0, 128
        %v2330 = vpop.trf.xlu0
        %v2331 = vpop.trf.xlu0
        %v2332 = vpop.trf.xlu0
        %v2333 = vpop.trf.xlu0
        %v2334 = vpop.trf.xlu0
        %v2335 = vpop.trf.xlu0
        %v2336 = vpop.trf.xlu0
        %v2337 = vpop.trf.xlu0
        %v2338 = vpop.trf.xlu0
        %v2339 = vpop.trf.xlu0
        %v2340 = vpop.trf.xlu0
        %v2341 = vpop.trf.xlu0
        %v2342 = vpop.trf.xlu0
        %v2343 = vpop.trf.xlu0
        %v2344 = vpop.trf.xlu0
        %v2345 = vpop.trf.xlu0
        %2346 = vxpose.xlu0.b32.start [1/16] %v1637, 128
        %2347 = vxpose.xlu0.b32.cont [2/16] 0.0, 128
        %2348 = vxpose.xlu0.b32.cont [3/16] 0.0, 128
        %2349 = vxpose.xlu0.b32.cont [4/16] 0.0, 128
        %2350 = vxpose.xlu0.b32.cont [5/16] 0.0, 128
        %2351 = vxpose.xlu0.b32.cont [6/16] 0.0, 128
        %2352 = vxpose.xlu0.b32.cont [7/16] 0.0, 128
        %2353 = vxpose.xlu0.b32.cont [8/16] 0.0, 128
        %2354 = vxpose.xlu0.b32.cont [9/16] 0.0, 128
        %2355 = vxpose.xlu0.b32.cont [10/16] 0.0, 128
        %2356 = vxpose.xlu0.b32.cont [11/16] 0.0, 128
        %2357 = vxpose.xlu0.b32.cont [12/16] 0.0, 128
        %2358 = vxpose.xlu0.b32.cont [13/16] 0.0, 128
        %2359 = vxpose.xlu0.b32.cont [14/16] 0.0, 128
        %2360 = vxpose.xlu0.b32.cont [15/16] 0.0, 128
        %2361 = vxpose.xlu0.b32.end [16/16] 0.0, 128
        %v2362 = vpop.trf.xlu0
        %v2363 = vpop.trf.xlu0
        %v2364 = vpop.trf.xlu0
        %v2365 = vpop.trf.xlu0
        %v2366 = vpop.trf.xlu0
        %v2367 = vpop.trf.xlu0
        %v2368 = vpop.trf.xlu0
        %v2369 = vpop.trf.xlu0
        %v2370 = vpop.trf.xlu0
        %v2371 = vpop.trf.xlu0
        %v2372 = vpop.trf.xlu0
        %v2373 = vpop.trf.xlu0
        %v2374 = vpop.trf.xlu0
        %v2375 = vpop.trf.xlu0
        %v2376 = vpop.trf.xlu0
        %v2377 = vpop.trf.xlu0
        %2378 = vxpose.xlu0.b32.start [1/16] %v1647, 128
        %2379 = vxpose.xlu0.b32.cont [2/16] 0.0, 128
        %2380 = vxpose.xlu0.b32.cont [3/16] 0.0, 128
        %2381 = vxpose.xlu0.b32.cont [4/16] 0.0, 128
        %2382 = vxpose.xlu0.b32.cont [5/16] 0.0, 128
        %2383 = vxpose.xlu0.b32.cont [6/16] 0.0, 128
        %2384 = vxpose.xlu0.b32.cont [7/16] 0.0, 128
        %2385 = vxpose.xlu0.b32.cont [8/16] 0.0, 128
        %2386 = vxpose.xlu0.b32.cont [9/16] 0.0, 128
        %2387 = vxpose.xlu0.b32.cont [10/16] 0.0, 128
        %2388 = vxpose.xlu0.b32.cont [11/16] 0.0, 128
        %2389 = vxpose.xlu0.b32.cont [12/16] 0.0, 128
        %2390 = vxpose.xlu0.b32.cont [13/16] 0.0, 128
        %2391 = vxpose.xlu0.b32.cont [14/16] 0.0, 128
        %2392 = vxpose.xlu0.b32.cont [15/16] 0.0, 128
        %2393 = vxpose.xlu0.b32.end [16/16] 0.0, 128
        %v2394 = vpop.trf.xlu0
        %v2395 = vpop.trf.xlu0
        %v2396 = vpop.trf.xlu0
        %v2397 = vpop.trf.xlu0
        %v2398 = vpop.trf.xlu0
        %v2399 = vpop.trf.xlu0
        %v2400 = vpop.trf.xlu0
        %v2401 = vpop.trf.xlu0
        %v2402 = vpop.trf.xlu0
        %v2403 = vpop.trf.xlu0
        %v2404 = vpop.trf.xlu0
        %v2405 = vpop.trf.xlu0
        %v2406 = vpop.trf.xlu0
        %v2407 = vpop.trf.xlu0
        %v2408 = vpop.trf.xlu0
        %v2409 = vpop.trf.xlu0
        %2410 = vxpose.xlu0.b32.start [1/16] %v1641, 128
        %2411 = vxpose.xlu0.b32.cont [2/16] 0.0, 128
        %2412 = vxpose.xlu0.b32.cont [3/16] 0.0, 128
        %2413 = vxpose.xlu0.b32.cont [4/16] 0.0, 128
        %2414 = vxpose.xlu0.b32.cont [5/16] 0.0, 128
        %2415 = vxpose.xlu0.b32.cont [6/16] 0.0, 128
        %2416 = vxpose.xlu0.b32.cont [7/16] 0.0, 128
        %2417 = vxpose.xlu0.b32.cont [8/16] 0.0, 128
        %2418 = vxpose.xlu0.b32.cont [9/16] 0.0, 128
        %2419 = vxpose.xlu0.b32.cont [10/16] 0.0, 128
        %2420 = vxpose.xlu0.b32.cont [11/16] 0.0, 128
        %2421 = vxpose.xlu0.b32.cont [12/16] 0.0, 128
        %2422 = vxpose.xlu0.b32.cont [13/16] 0.0, 128
        %2423 = vxpose.xlu0.b32.cont [14/16] 0.0, 128
        %2424 = vxpose.xlu0.b32.cont [15/16] 0.0, 128
        %2425 = vxpose.xlu0.b32.end [16/16] 0.0, 128
        %v2426 = vpop.trf.xlu0
        %v2427 = vpop.trf.xlu0
        %v2428 = vpop.trf.xlu0
        %v2429 = vpop.trf.xlu0
        %v2430 = vpop.trf.xlu0
        %v2431 = vpop.trf.xlu0
        %v2432 = vpop.trf.xlu0
        %v2433 = vpop.trf.xlu0
        %v2434 = vpop.trf.xlu0
        %v2435 = vpop.trf.xlu0
        %v2436 = vpop.trf.xlu0
        %v2437 = vpop.trf.xlu0
        %v2438 = vpop.trf.xlu0
        %v2439 = vpop.trf.xlu0
        %v2440 = vpop.trf.xlu0
        %v2441 = vpop.trf.xlu0
        %2442 = vxpose.xlu0.b32.start [1/16] %v1649, 128
        %2443 = vxpose.xlu0.b32.cont [2/16] 0.0, 128
        %2444 = vxpose.xlu0.b32.cont [3/16] 0.0, 128
        %2445 = vxpose.xlu0.b32.cont [4/16] 0.0, 128
        %2446 = vxpose.xlu0.b32.cont [5/16] 0.0, 128
        %2447 = vxpose.xlu0.b32.cont [6/16] 0.0, 128
        %2448 = vxpose.xlu0.b32.cont [7/16] 0.0, 128
        %2449 = vxpose.xlu0.b32.cont [8/16] 0.0, 128
        %2450 = vxpose.xlu0.b32.cont [9/16] 0.0, 128
        %2451 = vxpose.xlu0.b32.cont [10/16] 0.0, 128
        %2452 = vxpose.xlu0.b32.cont [11/16] 0.0, 128
        %2453 = vxpose.xlu0.b32.cont [12/16] 0.0, 128
        %2454 = vxpose.xlu0.b32.cont [13/16] 0.0, 128
        %2455 = vxpose.xlu0.b32.cont [14/16] 0.0, 128
        %2456 = vxpose.xlu0.b32.cont [15/16] 0.0, 128
        %2457 = vxpose.xlu0.b32.end [16/16] 0.0, 128
        %v2458 = vpop.trf.xlu0
        %v2459 = vpop.trf.xlu0
        %v2460 = vpop.trf.xlu0
        %v2461 = vpop.trf.xlu0
        %v2462 = vpop.trf.xlu0
        %v2463 = vpop.trf.xlu0
        %v2464 = vpop.trf.xlu0
        %v2465 = vpop.trf.xlu0
        %v2466 = vpop.trf.xlu0
        %v2467 = vpop.trf.xlu0
        %v2468 = vpop.trf.xlu0
        %v2469 = vpop.trf.xlu0
        %v2470 = vpop.trf.xlu0
        %v2471 = vpop.trf.xlu0
        %v2472 = vpop.trf.xlu0
        %v2473 = vpop.trf.xlu0
        %2474 = vxpose.xlu0.b32.start [1/16] %v1681, 128
        %2475 = vxpose.xlu0.b32.cont [2/16] 0.0, 128
        %2476 = vxpose.xlu0.b32.cont [3/16] 0.0, 128
        %2477 = vxpose.xlu0.b32.cont [4/16] 0.0, 128
        %2478 = vxpose.xlu0.b32.cont [5/16] 0.0, 128
        %2479 = vxpose.xlu0.b32.cont [6/16] 0.0, 128
        %2480 = vxpose.xlu0.b32.cont [7/16] 0.0, 128
        %2481 = vxpose.xlu0.b32.cont [8/16] 0.0, 128
        %2482 = vxpose.xlu0.b32.cont [9/16] 0.0, 128
        %2483 = vxpose.xlu0.b32.cont [10/16] 0.0, 128
        %2484 = vxpose.xlu0.b32.cont [11/16] 0.0, 128
        %2485 = vxpose.xlu0.b32.cont [12/16] 0.0, 128
        %2486 = vxpose.xlu0.b32.cont [13/16] 0.0, 128
        %2487 = vxpose.xlu0.b32.cont [14/16] 0.0, 128
        %2488 = vxpose.xlu0.b32.cont [15/16] 0.0, 128
        %2489 = vxpose.xlu0.b32.end [16/16] 0.0, 128
        %v2490 = vpop.trf.xlu0
        %v2491 = vpop.trf.xlu0
        %v2492 = vpop.trf.xlu0
        %v2493 = vpop.trf.xlu0
        %v2494 = vpop.trf.xlu0
        %v2495 = vpop.trf.xlu0
        %v2496 = vpop.trf.xlu0
        %v2497 = vpop.trf.xlu0
        %v2498 = vpop.trf.xlu0
        %v2499 = vpop.trf.xlu0
        %v2500 = vpop.trf.xlu0
        %v2501 = vpop.trf.xlu0
        %v2502 = vpop.trf.xlu0
        %v2503 = vpop.trf.xlu0
        %v2504 = vpop.trf.xlu0
        %v2505 = vpop.trf.xlu0
        %2506 = vxpose.xlu0.b32.start [1/16] %v1699, 128
        %2507 = vxpose.xlu0.b32.cont [2/16] 0.0, 128
        %2508 = vxpose.xlu0.b32.cont [3/16] 0.0, 128
        %2509 = vxpose.xlu0.b32.cont [4/16] 0.0, 128
        %2510 = vxpose.xlu0.b32.cont [5/16] 0.0, 128
        %2511 = vxpose.xlu0.b32.cont [6/16] 0.0, 128
        %2512 = vxpose.xlu0.b32.cont [7/16] 0.0, 128
        %2513 = vxpose.xlu0.b32.cont [8/16] 0.0, 128
        %2514 = vxpose.xlu0.b32.cont [9/16] 0.0, 128
        %2515 = vxpose.xlu0.b32.cont [10/16] 0.0, 128
        %2516 = vxpose.xlu0.b32.cont [11/16] 0.0, 128
        %2517 = vxpose.xlu0.b32.cont [12/16] 0.0, 128
        %2518 = vxpose.xlu0.b32.cont [13/16] 0.0, 128
        %2519 = vxpose.xlu0.b32.cont [14/16] 0.0, 128
        %2520 = vxpose.xlu0.b32.cont [15/16] 0.0, 128
        %2521 = vxpose.xlu0.b32.end [16/16] 0.0, 128
        %v2522 = vpop.trf.xlu0
        %v2523 = vpop.trf.xlu0
        %v2524 = vpop.trf.xlu0
        %v2525 = vpop.trf.xlu0
        %v2526 = vpop.trf.xlu0
        %v2527 = vpop.trf.xlu0
        %v2528 = vpop.trf.xlu0
        %v2529 = vpop.trf.xlu0
        %v2530 = vpop.trf.xlu0
        %v2531 = vpop.trf.xlu0
        %v2532 = vpop.trf.xlu0
        %v2533 = vpop.trf.xlu0
        %v2534 = vpop.trf.xlu0
        %v2535 = vpop.trf.xlu0
        %v2536 = vpop.trf.xlu0
        %v2537 = vpop.trf.xlu0
        %2538 = vxpose.xlu0.b32.start [1/16] %v1685, 128
        %2539 = vxpose.xlu0.b32.cont [2/16] 0.0, 128
        %2540 = vxpose.xlu0.b32.cont [3/16] 0.0, 128
        %2541 = vxpose.xlu0.b32.cont [4/16] 0.0, 128
        %2542 = vxpose.xlu0.b32.cont [5/16] 0.0, 128
        %2543 = vxpose.xlu0.b32.cont [6/16] 0.0, 128
        %2544 = vxpose.xlu0.b32.cont [7/16] 0.0, 128
        %2545 = vxpose.xlu0.b32.cont [8/16] 0.0, 128
        %2546 = vxpose.xlu0.b32.cont [9/16] 0.0, 128
        %2547 = vxpose.xlu0.b32.cont [10/16] 0.0, 128
        %2548 = vxpose.xlu0.b32.cont [11/16] 0.0, 128
        %2549 = vxpose.xlu0.b32.cont [12/16] 0.0, 128
        %2550 = vxpose.xlu0.b32.cont [13/16] 0.0, 128
        %2551 = vxpose.xlu0.b32.cont [14/16] 0.0, 128
        %2552 = vxpose.xlu0.b32.cont [15/16] 0.0, 128
        %2553 = vxpose.xlu0.b32.end [16/16] 0.0, 128
        %v2554 = vpop.trf.xlu0
        %v2555 = vpop.trf.xlu0
        %v2556 = vpop.trf.xlu0
        %v2557 = vpop.trf.xlu0
        %v2558 = vpop.trf.xlu0
        %v2559 = vpop.trf.xlu0
        %v2560 = vpop.trf.xlu0
        %v2561 = vpop.trf.xlu0
        %v2562 = vpop.trf.xlu0
        %v2563 = vpop.trf.xlu0
        %v2564 = vpop.trf.xlu0
        %v2565 = vpop.trf.xlu0
        %v2566 = vpop.trf.xlu0
        %v2567 = vpop.trf.xlu0
        %v2568 = vpop.trf.xlu0
        %v2569 = vpop.trf.xlu0
        %2570 = vxpose.xlu0.b32.start [1/16] %v1701, 128
        %2571 = vxpose.xlu0.b32.cont [2/16] 0.0, 128
        %2572 = vxpose.xlu0.b32.cont [3/16] 0.0, 128
        %2573 = vxpose.xlu0.b32.cont [4/16] 0.0, 128
        %2574 = vxpose.xlu0.b32.cont [5/16] 0.0, 128
        %2575 = vxpose.xlu0.b32.cont [6/16] 0.0, 128
        %2576 = vxpose.xlu0.b32.cont [7/16] 0.0, 128
        %2577 = vxpose.xlu0.b32.cont [8/16] 0.0, 128
        %2578 = vxpose.xlu0.b32.cont [9/16] 0.0, 128
        %2579 = vxpose.xlu0.b32.cont [10/16] 0.0, 128
        %2580 = vxpose.xlu0.b32.cont [11/16] 0.0, 128
        %2581 = vxpose.xlu0.b32.cont [12/16] 0.0, 128
        %2582 = vxpose.xlu0.b32.cont [13/16] 0.0, 128
        %2583 = vxpose.xlu0.b32.cont [14/16] 0.0, 128
        %2584 = vxpose.xlu0.b32.cont [15/16] 0.0, 128
        %2585 = vxpose.xlu0.b32.end [16/16] 0.0, 128
        %v2586 = vpop.trf.xlu0
        %v2587 = vpop.trf.xlu0
        %v2588 = vpop.trf.xlu0
        %v2589 = vpop.trf.xlu0
        %v2590 = vpop.trf.xlu0
        %v2591 = vpop.trf.xlu0
        %v2592 = vpop.trf.xlu0
        %v2593 = vpop.trf.xlu0
        %v2594 = vpop.trf.xlu0
        %v2595 = vpop.trf.xlu0
        %v2596 = vpop.trf.xlu0
        %v2597 = vpop.trf.xlu0
        %v2598 = vpop.trf.xlu0
        %v2599 = vpop.trf.xlu0
        %v2600 = vpop.trf.xlu0
        %v2601 = vpop.trf.xlu0
        %2602 = vxpose.xlu0.b32.start [1/16] %v1693, 128
        %2603 = vxpose.xlu0.b32.cont [2/16] 0.0, 128
        %2604 = vxpose.xlu0.b32.cont [3/16] 0.0, 128
        %2605 = vxpose.xlu0.b32.cont [4/16] 0.0, 128
        %2606 = vxpose.xlu0.b32.cont [5/16] 0.0, 128
        %2607 = vxpose.xlu0.b32.cont [6/16] 0.0, 128
        %2608 = vxpose.xlu0.b32.cont [7/16] 0.0, 128
        %2609 = vxpose.xlu0.b32.cont [8/16] 0.0, 128
        %2610 = vxpose.xlu0.b32.cont [9/16] 0.0, 128
        %2611 = vxpose.xlu0.b32.cont [10/16] 0.0, 128
        %2612 = vxpose.xlu0.b32.cont [11/16] 0.0, 128
        %2613 = vxpose.xlu0.b32.cont [12/16] 0.0, 128
        %2614 = vxpose.xlu0.b32.cont [13/16] 0.0, 128
        %2615 = vxpose.xlu0.b32.cont [14/16] 0.0, 128
        %2616 = vxpose.xlu0.b32.cont [15/16] 0.0, 128
        %2617 = vxpose.xlu0.b32.end [16/16] 0.0, 128
        %v2618 = vpop.trf.xlu0
        %v2619 = vpop.trf.xlu0
        %v2620 = vpop.trf.xlu0
        %v2621 = vpop.trf.xlu0
        %v2622 = vpop.trf.xlu0
        %v2623 = vpop.trf.xlu0
        %v2624 = vpop.trf.xlu0
        %v2625 = vpop.trf.xlu0
        %v2626 = vpop.trf.xlu0
        %v2627 = vpop.trf.xlu0
        %v2628 = vpop.trf.xlu0
        %v2629 = vpop.trf.xlu0
        %v2630 = vpop.trf.xlu0
        %v2631 = vpop.trf.xlu0
        %v2632 = vpop.trf.xlu0
        %v2633 = vpop.trf.xlu0
        %2634 = vxpose.xlu0.b32.start [1/16] %v1703, 128
        %2635 = vxpose.xlu0.b32.cont [2/16] 0.0, 128
        %2636 = vxpose.xlu0.b32.cont [3/16] 0.0, 128
        %2637 = vxpose.xlu0.b32.cont [4/16] 0.0, 128
        %2638 = vxpose.xlu0.b32.cont [5/16] 0.0, 128
        %2639 = vxpose.xlu0.b32.cont [6/16] 0.0, 128
        %2640 = vxpose.xlu0.b32.cont [7/16] 0.0, 128
        %2641 = vxpose.xlu0.b32.cont [8/16] 0.0, 128
        %2642 = vxpose.xlu0.b32.cont [9/16] 0.0, 128
        %2643 = vxpose.xlu0.b32.cont [10/16] 0.0, 128
        %2644 = vxpose.xlu0.b32.cont [11/16] 0.0, 128
        %2645 = vxpose.xlu0.b32.cont [12/16] 0.0, 128
        %2646 = vxpose.xlu0.b32.cont [13/16] 0.0, 128
        %2647 = vxpose.xlu0.b32.cont [14/16] 0.0, 128
        %2648 = vxpose.xlu0.b32.cont [15/16] 0.0, 128
        %2649 = vxpose.xlu0.b32.end [16/16] 0.0, 128
        %v2650 = vpop.trf.xlu0
        %v2651 = vpop.trf.xlu0
        %v2652 = vpop.trf.xlu0
        %v2653 = vpop.trf.xlu0
        %v2654 = vpop.trf.xlu0
        %v2655 = vpop.trf.xlu0
        %v2656 = vpop.trf.xlu0
        %v2657 = vpop.trf.xlu0
        %v2658 = vpop.trf.xlu0
        %v2659 = vpop.trf.xlu0
        %v2660 = vpop.trf.xlu0
        %v2661 = vpop.trf.xlu0
        %v2662 = vpop.trf.xlu0
        %v2663 = vpop.trf.xlu0
        %v2664 = vpop.trf.xlu0
        %v2665 = vpop.trf.xlu0
        %2666 = vxpose.xlu0.b32.start [1/16] %v1697, 128
        %2667 = vxpose.xlu0.b32.cont [2/16] 0.0, 128
        %2668 = vxpose.xlu0.b32.cont [3/16] 0.0, 128
        %2669 = vxpose.xlu0.b32.cont [4/16] 0.0, 128
        %2670 = vxpose.xlu0.b32.cont [5/16] 0.0, 128
        %2671 = vxpose.xlu0.b32.cont [6/16] 0.0, 128
        %2672 = vxpose.xlu0.b32.cont [7/16] 0.0, 128
        %2673 = vxpose.xlu0.b32.cont [8/16] 0.0, 128
        %2674 = vxpose.xlu0.b32.cont [9/16] 0.0, 128
        %2675 = vxpose.xlu0.b32.cont [10/16] 0.0, 128
        %2676 = vxpose.xlu0.b32.cont [11/16] 0.0, 128
        %2677 = vxpose.xlu0.b32.cont [12/16] 0.0, 128
        %2678 = vxpose.xlu0.b32.cont [13/16] 0.0, 128
        %2679 = vxpose.xlu0.b32.cont [14/16] 0.0, 128
        %2680 = vxpose.xlu0.b32.cont [15/16] 0.0, 128
        %2681 = vxpose.xlu0.b32.end [16/16] 0.0, 128
        %v2682 = vpop.trf.xlu0
        %v2683 = vpop.trf.xlu0
        %v2684 = vpop.trf.xlu0
        %v2685 = vpop.trf.xlu0
        %v2686 = vpop.trf.xlu0
        %v2687 = vpop.trf.xlu0
        %v2688 = vpop.trf.xlu0
        %v2689 = vpop.trf.xlu0
        %v2690 = vpop.trf.xlu0
        %v2691 = vpop.trf.xlu0
        %v2692 = vpop.trf.xlu0
        %v2693 = vpop.trf.xlu0
        %v2694 = vpop.trf.xlu0
        %v2695 = vpop.trf.xlu0
        %v2696 = vpop.trf.xlu0
        %v2697 = vpop.trf.xlu0
        %2698 = vxpose.xlu0.b32.start [1/16] %v1705, 128
        %2699 = vxpose.xlu0.b32.cont [2/16] 0.0, 128
        %2700 = vxpose.xlu0.b32.cont [3/16] 0.0, 128
        %2701 = vxpose.xlu0.b32.cont [4/16] 0.0, 128
        %2702 = vxpose.xlu0.b32.cont [5/16] 0.0, 128
        %2703 = vxpose.xlu0.b32.cont [6/16] 0.0, 128
        %2704 = vxpose.xlu0.b32.cont [7/16] 0.0, 128
        %2705 = vxpose.xlu0.b32.cont [8/16] 0.0, 128
        %2706 = vxpose.xlu0.b32.cont [9/16] 0.0, 128
        %2707 = vxpose.xlu0.b32.cont [10/16] 0.0, 128
        %2708 = vxpose.xlu0.b32.cont [11/16] 0.0, 128
        %2709 = vxpose.xlu0.b32.cont [12/16] 0.0, 128
        %2710 = vxpose.xlu0.b32.cont [13/16] 0.0, 128
        %2711 = vxpose.xlu0.b32.cont [14/16] 0.0, 128
        %2712 = vxpose.xlu0.b32.cont [15/16] 0.0, 128
        %2713 = vxpose.xlu0.b32.end [16/16] 0.0, 128
        %v2714 = vpop.trf.xlu0
        %v2715 = vpop.trf.xlu0
        %v2716 = vpop.trf.xlu0
        %v2717 = vpop.trf.xlu0
        %v2718 = vpop.trf.xlu0
        %v2719 = vpop.trf.xlu0
        %v2720 = vpop.trf.xlu0
        %v2721 = vpop.trf.xlu0
        %v2722 = vpop.trf.xlu0
        %v2723 = vpop.trf.xlu0
        %v2724 = vpop.trf.xlu0
        %v2725 = vpop.trf.xlu0
        %v2726 = vpop.trf.xlu0
        %v2727 = vpop.trf.xlu0
        %v2728 = vpop.trf.xlu0
        %v2729 = vpop.trf.xlu0
        %v2730 = vld [vmem:[%s1] sm:$0xf]
        %vm2731 = vcmask 31744
        %v2733 = vsel %vm2731, %v1722, 0
        %v2736 = vsel %vm2731, %v1723, 0
        %v2739 = vsel %vm2731, %v1724, 0
        %v2742 = vsel %vm2731, %v1725, 0
        %v2745 = vsel %vm2731, %v1754, 0
        %v2748 = vsel %vm2731, %v1755, 0
        %v2751 = vsel %vm2731, %v1756, 0
        %v2754 = vsel %vm2731, %v1757, 0
        %v2757 = vsel %vm2731, %v1786, 0
        %v2760 = vsel %vm2731, %v1787, 0
        %v2763 = vsel %vm2731, %v1788, 0
        %v2766 = vsel %vm2731, %v1789, 0
        %v2769 = vsel %vm2731, %v1818, 0
        %v2772 = vsel %vm2731, %v1819, 0
        %v2775 = vsel %vm2731, %v1820, 0
        %v2778 = vsel %vm2731, %v1821, 0
        %v2781 = vsel %vm2731, %v1850, 0
        %v2784 = vsel %vm2731, %v1851, 0
        %v2787 = vsel %vm2731, %v1852, 0
        %v2790 = vsel %vm2731, %v1853, 0
        %v2793 = vsel %vm2731, %v1882, 0
        %v2796 = vsel %vm2731, %v1883, 0
        %v2799 = vsel %vm2731, %v1884, 0
        %v2802 = vsel %vm2731, %v1885, 0
        %v2805 = vsel %vm2731, %v1914, 0
        %v2808 = vsel %vm2731, %v1915, 0
        %v2811 = vsel %vm2731, %v1916, 0
        %v2814 = vsel %vm2731, %v1917, 0
        %v2817 = vsel %vm2731, %v1946, 0
        %v2820 = vsel %vm2731, %v1947, 0
        %v2823 = vsel %vm2731, %v1948, 0
        %v2826 = vsel %vm2731, %v1949, 0
        %v2829 = vsel %vm2731, %v1978, 0
        %v2832 = vsel %vm2731, %v1979, 0
        %v2835 = vsel %vm2731, %v1980, 0
        %v2838 = vsel %vm2731, %v1981, 0
        %v2841 = vsel %vm2731, %v2010, 0
        %v2844 = vsel %vm2731, %v2011, 0
        %v2847 = vsel %vm2731, %v2012, 0
        %v2850 = vsel %vm2731, %v2013, 0
        %v2853 = vsel %vm2731, %v2042, 0
        %v2856 = vsel %vm2731, %v2043, 0
        %v2859 = vsel %vm2731, %v2044, 0
        %v2862 = vsel %vm2731, %v2045, 0
        %v2865 = vsel %vm2731, %v2074, 0
        %v2868 = vsel %vm2731, %v2075, 0
        %v2871 = vsel %vm2731, %v2076, 0
        %v2874 = vsel %vm2731, %v2077, 0
        %v2877 = vsel %vm2731, %v2106, 0
        %v2880 = vsel %vm2731, %v2107, 0
        %v2883 = vsel %vm2731, %v2108, 0
        %v2886 = vsel %vm2731, %v2109, 0
        %v2889 = vsel %vm2731, %v2138, 0
        %v2892 = vsel %vm2731, %v2139, 0
        %v2895 = vsel %vm2731, %v2140, 0
        %v2898 = vsel %vm2731, %v2141, 0
        %v2901 = vsel %vm2731, %v2170, 0
        %v2904 = vsel %vm2731, %v2171, 0
        %v2907 = vsel %vm2731, %v2172, 0
        %v2910 = vsel %vm2731, %v2173, 0
        %v2913 = vsel %vm2731, %v2202, 0
        %v2916 = vsel %vm2731, %v2203, 0
        %v2919 = vsel %vm2731, %v2204, 0
        %v2922 = vsel %vm2731, %v2205, 0
        %v2925 = vsel %vm2731, %v2234, 0
        %v2928 = vsel %vm2731, %v2235, 0
        %v2931 = vsel %vm2731, %v2236, 0
        %v2934 = vsel %vm2731, %v2237, 0
        %v2937 = vsel %vm2731, %v2266, 0
        %v2940 = vsel %vm2731, %v2267, 0
        %v2943 = vsel %vm2731, %v2268, 0
        %v2946 = vsel %vm2731, %v2269, 0
        %v2949 = vsel %vm2731, %v2298, 0
        %v2952 = vsel %vm2731, %v2299, 0
        %v2955 = vsel %vm2731, %v2300, 0
        %v2958 = vsel %vm2731, %v2301, 0
        %v2961 = vsel %vm2731, %v2330, 0
        %v2964 = vsel %vm2731, %v2331, 0
        %v2967 = vsel %vm2731, %v2332, 0
        %v2970 = vsel %vm2731, %v2333, 0
        %v2973 = vsel %vm2731, %v2362, 0
        %v2976 = vsel %vm2731, %v2363, 0
        %v2979 = vsel %vm2731, %v2364, 0
        %v2982 = vsel %vm2731, %v2365, 0
        %v2985 = vsel %vm2731, %v2394, 0
        %v2988 = vsel %vm2731, %v2395, 0
        %v2991 = vsel %vm2731, %v2396, 0
        %v2994 = vsel %vm2731, %v2397, 0
        %v2997 = vsel %vm2731, %v2426, 0
        %v3000 = vsel %vm2731, %v2427, 0
        %v3003 = vsel %vm2731, %v2428, 0
        %v3006 = vsel %vm2731, %v2429, 0
        %v3009 = vsel %vm2731, %v2458, 0
        %v3012 = vsel %vm2731, %v2459, 0
        %v3015 = vsel %vm2731, %v2460, 0
        %v3018 = vsel %vm2731, %v2461, 0
        %v3021 = vsel %vm2731, %v2490, 0
        %v3024 = vsel %vm2731, %v2491, 0
        %v3027 = vsel %vm2731, %v2492, 0
        %v3030 = vsel %vm2731, %v2493, 0
        %v3033 = vsel %vm2731, %v2522, 0
        %v3036 = vsel %vm2731, %v2523, 0
        %v3039 = vsel %vm2731, %v2524, 0
        %v3042 = vsel %vm2731, %v2525, 0
        %v3045 = vsel %vm2731, %v2554, 0
        %v3048 = vsel %vm2731, %v2555, 0
        %v3051 = vsel %vm2731, %v2556, 0
        %v3054 = vsel %vm2731, %v2557, 0
        %v3057 = vsel %vm2731, %v2586, 0
        %v3060 = vsel %vm2731, %v2587, 0
        %v3063 = vsel %vm2731, %v2588, 0
        %v3066 = vsel %vm2731, %v2589, 0
        %v3069 = vsel %vm2731, %v2618, 0
        %v3072 = vsel %vm2731, %v2619, 0
        %v3075 = vsel %vm2731, %v2620, 0
        %v3078 = vsel %vm2731, %v2621, 0
        %v3081 = vsel %vm2731, %v2650, 0
        %v3084 = vsel %vm2731, %v2651, 0
        %v3087 = vsel %vm2731, %v2652, 0
        %v3090 = vsel %vm2731, %v2653, 0
        %v3093 = vsel %vm2731, %v2682, 0
        %v3096 = vsel %vm2731, %v2683, 0
        %v3099 = vsel %vm2731, %v2684, 0
        %v3102 = vsel %vm2731, %v2685, 0
        %v3105 = vsel %vm2731, %v2714, 0
        %v3108 = vsel %vm2731, %v2715, 0
        %v3111 = vsel %vm2731, %v2716, 0
        %v3114 = vsel %vm2731, %v2717, 0
        %vm3116 = vcmask 1043456
        %v3118 = vsel %vm3116, %v2730, 0
        %3120 = vmatpush.msra.mxu0 0.0
        %3121 = vmatpush.msra.mxu0 0.0
        %3122 = vmatpush.msra.mxu0 0.0
        %3123 = vmatpush.msra.mxu0 0.0
        %3124 = vmatpush.msra.mxu0 0.0
        %3125 = vmatpush.msra.mxu0 0.0
        %3126 = vmatpush.msra.mxu0 0.0
        %3127 = vmatpush.msra.mxu0 0.0
        %3128 = vmatpush.msra.mxu0 0.0
        %3129 = vmatpush.msra.mxu0 0.0
        %3130 = vmatpush.msra.mxu0 0.0
        %3131 = vmatpush.msra.mxu0 0.0
        %3132 = vmatpush.msra.mxu0 0.0
        %3133 = vmatpush.msra.mxu0 0.0
        %3134 = vmatpush.msra.mxu0 0.0
        %v3135 = vand.u32 %v3118, 4294901760
        %3136 = vmatpush.msra.mxu0 %v3135
        %v3137 = vand.u32 %v2733, 4294901760
        %v3138 = vsub.f32 %v2733, %v3137
        %v3139 = vand.u32 %v3138, 4294901760
        %v3140 = vsub.f32 %v3138, %v3139
        %v3141 = vand.u32 %v3140, 4294901760
        %3142 = vmatmul.f32.gmra.mxu0 %v3141
        %v3143 = vpop.f32.mrf.mxu0
        %v3144 = vadd.f32 0.0, %v3143
        %v3145 = vand.u32 %v2736, 4294901760
        %v3146 = vsub.f32 %v2736, %v3145
        %v3147 = vand.u32 %v3146, 4294901760
        %v3148 = vsub.f32 %v3146, %v3147
        %v3149 = vand.u32 %v3148, 4294901760
        %3150 = vmatmul.f32.gmra.mxu0 %v3149
        %v3151 = vpop.f32.mrf.mxu0
        %v3152 = vadd.f32 0.0, %v3151
        %v3153 = vand.u32 %v2739, 4294901760
        %v3154 = vsub.f32 %v2739, %v3153
        %v3155 = vand.u32 %v3154, 4294901760
        %v3156 = vsub.f32 %v3154, %v3155
        %v3157 = vand.u32 %v3156, 4294901760
        %3158 = vmatmul.f32.gmra.mxu0 %v3157
        %v3159 = vpop.f32.mrf.mxu0
        %v3160 = vadd.f32 0.0, %v3159
        %v3161 = vand.u32 %v2742, 4294901760
        %v3162 = vsub.f32 %v2742, %v3161
        %v3163 = vand.u32 %v3162, 4294901760
        %v3164 = vsub.f32 %v3162, %v3163
        %v3165 = vand.u32 %v3164, 4294901760
        %3166 = vmatmul.f32.gmra.mxu0 %v3165
        %v3167 = vpop.f32.mrf.mxu0
        %v3168 = vadd.f32 0.0, %v3167
        %v3169 = vand.u32 %v2745, 4294901760
        %v3170 = vsub.f32 %v2745, %v3169
        %v3171 = vand.u32 %v3170, 4294901760
        %v3172 = vsub.f32 %v3170, %v3171
        %v3173 = vand.u32 %v3172, 4294901760
        %3174 = vmatmul.f32.gmra.mxu0 %v3173
        %v3175 = vpop.f32.mrf.mxu0
        %v3176 = vadd.f32 0.0, %v3175
        %v3177 = vand.u32 %v2748, 4294901760
        %v3178 = vsub.f32 %v2748, %v3177
        %v3179 = vand.u32 %v3178, 4294901760
        %v3180 = vsub.f32 %v3178, %v3179
        %v3181 = vand.u32 %v3180, 4294901760
        %3182 = vmatmul.f32.gmra.mxu0 %v3181
        %v3183 = vpop.f32.mrf.mxu0
        %v3184 = vadd.f32 0.0, %v3183
        %v3185 = vand.u32 %v2751, 4294901760
        %v3186 = vsub.f32 %v2751, %v3185
        %v3187 = vand.u32 %v3186, 4294901760
        %v3188 = vsub.f32 %v3186, %v3187
        %v3189 = vand.u32 %v3188, 4294901760
        %3190 = vmatmul.f32.gmra.mxu0 %v3189
        %v3191 = vpop.f32.mrf.mxu0
        %v3192 = vadd.f32 0.0, %v3191
        %v3193 = vand.u32 %v2754, 4294901760
        %v3194 = vsub.f32 %v2754, %v3193
        %v3195 = vand.u32 %v3194, 4294901760
        %v3196 = vsub.f32 %v3194, %v3195
        %v3197 = vand.u32 %v3196, 4294901760
        %3198 = vmatmul.f32.gmra.mxu0 %v3197
        %v3199 = vpop.f32.mrf.mxu0
        %v3200 = vadd.f32 0.0, %v3199
        %v3201 = vand.u32 %v2757, 4294901760
        %v3202 = vsub.f32 %v2757, %v3201
        %v3203 = vand.u32 %v3202, 4294901760
        %v3204 = vsub.f32 %v3202, %v3203
        %v3205 = vand.u32 %v3204, 4294901760
        %3206 = vmatmul.f32.gmra.mxu0 %v3205
        %v3207 = vpop.f32.mrf.mxu0
        %v3208 = vadd.f32 0.0, %v3207
        %v3209 = vand.u32 %v2760, 4294901760
        %v3210 = vsub.f32 %v2760, %v3209
        %v3211 = vand.u32 %v3210, 4294901760
        %v3212 = vsub.f32 %v3210, %v3211
        %v3213 = vand.u32 %v3212, 4294901760
        %3214 = vmatmul.f32.gmra.mxu0 %v3213
        %v3215 = vpop.f32.mrf.mxu0
        %v3216 = vadd.f32 0.0, %v3215
        %v3217 = vand.u32 %v2763, 4294901760
        %v3218 = vsub.f32 %v2763, %v3217
        %v3219 = vand.u32 %v3218, 4294901760
        %v3220 = vsub.f32 %v3218, %v3219
        %v3221 = vand.u32 %v3220, 4294901760
        %3222 = vmatmul.f32.gmra.mxu0 %v3221
        %v3223 = vpop.f32.mrf.mxu0
        %v3224 = vadd.f32 0.0, %v3223
        %v3225 = vand.u32 %v2766, 4294901760
        %v3226 = vsub.f32 %v2766, %v3225
        %v3227 = vand.u32 %v3226, 4294901760
        %v3228 = vsub.f32 %v3226, %v3227
        %v3229 = vand.u32 %v3228, 4294901760
        %3230 = vmatmul.f32.gmra.mxu0 %v3229
        %v3231 = vpop.f32.mrf.mxu0
        %v3232 = vadd.f32 0.0, %v3231
        %v3233 = vand.u32 %v2769, 4294901760
        %v3234 = vsub.f32 %v2769, %v3233
        %v3235 = vand.u32 %v3234, 4294901760
        %v3236 = vsub.f32 %v3234, %v3235
        %v3237 = vand.u32 %v3236, 4294901760
        %3238 = vmatmul.f32.gmra.mxu0 %v3237
        %v3239 = vpop.f32.mrf.mxu0
        %v3240 = vadd.f32 0.0, %v3239
        %v3241 = vand.u32 %v2772, 4294901760
        %v3242 = vsub.f32 %v2772, %v3241
        %v3243 = vand.u32 %v3242, 4294901760
        %v3244 = vsub.f32 %v3242, %v3243
        %v3245 = vand.u32 %v3244, 4294901760
        %3246 = vmatmul.f32.gmra.mxu0 %v3245
        %v3247 = vpop.f32.mrf.mxu0
        %v3248 = vadd.f32 0.0, %v3247
        %v3249 = vand.u32 %v2775, 4294901760
        %v3250 = vsub.f32 %v2775, %v3249
        %v3251 = vand.u32 %v3250, 4294901760
        %v3252 = vsub.f32 %v3250, %v3251
        %v3253 = vand.u32 %v3252, 4294901760
        %3254 = vmatmul.f32.gmra.mxu0 %v3253
        %v3255 = vpop.f32.mrf.mxu0
        %v3256 = vadd.f32 0.0, %v3255
        %v3257 = vand.u32 %v2778, 4294901760
        %v3258 = vsub.f32 %v2778, %v3257
        %v3259 = vand.u32 %v3258, 4294901760
        %v3260 = vsub.f32 %v3258, %v3259
        %v3261 = vand.u32 %v3260, 4294901760
        %3262 = vmatmul.f32.gmra.mxu0 %v3261
        %v3263 = vpop.f32.mrf.mxu0
        %v3264 = vadd.f32 0.0, %v3263
        %v3265 = vand.u32 %v2781, 4294901760
        %v3266 = vsub.f32 %v2781, %v3265
        %v3267 = vand.u32 %v3266, 4294901760
        %v3268 = vsub.f32 %v3266, %v3267
        %v3269 = vand.u32 %v3268, 4294901760
        %3270 = vmatmul.f32.gmra.mxu0 %v3269
        %v3271 = vpop.f32.mrf.mxu0
        %v3272 = vadd.f32 0.0, %v3271
        %v3273 = vand.u32 %v2784, 4294901760
        %v3274 = vsub.f32 %v2784, %v3273
        %v3275 = vand.u32 %v3274, 4294901760
        %v3276 = vsub.f32 %v3274, %v3275
        %v3277 = vand.u32 %v3276, 4294901760
        %3278 = vmatmul.f32.gmra.mxu0 %v3277
        %v3279 = vpop.f32.mrf.mxu0
        %v3280 = vadd.f32 0.0, %v3279
        %v3281 = vand.u32 %v2787, 4294901760
        %v3282 = vsub.f32 %v2787, %v3281
        %v3283 = vand.u32 %v3282, 4294901760
        %v3284 = vsub.f32 %v3282, %v3283
        %v3285 = vand.u32 %v3284, 4294901760
        %3286 = vmatmul.f32.gmra.mxu0 %v3285
        %v3287 = vpop.f32.mrf.mxu0
        %v3288 = vadd.f32 0.0, %v3287
        %v3289 = vand.u32 %v2790, 4294901760
        %v3290 = vsub.f32 %v2790, %v3289
        %v3291 = vand.u32 %v3290, 4294901760
        %v3292 = vsub.f32 %v3290, %v3291
        %v3293 = vand.u32 %v3292, 4294901760
        %3294 = vmatmul.f32.gmra.mxu0 %v3293
        %v3295 = vpop.f32.mrf.mxu0
        %v3296 = vadd.f32 0.0, %v3295
        %v3297 = vand.u32 %v2793, 4294901760
        %v3298 = vsub.f32 %v2793, %v3297
        %v3299 = vand.u32 %v3298, 4294901760
        %v3300 = vsub.f32 %v3298, %v3299
        %v3301 = vand.u32 %v3300, 4294901760
        %3302 = vmatmul.f32.gmra.mxu0 %v3301
        %v3303 = vpop.f32.mrf.mxu0
        %v3304 = vadd.f32 0.0, %v3303
        %v3305 = vand.u32 %v2796, 4294901760
        %v3306 = vsub.f32 %v2796, %v3305
        %v3307 = vand.u32 %v3306, 4294901760
        %v3308 = vsub.f32 %v3306, %v3307
        %v3309 = vand.u32 %v3308, 4294901760
        %3310 = vmatmul.f32.gmra.mxu0 %v3309
        %v3311 = vpop.f32.mrf.mxu0
        %v3312 = vadd.f32 0.0, %v3311
        %v3313 = vand.u32 %v2799, 4294901760
        %v3314 = vsub.f32 %v2799, %v3313
        %v3315 = vand.u32 %v3314, 4294901760
        %v3316 = vsub.f32 %v3314, %v3315
        %v3317 = vand.u32 %v3316, 4294901760
        %3318 = vmatmul.f32.gmra.mxu0 %v3317
        %v3319 = vpop.f32.mrf.mxu0
        %v3320 = vadd.f32 0.0, %v3319
        %v3321 = vand.u32 %v2802, 4294901760
        %v3322 = vsub.f32 %v2802, %v3321
        %v3323 = vand.u32 %v3322, 4294901760
        %v3324 = vsub.f32 %v3322, %v3323
        %v3325 = vand.u32 %v3324, 4294901760
        %3326 = vmatmul.f32.gmra.mxu0 %v3325
        %v3327 = vpop.f32.mrf.mxu0
        %v3328 = vadd.f32 0.0, %v3327
        %v3329 = vand.u32 %v2805, 4294901760
        %v3330 = vsub.f32 %v2805, %v3329
        %v3331 = vand.u32 %v3330, 4294901760
        %v3332 = vsub.f32 %v3330, %v3331
        %v3333 = vand.u32 %v3332, 4294901760
        %3334 = vmatmul.f32.gmra.mxu0 %v3333
        %v3335 = vpop.f32.mrf.mxu0
        %v3336 = vadd.f32 0.0, %v3335
        %v3337 = vand.u32 %v2808, 4294901760
        %v3338 = vsub.f32 %v2808, %v3337
        %v3339 = vand.u32 %v3338, 4294901760
        %v3340 = vsub.f32 %v3338, %v3339
        %v3341 = vand.u32 %v3340, 4294901760
        %3342 = vmatmul.f32.gmra.mxu0 %v3341
        %v3343 = vpop.f32.mrf.mxu0
        %v3344 = vadd.f32 0.0, %v3343
        %v3345 = vand.u32 %v2811, 4294901760
        %v3346 = vsub.f32 %v2811, %v3345
        %v3347 = vand.u32 %v3346, 4294901760
        %v3348 = vsub.f32 %v3346, %v3347
        %v3349 = vand.u32 %v3348, 4294901760
        %3350 = vmatmul.f32.gmra.mxu0 %v3349
        %v3351 = vpop.f32.mrf.mxu0
        %v3352 = vadd.f32 0.0, %v3351
        %v3353 = vand.u32 %v2814, 4294901760
        %v3354 = vsub.f32 %v2814, %v3353
        %v3355 = vand.u32 %v3354, 4294901760
        %v3356 = vsub.f32 %v3354, %v3355
        %v3357 = vand.u32 %v3356, 4294901760
        %3358 = vmatmul.f32.gmra.mxu0 %v3357
        %v3359 = vpop.f32.mrf.mxu0
        %v3360 = vadd.f32 0.0, %v3359
        %v3361 = vand.u32 %v2817, 4294901760
        %v3362 = vsub.f32 %v2817, %v3361
        %v3363 = vand.u32 %v3362, 4294901760
        %v3364 = vsub.f32 %v3362, %v3363
        %v3365 = vand.u32 %v3364, 4294901760
        %3366 = vmatmul.f32.gmra.mxu0 %v3365
        %v3367 = vpop.f32.mrf.mxu0
        %v3368 = vadd.f32 0.0, %v3367
        %v3369 = vand.u32 %v2820, 4294901760
        %v3370 = vsub.f32 %v2820, %v3369
        %v3371 = vand.u32 %v3370, 4294901760
        %v3372 = vsub.f32 %v3370, %v3371
        %v3373 = vand.u32 %v3372, 4294901760
        %3374 = vmatmul.f32.gmra.mxu0 %v3373
        %v3375 = vpop.f32.mrf.mxu0
        %v3376 = vadd.f32 0.0, %v3375
        %v3377 = vand.u32 %v2823, 4294901760
        %v3378 = vsub.f32 %v2823, %v3377
        %v3379 = vand.u32 %v3378, 4294901760
        %v3380 = vsub.f32 %v3378, %v3379
        %v3381 = vand.u32 %v3380, 4294901760
        %3382 = vmatmul.f32.gmra.mxu0 %v3381
        %v3383 = vpop.f32.mrf.mxu0
        %v3384 = vadd.f32 0.0, %v3383
        %v3385 = vand.u32 %v2826, 4294901760
        %v3386 = vsub.f32 %v2826, %v3385
        %v3387 = vand.u32 %v3386, 4294901760
        %v3388 = vsub.f32 %v3386, %v3387
        %v3389 = vand.u32 %v3388, 4294901760
        %3390 = vmatmul.f32.gmra.mxu0 %v3389
        %v3391 = vpop.f32.mrf.mxu0
        %v3392 = vadd.f32 0.0, %v3391
        %v3393 = vand.u32 %v2829, 4294901760
        %v3394 = vsub.f32 %v2829, %v3393
        %v3395 = vand.u32 %v3394, 4294901760
        %v3396 = vsub.f32 %v3394, %v3395
        %v3397 = vand.u32 %v3396, 4294901760
        %3398 = vmatmul.f32.gmra.mxu0 %v3397
        %v3399 = vpop.f32.mrf.mxu0
        %v3400 = vadd.f32 0.0, %v3399
        %v3401 = vand.u32 %v2832, 4294901760
        %v3402 = vsub.f32 %v2832, %v3401
        %v3403 = vand.u32 %v3402, 4294901760
        %v3404 = vsub.f32 %v3402, %v3403
        %v3405 = vand.u32 %v3404, 4294901760
        %3406 = vmatmul.f32.gmra.mxu0 %v3405
        %v3407 = vpop.f32.mrf.mxu0
        %v3408 = vadd.f32 0.0, %v3407
        %v3409 = vand.u32 %v2835, 4294901760
        %v3410 = vsub.f32 %v2835, %v3409
        %v3411 = vand.u32 %v3410, 4294901760
        %v3412 = vsub.f32 %v3410, %v3411
        %v3413 = vand.u32 %v3412, 4294901760
        %3414 = vmatmul.f32.gmra.mxu0 %v3413
        %v3415 = vpop.f32.mrf.mxu0
        %v3416 = vadd.f32 0.0, %v3415
        %v3417 = vand.u32 %v2838, 4294901760
        %v3418 = vsub.f32 %v2838, %v3417
        %v3419 = vand.u32 %v3418, 4294901760
        %v3420 = vsub.f32 %v3418, %v3419
        %v3421 = vand.u32 %v3420, 4294901760
        %3422 = vmatmul.f32.gmra.mxu0 %v3421
        %v3423 = vpop.f32.mrf.mxu0
        %v3424 = vadd.f32 0.0, %v3423
        %v3425 = vand.u32 %v2841, 4294901760
        %v3426 = vsub.f32 %v2841, %v3425
        %v3427 = vand.u32 %v3426, 4294901760
        %v3428 = vsub.f32 %v3426, %v3427
        %v3429 = vand.u32 %v3428, 4294901760
        %3430 = vmatmul.f32.gmra.mxu0 %v3429
        %v3431 = vpop.f32.mrf.mxu0
        %v3432 = vadd.f32 0.0, %v3431
        %v3433 = vand.u32 %v2844, 4294901760
        %v3434 = vsub.f32 %v2844, %v3433
        %v3435 = vand.u32 %v3434, 4294901760
        %v3436 = vsub.f32 %v3434, %v3435
        %v3437 = vand.u32 %v3436, 4294901760
        %3438 = vmatmul.f32.gmra.mxu0 %v3437
        %v3439 = vpop.f32.mrf.mxu0
        %v3440 = vadd.f32 0.0, %v3439
        %v3441 = vand.u32 %v2847, 4294901760
        %v3442 = vsub.f32 %v2847, %v3441
        %v3443 = vand.u32 %v3442, 4294901760
        %v3444 = vsub.f32 %v3442, %v3443
        %v3445 = vand.u32 %v3444, 4294901760
        %3446 = vmatmul.f32.gmra.mxu0 %v3445
        %v3447 = vpop.f32.mrf.mxu0
        %v3448 = vadd.f32 0.0, %v3447
        %v3449 = vand.u32 %v2850, 4294901760
        %v3450 = vsub.f32 %v2850, %v3449
        %v3451 = vand.u32 %v3450, 4294901760
        %v3452 = vsub.f32 %v3450, %v3451
        %v3453 = vand.u32 %v3452, 4294901760
        %3454 = vmatmul.f32.gmra.mxu0 %v3453
        %v3455 = vpop.f32.mrf.mxu0
        %v3456 = vadd.f32 0.0, %v3455
        %v3457 = vand.u32 %v2853, 4294901760
        %v3458 = vsub.f32 %v2853, %v3457
        %v3459 = vand.u32 %v3458, 4294901760
        %v3460 = vsub.f32 %v3458, %v3459
        %v3461 = vand.u32 %v3460, 4294901760
        %3462 = vmatmul.f32.gmra.mxu0 %v3461
        %v3463 = vpop.f32.mrf.mxu0
        %v3464 = vadd.f32 0.0, %v3463
        %v3465 = vand.u32 %v2856, 4294901760
        %v3466 = vsub.f32 %v2856, %v3465
        %v3467 = vand.u32 %v3466, 4294901760
        %v3468 = vsub.f32 %v3466, %v3467
        %v3469 = vand.u32 %v3468, 4294901760
        %3470 = vmatmul.f32.gmra.mxu0 %v3469
        %v3471 = vpop.f32.mrf.mxu0
        %v3472 = vadd.f32 0.0, %v3471
        %v3473 = vand.u32 %v2859, 4294901760
        %v3474 = vsub.f32 %v2859, %v3473
        %v3475 = vand.u32 %v3474, 4294901760
        %v3476 = vsub.f32 %v3474, %v3475
        %v3477 = vand.u32 %v3476, 4294901760
        %3478 = vmatmul.f32.gmra.mxu0 %v3477
        %v3479 = vpop.f32.mrf.mxu0
        %v3480 = vadd.f32 0.0, %v3479
        %v3481 = vand.u32 %v2862, 4294901760
        %v3482 = vsub.f32 %v2862, %v3481
        %v3483 = vand.u32 %v3482, 4294901760
        %v3484 = vsub.f32 %v3482, %v3483
        %v3485 = vand.u32 %v3484, 4294901760
        %3486 = vmatmul.f32.gmra.mxu0 %v3485
        %v3487 = vpop.f32.mrf.mxu0
        %v3488 = vadd.f32 0.0, %v3487
        %v3489 = vand.u32 %v2865, 4294901760
        %v3490 = vsub.f32 %v2865, %v3489
        %v3491 = vand.u32 %v3490, 4294901760
        %v3492 = vsub.f32 %v3490, %v3491
        %v3493 = vand.u32 %v3492, 4294901760
        %3494 = vmatmul.f32.gmra.mxu0 %v3493
        %v3495 = vpop.f32.mrf.mxu0
        %v3496 = vadd.f32 0.0, %v3495
        %v3497 = vand.u32 %v2868, 4294901760
        %v3498 = vsub.f32 %v2868, %v3497
        %v3499 = vand.u32 %v3498, 4294901760
        %v3500 = vsub.f32 %v3498, %v3499
        %v3501 = vand.u32 %v3500, 4294901760
        %3502 = vmatmul.f32.gmra.mxu0 %v3501
        %v3503 = vpop.f32.mrf.mxu0
        %v3504 = vadd.f32 0.0, %v3503
        %v3505 = vand.u32 %v2871, 4294901760
        %v3506 = vsub.f32 %v2871, %v3505
        %v3507 = vand.u32 %v3506, 4294901760
        %v3508 = vsub.f32 %v3506, %v3507
        %v3509 = vand.u32 %v3508, 4294901760
        %3510 = vmatmul.f32.gmra.mxu0 %v3509
        %v3511 = vpop.f32.mrf.mxu0
        %v3512 = vadd.f32 0.0, %v3511
        %v3513 = vand.u32 %v2874, 4294901760
        %v3514 = vsub.f32 %v2874, %v3513
        %v3515 = vand.u32 %v3514, 4294901760
        %v3516 = vsub.f32 %v3514, %v3515
        %v3517 = vand.u32 %v3516, 4294901760
        %3518 = vmatmul.f32.gmra.mxu0 %v3517
        %v3519 = vpop.f32.mrf.mxu0
        %v3520 = vadd.f32 0.0, %v3519
        %v3521 = vand.u32 %v2877, 4294901760
        %v3522 = vsub.f32 %v2877, %v3521
        %v3523 = vand.u32 %v3522, 4294901760
        %v3524 = vsub.f32 %v3522, %v3523
        %v3525 = vand.u32 %v3524, 4294901760
        %3526 = vmatmul.f32.gmra.mxu0 %v3525
        %v3527 = vpop.f32.mrf.mxu0
        %v3528 = vadd.f32 0.0, %v3527
        %v3529 = vand.u32 %v2880, 4294901760
        %v3530 = vsub.f32 %v2880, %v3529
        %v3531 = vand.u32 %v3530, 4294901760
        %v3532 = vsub.f32 %v3530, %v3531
        %v3533 = vand.u32 %v3532, 4294901760
        %3534 = vmatmul.f32.gmra.mxu0 %v3533
        %v3535 = vpop.f32.mrf.mxu0
        %v3536 = vadd.f32 0.0, %v3535
        %v3537 = vand.u32 %v2883, 4294901760
        %v3538 = vsub.f32 %v2883, %v3537
        %v3539 = vand.u32 %v3538, 4294901760
        %v3540 = vsub.f32 %v3538, %v3539
        %v3541 = vand.u32 %v3540, 4294901760
        %3542 = vmatmul.f32.gmra.mxu0 %v3541
        %v3543 = vpop.f32.mrf.mxu0
        %v3544 = vadd.f32 0.0, %v3543
        %v3545 = vand.u32 %v2886, 4294901760
        %v3546 = vsub.f32 %v2886, %v3545
        %v3547 = vand.u32 %v3546, 4294901760
        %v3548 = vsub.f32 %v3546, %v3547
        %v3549 = vand.u32 %v3548, 4294901760
        %3550 = vmatmul.f32.gmra.mxu0 %v3549
        %v3551 = vpop.f32.mrf.mxu0
        %v3552 = vadd.f32 0.0, %v3551
        %v3553 = vand.u32 %v2889, 4294901760
        %v3554 = vsub.f32 %v2889, %v3553
        %v3555 = vand.u32 %v3554, 4294901760
        %v3556 = vsub.f32 %v3554, %v3555
        %v3557 = vand.u32 %v3556, 4294901760
        %3558 = vmatmul.f32.gmra.mxu0 %v3557
        %v3559 = vpop.f32.mrf.mxu0
        %v3560 = vadd.f32 0.0, %v3559
        %v3561 = vand.u32 %v2892, 4294901760
        %v3562 = vsub.f32 %v2892, %v3561
        %v3563 = vand.u32 %v3562, 4294901760
        %v3564 = vsub.f32 %v3562, %v3563
        %v3565 = vand.u32 %v3564, 4294901760
        %3566 = vmatmul.f32.gmra.mxu0 %v3565
        %v3567 = vpop.f32.mrf.mxu0
        %v3568 = vadd.f32 0.0, %v3567
        %v3569 = vand.u32 %v2895, 4294901760
        %v3570 = vsub.f32 %v2895, %v3569
        %v3571 = vand.u32 %v3570, 4294901760
        %v3572 = vsub.f32 %v3570, %v3571
        %v3573 = vand.u32 %v3572, 4294901760
        %3574 = vmatmul.f32.gmra.mxu0 %v3573
        %v3575 = vpop.f32.mrf.mxu0
        %v3576 = vadd.f32 0.0, %v3575
        %v3577 = vand.u32 %v2898, 4294901760
        %v3578 = vsub.f32 %v2898, %v3577
        %v3579 = vand.u32 %v3578, 4294901760
        %v3580 = vsub.f32 %v3578, %v3579
        %v3581 = vand.u32 %v3580, 4294901760
        %3582 = vmatmul.f32.gmra.mxu0 %v3581
        %v3583 = vpop.f32.mrf.mxu0
        %v3584 = vadd.f32 0.0, %v3583
        %v3585 = vand.u32 %v2901, 4294901760
        %v3586 = vsub.f32 %v2901, %v3585
        %v3587 = vand.u32 %v3586, 4294901760
        %v3588 = vsub.f32 %v3586, %v3587
        %v3589 = vand.u32 %v3588, 4294901760
        %3590 = vmatmul.f32.gmra.mxu0 %v3589
        %v3591 = vpop.f32.mrf.mxu0
        %v3592 = vadd.f32 0.0, %v3591
        %v3593 = vand.u32 %v2904, 4294901760
        %v3594 = vsub.f32 %v2904, %v3593
        %v3595 = vand.u32 %v3594, 4294901760
        %v3596 = vsub.f32 %v3594, %v3595
        %v3597 = vand.u32 %v3596, 4294901760
        %3598 = vmatmul.f32.gmra.mxu0 %v3597
        %v3599 = vpop.f32.mrf.mxu0
        %v3600 = vadd.f32 0.0, %v3599
        %v3601 = vand.u32 %v2907, 4294901760
        %v3602 = vsub.f32 %v2907, %v3601
        %v3603 = vand.u32 %v3602, 4294901760
        %v3604 = vsub.f32 %v3602, %v3603
        %v3605 = vand.u32 %v3604, 4294901760
        %3606 = vmatmul.f32.gmra.mxu0 %v3605
        %v3607 = vpop.f32.mrf.mxu0
        %v3608 = vadd.f32 0.0, %v3607
        %v3609 = vand.u32 %v2910, 4294901760
        %v3610 = vsub.f32 %v2910, %v3609
        %v3611 = vand.u32 %v3610, 4294901760
        %v3612 = vsub.f32 %v3610, %v3611
        %v3613 = vand.u32 %v3612, 4294901760
        %3614 = vmatmul.f32.gmra.mxu0 %v3613
        %v3615 = vpop.f32.mrf.mxu0
        %v3616 = vadd.f32 0.0, %v3615
        %v3617 = vand.u32 %v2913, 4294901760
        %v3618 = vsub.f32 %v2913, %v3617
        %v3619 = vand.u32 %v3618, 4294901760
        %v3620 = vsub.f32 %v3618, %v3619
        %v3621 = vand.u32 %v3620, 4294901760
        %3622 = vmatmul.f32.gmra.mxu0 %v3621
        %v3623 = vpop.f32.mrf.mxu0
        %v3624 = vadd.f32 0.0, %v3623
        %v3625 = vand.u32 %v2916, 4294901760
        %v3626 = vsub.f32 %v2916, %v3625
        %v3627 = vand.u32 %v3626, 4294901760
        %v3628 = vsub.f32 %v3626, %v3627
        %v3629 = vand.u32 %v3628, 4294901760
        %3630 = vmatmul.f32.gmra.mxu0 %v3629
        %v3631 = vpop.f32.mrf.mxu0
        %v3632 = vadd.f32 0.0, %v3631
        %v3633 = vand.u32 %v2919, 4294901760
        %v3634 = vsub.f32 %v2919, %v3633
        %v3635 = vand.u32 %v3634, 4294901760
        %v3636 = vsub.f32 %v3634, %v3635
        %v3637 = vand.u32 %v3636, 4294901760
        %3638 = vmatmul.f32.gmra.mxu0 %v3637
        %v3639 = vpop.f32.mrf.mxu0
        %v3640 = vadd.f32 0.0, %v3639
        %v3641 = vand.u32 %v2922, 4294901760
        %v3642 = vsub.f32 %v2922, %v3641
        %v3643 = vand.u32 %v3642, 4294901760
        %v3644 = vsub.f32 %v3642, %v3643
        %v3645 = vand.u32 %v3644, 4294901760
        %3646 = vmatmul.f32.gmra.mxu0 %v3645
        %v3647 = vpop.f32.mrf.mxu0
        %v3648 = vadd.f32 0.0, %v3647
        %v3649 = vand.u32 %v2925, 4294901760
        %v3650 = vsub.f32 %v2925, %v3649
        %v3651 = vand.u32 %v3650, 4294901760
        %v3652 = vsub.f32 %v3650, %v3651
        %v3653 = vand.u32 %v3652, 4294901760
        %3654 = vmatmul.f32.gmra.mxu0 %v3653
        %v3655 = vpop.f32.mrf.mxu0
        %v3656 = vadd.f32 0.0, %v3655
        %v3657 = vand.u32 %v2928, 4294901760
        %v3658 = vsub.f32 %v2928, %v3657
        %v3659 = vand.u32 %v3658, 4294901760
        %v3660 = vsub.f32 %v3658, %v3659
        %v3661 = vand.u32 %v3660, 4294901760
        %3662 = vmatmul.f32.gmra.mxu0 %v3661
        %v3663 = vpop.f32.mrf.mxu0
        %v3664 = vadd.f32 0.0, %v3663
        %v3665 = vand.u32 %v2931, 4294901760
        %v3666 = vsub.f32 %v2931, %v3665
        %v3667 = vand.u32 %v3666, 4294901760
        %v3668 = vsub.f32 %v3666, %v3667
        %v3669 = vand.u32 %v3668, 4294901760
        %3670 = vmatmul.f32.gmra.mxu0 %v3669
        %v3671 = vpop.f32.mrf.mxu0
        %v3672 = vadd.f32 0.0, %v3671
        %v3673 = vand.u32 %v2934, 4294901760
        %v3674 = vsub.f32 %v2934, %v3673
        %v3675 = vand.u32 %v3674, 4294901760
        %v3676 = vsub.f32 %v3674, %v3675
        %v3677 = vand.u32 %v3676, 4294901760
        %3678 = vmatmul.f32.gmra.mxu0 %v3677
        %v3679 = vpop.f32.mrf.mxu0
        %v3680 = vadd.f32 0.0, %v3679
        %v3681 = vand.u32 %v2937, 4294901760
        %v3682 = vsub.f32 %v2937, %v3681
        %v3683 = vand.u32 %v3682, 4294901760
        %v3684 = vsub.f32 %v3682, %v3683
        %v3685 = vand.u32 %v3684, 4294901760
        %3686 = vmatmul.f32.gmra.mxu0 %v3685
        %v3687 = vpop.f32.mrf.mxu0
        %v3688 = vadd.f32 0.0, %v3687
        %v3689 = vand.u32 %v2940, 4294901760
        %v3690 = vsub.f32 %v2940, %v3689
        %v3691 = vand.u32 %v3690, 4294901760
        %v3692 = vsub.f32 %v3690, %v3691
        %v3693 = vand.u32 %v3692, 4294901760
        %3694 = vmatmul.f32.gmra.mxu0 %v3693
        %v3695 = vpop.f32.mrf.mxu0
        %v3696 = vadd.f32 0.0, %v3695
        %v3697 = vand.u32 %v2943, 4294901760
        %v3698 = vsub.f32 %v2943, %v3697
        %v3699 = vand.u32 %v3698, 4294901760
        %v3700 = vsub.f32 %v3698, %v3699
        %v3701 = vand.u32 %v3700, 4294901760
        %3702 = vmatmul.f32.gmra.mxu0 %v3701
        %v3703 = vpop.f32.mrf.mxu0
        %v3704 = vadd.f32 0.0, %v3703
        %v3705 = vand.u32 %v2946, 4294901760
        %v3706 = vsub.f32 %v2946, %v3705
        %v3707 = vand.u32 %v3706, 4294901760
        %v3708 = vsub.f32 %v3706, %v3707
        %v3709 = vand.u32 %v3708, 4294901760
        %3710 = vmatmul.f32.gmra.mxu0 %v3709
        %v3711 = vpop.f32.mrf.mxu0
        %v3712 = vadd.f32 0.0, %v3711
        %v3713 = vand.u32 %v2949, 4294901760
        %v3714 = vsub.f32 %v2949, %v3713
        %v3715 = vand.u32 %v3714, 4294901760
        %v3716 = vsub.f32 %v3714, %v3715
        %v3717 = vand.u32 %v3716, 4294901760
        %3718 = vmatmul.f32.gmra.mxu0 %v3717
        %v3719 = vpop.f32.mrf.mxu0
        %v3720 = vadd.f32 0.0, %v3719
        %v3721 = vand.u32 %v2952, 4294901760
        %v3722 = vsub.f32 %v2952, %v3721
        %v3723 = vand.u32 %v3722, 4294901760
        %v3724 = vsub.f32 %v3722, %v3723
        %v3725 = vand.u32 %v3724, 4294901760
        %3726 = vmatmul.f32.gmra.mxu0 %v3725
        %v3727 = vpop.f32.mrf.mxu0
        %v3728 = vadd.f32 0.0, %v3727
        %v3729 = vand.u32 %v2955, 4294901760
        %v3730 = vsub.f32 %v2955, %v3729
        %v3731 = vand.u32 %v3730, 4294901760
        %v3732 = vsub.f32 %v3730, %v3731
        %v3733 = vand.u32 %v3732, 4294901760
        %3734 = vmatmul.f32.gmra.mxu0 %v3733
        %v3735 = vpop.f32.mrf.mxu0
        %v3736 = vadd.f32 0.0, %v3735
        %v3737 = vand.u32 %v2958, 4294901760
        %v3738 = vsub.f32 %v2958, %v3737
        %v3739 = vand.u32 %v3738, 4294901760
        %v3740 = vsub.f32 %v3738, %v3739
        %v3741 = vand.u32 %v3740, 4294901760
        %3742 = vmatmul.f32.gmra.mxu0 %v3741
        %v3743 = vpop.f32.mrf.mxu0
        %v3744 = vadd.f32 0.0, %v3743
        %v3745 = vand.u32 %v2961, 4294901760
        %v3746 = vsub.f32 %v2961, %v3745
        %v3747 = vand.u32 %v3746, 4294901760
        %v3748 = vsub.f32 %v3746, %v3747
        %v3749 = vand.u32 %v3748, 4294901760
        %3750 = vmatmul.f32.gmra.mxu0 %v3749
        %v3751 = vpop.f32.mrf.mxu0
        %v3752 = vadd.f32 0.0, %v3751
        %v3753 = vand.u32 %v2964, 4294901760
        %v3754 = vsub.f32 %v2964, %v3753
        %v3755 = vand.u32 %v3754, 4294901760
        %v3756 = vsub.f32 %v3754, %v3755
        %v3757 = vand.u32 %v3756, 4294901760
        %3758 = vmatmul.f32.gmra.mxu0 %v3757
        %v3759 = vpop.f32.mrf.mxu0
        %v3760 = vadd.f32 0.0, %v3759
        %v3761 = vand.u32 %v2967, 4294901760
        %v3762 = vsub.f32 %v2967, %v3761
        %v3763 = vand.u32 %v3762, 4294901760
        %v3764 = vsub.f32 %v3762, %v3763
        %v3765 = vand.u32 %v3764, 4294901760
        %3766 = vmatmul.f32.gmra.mxu0 %v3765
        %v3767 = vpop.f32.mrf.mxu0
        %v3768 = vadd.f32 0.0, %v3767
        %v3769 = vand.u32 %v2970, 4294901760
        %v3770 = vsub.f32 %v2970, %v3769
        %v3771 = vand.u32 %v3770, 4294901760
        %v3772 = vsub.f32 %v3770, %v3771
        %v3773 = vand.u32 %v3772, 4294901760
        %3774 = vmatmul.f32.gmra.mxu0 %v3773
        %v3775 = vpop.f32.mrf.mxu0
        %v3776 = vadd.f32 0.0, %v3775
        %v3777 = vand.u32 %v2973, 4294901760
        %v3778 = vsub.f32 %v2973, %v3777
        %v3779 = vand.u32 %v3778, 4294901760
        %v3780 = vsub.f32 %v3778, %v3779
        %v3781 = vand.u32 %v3780, 4294901760
        %3782 = vmatmul.f32.gmra.mxu0 %v3781
        %v3783 = vpop.f32.mrf.mxu0
        %v3784 = vadd.f32 0.0, %v3783
        %v3785 = vand.u32 %v2976, 4294901760
        %v3786 = vsub.f32 %v2976, %v3785
        %v3787 = vand.u32 %v3786, 4294901760
        %v3788 = vsub.f32 %v3786, %v3787
        %v3789 = vand.u32 %v3788, 4294901760
        %3790 = vmatmul.f32.gmra.mxu0 %v3789
        %v3791 = vpop.f32.mrf.mxu0
        %v3792 = vadd.f32 0.0, %v3791
        %v3793 = vand.u32 %v2979, 4294901760
        %v3794 = vsub.f32 %v2979, %v3793
        %v3795 = vand.u32 %v3794, 4294901760
        %v3796 = vsub.f32 %v3794, %v3795
        %v3797 = vand.u32 %v3796, 4294901760
        %3798 = vmatmul.f32.gmra.mxu0 %v3797
        %v3799 = vpop.f32.mrf.mxu0
        %v3800 = vadd.f32 0.0, %v3799
        %v3801 = vand.u32 %v2982, 4294901760
        %v3802 = vsub.f32 %v2982, %v3801
        %v3803 = vand.u32 %v3802, 4294901760
        %v3804 = vsub.f32 %v3802, %v3803
        %v3805 = vand.u32 %v3804, 4294901760
        %3806 = vmatmul.f32.gmra.mxu0 %v3805
        %v3807 = vpop.f32.mrf.mxu0
        %v3808 = vadd.f32 0.0, %v3807
        %v3809 = vand.u32 %v2985, 4294901760
        %v3810 = vsub.f32 %v2985, %v3809
        %v3811 = vand.u32 %v3810, 4294901760
        %v3812 = vsub.f32 %v3810, %v3811
        %v3813 = vand.u32 %v3812, 4294901760
        %3814 = vmatmul.f32.gmra.mxu0 %v3813
        %v3815 = vpop.f32.mrf.mxu0
        %v3816 = vadd.f32 0.0, %v3815
        %v3817 = vand.u32 %v2988, 4294901760
        %v3818 = vsub.f32 %v2988, %v3817
        %v3819 = vand.u32 %v3818, 4294901760
        %v3820 = vsub.f32 %v3818, %v3819
        %v3821 = vand.u32 %v3820, 4294901760
        %3822 = vmatmul.f32.gmra.mxu0 %v3821
        %v3823 = vpop.f32.mrf.mxu0
        %v3824 = vadd.f32 0.0, %v3823
        %v3825 = vand.u32 %v2991, 4294901760
        %v3826 = vsub.f32 %v2991, %v3825
        %v3827 = vand.u32 %v3826, 4294901760
        %v3828 = vsub.f32 %v3826, %v3827
        %v3829 = vand.u32 %v3828, 4294901760
        %3830 = vmatmul.f32.gmra.mxu0 %v3829
        %v3831 = vpop.f32.mrf.mxu0
        %v3832 = vadd.f32 0.0, %v3831
        %v3833 = vand.u32 %v2994, 4294901760
        %v3834 = vsub.f32 %v2994, %v3833
        %v3835 = vand.u32 %v3834, 4294901760
        %v3836 = vsub.f32 %v3834, %v3835
        %v3837 = vand.u32 %v3836, 4294901760
        %3838 = vmatmul.f32.gmra.mxu0 %v3837
        %v3839 = vpop.f32.mrf.mxu0
        %v3840 = vadd.f32 0.0, %v3839
        %v3841 = vand.u32 %v2997, 4294901760
        %v3842 = vsub.f32 %v2997, %v3841
        %v3843 = vand.u32 %v3842, 4294901760
        %v3844 = vsub.f32 %v3842, %v3843
        %v3845 = vand.u32 %v3844, 4294901760
        %3846 = vmatmul.f32.gmra.mxu0 %v3845
        %v3847 = vpop.f32.mrf.mxu0
        %v3848 = vadd.f32 0.0, %v3847
        %v3849 = vand.u32 %v3000, 4294901760
        %v3850 = vsub.f32 %v3000, %v3849
        %v3851 = vand.u32 %v3850, 4294901760
        %v3852 = vsub.f32 %v3850, %v3851
        %v3853 = vand.u32 %v3852, 4294901760
        %3854 = vmatmul.f32.gmra.mxu0 %v3853
        %v3855 = vpop.f32.mrf.mxu0
        %v3856 = vadd.f32 0.0, %v3855
        %v3857 = vand.u32 %v3003, 4294901760
        %v3858 = vsub.f32 %v3003, %v3857
        %v3859 = vand.u32 %v3858, 4294901760
        %v3860 = vsub.f32 %v3858, %v3859
        %v3861 = vand.u32 %v3860, 4294901760
        %3862 = vmatmul.f32.gmra.mxu0 %v3861
        %v3863 = vpop.f32.mrf.mxu0
        %v3864 = vadd.f32 0.0, %v3863
        %v3865 = vand.u32 %v3006, 4294901760
        %v3866 = vsub.f32 %v3006, %v3865
        %v3867 = vand.u32 %v3866, 4294901760
        %v3868 = vsub.f32 %v3866, %v3867
        %v3869 = vand.u32 %v3868, 4294901760
        %3870 = vmatmul.f32.gmra.mxu0 %v3869
        %v3871 = vpop.f32.mrf.mxu0
        %v3872 = vadd.f32 0.0, %v3871
        %v3873 = vand.u32 %v3009, 4294901760
        %v3874 = vsub.f32 %v3009, %v3873
        %v3875 = vand.u32 %v3874, 4294901760
        %v3876 = vsub.f32 %v3874, %v3875
        %v3877 = vand.u32 %v3876, 4294901760
        %3878 = vmatmul.f32.gmra.mxu0 %v3877
        %v3879 = vpop.f32.mrf.mxu0
        %v3880 = vadd.f32 0.0, %v3879
        %v3881 = vand.u32 %v3012, 4294901760
        %v3882 = vsub.f32 %v3012, %v3881
        %v3883 = vand.u32 %v3882, 4294901760
        %v3884 = vsub.f32 %v3882, %v3883
        %v3885 = vand.u32 %v3884, 4294901760
        %3886 = vmatmul.f32.gmra.mxu0 %v3885
        %v3887 = vpop.f32.mrf.mxu0
        %v3888 = vadd.f32 0.0, %v3887
        %v3889 = vand.u32 %v3015, 4294901760
        %v3890 = vsub.f32 %v3015, %v3889
        %v3891 = vand.u32 %v3890, 4294901760
        %v3892 = vsub.f32 %v3890, %v3891
        %v3893 = vand.u32 %v3892, 4294901760
        %3894 = vmatmul.f32.gmra.mxu0 %v3893
        %v3895 = vpop.f32.mrf.mxu0
        %v3896 = vadd.f32 0.0, %v3895
        %v3897 = vand.u32 %v3018, 4294901760
        %v3898 = vsub.f32 %v3018, %v3897
        %v3899 = vand.u32 %v3898, 4294901760
        %v3900 = vsub.f32 %v3898, %v3899
        %v3901 = vand.u32 %v3900, 4294901760
        %3902 = vmatmul.f32.gmra.mxu0 %v3901
        %v3903 = vpop.f32.mrf.mxu0
        %v3904 = vadd.f32 0.0, %v3903
        %v3905 = vand.u32 %v3021, 4294901760
        %v3906 = vsub.f32 %v3021, %v3905
        %v3907 = vand.u32 %v3906, 4294901760
        %v3908 = vsub.f32 %v3906, %v3907
        %v3909 = vand.u32 %v3908, 4294901760
        %3910 = vmatmul.f32.gmra.mxu0 %v3909
        %v3911 = vpop.f32.mrf.mxu0
        %v3912 = vadd.f32 0.0, %v3911
        %v3913 = vand.u32 %v3024, 4294901760
        %v3914 = vsub.f32 %v3024, %v3913
        %v3915 = vand.u32 %v3914, 4294901760
        %v3916 = vsub.f32 %v3914, %v3915
        %v3917 = vand.u32 %v3916, 4294901760
        %3918 = vmatmul.f32.gmra.mxu0 %v3917
        %v3919 = vpop.f32.mrf.mxu0
        %v3920 = vadd.f32 0.0, %v3919
        %v3921 = vand.u32 %v3027, 4294901760
        %v3922 = vsub.f32 %v3027, %v3921
        %v3923 = vand.u32 %v3922, 4294901760
        %v3924 = vsub.f32 %v3922, %v3923
        %v3925 = vand.u32 %v3924, 4294901760
        %3926 = vmatmul.f32.gmra.mxu0 %v3925
        %v3927 = vpop.f32.mrf.mxu0
        %v3928 = vadd.f32 0.0, %v3927
        %v3929 = vand.u32 %v3030, 4294901760
        %v3930 = vsub.f32 %v3030, %v3929
        %v3931 = vand.u32 %v3930, 4294901760
        %v3932 = vsub.f32 %v3930, %v3931
        %v3933 = vand.u32 %v3932, 4294901760
        %3934 = vmatmul.f32.gmra.mxu0 %v3933
        %v3935 = vpop.f32.mrf.mxu0
        %v3936 = vadd.f32 0.0, %v3935
        %v3937 = vand.u32 %v3033, 4294901760
        %v3938 = vsub.f32 %v3033, %v3937
        %v3939 = vand.u32 %v3938, 4294901760
        %v3940 = vsub.f32 %v3938, %v3939
        %v3941 = vand.u32 %v3940, 4294901760
        %3942 = vmatmul.f32.gmra.mxu0 %v3941
        %v3943 = vpop.f32.mrf.mxu0
        %v3944 = vadd.f32 0.0, %v3943
        %v3945 = vand.u32 %v3036, 4294901760
        %v3946 = vsub.f32 %v3036, %v3945
        %v3947 = vand.u32 %v3946, 4294901760
        %v3948 = vsub.f32 %v3946, %v3947
        %v3949 = vand.u32 %v3948, 4294901760
        %3950 = vmatmul.f32.gmra.mxu0 %v3949
        %v3951 = vpop.f32.mrf.mxu0
        %v3952 = vadd.f32 0.0, %v3951
        %v3953 = vand.u32 %v3039, 4294901760
        %v3954 = vsub.f32 %v3039, %v3953
        %v3955 = vand.u32 %v3954, 4294901760
        %v3956 = vsub.f32 %v3954, %v3955
        %v3957 = vand.u32 %v3956, 4294901760
        %3958 = vmatmul.f32.gmra.mxu0 %v3957
        %v3959 = vpop.f32.mrf.mxu0
        %v3960 = vadd.f32 0.0, %v3959
        %v3961 = vand.u32 %v3042, 4294901760
        %v3962 = vsub.f32 %v3042, %v3961
        %v3963 = vand.u32 %v3962, 4294901760
        %v3964 = vsub.f32 %v3962, %v3963
        %v3965 = vand.u32 %v3964, 4294901760
        %3966 = vmatmul.f32.gmra.mxu0 %v3965
        %v3967 = vpop.f32.mrf.mxu0
        %v3968 = vadd.f32 0.0, %v3967
        %v3969 = vand.u32 %v3045, 4294901760
        %v3970 = vsub.f32 %v3045, %v3969
        %v3971 = vand.u32 %v3970, 4294901760
        %v3972 = vsub.f32 %v3970, %v3971
        %v3973 = vand.u32 %v3972, 4294901760
        %3974 = vmatmul.f32.gmra.mxu0 %v3973
        %v3975 = vpop.f32.mrf.mxu0
        %v3976 = vadd.f32 0.0, %v3975
        %v3977 = vand.u32 %v3048, 4294901760
        %v3978 = vsub.f32 %v3048, %v3977
        %v3979 = vand.u32 %v3978, 4294901760
        %v3980 = vsub.f32 %v3978, %v3979
        %v3981 = vand.u32 %v3980, 4294901760
        %3982 = vmatmul.f32.gmra.mxu0 %v3981
        %v3983 = vpop.f32.mrf.mxu0
        %v3984 = vadd.f32 0.0, %v3983
        %v3985 = vand.u32 %v3051, 4294901760
        %v3986 = vsub.f32 %v3051, %v3985
        %v3987 = vand.u32 %v3986, 4294901760
        %v3988 = vsub.f32 %v3986, %v3987
        %v3989 = vand.u32 %v3988, 4294901760
        %3990 = vmatmul.f32.gmra.mxu0 %v3989
        %v3991 = vpop.f32.mrf.mxu0
        %v3992 = vadd.f32 0.0, %v3991
        %v3993 = vand.u32 %v3054, 4294901760
        %v3994 = vsub.f32 %v3054, %v3993
        %v3995 = vand.u32 %v3994, 4294901760
        %v3996 = vsub.f32 %v3994, %v3995
        %v3997 = vand.u32 %v3996, 4294901760
        %3998 = vmatmul.f32.gmra.mxu0 %v3997
        %v3999 = vpop.f32.mrf.mxu0
        %v4000 = vadd.f32 0.0, %v3999
        %v4001 = vand.u32 %v3057, 4294901760
        %v4002 = vsub.f32 %v3057, %v4001
        %v4003 = vand.u32 %v4002, 4294901760
        %v4004 = vsub.f32 %v4002, %v4003
        %v4005 = vand.u32 %v4004, 4294901760
        %4006 = vmatmul.f32.gmra.mxu0 %v4005
        %v4007 = vpop.f32.mrf.mxu0
        %v4008 = vadd.f32 0.0, %v4007
        %v4009 = vand.u32 %v3060, 4294901760
        %v4010 = vsub.f32 %v3060, %v4009
        %v4011 = vand.u32 %v4010, 4294901760
        %v4012 = vsub.f32 %v4010, %v4011
        %v4013 = vand.u32 %v4012, 4294901760
        %4014 = vmatmul.f32.gmra.mxu0 %v4013
        %v4015 = vpop.f32.mrf.mxu0
        %v4016 = vadd.f32 0.0, %v4015
        %v4017 = vand.u32 %v3063, 4294901760
        %v4018 = vsub.f32 %v3063, %v4017
        %v4019 = vand.u32 %v4018, 4294901760
        %v4020 = vsub.f32 %v4018, %v4019
        %v4021 = vand.u32 %v4020, 4294901760
        %4022 = vmatmul.f32.gmra.mxu0 %v4021
        %v4023 = vpop.f32.mrf.mxu0
        %v4024 = vadd.f32 0.0, %v4023
        %v4025 = vand.u32 %v3066, 4294901760
        %v4026 = vsub.f32 %v3066, %v4025
        %v4027 = vand.u32 %v4026, 4294901760
        %v4028 = vsub.f32 %v4026, %v4027
        %v4029 = vand.u32 %v4028, 4294901760
        %4030 = vmatmul.f32.gmra.mxu0 %v4029
        %v4031 = vpop.f32.mrf.mxu0
        %v4032 = vadd.f32 0.0, %v4031
        %v4033 = vand.u32 %v3069, 4294901760
        %v4034 = vsub.f32 %v3069, %v4033
        %v4035 = vand.u32 %v4034, 4294901760
        %v4036 = vsub.f32 %v4034, %v4035
        %v4037 = vand.u32 %v4036, 4294901760
        %4038 = vmatmul.f32.gmra.mxu0 %v4037
        %v4039 = vpop.f32.mrf.mxu0
        %v4040 = vadd.f32 0.0, %v4039
        %v4041 = vand.u32 %v3072, 4294901760
        %v4042 = vsub.f32 %v3072, %v4041
        %v4043 = vand.u32 %v4042, 4294901760
        %v4044 = vsub.f32 %v4042, %v4043
        %v4045 = vand.u32 %v4044, 4294901760
        %4046 = vmatmul.f32.gmra.mxu0 %v4045
        %v4047 = vpop.f32.mrf.mxu0
        %v4048 = vadd.f32 0.0, %v4047
        %v4049 = vand.u32 %v3075, 4294901760
        %v4050 = vsub.f32 %v3075, %v4049
        %v4051 = vand.u32 %v4050, 4294901760
        %v4052 = vsub.f32 %v4050, %v4051
        %v4053 = vand.u32 %v4052, 4294901760
        %4054 = vmatmul.f32.gmra.mxu0 %v4053
        %v4055 = vpop.f32.mrf.mxu0
        %v4056 = vadd.f32 0.0, %v4055
        %v4057 = vand.u32 %v3078, 4294901760
        %v4058 = vsub.f32 %v3078, %v4057
        %v4059 = vand.u32 %v4058, 4294901760
        %v4060 = vsub.f32 %v4058, %v4059
        %v4061 = vand.u32 %v4060, 4294901760
        %4062 = vmatmul.f32.gmra.mxu0 %v4061
        %v4063 = vpop.f32.mrf.mxu0
        %v4064 = vadd.f32 0.0, %v4063
        %v4065 = vand.u32 %v3081, 4294901760
        %v4066 = vsub.f32 %v3081, %v4065
        %v4067 = vand.u32 %v4066, 4294901760
        %v4068 = vsub.f32 %v4066, %v4067
        %v4069 = vand.u32 %v4068, 4294901760
        %4070 = vmatmul.f32.gmra.mxu0 %v4069
        %v4071 = vpop.f32.mrf.mxu0
        %v4072 = vadd.f32 0.0, %v4071
        %v4073 = vand.u32 %v3084, 4294901760
        %v4074 = vsub.f32 %v3084, %v4073
        %v4075 = vand.u32 %v4074, 4294901760
        %v4076 = vsub.f32 %v4074, %v4075
        %v4077 = vand.u32 %v4076, 4294901760
        %4078 = vmatmul.f32.gmra.mxu0 %v4077
        %v4079 = vpop.f32.mrf.mxu0
        %v4080 = vadd.f32 0.0, %v4079
        %v4081 = vand.u32 %v3087, 4294901760
        %v4082 = vsub.f32 %v3087, %v4081
        %v4083 = vand.u32 %v4082, 4294901760
        %v4084 = vsub.f32 %v4082, %v4083
        %v4085 = vand.u32 %v4084, 4294901760
        %4086 = vmatmul.f32.gmra.mxu0 %v4085
        %v4087 = vpop.f32.mrf.mxu0
        %v4088 = vadd.f32 0.0, %v4087
        %v4089 = vand.u32 %v3090, 4294901760
        %v4090 = vsub.f32 %v3090, %v4089
        %v4091 = vand.u32 %v4090, 4294901760
        %v4092 = vsub.f32 %v4090, %v4091
        %v4093 = vand.u32 %v4092, 4294901760
        %4094 = vmatmul.f32.gmra.mxu0 %v4093
        %v4095 = vpop.f32.mrf.mxu0
        %v4096 = vadd.f32 0.0, %v4095
        %v4097 = vand.u32 %v3093, 4294901760
        %v4098 = vsub.f32 %v3093, %v4097
        %v4099 = vand.u32 %v4098, 4294901760
        %v4100 = vsub.f32 %v4098, %v4099
        %v4101 = vand.u32 %v4100, 4294901760
        %4102 = vmatmul.f32.gmra.mxu0 %v4101
        %v4103 = vpop.f32.mrf.mxu0
        %v4104 = vadd.f32 0.0, %v4103
        %v4105 = vand.u32 %v3096, 4294901760
        %v4106 = vsub.f32 %v3096, %v4105
        %v4107 = vand.u32 %v4106, 4294901760
        %v4108 = vsub.f32 %v4106, %v4107
        %v4109 = vand.u32 %v4108, 4294901760
        %4110 = vmatmul.f32.gmra.mxu0 %v4109
        %v4111 = vpop.f32.mrf.mxu0
        %v4112 = vadd.f32 0.0, %v4111
        %v4113 = vand.u32 %v3099, 4294901760
        %v4114 = vsub.f32 %v3099, %v4113
        %v4115 = vand.u32 %v4114, 4294901760
        %v4116 = vsub.f32 %v4114, %v4115
        %v4117 = vand.u32 %v4116, 4294901760
        %4118 = vmatmul.f32.gmra.mxu0 %v4117
        %v4119 = vpop.f32.mrf.mxu0
        %v4120 = vadd.f32 0.0, %v4119
        %v4121 = vand.u32 %v3102, 4294901760
        %v4122 = vsub.f32 %v3102, %v4121
        %v4123 = vand.u32 %v4122, 4294901760
        %v4124 = vsub.f32 %v4122, %v4123
        %v4125 = vand.u32 %v4124, 4294901760
        %4126 = vmatmul.f32.gmra.mxu0 %v4125
        %v4127 = vpop.f32.mrf.mxu0
        %v4128 = vadd.f32 0.0, %v4127
        %v4129 = vand.u32 %v3105, 4294901760
        %v4130 = vsub.f32 %v3105, %v4129
        %v4131 = vand.u32 %v4130, 4294901760
        %v4132 = vsub.f32 %v4130, %v4131
        %v4133 = vand.u32 %v4132, 4294901760
        %4134 = vmatmul.f32.gmra.mxu0 %v4133
        %v4135 = vpop.f32.mrf.mxu0
        %v4136 = vadd.f32 0.0, %v4135
        %v4137 = vand.u32 %v3108, 4294901760
        %v4138 = vsub.f32 %v3108, %v4137
        %v4139 = vand.u32 %v4138, 4294901760
        %v4140 = vsub.f32 %v4138, %v4139
        %v4141 = vand.u32 %v4140, 4294901760
        %4142 = vmatmul.f32.gmra.mxu0 %v4141
        %v4143 = vpop.f32.mrf.mxu0
        %v4144 = vadd.f32 0.0, %v4143
        %v4145 = vand.u32 %v3111, 4294901760
        %v4146 = vsub.f32 %v3111, %v4145
        %v4147 = vand.u32 %v4146, 4294901760
        %v4148 = vsub.f32 %v4146, %v4147
        %v4149 = vand.u32 %v4148, 4294901760
        %4150 = vmatmul.f32.gmra.mxu0 %v4149
        %v4151 = vpop.f32.mrf.mxu0
        %v4152 = vadd.f32 0.0, %v4151
        %v4153 = vand.u32 %v3114, 4294901760
        %v4154 = vsub.f32 %v3114, %v4153
        %v4155 = vand.u32 %v4154, 4294901760
        %v4156 = vsub.f32 %v4154, %v4155
        %v4157 = vand.u32 %v4156, 4294901760
        %4158 = vmatmul.f32.gmra.mxu0 %v4157
        %v4159 = vpop.f32.mrf.mxu0
        %v4160 = vadd.f32 0.0, %v4159
        %4161 = vdwg.mxu0
        %4162 = vmatpush.msra.mxu0 0.0
        %4163 = vmatpush.msra.mxu0 0.0
        %4164 = vmatpush.msra.mxu0 0.0
        %4165 = vmatpush.msra.mxu0 0.0
        %4166 = vmatpush.msra.mxu0 0.0
        %4167 = vmatpush.msra.mxu0 0.0
        %4168 = vmatpush.msra.mxu0 0.0
        %4169 = vmatpush.msra.mxu0 0.0
        %4170 = vmatpush.msra.mxu0 0.0
        %4171 = vmatpush.msra.mxu0 0.0
        %4172 = vmatpush.msra.mxu0 0.0
        %4173 = vmatpush.msra.mxu0 0.0
        %4174 = vmatpush.msra.mxu0 0.0
        %4175 = vmatpush.msra.mxu0 0.0
        %4176 = vmatpush.msra.mxu0 0.0
        %v4177 = vand.u32 %v3118, 4294901760
        %v4178 = vsub.f32 %v3118, %v4177
        %v4179 = vand.u32 %v4178, 4294901760
        %v4180 = vsub.f32 %v4178, %v4179
        %v4181 = vand.u32 %v4180, 4294901760
        %4182 = vmatpush.msra.mxu0 %v4181
        %v4183 = vand.u32 %v2733, 4294901760
        %4184 = vmatmul.f32.gmra.mxu0 %v4183
        %v4185 = vpop.f32.mrf.mxu0
        %v4186 = vadd.f32 %v3144, %v4185
        %v4187 = vand.u32 %v2736, 4294901760
        %4188 = vmatmul.f32.gmra.mxu0 %v4187
        %v4189 = vpop.f32.mrf.mxu0
        %v4190 = vadd.f32 %v3152, %v4189
        %v4191 = vand.u32 %v2739, 4294901760
        %4192 = vmatmul.f32.gmra.mxu0 %v4191
        %v4193 = vpop.f32.mrf.mxu0
        %v4194 = vadd.f32 %v3160, %v4193
        %v4195 = vand.u32 %v2742, 4294901760
        %4196 = vmatmul.f32.gmra.mxu0 %v4195
        %v4197 = vpop.f32.mrf.mxu0
        %v4198 = vadd.f32 %v3168, %v4197
        %v4199 = vand.u32 %v2745, 4294901760
        %4200 = vmatmul.f32.gmra.mxu0 %v4199
        %v4201 = vpop.f32.mrf.mxu0
        %v4202 = vadd.f32 %v3176, %v4201
        %v4203 = vand.u32 %v2748, 4294901760
        %4204 = vmatmul.f32.gmra.mxu0 %v4203
        %v4205 = vpop.f32.mrf.mxu0
        %v4206 = vadd.f32 %v3184, %v4205
        %v4207 = vand.u32 %v2751, 4294901760
        %4208 = vmatmul.f32.gmra.mxu0 %v4207
        %v4209 = vpop.f32.mrf.mxu0
        %v4210 = vadd.f32 %v3192, %v4209
        %v4211 = vand.u32 %v2754, 4294901760
        %4212 = vmatmul.f32.gmra.mxu0 %v4211
        %v4213 = vpop.f32.mrf.mxu0
        %v4214 = vadd.f32 %v3200, %v4213
        %v4215 = vand.u32 %v2757, 4294901760
        %4216 = vmatmul.f32.gmra.mxu0 %v4215
        %v4217 = vpop.f32.mrf.mxu0
        %v4218 = vadd.f32 %v3208, %v4217
        %v4219 = vand.u32 %v2760, 4294901760
        %4220 = vmatmul.f32.gmra.mxu0 %v4219
        %v4221 = vpop.f32.mrf.mxu0
        %v4222 = vadd.f32 %v3216, %v4221
        %v4223 = vand.u32 %v2763, 4294901760
        %4224 = vmatmul.f32.gmra.mxu0 %v4223
        %v4225 = vpop.f32.mrf.mxu0
        %v4226 = vadd.f32 %v3224, %v4225
        %v4227 = vand.u32 %v2766, 4294901760
        %4228 = vmatmul.f32.gmra.mxu0 %v4227
        %v4229 = vpop.f32.mrf.mxu0
        %v4230 = vadd.f32 %v3232, %v4229
        %v4231 = vand.u32 %v2769, 4294901760
        %4232 = vmatmul.f32.gmra.mxu0 %v4231
        %v4233 = vpop.f32.mrf.mxu0
        %v4234 = vadd.f32 %v3240, %v4233
        %v4235 = vand.u32 %v2772, 4294901760
        %4236 = vmatmul.f32.gmra.mxu0 %v4235
        %v4237 = vpop.f32.mrf.mxu0
        %v4238 = vadd.f32 %v3248, %v4237
        %v4239 = vand.u32 %v2775, 4294901760
        %4240 = vmatmul.f32.gmra.mxu0 %v4239
        %v4241 = vpop.f32.mrf.mxu0
        %v4242 = vadd.f32 %v3256, %v4241
        %v4243 = vand.u32 %v2778, 4294901760
        %4244 = vmatmul.f32.gmra.mxu0 %v4243
        %v4245 = vpop.f32.mrf.mxu0
        %v4246 = vadd.f32 %v3264, %v4245
        %v4247 = vand.u32 %v2781, 4294901760
        %4248 = vmatmul.f32.gmra.mxu0 %v4247
        %v4249 = vpop.f32.mrf.mxu0
        %v4250 = vadd.f32 %v3272, %v4249
        %v4251 = vand.u32 %v2784, 4294901760
        %4252 = vmatmul.f32.gmra.mxu0 %v4251
        %v4253 = vpop.f32.mrf.mxu0
        %v4254 = vadd.f32 %v3280, %v4253
        %v4255 = vand.u32 %v2787, 4294901760
        %4256 = vmatmul.f32.gmra.mxu0 %v4255
        %v4257 = vpop.f32.mrf.mxu0
        %v4258 = vadd.f32 %v3288, %v4257
        %v4259 = vand.u32 %v2790, 4294901760
        %4260 = vmatmul.f32.gmra.mxu0 %v4259
        %v4261 = vpop.f32.mrf.mxu0
        %v4262 = vadd.f32 %v3296, %v4261
        %v4263 = vand.u32 %v2793, 4294901760
        %4264 = vmatmul.f32.gmra.mxu0 %v4263
        %v4265 = vpop.f32.mrf.mxu0
        %v4266 = vadd.f32 %v3304, %v4265
        %v4267 = vand.u32 %v2796, 4294901760
        %4268 = vmatmul.f32.gmra.mxu0 %v4267
        %v4269 = vpop.f32.mrf.mxu0
        %v4270 = vadd.f32 %v3312, %v4269
        %v4271 = vand.u32 %v2799, 4294901760
        %4272 = vmatmul.f32.gmra.mxu0 %v4271
        %v4273 = vpop.f32.mrf.mxu0
        %v4274 = vadd.f32 %v3320, %v4273
        %v4275 = vand.u32 %v2802, 4294901760
        %4276 = vmatmul.f32.gmra.mxu0 %v4275
        %v4277 = vpop.f32.mrf.mxu0
        %v4278 = vadd.f32 %v3328, %v4277
        %v4279 = vand.u32 %v2805, 4294901760
        %4280 = vmatmul.f32.gmra.mxu0 %v4279
        %v4281 = vpop.f32.mrf.mxu0
        %v4282 = vadd.f32 %v3336, %v4281
        %v4283 = vand.u32 %v2808, 4294901760
        %4284 = vmatmul.f32.gmra.mxu0 %v4283
        %v4285 = vpop.f32.mrf.mxu0
        %v4286 = vadd.f32 %v3344, %v4285
        %v4287 = vand.u32 %v2811, 4294901760
        %4288 = vmatmul.f32.gmra.mxu0 %v4287
        %v4289 = vpop.f32.mrf.mxu0
        %v4290 = vadd.f32 %v3352, %v4289
        %v4291 = vand.u32 %v2814, 4294901760
        %4292 = vmatmul.f32.gmra.mxu0 %v4291
        %v4293 = vpop.f32.mrf.mxu0
        %v4294 = vadd.f32 %v3360, %v4293
        %v4295 = vand.u32 %v2817, 4294901760
        %4296 = vmatmul.f32.gmra.mxu0 %v4295
        %v4297 = vpop.f32.mrf.mxu0
        %v4298 = vadd.f32 %v3368, %v4297
        %v4299 = vand.u32 %v2820, 4294901760
        %4300 = vmatmul.f32.gmra.mxu0 %v4299
        %v4301 = vpop.f32.mrf.mxu0
        %v4302 = vadd.f32 %v3376, %v4301
        %v4303 = vand.u32 %v2823, 4294901760
        %4304 = vmatmul.f32.gmra.mxu0 %v4303
        %v4305 = vpop.f32.mrf.mxu0
        %v4306 = vadd.f32 %v3384, %v4305
        %v4307 = vand.u32 %v2826, 4294901760
        %4308 = vmatmul.f32.gmra.mxu0 %v4307
        %v4309 = vpop.f32.mrf.mxu0
        %v4310 = vadd.f32 %v3392, %v4309
        %v4311 = vand.u32 %v2829, 4294901760
        %4312 = vmatmul.f32.gmra.mxu0 %v4311
        %v4313 = vpop.f32.mrf.mxu0
        %v4314 = vadd.f32 %v3400, %v4313
        %v4315 = vand.u32 %v2832, 4294901760
        %4316 = vmatmul.f32.gmra.mxu0 %v4315
        %v4317 = vpop.f32.mrf.mxu0
        %v4318 = vadd.f32 %v3408, %v4317
        %v4319 = vand.u32 %v2835, 4294901760
        %4320 = vmatmul.f32.gmra.mxu0 %v4319
        %v4321 = vpop.f32.mrf.mxu0
        %v4322 = vadd.f32 %v3416, %v4321
        %v4323 = vand.u32 %v2838, 4294901760
        %4324 = vmatmul.f32.gmra.mxu0 %v4323
        %v4325 = vpop.f32.mrf.mxu0
        %v4326 = vadd.f32 %v3424, %v4325
        %v4327 = vand.u32 %v2841, 4294901760
        %4328 = vmatmul.f32.gmra.mxu0 %v4327
        %v4329 = vpop.f32.mrf.mxu0
        %v4330 = vadd.f32 %v3432, %v4329
        %v4331 = vand.u32 %v2844, 4294901760
        %4332 = vmatmul.f32.gmra.mxu0 %v4331
        %v4333 = vpop.f32.mrf.mxu0
        %v4334 = vadd.f32 %v3440, %v4333
        %v4335 = vand.u32 %v2847, 4294901760
        %4336 = vmatmul.f32.gmra.mxu0 %v4335
        %v4337 = vpop.f32.mrf.mxu0
        %v4338 = vadd.f32 %v3448, %v4337
        %v4339 = vand.u32 %v2850, 4294901760
        %4340 = vmatmul.f32.gmra.mxu0 %v4339
        %v4341 = vpop.f32.mrf.mxu0
        %v4342 = vadd.f32 %v3456, %v4341
        %v4343 = vand.u32 %v2853, 4294901760
        %4344 = vmatmul.f32.gmra.mxu0 %v4343
        %v4345 = vpop.f32.mrf.mxu0
        %v4346 = vadd.f32 %v3464, %v4345
        %v4347 = vand.u32 %v2856, 4294901760
        %4348 = vmatmul.f32.gmra.mxu0 %v4347
        %v4349 = vpop.f32.mrf.mxu0
        %v4350 = vadd.f32 %v3472, %v4349
        %v4351 = vand.u32 %v2859, 4294901760
        %4352 = vmatmul.f32.gmra.mxu0 %v4351
        %v4353 = vpop.f32.mrf.mxu0
        %v4354 = vadd.f32 %v3480, %v4353
        %v4355 = vand.u32 %v2862, 4294901760
        %4356 = vmatmul.f32.gmra.mxu0 %v4355
        %v4357 = vpop.f32.mrf.mxu0
        %v4358 = vadd.f32 %v3488, %v4357
        %v4359 = vand.u32 %v2865, 4294901760
        %4360 = vmatmul.f32.gmra.mxu0 %v4359
        %v4361 = vpop.f32.mrf.mxu0
        %v4362 = vadd.f32 %v3496, %v4361
        %v4363 = vand.u32 %v2868, 4294901760
        %4364 = vmatmul.f32.gmra.mxu0 %v4363
        %v4365 = vpop.f32.mrf.mxu0
        %v4366 = vadd.f32 %v3504, %v4365
        %v4367 = vand.u32 %v2871, 4294901760
        %4368 = vmatmul.f32.gmra.mxu0 %v4367
        %v4369 = vpop.f32.mrf.mxu0
        %v4370 = vadd.f32 %v3512, %v4369
        %v4371 = vand.u32 %v2874, 4294901760
        %4372 = vmatmul.f32.gmra.mxu0 %v4371
        %v4373 = vpop.f32.mrf.mxu0
        %v4374 = vadd.f32 %v3520, %v4373
        %v4375 = vand.u32 %v2877, 4294901760
        %4376 = vmatmul.f32.gmra.mxu0 %v4375
        %v4377 = vpop.f32.mrf.mxu0
        %v4378 = vadd.f32 %v3528, %v4377
        %v4379 = vand.u32 %v2880, 4294901760
        %4380 = vmatmul.f32.gmra.mxu0 %v4379
        %v4381 = vpop.f32.mrf.mxu0
        %v4382 = vadd.f32 %v3536, %v4381
        %v4383 = vand.u32 %v2883, 4294901760
        %4384 = vmatmul.f32.gmra.mxu0 %v4383
        %v4385 = vpop.f32.mrf.mxu0
        %v4386 = vadd.f32 %v3544, %v4385
        %v4387 = vand.u32 %v2886, 4294901760
        %4388 = vmatmul.f32.gmra.mxu0 %v4387
        %v4389 = vpop.f32.mrf.mxu0
        %v4390 = vadd.f32 %v3552, %v4389
        %v4391 = vand.u32 %v2889, 4294901760
        %4392 = vmatmul.f32.gmra.mxu0 %v4391
        %v4393 = vpop.f32.mrf.mxu0
        %v4394 = vadd.f32 %v3560, %v4393
        %v4395 = vand.u32 %v2892, 4294901760
        %4396 = vmatmul.f32.gmra.mxu0 %v4395
        %v4397 = vpop.f32.mrf.mxu0
        %v4398 = vadd.f32 %v3568, %v4397
        %v4399 = vand.u32 %v2895, 4294901760
        %4400 = vmatmul.f32.gmra.mxu0 %v4399
        %v4401 = vpop.f32.mrf.mxu0
        %v4402 = vadd.f32 %v3576, %v4401
        %v4403 = vand.u32 %v2898, 4294901760
        %4404 = vmatmul.f32.gmra.mxu0 %v4403
        %v4405 = vpop.f32.mrf.mxu0
        %v4406 = vadd.f32 %v3584, %v4405
        %v4407 = vand.u32 %v2901, 4294901760
        %4408 = vmatmul.f32.gmra.mxu0 %v4407
        %v4409 = vpop.f32.mrf.mxu0
        %v4410 = vadd.f32 %v3592, %v4409
        %v4411 = vand.u32 %v2904, 4294901760
        %4412 = vmatmul.f32.gmra.mxu0 %v4411
        %v4413 = vpop.f32.mrf.mxu0
        %v4414 = vadd.f32 %v3600, %v4413
        %v4415 = vand.u32 %v2907, 4294901760
        %4416 = vmatmul.f32.gmra.mxu0 %v4415
        %v4417 = vpop.f32.mrf.mxu0
        %v4418 = vadd.f32 %v3608, %v4417
        %v4419 = vand.u32 %v2910, 4294901760
        %4420 = vmatmul.f32.gmra.mxu0 %v4419
        %v4421 = vpop.f32.mrf.mxu0
        %v4422 = vadd.f32 %v3616, %v4421
        %v4423 = vand.u32 %v2913, 4294901760
        %4424 = vmatmul.f32.gmra.mxu0 %v4423
        %v4425 = vpop.f32.mrf.mxu0
        %v4426 = vadd.f32 %v3624, %v4425
        %v4427 = vand.u32 %v2916, 4294901760
        %4428 = vmatmul.f32.gmra.mxu0 %v4427
        %v4429 = vpop.f32.mrf.mxu0
        %v4430 = vadd.f32 %v3632, %v4429
        %v4431 = vand.u32 %v2919, 4294901760
        %4432 = vmatmul.f32.gmra.mxu0 %v4431
        %v4433 = vpop.f32.mrf.mxu0
        %v4434 = vadd.f32 %v3640, %v4433
        %v4435 = vand.u32 %v2922, 4294901760
        %4436 = vmatmul.f32.gmra.mxu0 %v4435
        %v4437 = vpop.f32.mrf.mxu0
        %v4438 = vadd.f32 %v3648, %v4437
        %v4439 = vand.u32 %v2925, 4294901760
        %4440 = vmatmul.f32.gmra.mxu0 %v4439
        %v4441 = vpop.f32.mrf.mxu0
        %v4442 = vadd.f32 %v3656, %v4441
        %v4443 = vand.u32 %v2928, 4294901760
        %4444 = vmatmul.f32.gmra.mxu0 %v4443
        %v4445 = vpop.f32.mrf.mxu0
        %v4446 = vadd.f32 %v3664, %v4445
        %v4447 = vand.u32 %v2931, 4294901760
        %4448 = vmatmul.f32.gmra.mxu0 %v4447
        %v4449 = vpop.f32.mrf.mxu0
        %v4450 = vadd.f32 %v3672, %v4449
        %v4451 = vand.u32 %v2934, 4294901760
        %4452 = vmatmul.f32.gmra.mxu0 %v4451
        %v4453 = vpop.f32.mrf.mxu0
        %v4454 = vadd.f32 %v3680, %v4453
        %v4455 = vand.u32 %v2937, 4294901760
        %4456 = vmatmul.f32.gmra.mxu0 %v4455
        %v4457 = vpop.f32.mrf.mxu0
        %v4458 = vadd.f32 %v3688, %v4457
        %v4459 = vand.u32 %v2940, 4294901760
        %4460 = vmatmul.f32.gmra.mxu0 %v4459
        %v4461 = vpop.f32.mrf.mxu0
        %v4462 = vadd.f32 %v3696, %v4461
        %v4463 = vand.u32 %v2943, 4294901760
        %4464 = vmatmul.f32.gmra.mxu0 %v4463
        %v4465 = vpop.f32.mrf.mxu0
        %v4466 = vadd.f32 %v3704, %v4465
        %v4467 = vand.u32 %v2946, 4294901760
        %4468 = vmatmul.f32.gmra.mxu0 %v4467
        %v4469 = vpop.f32.mrf.mxu0
        %v4470 = vadd.f32 %v3712, %v4469
        %v4471 = vand.u32 %v2949, 4294901760
        %4472 = vmatmul.f32.gmra.mxu0 %v4471
        %v4473 = vpop.f32.mrf.mxu0
        %v4474 = vadd.f32 %v3720, %v4473
        %v4475 = vand.u32 %v2952, 4294901760
        %4476 = vmatmul.f32.gmra.mxu0 %v4475
        %v4477 = vpop.f32.mrf.mxu0
        %v4478 = vadd.f32 %v3728, %v4477
        %v4479 = vand.u32 %v2955, 4294901760
        %4480 = vmatmul.f32.gmra.mxu0 %v4479
        %v4481 = vpop.f32.mrf.mxu0
        %v4482 = vadd.f32 %v3736, %v4481
        %v4483 = vand.u32 %v2958, 4294901760
        %4484 = vmatmul.f32.gmra.mxu0 %v4483
        %v4485 = vpop.f32.mrf.mxu0
        %v4486 = vadd.f32 %v3744, %v4485
        %v4487 = vand.u32 %v2961, 4294901760
        %4488 = vmatmul.f32.gmra.mxu0 %v4487
        %v4489 = vpop.f32.mrf.mxu0
        %v4490 = vadd.f32 %v3752, %v4489
        %v4491 = vand.u32 %v2964, 4294901760
        %4492 = vmatmul.f32.gmra.mxu0 %v4491
        %v4493 = vpop.f32.mrf.mxu0
        %v4494 = vadd.f32 %v3760, %v4493
        %v4495 = vand.u32 %v2967, 4294901760
        %4496 = vmatmul.f32.gmra.mxu0 %v4495
        %v4497 = vpop.f32.mrf.mxu0
        %v4498 = vadd.f32 %v3768, %v4497
        %v4499 = vand.u32 %v2970, 4294901760
        %4500 = vmatmul.f32.gmra.mxu0 %v4499
        %v4501 = vpop.f32.mrf.mxu0
        %v4502 = vadd.f32 %v3776, %v4501
        %v4503 = vand.u32 %v2973, 4294901760
        %4504 = vmatmul.f32.gmra.mxu0 %v4503
        %v4505 = vpop.f32.mrf.mxu0
        %v4506 = vadd.f32 %v3784, %v4505
        %v4507 = vand.u32 %v2976, 4294901760
        %4508 = vmatmul.f32.gmra.mxu0 %v4507
        %v4509 = vpop.f32.mrf.mxu0
        %v4510 = vadd.f32 %v3792, %v4509
        %v4511 = vand.u32 %v2979, 4294901760
        %4512 = vmatmul.f32.gmra.mxu0 %v4511
        %v4513 = vpop.f32.mrf.mxu0
        %v4514 = vadd.f32 %v3800, %v4513
        %v4515 = vand.u32 %v2982, 4294901760
        %4516 = vmatmul.f32.gmra.mxu0 %v4515
        %v4517 = vpop.f32.mrf.mxu0
        %v4518 = vadd.f32 %v3808, %v4517
        %v4519 = vand.u32 %v2985, 4294901760
        %4520 = vmatmul.f32.gmra.mxu0 %v4519
        %v4521 = vpop.f32.mrf.mxu0
        %v4522 = vadd.f32 %v3816, %v4521
        %v4523 = vand.u32 %v2988, 4294901760
        %4524 = vmatmul.f32.gmra.mxu0 %v4523
        %v4525 = vpop.f32.mrf.mxu0
        %v4526 = vadd.f32 %v3824, %v4525
        %v4527 = vand.u32 %v2991, 4294901760
        %4528 = vmatmul.f32.gmra.mxu0 %v4527
        %v4529 = vpop.f32.mrf.mxu0
        %v4530 = vadd.f32 %v3832, %v4529
        %v4531 = vand.u32 %v2994, 4294901760
        %4532 = vmatmul.f32.gmra.mxu0 %v4531
        %v4533 = vpop.f32.mrf.mxu0
        %v4534 = vadd.f32 %v3840, %v4533
        %v4535 = vand.u32 %v2997, 4294901760
        %4536 = vmatmul.f32.gmra.mxu0 %v4535
        %v4537 = vpop.f32.mrf.mxu0
        %v4538 = vadd.f32 %v3848, %v4537
        %v4539 = vand.u32 %v3000, 4294901760
        %4540 = vmatmul.f32.gmra.mxu0 %v4539
        %v4541 = vpop.f32.mrf.mxu0
        %v4542 = vadd.f32 %v3856, %v4541
        %v4543 = vand.u32 %v3003, 4294901760
        %4544 = vmatmul.f32.gmra.mxu0 %v4543
        %v4545 = vpop.f32.mrf.mxu0
        %v4546 = vadd.f32 %v3864, %v4545
        %v4547 = vand.u32 %v3006, 4294901760
        %4548 = vmatmul.f32.gmra.mxu0 %v4547
        %v4549 = vpop.f32.mrf.mxu0
        %v4550 = vadd.f32 %v3872, %v4549
        %v4551 = vand.u32 %v3009, 4294901760
        %4552 = vmatmul.f32.gmra.mxu0 %v4551
        %v4553 = vpop.f32.mrf.mxu0
        %v4554 = vadd.f32 %v3880, %v4553
        %v4555 = vand.u32 %v3012, 4294901760
        %4556 = vmatmul.f32.gmra.mxu0 %v4555
        %v4557 = vpop.f32.mrf.mxu0
        %v4558 = vadd.f32 %v3888, %v4557
        %v4559 = vand.u32 %v3015, 4294901760
        %4560 = vmatmul.f32.gmra.mxu0 %v4559
        %v4561 = vpop.f32.mrf.mxu0
        %v4562 = vadd.f32 %v3896, %v4561
        %v4563 = vand.u32 %v3018, 4294901760
        %4564 = vmatmul.f32.gmra.mxu0 %v4563
        %v4565 = vpop.f32.mrf.mxu0
        %v4566 = vadd.f32 %v3904, %v4565
        %v4567 = vand.u32 %v3021, 4294901760
        %4568 = vmatmul.f32.gmra.mxu0 %v4567
        %v4569 = vpop.f32.mrf.mxu0
        %v4570 = vadd.f32 %v3912, %v4569
        %v4571 = vand.u32 %v3024, 4294901760
        %4572 = vmatmul.f32.gmra.mxu0 %v4571
        %v4573 = vpop.f32.mrf.mxu0
        %v4574 = vadd.f32 %v3920, %v4573
        %v4575 = vand.u32 %v3027, 4294901760
        %4576 = vmatmul.f32.gmra.mxu0 %v4575
        %v4577 = vpop.f32.mrf.mxu0
        %v4578 = vadd.f32 %v3928, %v4577
        %v4579 = vand.u32 %v3030, 4294901760
        %4580 = vmatmul.f32.gmra.mxu0 %v4579
        %v4581 = vpop.f32.mrf.mxu0
        %v4582 = vadd.f32 %v3936, %v4581
        %v4583 = vand.u32 %v3033, 4294901760
        %4584 = vmatmul.f32.gmra.mxu0 %v4583
        %v4585 = vpop.f32.mrf.mxu0
        %v4586 = vadd.f32 %v3944, %v4585
        %v4587 = vand.u32 %v3036, 4294901760
        %4588 = vmatmul.f32.gmra.mxu0 %v4587
        %v4589 = vpop.f32.mrf.mxu0
        %v4590 = vadd.f32 %v3952, %v4589
        %v4591 = vand.u32 %v3039, 4294901760
        %4592 = vmatmul.f32.gmra.mxu0 %v4591
        %v4593 = vpop.f32.mrf.mxu0
        %v4594 = vadd.f32 %v3960, %v4593
        %v4595 = vand.u32 %v3042, 4294901760
        %4596 = vmatmul.f32.gmra.mxu0 %v4595
        %v4597 = vpop.f32.mrf.mxu0
        %v4598 = vadd.f32 %v3968, %v4597
        %v4599 = vand.u32 %v3045, 4294901760
        %4600 = vmatmul.f32.gmra.mxu0 %v4599
        %v4601 = vpop.f32.mrf.mxu0
        %v4602 = vadd.f32 %v3976, %v4601
        %v4603 = vand.u32 %v3048, 4294901760
        %4604 = vmatmul.f32.gmra.mxu0 %v4603
        %v4605 = vpop.f32.mrf.mxu0
        %v4606 = vadd.f32 %v3984, %v4605
        %v4607 = vand.u32 %v3051, 4294901760
        %4608 = vmatmul.f32.gmra.mxu0 %v4607
        %v4609 = vpop.f32.mrf.mxu0
        %v4610 = vadd.f32 %v3992, %v4609
        %v4611 = vand.u32 %v3054, 4294901760
        %4612 = vmatmul.f32.gmra.mxu0 %v4611
        %v4613 = vpop.f32.mrf.mxu0
        %v4614 = vadd.f32 %v4000, %v4613
        %v4615 = vand.u32 %v3057, 4294901760
        %4616 = vmatmul.f32.gmra.mxu0 %v4615
        %v4617 = vpop.f32.mrf.mxu0
        %v4618 = vadd.f32 %v4008, %v4617
        %v4619 = vand.u32 %v3060, 4294901760
        %4620 = vmatmul.f32.gmra.mxu0 %v4619
        %v4621 = vpop.f32.mrf.mxu0
        %v4622 = vadd.f32 %v4016, %v4621
        %v4623 = vand.u32 %v3063, 4294901760
        %4624 = vmatmul.f32.gmra.mxu0 %v4623
        %v4625 = vpop.f32.mrf.mxu0
        %v4626 = vadd.f32 %v4024, %v4625
        %v4627 = vand.u32 %v3066, 4294901760
        %4628 = vmatmul.f32.gmra.mxu0 %v4627
        %v4629 = vpop.f32.mrf.mxu0
        %v4630 = vadd.f32 %v4032, %v4629
        %v4631 = vand.u32 %v3069, 4294901760
        %4632 = vmatmul.f32.gmra.mxu0 %v4631
        %v4633 = vpop.f32.mrf.mxu0
        %v4634 = vadd.f32 %v4040, %v4633
        %v4635 = vand.u32 %v3072, 4294901760
        %4636 = vmatmul.f32.gmra.mxu0 %v4635
        %v4637 = vpop.f32.mrf.mxu0
        %v4638 = vadd.f32 %v4048, %v4637
        %v4639 = vand.u32 %v3075, 4294901760
        %4640 = vmatmul.f32.gmra.mxu0 %v4639
        %v4641 = vpop.f32.mrf.mxu0
        %v4642 = vadd.f32 %v4056, %v4641
        %v4643 = vand.u32 %v3078, 4294901760
        %4644 = vmatmul.f32.gmra.mxu0 %v4643
        %v4645 = vpop.f32.mrf.mxu0
        %v4646 = vadd.f32 %v4064, %v4645
        %v4647 = vand.u32 %v3081, 4294901760
        %4648 = vmatmul.f32.gmra.mxu0 %v4647
        %v4649 = vpop.f32.mrf.mxu0
        %v4650 = vadd.f32 %v4072, %v4649
        %v4651 = vand.u32 %v3084, 4294901760
        %4652 = vmatmul.f32.gmra.mxu0 %v4651
        %v4653 = vpop.f32.mrf.mxu0
        %v4654 = vadd.f32 %v4080, %v4653
        %v4655 = vand.u32 %v3087, 4294901760
        %4656 = vmatmul.f32.gmra.mxu0 %v4655
        %v4657 = vpop.f32.mrf.mxu0
        %v4658 = vadd.f32 %v4088, %v4657
        %v4659 = vand.u32 %v3090, 4294901760
        %4660 = vmatmul.f32.gmra.mxu0 %v4659
        %v4661 = vpop.f32.mrf.mxu0
        %v4662 = vadd.f32 %v4096, %v4661
        %v4663 = vand.u32 %v3093, 4294901760
        %4664 = vmatmul.f32.gmra.mxu0 %v4663
        %v4665 = vpop.f32.mrf.mxu0
        %v4666 = vadd.f32 %v4104, %v4665
        %v4667 = vand.u32 %v3096, 4294901760
        %4668 = vmatmul.f32.gmra.mxu0 %v4667
        %v4669 = vpop.f32.mrf.mxu0
        %v4670 = vadd.f32 %v4112, %v4669
        %v4671 = vand.u32 %v3099, 4294901760
        %4672 = vmatmul.f32.gmra.mxu0 %v4671
        %v4673 = vpop.f32.mrf.mxu0
        %v4674 = vadd.f32 %v4120, %v4673
        %v4675 = vand.u32 %v3102, 4294901760
        %4676 = vmatmul.f32.gmra.mxu0 %v4675
        %v4677 = vpop.f32.mrf.mxu0
        %v4678 = vadd.f32 %v4128, %v4677
        %v4679 = vand.u32 %v3105, 4294901760
        %4680 = vmatmul.f32.gmra.mxu0 %v4679
        %v4681 = vpop.f32.mrf.mxu0
        %v4682 = vadd.f32 %v4136, %v4681
        %v4683 = vand.u32 %v3108, 4294901760
        %4684 = vmatmul.f32.gmra.mxu0 %v4683
        %v4685 = vpop.f32.mrf.mxu0
        %v4686 = vadd.f32 %v4144, %v4685
        %v4687 = vand.u32 %v3111, 4294901760
        %4688 = vmatmul.f32.gmra.mxu0 %v4687
        %v4689 = vpop.f32.mrf.mxu0
        %v4690 = vadd.f32 %v4152, %v4689
        %v4691 = vand.u32 %v3114, 4294901760
        %4692 = vmatmul.f32.gmra.mxu0 %v4691
        %v4693 = vpop.f32.mrf.mxu0
        %v4694 = vadd.f32 %v4160, %v4693
        %4695 = vdwg.mxu0
        %4696 = vmatpush.msra.mxu0 0.0
        %4697 = vmatpush.msra.mxu0 0.0
        %4698 = vmatpush.msra.mxu0 0.0
        %4699 = vmatpush.msra.mxu0 0.0
        %4700 = vmatpush.msra.mxu0 0.0
        %4701 = vmatpush.msra.mxu0 0.0
        %4702 = vmatpush.msra.mxu0 0.0
        %4703 = vmatpush.msra.mxu0 0.0
        %4704 = vmatpush.msra.mxu0 0.0
        %4705 = vmatpush.msra.mxu0 0.0
        %4706 = vmatpush.msra.mxu0 0.0
        %4707 = vmatpush.msra.mxu0 0.0
        %4708 = vmatpush.msra.mxu0 0.0
        %4709 = vmatpush.msra.mxu0 0.0
        %4710 = vmatpush.msra.mxu0 0.0
        %v4711 = vand.u32 %v3118, 4294901760
        %v4712 = vsub.f32 %v3118, %v4711
        %4713 = vmatpush.msra.mxu0 %v4712
        %v4714 = vand.u32 %v2733, 4294901760
        %v4715 = vsub.f32 %v2733, %v4714
        %4716 = vmatmul.f32.gmra.mxu0 %v4715
        %v4717 = vpop.f32.mrf.mxu0
        %v4718 = vadd.f32 %v4186, %v4717
        %v4719 = vand.u32 %v2736, 4294901760
        %v4720 = vsub.f32 %v2736, %v4719
        %4721 = vmatmul.f32.gmra.mxu0 %v4720
        %v4722 = vpop.f32.mrf.mxu0
        %v4723 = vadd.f32 %v4190, %v4722
        %v4724 = vand.u32 %v2739, 4294901760
        %v4725 = vsub.f32 %v2739, %v4724
        %4726 = vmatmul.f32.gmra.mxu0 %v4725
        %v4727 = vpop.f32.mrf.mxu0
        %v4728 = vadd.f32 %v4194, %v4727
        %v4729 = vand.u32 %v2742, 4294901760
        %v4730 = vsub.f32 %v2742, %v4729
        %4731 = vmatmul.f32.gmra.mxu0 %v4730
        %v4732 = vpop.f32.mrf.mxu0
        %v4733 = vadd.f32 %v4198, %v4732
        %v4734 = vand.u32 %v2745, 4294901760
        %v4735 = vsub.f32 %v2745, %v4734
        %4736 = vmatmul.f32.gmra.mxu0 %v4735
        %v4737 = vpop.f32.mrf.mxu0
        %v4738 = vadd.f32 %v4202, %v4737
        %v4739 = vand.u32 %v2748, 4294901760
        %v4740 = vsub.f32 %v2748, %v4739
        %4741 = vmatmul.f32.gmra.mxu0 %v4740
        %v4742 = vpop.f32.mrf.mxu0
        %v4743 = vadd.f32 %v4206, %v4742
        %v4744 = vand.u32 %v2751, 4294901760
        %v4745 = vsub.f32 %v2751, %v4744
        %4746 = vmatmul.f32.gmra.mxu0 %v4745
        %v4747 = vpop.f32.mrf.mxu0
        %v4748 = vadd.f32 %v4210, %v4747
        %v4749 = vand.u32 %v2754, 4294901760
        %v4750 = vsub.f32 %v2754, %v4749
        %4751 = vmatmul.f32.gmra.mxu0 %v4750
        %v4752 = vpop.f32.mrf.mxu0
        %v4753 = vadd.f32 %v4214, %v4752
        %v4754 = vand.u32 %v2757, 4294901760
        %v4755 = vsub.f32 %v2757, %v4754
        %4756 = vmatmul.f32.gmra.mxu0 %v4755
        %v4757 = vpop.f32.mrf.mxu0
        %v4758 = vadd.f32 %v4218, %v4757
        %v4759 = vand.u32 %v2760, 4294901760
        %v4760 = vsub.f32 %v2760, %v4759
        %4761 = vmatmul.f32.gmra.mxu0 %v4760
        %v4762 = vpop.f32.mrf.mxu0
        %v4763 = vadd.f32 %v4222, %v4762
        %v4764 = vand.u32 %v2763, 4294901760
        %v4765 = vsub.f32 %v2763, %v4764
        %4766 = vmatmul.f32.gmra.mxu0 %v4765
        %v4767 = vpop.f32.mrf.mxu0
        %v4768 = vadd.f32 %v4226, %v4767
        %v4769 = vand.u32 %v2766, 4294901760
        %v4770 = vsub.f32 %v2766, %v4769
        %4771 = vmatmul.f32.gmra.mxu0 %v4770
        %v4772 = vpop.f32.mrf.mxu0
        %v4773 = vadd.f32 %v4230, %v4772
        %v4774 = vand.u32 %v2769, 4294901760
        %v4775 = vsub.f32 %v2769, %v4774
        %4776 = vmatmul.f32.gmra.mxu0 %v4775
        %v4777 = vpop.f32.mrf.mxu0
        %v4778 = vadd.f32 %v4234, %v4777
        %v4779 = vand.u32 %v2772, 4294901760
        %v4780 = vsub.f32 %v2772, %v4779
        %4781 = vmatmul.f32.gmra.mxu0 %v4780
        %v4782 = vpop.f32.mrf.mxu0
        %v4783 = vadd.f32 %v4238, %v4782
        %v4784 = vand.u32 %v2775, 4294901760
        %v4785 = vsub.f32 %v2775, %v4784
        %4786 = vmatmul.f32.gmra.mxu0 %v4785
        %v4787 = vpop.f32.mrf.mxu0
        %v4788 = vadd.f32 %v4242, %v4787
        %v4789 = vand.u32 %v2778, 4294901760
        %v4790 = vsub.f32 %v2778, %v4789
        %4791 = vmatmul.f32.gmra.mxu0 %v4790
        %v4792 = vpop.f32.mrf.mxu0
        %v4793 = vadd.f32 %v4246, %v4792
        %v4794 = vand.u32 %v2781, 4294901760
        %v4795 = vsub.f32 %v2781, %v4794
        %4796 = vmatmul.f32.gmra.mxu0 %v4795
        %v4797 = vpop.f32.mrf.mxu0
        %v4798 = vadd.f32 %v4250, %v4797
        %v4799 = vand.u32 %v2784, 4294901760
        %v4800 = vsub.f32 %v2784, %v4799
        %4801 = vmatmul.f32.gmra.mxu0 %v4800
        %v4802 = vpop.f32.mrf.mxu0
        %v4803 = vadd.f32 %v4254, %v4802
        %v4804 = vand.u32 %v2787, 4294901760
        %v4805 = vsub.f32 %v2787, %v4804
        %4806 = vmatmul.f32.gmra.mxu0 %v4805
        %v4807 = vpop.f32.mrf.mxu0
        %v4808 = vadd.f32 %v4258, %v4807
        %v4809 = vand.u32 %v2790, 4294901760
        %v4810 = vsub.f32 %v2790, %v4809
        %4811 = vmatmul.f32.gmra.mxu0 %v4810
        %v4812 = vpop.f32.mrf.mxu0
        %v4813 = vadd.f32 %v4262, %v4812
        %v4814 = vand.u32 %v2793, 4294901760
        %v4815 = vsub.f32 %v2793, %v4814
        %4816 = vmatmul.f32.gmra.mxu0 %v4815
        %v4817 = vpop.f32.mrf.mxu0
        %v4818 = vadd.f32 %v4266, %v4817
        %v4819 = vand.u32 %v2796, 4294901760
        %v4820 = vsub.f32 %v2796, %v4819
        %4821 = vmatmul.f32.gmra.mxu0 %v4820
        %v4822 = vpop.f32.mrf.mxu0
        %v4823 = vadd.f32 %v4270, %v4822
        %v4824 = vand.u32 %v2799, 4294901760
        %v4825 = vsub.f32 %v2799, %v4824
        %4826 = vmatmul.f32.gmra.mxu0 %v4825
        %v4827 = vpop.f32.mrf.mxu0
        %v4828 = vadd.f32 %v4274, %v4827
        %v4829 = vand.u32 %v2802, 4294901760
        %v4830 = vsub.f32 %v2802, %v4829
        %4831 = vmatmul.f32.gmra.mxu0 %v4830
        %v4832 = vpop.f32.mrf.mxu0
        %v4833 = vadd.f32 %v4278, %v4832
        %v4834 = vand.u32 %v2805, 4294901760
        %v4835 = vsub.f32 %v2805, %v4834
        %4836 = vmatmul.f32.gmra.mxu0 %v4835
        %v4837 = vpop.f32.mrf.mxu0
        %v4838 = vadd.f32 %v4282, %v4837
        %v4839 = vand.u32 %v2808, 4294901760
        %v4840 = vsub.f32 %v2808, %v4839
        %4841 = vmatmul.f32.gmra.mxu0 %v4840
        %v4842 = vpop.f32.mrf.mxu0
        %v4843 = vadd.f32 %v4286, %v4842
        %v4844 = vand.u32 %v2811, 4294901760
        %v4845 = vsub.f32 %v2811, %v4844
        %4846 = vmatmul.f32.gmra.mxu0 %v4845
        %v4847 = vpop.f32.mrf.mxu0
        %v4848 = vadd.f32 %v4290, %v4847
        %v4849 = vand.u32 %v2814, 4294901760
        %v4850 = vsub.f32 %v2814, %v4849
        %4851 = vmatmul.f32.gmra.mxu0 %v4850
        %v4852 = vpop.f32.mrf.mxu0
        %v4853 = vadd.f32 %v4294, %v4852
        %v4854 = vand.u32 %v2817, 4294901760
        %v4855 = vsub.f32 %v2817, %v4854
        %4856 = vmatmul.f32.gmra.mxu0 %v4855
        %v4857 = vpop.f32.mrf.mxu0
        %v4858 = vadd.f32 %v4298, %v4857
        %v4859 = vand.u32 %v2820, 4294901760
        %v4860 = vsub.f32 %v2820, %v4859
        %4861 = vmatmul.f32.gmra.mxu0 %v4860
        %v4862 = vpop.f32.mrf.mxu0
        %v4863 = vadd.f32 %v4302, %v4862
        %v4864 = vand.u32 %v2823, 4294901760
        %v4865 = vsub.f32 %v2823, %v4864
        %4866 = vmatmul.f32.gmra.mxu0 %v4865
        %v4867 = vpop.f32.mrf.mxu0
        %v4868 = vadd.f32 %v4306, %v4867
        %v4869 = vand.u32 %v2826, 4294901760
        %v4870 = vsub.f32 %v2826, %v4869
        %4871 = vmatmul.f32.gmra.mxu0 %v4870
        %v4872 = vpop.f32.mrf.mxu0
        %v4873 = vadd.f32 %v4310, %v4872
        %v4874 = vand.u32 %v2829, 4294901760
        %v4875 = vsub.f32 %v2829, %v4874
        %4876 = vmatmul.f32.gmra.mxu0 %v4875
        %v4877 = vpop.f32.mrf.mxu0
        %v4878 = vadd.f32 %v4314, %v4877
        %v4879 = vand.u32 %v2832, 4294901760
        %v4880 = vsub.f32 %v2832, %v4879
        %4881 = vmatmul.f32.gmra.mxu0 %v4880
        %v4882 = vpop.f32.mrf.mxu0
        %v4883 = vadd.f32 %v4318, %v4882
        %v4884 = vand.u32 %v2835, 4294901760
        %v4885 = vsub.f32 %v2835, %v4884
        %4886 = vmatmul.f32.gmra.mxu0 %v4885
        %v4887 = vpop.f32.mrf.mxu0
        %v4888 = vadd.f32 %v4322, %v4887
        %v4889 = vand.u32 %v2838, 4294901760
        %v4890 = vsub.f32 %v2838, %v4889
        %4891 = vmatmul.f32.gmra.mxu0 %v4890
        %v4892 = vpop.f32.mrf.mxu0
        %v4893 = vadd.f32 %v4326, %v4892
        %v4894 = vand.u32 %v2841, 4294901760
        %v4895 = vsub.f32 %v2841, %v4894
        %4896 = vmatmul.f32.gmra.mxu0 %v4895
        %v4897 = vpop.f32.mrf.mxu0
        %v4898 = vadd.f32 %v4330, %v4897
        %v4899 = vand.u32 %v2844, 4294901760
        %v4900 = vsub.f32 %v2844, %v4899
        %4901 = vmatmul.f32.gmra.mxu0 %v4900
        %v4902 = vpop.f32.mrf.mxu0
        %v4903 = vadd.f32 %v4334, %v4902
        %v4904 = vand.u32 %v2847, 4294901760
        %v4905 = vsub.f32 %v2847, %v4904
        %4906 = vmatmul.f32.gmra.mxu0 %v4905
        %v4907 = vpop.f32.mrf.mxu0
        %v4908 = vadd.f32 %v4338, %v4907
        %v4909 = vand.u32 %v2850, 4294901760
        %v4910 = vsub.f32 %v2850, %v4909
        %4911 = vmatmul.f32.gmra.mxu0 %v4910
        %v4912 = vpop.f32.mrf.mxu0
        %v4913 = vadd.f32 %v4342, %v4912
        %v4914 = vand.u32 %v2853, 4294901760
        %v4915 = vsub.f32 %v2853, %v4914
        %4916 = vmatmul.f32.gmra.mxu0 %v4915
        %v4917 = vpop.f32.mrf.mxu0
        %v4918 = vadd.f32 %v4346, %v4917
        %v4919 = vand.u32 %v2856, 4294901760
        %v4920 = vsub.f32 %v2856, %v4919
        %4921 = vmatmul.f32.gmra.mxu0 %v4920
        %v4922 = vpop.f32.mrf.mxu0
        %v4923 = vadd.f32 %v4350, %v4922
        %v4924 = vand.u32 %v2859, 4294901760
        %v4925 = vsub.f32 %v2859, %v4924
        %4926 = vmatmul.f32.gmra.mxu0 %v4925
        %v4927 = vpop.f32.mrf.mxu0
        %v4928 = vadd.f32 %v4354, %v4927
        %v4929 = vand.u32 %v2862, 4294901760
        %v4930 = vsub.f32 %v2862, %v4929
        %4931 = vmatmul.f32.gmra.mxu0 %v4930
        %v4932 = vpop.f32.mrf.mxu0
        %v4933 = vadd.f32 %v4358, %v4932
        %v4934 = vand.u32 %v2865, 4294901760
        %v4935 = vsub.f32 %v2865, %v4934
        %4936 = vmatmul.f32.gmra.mxu0 %v4935
        %v4937 = vpop.f32.mrf.mxu0
        %v4938 = vadd.f32 %v4362, %v4937
        %v4939 = vand.u32 %v2868, 4294901760
        %v4940 = vsub.f32 %v2868, %v4939
        %4941 = vmatmul.f32.gmra.mxu0 %v4940
        %v4942 = vpop.f32.mrf.mxu0
        %v4943 = vadd.f32 %v4366, %v4942
        %v4944 = vand.u32 %v2871, 4294901760
        %v4945 = vsub.f32 %v2871, %v4944
        %4946 = vmatmul.f32.gmra.mxu0 %v4945
        %v4947 = vpop.f32.mrf.mxu0
        %v4948 = vadd.f32 %v4370, %v4947
        %v4949 = vand.u32 %v2874, 4294901760
        %v4950 = vsub.f32 %v2874, %v4949
        %4951 = vmatmul.f32.gmra.mxu0 %v4950
        %v4952 = vpop.f32.mrf.mxu0
        %v4953 = vadd.f32 %v4374, %v4952
        %v4954 = vand.u32 %v2877, 4294901760
        %v4955 = vsub.f32 %v2877, %v4954
        %4956 = vmatmul.f32.gmra.mxu0 %v4955
        %v4957 = vpop.f32.mrf.mxu0
        %v4958 = vadd.f32 %v4378, %v4957
        %v4959 = vand.u32 %v2880, 4294901760
        %v4960 = vsub.f32 %v2880, %v4959
        %4961 = vmatmul.f32.gmra.mxu0 %v4960
        %v4962 = vpop.f32.mrf.mxu0
        %v4963 = vadd.f32 %v4382, %v4962
        %v4964 = vand.u32 %v2883, 4294901760
        %v4965 = vsub.f32 %v2883, %v4964
        %4966 = vmatmul.f32.gmra.mxu0 %v4965
        %v4967 = vpop.f32.mrf.mxu0
        %v4968 = vadd.f32 %v4386, %v4967
        %v4969 = vand.u32 %v2886, 4294901760
        %v4970 = vsub.f32 %v2886, %v4969
        %4971 = vmatmul.f32.gmra.mxu0 %v4970
        %v4972 = vpop.f32.mrf.mxu0
        %v4973 = vadd.f32 %v4390, %v4972
        %v4974 = vand.u32 %v2889, 4294901760
        %v4975 = vsub.f32 %v2889, %v4974
        %4976 = vmatmul.f32.gmra.mxu0 %v4975
        %v4977 = vpop.f32.mrf.mxu0
        %v4978 = vadd.f32 %v4394, %v4977
        %v4979 = vand.u32 %v2892, 4294901760
        %v4980 = vsub.f32 %v2892, %v4979
        %4981 = vmatmul.f32.gmra.mxu0 %v4980
        %v4982 = vpop.f32.mrf.mxu0
        %v4983 = vadd.f32 %v4398, %v4982
        %v4984 = vand.u32 %v2895, 4294901760
        %v4985 = vsub.f32 %v2895, %v4984
        %4986 = vmatmul.f32.gmra.mxu0 %v4985
        %v4987 = vpop.f32.mrf.mxu0
        %v4988 = vadd.f32 %v4402, %v4987
        %v4989 = vand.u32 %v2898, 4294901760
        %v4990 = vsub.f32 %v2898, %v4989
        %4991 = vmatmul.f32.gmra.mxu0 %v4990
        %v4992 = vpop.f32.mrf.mxu0
        %v4993 = vadd.f32 %v4406, %v4992
        %v4994 = vand.u32 %v2901, 4294901760
        %v4995 = vsub.f32 %v2901, %v4994
        %4996 = vmatmul.f32.gmra.mxu0 %v4995
        %v4997 = vpop.f32.mrf.mxu0
        %v4998 = vadd.f32 %v4410, %v4997
        %v4999 = vand.u32 %v2904, 4294901760
        %v5000 = vsub.f32 %v2904, %v4999
        %5001 = vmatmul.f32.gmra.mxu0 %v5000
        %v5002 = vpop.f32.mrf.mxu0
        %v5003 = vadd.f32 %v4414, %v5002
        %v5004 = vand.u32 %v2907, 4294901760
        %v5005 = vsub.f32 %v2907, %v5004
        %5006 = vmatmul.f32.gmra.mxu0 %v5005
        %v5007 = vpop.f32.mrf.mxu0
        %v5008 = vadd.f32 %v4418, %v5007
        %v5009 = vand.u32 %v2910, 4294901760
        %v5010 = vsub.f32 %v2910, %v5009
        %5011 = vmatmul.f32.gmra.mxu0 %v5010
        %v5012 = vpop.f32.mrf.mxu0
        %v5013 = vadd.f32 %v4422, %v5012
        %v5014 = vand.u32 %v2913, 4294901760
        %v5015 = vsub.f32 %v2913, %v5014
        %5016 = vmatmul.f32.gmra.mxu0 %v5015
        %v5017 = vpop.f32.mrf.mxu0
        %v5018 = vadd.f32 %v4426, %v5017
        %v5019 = vand.u32 %v2916, 4294901760
        %v5020 = vsub.f32 %v2916, %v5019
        %5021 = vmatmul.f32.gmra.mxu0 %v5020
        %v5022 = vpop.f32.mrf.mxu0
        %v5023 = vadd.f32 %v4430, %v5022
        %v5024 = vand.u32 %v2919, 4294901760
        %v5025 = vsub.f32 %v2919, %v5024
        %5026 = vmatmul.f32.gmra.mxu0 %v5025
        %v5027 = vpop.f32.mrf.mxu0
        %v5028 = vadd.f32 %v4434, %v5027
        %v5029 = vand.u32 %v2922, 4294901760
        %v5030 = vsub.f32 %v2922, %v5029
        %5031 = vmatmul.f32.gmra.mxu0 %v5030
        %v5032 = vpop.f32.mrf.mxu0
        %v5033 = vadd.f32 %v4438, %v5032
        %v5034 = vand.u32 %v2925, 4294901760
        %v5035 = vsub.f32 %v2925, %v5034
        %5036 = vmatmul.f32.gmra.mxu0 %v5035
        %v5037 = vpop.f32.mrf.mxu0
        %v5038 = vadd.f32 %v4442, %v5037
        %v5039 = vand.u32 %v2928, 4294901760
        %v5040 = vsub.f32 %v2928, %v5039
        %5041 = vmatmul.f32.gmra.mxu0 %v5040
        %v5042 = vpop.f32.mrf.mxu0
        %v5043 = vadd.f32 %v4446, %v5042
        %v5044 = vand.u32 %v2931, 4294901760
        %v5045 = vsub.f32 %v2931, %v5044
        %5046 = vmatmul.f32.gmra.mxu0 %v5045
        %v5047 = vpop.f32.mrf.mxu0
        %v5048 = vadd.f32 %v4450, %v5047
        %v5049 = vand.u32 %v2934, 4294901760
        %v5050 = vsub.f32 %v2934, %v5049
        %5051 = vmatmul.f32.gmra.mxu0 %v5050
        %v5052 = vpop.f32.mrf.mxu0
        %v5053 = vadd.f32 %v4454, %v5052
        %v5054 = vand.u32 %v2937, 4294901760
        %v5055 = vsub.f32 %v2937, %v5054
        %5056 = vmatmul.f32.gmra.mxu0 %v5055
        %v5057 = vpop.f32.mrf.mxu0
        %v5058 = vadd.f32 %v4458, %v5057
        %v5059 = vand.u32 %v2940, 4294901760
        %v5060 = vsub.f32 %v2940, %v5059
        %5061 = vmatmul.f32.gmra.mxu0 %v5060
        %v5062 = vpop.f32.mrf.mxu0
        %v5063 = vadd.f32 %v4462, %v5062
        %v5064 = vand.u32 %v2943, 4294901760
        %v5065 = vsub.f32 %v2943, %v5064
        %5066 = vmatmul.f32.gmra.mxu0 %v5065
        %v5067 = vpop.f32.mrf.mxu0
        %v5068 = vadd.f32 %v4466, %v5067
        %v5069 = vand.u32 %v2946, 4294901760
        %v5070 = vsub.f32 %v2946, %v5069
        %5071 = vmatmul.f32.gmra.mxu0 %v5070
        %v5072 = vpop.f32.mrf.mxu0
        %v5073 = vadd.f32 %v4470, %v5072
        %v5074 = vand.u32 %v2949, 4294901760
        %v5075 = vsub.f32 %v2949, %v5074
        %5076 = vmatmul.f32.gmra.mxu0 %v5075
        %v5077 = vpop.f32.mrf.mxu0
        %v5078 = vadd.f32 %v4474, %v5077
        %v5079 = vand.u32 %v2952, 4294901760
        %v5080 = vsub.f32 %v2952, %v5079
        %5081 = vmatmul.f32.gmra.mxu0 %v5080
        %v5082 = vpop.f32.mrf.mxu0
        %v5083 = vadd.f32 %v4478, %v5082
        %v5084 = vand.u32 %v2955, 4294901760
        %v5085 = vsub.f32 %v2955, %v5084
        %5086 = vmatmul.f32.gmra.mxu0 %v5085
        %v5087 = vpop.f32.mrf.mxu0
        %v5088 = vadd.f32 %v4482, %v5087
        %v5089 = vand.u32 %v2958, 4294901760
        %v5090 = vsub.f32 %v2958, %v5089
        %5091 = vmatmul.f32.gmra.mxu0 %v5090
        %v5092 = vpop.f32.mrf.mxu0
        %v5093 = vadd.f32 %v4486, %v5092
        %v5094 = vand.u32 %v2961, 4294901760
        %v5095 = vsub.f32 %v2961, %v5094
        %5096 = vmatmul.f32.gmra.mxu0 %v5095
        %v5097 = vpop.f32.mrf.mxu0
        %v5098 = vadd.f32 %v4490, %v5097
        %v5099 = vand.u32 %v2964, 4294901760
        %v5100 = vsub.f32 %v2964, %v5099
        %5101 = vmatmul.f32.gmra.mxu0 %v5100
        %v5102 = vpop.f32.mrf.mxu0
        %v5103 = vadd.f32 %v4494, %v5102
        %v5104 = vand.u32 %v2967, 4294901760
        %v5105 = vsub.f32 %v2967, %v5104
        %5106 = vmatmul.f32.gmra.mxu0 %v5105
        %v5107 = vpop.f32.mrf.mxu0
        %v5108 = vadd.f32 %v4498, %v5107
        %v5109 = vand.u32 %v2970, 4294901760
        %v5110 = vsub.f32 %v2970, %v5109
        %5111 = vmatmul.f32.gmra.mxu0 %v5110
        %v5112 = vpop.f32.mrf.mxu0
        %v5113 = vadd.f32 %v4502, %v5112
        %v5114 = vand.u32 %v2973, 4294901760
        %v5115 = vsub.f32 %v2973, %v5114
        %5116 = vmatmul.f32.gmra.mxu0 %v5115
        %v5117 = vpop.f32.mrf.mxu0
        %v5118 = vadd.f32 %v4506, %v5117
        %v5119 = vand.u32 %v2976, 4294901760
        %v5120 = vsub.f32 %v2976, %v5119
        %5121 = vmatmul.f32.gmra.mxu0 %v5120
        %v5122 = vpop.f32.mrf.mxu0
        %v5123 = vadd.f32 %v4510, %v5122
        %v5124 = vand.u32 %v2979, 4294901760
        %v5125 = vsub.f32 %v2979, %v5124
        %5126 = vmatmul.f32.gmra.mxu0 %v5125
        %v5127 = vpop.f32.mrf.mxu0
        %v5128 = vadd.f32 %v4514, %v5127
        %v5129 = vand.u32 %v2982, 4294901760
        %v5130 = vsub.f32 %v2982, %v5129
        %5131 = vmatmul.f32.gmra.mxu0 %v5130
        %v5132 = vpop.f32.mrf.mxu0
        %v5133 = vadd.f32 %v4518, %v5132
        %v5134 = vand.u32 %v2985, 4294901760
        %v5135 = vsub.f32 %v2985, %v5134
        %5136 = vmatmul.f32.gmra.mxu0 %v5135
        %v5137 = vpop.f32.mrf.mxu0
        %v5138 = vadd.f32 %v4522, %v5137
        %v5139 = vand.u32 %v2988, 4294901760
        %v5140 = vsub.f32 %v2988, %v5139
        %5141 = vmatmul.f32.gmra.mxu0 %v5140
        %v5142 = vpop.f32.mrf.mxu0
        %v5143 = vadd.f32 %v4526, %v5142
        %v5144 = vand.u32 %v2991, 4294901760
        %v5145 = vsub.f32 %v2991, %v5144
        %5146 = vmatmul.f32.gmra.mxu0 %v5145
        %v5147 = vpop.f32.mrf.mxu0
        %v5148 = vadd.f32 %v4530, %v5147
        %v5149 = vand.u32 %v2994, 4294901760
        %v5150 = vsub.f32 %v2994, %v5149
        %5151 = vmatmul.f32.gmra.mxu0 %v5150
        %v5152 = vpop.f32.mrf.mxu0
        %v5153 = vadd.f32 %v4534, %v5152
        %v5154 = vand.u32 %v2997, 4294901760
        %v5155 = vsub.f32 %v2997, %v5154
        %5156 = vmatmul.f32.gmra.mxu0 %v5155
        %v5157 = vpop.f32.mrf.mxu0
        %v5158 = vadd.f32 %v4538, %v5157
        %v5159 = vand.u32 %v3000, 4294901760
        %v5160 = vsub.f32 %v3000, %v5159
        %5161 = vmatmul.f32.gmra.mxu0 %v5160
        %v5162 = vpop.f32.mrf.mxu0
        %v5163 = vadd.f32 %v4542, %v5162
        %v5164 = vand.u32 %v3003, 4294901760
        %v5165 = vsub.f32 %v3003, %v5164
        %5166 = vmatmul.f32.gmra.mxu0 %v5165
        %v5167 = vpop.f32.mrf.mxu0
        %v5168 = vadd.f32 %v4546, %v5167
        %v5169 = vand.u32 %v3006, 4294901760
        %v5170 = vsub.f32 %v3006, %v5169
        %5171 = vmatmul.f32.gmra.mxu0 %v5170
        %v5172 = vpop.f32.mrf.mxu0
        %v5173 = vadd.f32 %v4550, %v5172
        %v5174 = vand.u32 %v3009, 4294901760
        %v5175 = vsub.f32 %v3009, %v5174
        %5176 = vmatmul.f32.gmra.mxu0 %v5175
        %v5177 = vpop.f32.mrf.mxu0
        %v5178 = vadd.f32 %v4554, %v5177
        %v5179 = vand.u32 %v3012, 4294901760
        %v5180 = vsub.f32 %v3012, %v5179
        %5181 = vmatmul.f32.gmra.mxu0 %v5180
        %v5182 = vpop.f32.mrf.mxu0
        %v5183 = vadd.f32 %v4558, %v5182
        %v5184 = vand.u32 %v3015, 4294901760
        %v5185 = vsub.f32 %v3015, %v5184
        %5186 = vmatmul.f32.gmra.mxu0 %v5185
        %v5187 = vpop.f32.mrf.mxu0
        %v5188 = vadd.f32 %v4562, %v5187
        %v5189 = vand.u32 %v3018, 4294901760
        %v5190 = vsub.f32 %v3018, %v5189
        %5191 = vmatmul.f32.gmra.mxu0 %v5190
        %v5192 = vpop.f32.mrf.mxu0
        %v5193 = vadd.f32 %v4566, %v5192
        %v5194 = vand.u32 %v3021, 4294901760
        %v5195 = vsub.f32 %v3021, %v5194
        %5196 = vmatmul.f32.gmra.mxu0 %v5195
        %v5197 = vpop.f32.mrf.mxu0
        %v5198 = vadd.f32 %v4570, %v5197
        %v5199 = vand.u32 %v3024, 4294901760
        %v5200 = vsub.f32 %v3024, %v5199
        %5201 = vmatmul.f32.gmra.mxu0 %v5200
        %v5202 = vpop.f32.mrf.mxu0
        %v5203 = vadd.f32 %v4574, %v5202
        %v5204 = vand.u32 %v3027, 4294901760
        %v5205 = vsub.f32 %v3027, %v5204
        %5206 = vmatmul.f32.gmra.mxu0 %v5205
        %v5207 = vpop.f32.mrf.mxu0
        %v5208 = vadd.f32 %v4578, %v5207
        %v5209 = vand.u32 %v3030, 4294901760
        %v5210 = vsub.f32 %v3030, %v5209
        %5211 = vmatmul.f32.gmra.mxu0 %v5210
        %v5212 = vpop.f32.mrf.mxu0
        %v5213 = vadd.f32 %v4582, %v5212
        %v5214 = vand.u32 %v3033, 4294901760
        %v5215 = vsub.f32 %v3033, %v5214
        %5216 = vmatmul.f32.gmra.mxu0 %v5215
        %v5217 = vpop.f32.mrf.mxu0
        %v5218 = vadd.f32 %v4586, %v5217
        %v5219 = vand.u32 %v3036, 4294901760
        %v5220 = vsub.f32 %v3036, %v5219
        %5221 = vmatmul.f32.gmra.mxu0 %v5220
        %v5222 = vpop.f32.mrf.mxu0
        %v5223 = vadd.f32 %v4590, %v5222
        %v5224 = vand.u32 %v3039, 4294901760
        %v5225 = vsub.f32 %v3039, %v5224
        %5226 = vmatmul.f32.gmra.mxu0 %v5225
        %v5227 = vpop.f32.mrf.mxu0
        %v5228 = vadd.f32 %v4594, %v5227
        %v5229 = vand.u32 %v3042, 4294901760
        %v5230 = vsub.f32 %v3042, %v5229
        %5231 = vmatmul.f32.gmra.mxu0 %v5230
        %v5232 = vpop.f32.mrf.mxu0
        %v5233 = vadd.f32 %v4598, %v5232
        %v5234 = vand.u32 %v3045, 4294901760
        %v5235 = vsub.f32 %v3045, %v5234
        %5236 = vmatmul.f32.gmra.mxu0 %v5235
        %v5237 = vpop.f32.mrf.mxu0
        %v5238 = vadd.f32 %v4602, %v5237
        %v5239 = vand.u32 %v3048, 4294901760
        %v5240 = vsub.f32 %v3048, %v5239
        %5241 = vmatmul.f32.gmra.mxu0 %v5240
        %v5242 = vpop.f32.mrf.mxu0
        %v5243 = vadd.f32 %v4606, %v5242
        %v5244 = vand.u32 %v3051, 4294901760
        %v5245 = vsub.f32 %v3051, %v5244
        %5246 = vmatmul.f32.gmra.mxu0 %v5245
        %v5247 = vpop.f32.mrf.mxu0
        %v5248 = vadd.f32 %v4610, %v5247
        %v5249 = vand.u32 %v3054, 4294901760
        %v5250 = vsub.f32 %v3054, %v5249
        %5251 = vmatmul.f32.gmra.mxu0 %v5250
        %v5252 = vpop.f32.mrf.mxu0
        %v5253 = vadd.f32 %v4614, %v5252
        %v5254 = vand.u32 %v3057, 4294901760
        %v5255 = vsub.f32 %v3057, %v5254
        %5256 = vmatmul.f32.gmra.mxu0 %v5255
        %v5257 = vpop.f32.mrf.mxu0
        %v5258 = vadd.f32 %v4618, %v5257
        %v5259 = vand.u32 %v3060, 4294901760
        %v5260 = vsub.f32 %v3060, %v5259
        %5261 = vmatmul.f32.gmra.mxu0 %v5260
        %v5262 = vpop.f32.mrf.mxu0
        %v5263 = vadd.f32 %v4622, %v5262
        %v5264 = vand.u32 %v3063, 4294901760
        %v5265 = vsub.f32 %v3063, %v5264
        %5266 = vmatmul.f32.gmra.mxu0 %v5265
        %v5267 = vpop.f32.mrf.mxu0
        %v5268 = vadd.f32 %v4626, %v5267
        %v5269 = vand.u32 %v3066, 4294901760
        %v5270 = vsub.f32 %v3066, %v5269
        %5271 = vmatmul.f32.gmra.mxu0 %v5270
        %v5272 = vpop.f32.mrf.mxu0
        %v5273 = vadd.f32 %v4630, %v5272
        %v5274 = vand.u32 %v3069, 4294901760
        %v5275 = vsub.f32 %v3069, %v5274
        %5276 = vmatmul.f32.gmra.mxu0 %v5275
        %v5277 = vpop.f32.mrf.mxu0
        %v5278 = vadd.f32 %v4634, %v5277
        %v5279 = vand.u32 %v3072, 4294901760
        %v5280 = vsub.f32 %v3072, %v5279
        %5281 = vmatmul.f32.gmra.mxu0 %v5280
        %v5282 = vpop.f32.mrf.mxu0
        %v5283 = vadd.f32 %v4638, %v5282
        %v5284 = vand.u32 %v3075, 4294901760
        %v5285 = vsub.f32 %v3075, %v5284
        %5286 = vmatmul.f32.gmra.mxu0 %v5285
        %v5287 = vpop.f32.mrf.mxu0
        %v5288 = vadd.f32 %v4642, %v5287
        %v5289 = vand.u32 %v3078, 4294901760
        %v5290 = vsub.f32 %v3078, %v5289
        %5291 = vmatmul.f32.gmra.mxu0 %v5290
        %v5292 = vpop.f32.mrf.mxu0
        %v5293 = vadd.f32 %v4646, %v5292
        %v5294 = vand.u32 %v3081, 4294901760
        %v5295 = vsub.f32 %v3081, %v5294
        %5296 = vmatmul.f32.gmra.mxu0 %v5295
        %v5297 = vpop.f32.mrf.mxu0
        %v5298 = vadd.f32 %v4650, %v5297
        %v5299 = vand.u32 %v3084, 4294901760
        %v5300 = vsub.f32 %v3084, %v5299
        %5301 = vmatmul.f32.gmra.mxu0 %v5300
        %v5302 = vpop.f32.mrf.mxu0
        %v5303 = vadd.f32 %v4654, %v5302
        %v5304 = vand.u32 %v3087, 4294901760
        %v5305 = vsub.f32 %v3087, %v5304
        %5306 = vmatmul.f32.gmra.mxu0 %v5305
        %v5307 = vpop.f32.mrf.mxu0
        %v5308 = vadd.f32 %v4658, %v5307
        %v5309 = vand.u32 %v3090, 4294901760
        %v5310 = vsub.f32 %v3090, %v5309
        %5311 = vmatmul.f32.gmra.mxu0 %v5310
        %v5312 = vpop.f32.mrf.mxu0
        %v5313 = vadd.f32 %v4662, %v5312
        %v5314 = vand.u32 %v3093, 4294901760
        %v5315 = vsub.f32 %v3093, %v5314
        %5316 = vmatmul.f32.gmra.mxu0 %v5315
        %v5317 = vpop.f32.mrf.mxu0
        %v5318 = vadd.f32 %v4666, %v5317
        %v5319 = vand.u32 %v3096, 4294901760
        %v5320 = vsub.f32 %v3096, %v5319
        %5321 = vmatmul.f32.gmra.mxu0 %v5320
        %v5322 = vpop.f32.mrf.mxu0
        %v5323 = vadd.f32 %v4670, %v5322
        %v5324 = vand.u32 %v3099, 4294901760
        %v5325 = vsub.f32 %v3099, %v5324
        %5326 = vmatmul.f32.gmra.mxu0 %v5325
        %v5327 = vpop.f32.mrf.mxu0
        %v5328 = vadd.f32 %v4674, %v5327
        %v5329 = vand.u32 %v3102, 4294901760
        %v5330 = vsub.f32 %v3102, %v5329
        %5331 = vmatmul.f32.gmra.mxu0 %v5330
        %v5332 = vpop.f32.mrf.mxu0
        %v5333 = vadd.f32 %v4678, %v5332
        %v5334 = vand.u32 %v3105, 4294901760
        %v5335 = vsub.f32 %v3105, %v5334
        %5336 = vmatmul.f32.gmra.mxu0 %v5335
        %v5337 = vpop.f32.mrf.mxu0
        %v5338 = vadd.f32 %v4682, %v5337
        %v5339 = vand.u32 %v3108, 4294901760
        %v5340 = vsub.f32 %v3108, %v5339
        %5341 = vmatmul.f32.gmra.mxu0 %v5340
        %v5342 = vpop.f32.mrf.mxu0
        %v5343 = vadd.f32 %v4686, %v5342
        %v5344 = vand.u32 %v3111, 4294901760
        %v5345 = vsub.f32 %v3111, %v5344
        %5346 = vmatmul.f32.gmra.mxu0 %v5345
        %v5347 = vpop.f32.mrf.mxu0
        %v5348 = vadd.f32 %v4690, %v5347
        %v5349 = vand.u32 %v3114, 4294901760
        %v5350 = vsub.f32 %v3114, %v5349
        %5351 = vmatmul.f32.gmra.mxu0 %v5350
        %v5352 = vpop.f32.mrf.mxu0
        %v5353 = vadd.f32 %v4694, %v5352
        %5354 = vdwg.mxu0
        %5355 = vmatpush.msra.mxu0 0.0
        %5356 = vmatpush.msra.mxu0 0.0
        %5357 = vmatpush.msra.mxu0 0.0
        %5358 = vmatpush.msra.mxu0 0.0
        %5359 = vmatpush.msra.mxu0 0.0
        %5360 = vmatpush.msra.mxu0 0.0
        %5361 = vmatpush.msra.mxu0 0.0
        %5362 = vmatpush.msra.mxu0 0.0
        %5363 = vmatpush.msra.mxu0 0.0
        %5364 = vmatpush.msra.mxu0 0.0
        %5365 = vmatpush.msra.mxu0 0.0
        %5366 = vmatpush.msra.mxu0 0.0
        %5367 = vmatpush.msra.mxu0 0.0
        %5368 = vmatpush.msra.mxu0 0.0
        %5369 = vmatpush.msra.mxu0 0.0
        %v5370 = vand.u32 %v3118, 4294901760
        %5371 = vmatpush.msra.mxu0 %v5370
        %v5372 = vand.u32 %v2733, 4294901760
        %v5373 = vsub.f32 %v2733, %v5372
        %v5374 = vand.u32 %v5373, 4294901760
        %5375 = vmatmul.f32.gmra.mxu0 %v5374
        %v5376 = vpop.f32.mrf.mxu0
        %v5377 = vadd.f32 %v4718, %v5376
        %v5378 = vand.u32 %v2736, 4294901760
        %v5379 = vsub.f32 %v2736, %v5378
        %v5380 = vand.u32 %v5379, 4294901760
        %5381 = vmatmul.f32.gmra.mxu0 %v5380
        %v5382 = vpop.f32.mrf.mxu0
        %v5383 = vadd.f32 %v4723, %v5382
        %v5384 = vand.u32 %v2739, 4294901760
        %v5385 = vsub.f32 %v2739, %v5384
        %v5386 = vand.u32 %v5385, 4294901760
        %5387 = vmatmul.f32.gmra.mxu0 %v5386
        %v5388 = vpop.f32.mrf.mxu0
        %v5389 = vadd.f32 %v4728, %v5388
        %v5390 = vand.u32 %v2742, 4294901760
        %v5391 = vsub.f32 %v2742, %v5390
        %v5392 = vand.u32 %v5391, 4294901760
        %5393 = vmatmul.f32.gmra.mxu0 %v5392
        %v5394 = vpop.f32.mrf.mxu0
        %v5395 = vadd.f32 %v4733, %v5394
        %v5396 = vand.u32 %v2745, 4294901760
        %v5397 = vsub.f32 %v2745, %v5396
        %v5398 = vand.u32 %v5397, 4294901760
        %5399 = vmatmul.f32.gmra.mxu0 %v5398
        %v5400 = vpop.f32.mrf.mxu0
        %v5401 = vadd.f32 %v4738, %v5400
        %v5402 = vand.u32 %v2748, 4294901760
        %v5403 = vsub.f32 %v2748, %v5402
        %v5404 = vand.u32 %v5403, 4294901760
        %5405 = vmatmul.f32.gmra.mxu0 %v5404
        %v5406 = vpop.f32.mrf.mxu0
        %v5407 = vadd.f32 %v4743, %v5406
        %v5408 = vand.u32 %v2751, 4294901760
        %v5409 = vsub.f32 %v2751, %v5408
        %v5410 = vand.u32 %v5409, 4294901760
        %5411 = vmatmul.f32.gmra.mxu0 %v5410
        %v5412 = vpop.f32.mrf.mxu0
        %v5413 = vadd.f32 %v4748, %v5412
        %v5414 = vand.u32 %v2754, 4294901760
        %v5415 = vsub.f32 %v2754, %v5414
        %v5416 = vand.u32 %v5415, 4294901760
        %5417 = vmatmul.f32.gmra.mxu0 %v5416
        %v5418 = vpop.f32.mrf.mxu0
        %v5419 = vadd.f32 %v4753, %v5418
        %v5420 = vand.u32 %v2757, 4294901760
        %v5421 = vsub.f32 %v2757, %v5420
        %v5422 = vand.u32 %v5421, 4294901760
        %5423 = vmatmul.f32.gmra.mxu0 %v5422
        %v5424 = vpop.f32.mrf.mxu0
        %v5425 = vadd.f32 %v4758, %v5424
        %v5426 = vand.u32 %v2760, 4294901760
        %v5427 = vsub.f32 %v2760, %v5426
        %v5428 = vand.u32 %v5427, 4294901760
        %5429 = vmatmul.f32.gmra.mxu0 %v5428
        %v5430 = vpop.f32.mrf.mxu0
        %v5431 = vadd.f32 %v4763, %v5430
        %v5432 = vand.u32 %v2763, 4294901760
        %v5433 = vsub.f32 %v2763, %v5432
        %v5434 = vand.u32 %v5433, 4294901760
        %5435 = vmatmul.f32.gmra.mxu0 %v5434
        %v5436 = vpop.f32.mrf.mxu0
        %v5437 = vadd.f32 %v4768, %v5436
        %v5438 = vand.u32 %v2766, 4294901760
        %v5439 = vsub.f32 %v2766, %v5438
        %v5440 = vand.u32 %v5439, 4294901760
        %5441 = vmatmul.f32.gmra.mxu0 %v5440
        %v5442 = vpop.f32.mrf.mxu0
        %v5443 = vadd.f32 %v4773, %v5442
        %v5444 = vand.u32 %v2769, 4294901760
        %v5445 = vsub.f32 %v2769, %v5444
        %v5446 = vand.u32 %v5445, 4294901760
        %5447 = vmatmul.f32.gmra.mxu0 %v5446
        %v5448 = vpop.f32.mrf.mxu0
        %v5449 = vadd.f32 %v4778, %v5448
        %v5450 = vand.u32 %v2772, 4294901760
        %v5451 = vsub.f32 %v2772, %v5450
        %v5452 = vand.u32 %v5451, 4294901760
        %5453 = vmatmul.f32.gmra.mxu0 %v5452
        %v5454 = vpop.f32.mrf.mxu0
        %v5455 = vadd.f32 %v4783, %v5454
        %v5456 = vand.u32 %v2775, 4294901760
        %v5457 = vsub.f32 %v2775, %v5456
        %v5458 = vand.u32 %v5457, 4294901760
        %5459 = vmatmul.f32.gmra.mxu0 %v5458
        %v5460 = vpop.f32.mrf.mxu0
        %v5461 = vadd.f32 %v4788, %v5460
        %v5462 = vand.u32 %v2778, 4294901760
        %v5463 = vsub.f32 %v2778, %v5462
        %v5464 = vand.u32 %v5463, 4294901760
        %5465 = vmatmul.f32.gmra.mxu0 %v5464
        %v5466 = vpop.f32.mrf.mxu0
        %v5467 = vadd.f32 %v4793, %v5466
        %v5468 = vand.u32 %v2781, 4294901760
        %v5469 = vsub.f32 %v2781, %v5468
        %v5470 = vand.u32 %v5469, 4294901760
        %5471 = vmatmul.f32.gmra.mxu0 %v5470
        %v5472 = vpop.f32.mrf.mxu0
        %v5473 = vadd.f32 %v4798, %v5472
        %v5474 = vand.u32 %v2784, 4294901760
        %v5475 = vsub.f32 %v2784, %v5474
        %v5476 = vand.u32 %v5475, 4294901760
        %5477 = vmatmul.f32.gmra.mxu0 %v5476
        %v5478 = vpop.f32.mrf.mxu0
        %v5479 = vadd.f32 %v4803, %v5478
        %v5480 = vand.u32 %v2787, 4294901760
        %v5481 = vsub.f32 %v2787, %v5480
        %v5482 = vand.u32 %v5481, 4294901760
        %5483 = vmatmul.f32.gmra.mxu0 %v5482
        %v5484 = vpop.f32.mrf.mxu0
        %v5485 = vadd.f32 %v4808, %v5484
        %v5486 = vand.u32 %v2790, 4294901760
        %v5487 = vsub.f32 %v2790, %v5486
        %v5488 = vand.u32 %v5487, 4294901760
        %5489 = vmatmul.f32.gmra.mxu0 %v5488
        %v5490 = vpop.f32.mrf.mxu0
        %v5491 = vadd.f32 %v4813, %v5490
        %v5492 = vand.u32 %v2793, 4294901760
        %v5493 = vsub.f32 %v2793, %v5492
        %v5494 = vand.u32 %v5493, 4294901760
        %5495 = vmatmul.f32.gmra.mxu0 %v5494
        %v5496 = vpop.f32.mrf.mxu0
        %v5497 = vadd.f32 %v4818, %v5496
        %v5498 = vand.u32 %v2796, 4294901760
        %v5499 = vsub.f32 %v2796, %v5498
        %v5500 = vand.u32 %v5499, 4294901760
        %5501 = vmatmul.f32.gmra.mxu0 %v5500
        %v5502 = vpop.f32.mrf.mxu0
        %v5503 = vadd.f32 %v4823, %v5502
        %v5504 = vand.u32 %v2799, 4294901760
        %v5505 = vsub.f32 %v2799, %v5504
        %v5506 = vand.u32 %v5505, 4294901760
        %5507 = vmatmul.f32.gmra.mxu0 %v5506
        %v5508 = vpop.f32.mrf.mxu0
        %v5509 = vadd.f32 %v4828, %v5508
        %v5510 = vand.u32 %v2802, 4294901760
        %v5511 = vsub.f32 %v2802, %v5510
        %v5512 = vand.u32 %v5511, 4294901760
        %5513 = vmatmul.f32.gmra.mxu0 %v5512
        %v5514 = vpop.f32.mrf.mxu0
        %v5515 = vadd.f32 %v4833, %v5514
        %v5516 = vand.u32 %v2805, 4294901760
        %v5517 = vsub.f32 %v2805, %v5516
        %v5518 = vand.u32 %v5517, 4294901760
        %5519 = vmatmul.f32.gmra.mxu0 %v5518
        %v5520 = vpop.f32.mrf.mxu0
        %v5521 = vadd.f32 %v4838, %v5520
        %v5522 = vand.u32 %v2808, 4294901760
        %v5523 = vsub.f32 %v2808, %v5522
        %v5524 = vand.u32 %v5523, 4294901760
        %5525 = vmatmul.f32.gmra.mxu0 %v5524
        %v5526 = vpop.f32.mrf.mxu0
        %v5527 = vadd.f32 %v4843, %v5526
        %v5528 = vand.u32 %v2811, 4294901760
        %v5529 = vsub.f32 %v2811, %v5528
        %v5530 = vand.u32 %v5529, 4294901760
        %5531 = vmatmul.f32.gmra.mxu0 %v5530
        %v5532 = vpop.f32.mrf.mxu0
        %v5533 = vadd.f32 %v4848, %v5532
        %v5534 = vand.u32 %v2814, 4294901760
        %v5535 = vsub.f32 %v2814, %v5534
        %v5536 = vand.u32 %v5535, 4294901760
        %5537 = vmatmul.f32.gmra.mxu0 %v5536
        %v5538 = vpop.f32.mrf.mxu0
        %v5539 = vadd.f32 %v4853, %v5538
        %v5540 = vand.u32 %v2817, 4294901760
        %v5541 = vsub.f32 %v2817, %v5540
        %v5542 = vand.u32 %v5541, 4294901760
        %5543 = vmatmul.f32.gmra.mxu0 %v5542
        %v5544 = vpop.f32.mrf.mxu0
        %v5545 = vadd.f32 %v4858, %v5544
        %v5546 = vand.u32 %v2820, 4294901760
        %v5547 = vsub.f32 %v2820, %v5546
        %v5548 = vand.u32 %v5547, 4294901760
        %5549 = vmatmul.f32.gmra.mxu0 %v5548
        %v5550 = vpop.f32.mrf.mxu0
        %v5551 = vadd.f32 %v4863, %v5550
        %v5552 = vand.u32 %v2823, 4294901760
        %v5553 = vsub.f32 %v2823, %v5552
        %v5554 = vand.u32 %v5553, 4294901760
        %5555 = vmatmul.f32.gmra.mxu0 %v5554
        %v5556 = vpop.f32.mrf.mxu0
        %v5557 = vadd.f32 %v4868, %v5556
        %v5558 = vand.u32 %v2826, 4294901760
        %v5559 = vsub.f32 %v2826, %v5558
        %v5560 = vand.u32 %v5559, 4294901760
        %5561 = vmatmul.f32.gmra.mxu0 %v5560
        %v5562 = vpop.f32.mrf.mxu0
        %v5563 = vadd.f32 %v4873, %v5562
        %v5564 = vand.u32 %v2829, 4294901760
        %v5565 = vsub.f32 %v2829, %v5564
        %v5566 = vand.u32 %v5565, 4294901760
        %5567 = vmatmul.f32.gmra.mxu0 %v5566
        %v5568 = vpop.f32.mrf.mxu0
        %v5569 = vadd.f32 %v4878, %v5568
        %v5570 = vand.u32 %v2832, 4294901760
        %v5571 = vsub.f32 %v2832, %v5570
        %v5572 = vand.u32 %v5571, 4294901760
        %5573 = vmatmul.f32.gmra.mxu0 %v5572
        %v5574 = vpop.f32.mrf.mxu0
        %v5575 = vadd.f32 %v4883, %v5574
        %v5576 = vand.u32 %v2835, 4294901760
        %v5577 = vsub.f32 %v2835, %v5576
        %v5578 = vand.u32 %v5577, 4294901760
        %5579 = vmatmul.f32.gmra.mxu0 %v5578
        %v5580 = vpop.f32.mrf.mxu0
        %v5581 = vadd.f32 %v4888, %v5580
        %v5582 = vand.u32 %v2838, 4294901760
        %v5583 = vsub.f32 %v2838, %v5582
        %v5584 = vand.u32 %v5583, 4294901760
        %5585 = vmatmul.f32.gmra.mxu0 %v5584
        %v5586 = vpop.f32.mrf.mxu0
        %v5587 = vadd.f32 %v4893, %v5586
        %v5588 = vand.u32 %v2841, 4294901760
        %v5589 = vsub.f32 %v2841, %v5588
        %v5590 = vand.u32 %v5589, 4294901760
        %5591 = vmatmul.f32.gmra.mxu0 %v5590
        %v5592 = vpop.f32.mrf.mxu0
        %v5593 = vadd.f32 %v4898, %v5592
        %v5594 = vand.u32 %v2844, 4294901760
        %v5595 = vsub.f32 %v2844, %v5594
        %v5596 = vand.u32 %v5595, 4294901760
        %5597 = vmatmul.f32.gmra.mxu0 %v5596
        %v5598 = vpop.f32.mrf.mxu0
        %v5599 = vadd.f32 %v4903, %v5598
        %v5600 = vand.u32 %v2847, 4294901760
        %v5601 = vsub.f32 %v2847, %v5600
        %v5602 = vand.u32 %v5601, 4294901760
        %5603 = vmatmul.f32.gmra.mxu0 %v5602
        %v5604 = vpop.f32.mrf.mxu0
        %v5605 = vadd.f32 %v4908, %v5604
        %v5606 = vand.u32 %v2850, 4294901760
        %v5607 = vsub.f32 %v2850, %v5606
        %v5608 = vand.u32 %v5607, 4294901760
        %5609 = vmatmul.f32.gmra.mxu0 %v5608
        %v5610 = vpop.f32.mrf.mxu0
        %v5611 = vadd.f32 %v4913, %v5610
        %v5612 = vand.u32 %v2853, 4294901760
        %v5613 = vsub.f32 %v2853, %v5612
        %v5614 = vand.u32 %v5613, 4294901760
        %5615 = vmatmul.f32.gmra.mxu0 %v5614
        %v5616 = vpop.f32.mrf.mxu0
        %v5617 = vadd.f32 %v4918, %v5616
        %v5618 = vand.u32 %v2856, 4294901760
        %v5619 = vsub.f32 %v2856, %v5618
        %v5620 = vand.u32 %v5619, 4294901760
        %5621 = vmatmul.f32.gmra.mxu0 %v5620
        %v5622 = vpop.f32.mrf.mxu0
        %v5623 = vadd.f32 %v4923, %v5622
        %v5624 = vand.u32 %v2859, 4294901760
        %v5625 = vsub.f32 %v2859, %v5624
        %v5626 = vand.u32 %v5625, 4294901760
        %5627 = vmatmul.f32.gmra.mxu0 %v5626
        %v5628 = vpop.f32.mrf.mxu0
        %v5629 = vadd.f32 %v4928, %v5628
        %v5630 = vand.u32 %v2862, 4294901760
        %v5631 = vsub.f32 %v2862, %v5630
        %v5632 = vand.u32 %v5631, 4294901760
        %5633 = vmatmul.f32.gmra.mxu0 %v5632
        %v5634 = vpop.f32.mrf.mxu0
        %v5635 = vadd.f32 %v4933, %v5634
        %v5636 = vand.u32 %v2865, 4294901760
        %v5637 = vsub.f32 %v2865, %v5636
        %v5638 = vand.u32 %v5637, 4294901760
        %5639 = vmatmul.f32.gmra.mxu0 %v5638
        %v5640 = vpop.f32.mrf.mxu0
        %v5641 = vadd.f32 %v4938, %v5640
        %v5642 = vand.u32 %v2868, 4294901760
        %v5643 = vsub.f32 %v2868, %v5642
        %v5644 = vand.u32 %v5643, 4294901760
        %5645 = vmatmul.f32.gmra.mxu0 %v5644
        %v5646 = vpop.f32.mrf.mxu0
        %v5647 = vadd.f32 %v4943, %v5646
        %v5648 = vand.u32 %v2871, 4294901760
        %v5649 = vsub.f32 %v2871, %v5648
        %v5650 = vand.u32 %v5649, 4294901760
        %5651 = vmatmul.f32.gmra.mxu0 %v5650
        %v5652 = vpop.f32.mrf.mxu0
        %v5653 = vadd.f32 %v4948, %v5652
        %v5654 = vand.u32 %v2874, 4294901760
        %v5655 = vsub.f32 %v2874, %v5654
        %v5656 = vand.u32 %v5655, 4294901760
        %5657 = vmatmul.f32.gmra.mxu0 %v5656
        %v5658 = vpop.f32.mrf.mxu0
        %v5659 = vadd.f32 %v4953, %v5658
        %v5660 = vand.u32 %v2877, 4294901760
        %v5661 = vsub.f32 %v2877, %v5660
        %v5662 = vand.u32 %v5661, 4294901760
        %5663 = vmatmul.f32.gmra.mxu0 %v5662
        %v5664 = vpop.f32.mrf.mxu0
        %v5665 = vadd.f32 %v4958, %v5664
        %v5666 = vand.u32 %v2880, 4294901760
        %v5667 = vsub.f32 %v2880, %v5666
        %v5668 = vand.u32 %v5667, 4294901760
        %5669 = vmatmul.f32.gmra.mxu0 %v5668
        %v5670 = vpop.f32.mrf.mxu0
        %v5671 = vadd.f32 %v4963, %v5670
        %v5672 = vand.u32 %v2883, 4294901760
        %v5673 = vsub.f32 %v2883, %v5672
        %v5674 = vand.u32 %v5673, 4294901760
        %5675 = vmatmul.f32.gmra.mxu0 %v5674
        %v5676 = vpop.f32.mrf.mxu0
        %v5677 = vadd.f32 %v4968, %v5676
        %v5678 = vand.u32 %v2886, 4294901760
        %v5679 = vsub.f32 %v2886, %v5678
        %v5680 = vand.u32 %v5679, 4294901760
        %5681 = vmatmul.f32.gmra.mxu0 %v5680
        %v5682 = vpop.f32.mrf.mxu0
        %v5683 = vadd.f32 %v4973, %v5682
        %v5684 = vand.u32 %v2889, 4294901760
        %v5685 = vsub.f32 %v2889, %v5684
        %v5686 = vand.u32 %v5685, 4294901760
        %5687 = vmatmul.f32.gmra.mxu0 %v5686
        %v5688 = vpop.f32.mrf.mxu0
        %v5689 = vadd.f32 %v4978, %v5688
        %v5690 = vand.u32 %v2892, 4294901760
        %v5691 = vsub.f32 %v2892, %v5690
        %v5692 = vand.u32 %v5691, 4294901760
        %5693 = vmatmul.f32.gmra.mxu0 %v5692
        %v5694 = vpop.f32.mrf.mxu0
        %v5695 = vadd.f32 %v4983, %v5694
        %v5696 = vand.u32 %v2895, 4294901760
        %v5697 = vsub.f32 %v2895, %v5696
        %v5698 = vand.u32 %v5697, 4294901760
        %5699 = vmatmul.f32.gmra.mxu0 %v5698
        %v5700 = vpop.f32.mrf.mxu0
        %v5701 = vadd.f32 %v4988, %v5700
        %v5702 = vand.u32 %v2898, 4294901760
        %v5703 = vsub.f32 %v2898, %v5702
        %v5704 = vand.u32 %v5703, 4294901760
        %5705 = vmatmul.f32.gmra.mxu0 %v5704
        %v5706 = vpop.f32.mrf.mxu0
        %v5707 = vadd.f32 %v4993, %v5706
        %v5708 = vand.u32 %v2901, 4294901760
        %v5709 = vsub.f32 %v2901, %v5708
        %v5710 = vand.u32 %v5709, 4294901760
        %5711 = vmatmul.f32.gmra.mxu0 %v5710
        %v5712 = vpop.f32.mrf.mxu0
        %v5713 = vadd.f32 %v4998, %v5712
        %v5714 = vand.u32 %v2904, 4294901760
        %v5715 = vsub.f32 %v2904, %v5714
        %v5716 = vand.u32 %v5715, 4294901760
        %5717 = vmatmul.f32.gmra.mxu0 %v5716
        %v5718 = vpop.f32.mrf.mxu0
        %v5719 = vadd.f32 %v5003, %v5718
        %v5720 = vand.u32 %v2907, 4294901760
        %v5721 = vsub.f32 %v2907, %v5720
        %v5722 = vand.u32 %v5721, 4294901760
        %5723 = vmatmul.f32.gmra.mxu0 %v5722
        %v5724 = vpop.f32.mrf.mxu0
        %v5725 = vadd.f32 %v5008, %v5724
        %v5726 = vand.u32 %v2910, 4294901760
        %v5727 = vsub.f32 %v2910, %v5726
        %v5728 = vand.u32 %v5727, 4294901760
        %5729 = vmatmul.f32.gmra.mxu0 %v5728
        %v5730 = vpop.f32.mrf.mxu0
        %v5731 = vadd.f32 %v5013, %v5730
        %v5732 = vand.u32 %v2913, 4294901760
        %v5733 = vsub.f32 %v2913, %v5732
        %v5734 = vand.u32 %v5733, 4294901760
        %5735 = vmatmul.f32.gmra.mxu0 %v5734
        %v5736 = vpop.f32.mrf.mxu0
        %v5737 = vadd.f32 %v5018, %v5736
        %v5738 = vand.u32 %v2916, 4294901760
        %v5739 = vsub.f32 %v2916, %v5738
        %v5740 = vand.u32 %v5739, 4294901760
        %5741 = vmatmul.f32.gmra.mxu0 %v5740
        %v5742 = vpop.f32.mrf.mxu0
        %v5743 = vadd.f32 %v5023, %v5742
        %v5744 = vand.u32 %v2919, 4294901760
        %v5745 = vsub.f32 %v2919, %v5744
        %v5746 = vand.u32 %v5745, 4294901760
        %5747 = vmatmul.f32.gmra.mxu0 %v5746
        %v5748 = vpop.f32.mrf.mxu0
        %v5749 = vadd.f32 %v5028, %v5748
        %v5750 = vand.u32 %v2922, 4294901760
        %v5751 = vsub.f32 %v2922, %v5750
        %v5752 = vand.u32 %v5751, 4294901760
        %5753 = vmatmul.f32.gmra.mxu0 %v5752
        %v5754 = vpop.f32.mrf.mxu0
        %v5755 = vadd.f32 %v5033, %v5754
        %v5756 = vand.u32 %v2925, 4294901760
        %v5757 = vsub.f32 %v2925, %v5756
        %v5758 = vand.u32 %v5757, 4294901760
        %5759 = vmatmul.f32.gmra.mxu0 %v5758
        %v5760 = vpop.f32.mrf.mxu0
        %v5761 = vadd.f32 %v5038, %v5760
        %v5762 = vand.u32 %v2928, 4294901760
        %v5763 = vsub.f32 %v2928, %v5762
        %v5764 = vand.u32 %v5763, 4294901760
        %5765 = vmatmul.f32.gmra.mxu0 %v5764
        %v5766 = vpop.f32.mrf.mxu0
        %v5767 = vadd.f32 %v5043, %v5766
        %v5768 = vand.u32 %v2931, 4294901760
        %v5769 = vsub.f32 %v2931, %v5768
        %v5770 = vand.u32 %v5769, 4294901760
        %5771 = vmatmul.f32.gmra.mxu0 %v5770
        %v5772 = vpop.f32.mrf.mxu0
        %v5773 = vadd.f32 %v5048, %v5772
        %v5774 = vand.u32 %v2934, 4294901760
        %v5775 = vsub.f32 %v2934, %v5774
        %v5776 = vand.u32 %v5775, 4294901760
        %5777 = vmatmul.f32.gmra.mxu0 %v5776
        %v5778 = vpop.f32.mrf.mxu0
        %v5779 = vadd.f32 %v5053, %v5778
        %v5780 = vand.u32 %v2937, 4294901760
        %v5781 = vsub.f32 %v2937, %v5780
        %v5782 = vand.u32 %v5781, 4294901760
        %5783 = vmatmul.f32.gmra.mxu0 %v5782
        %v5784 = vpop.f32.mrf.mxu0
        %v5785 = vadd.f32 %v5058, %v5784
        %v5786 = vand.u32 %v2940, 4294901760
        %v5787 = vsub.f32 %v2940, %v5786
        %v5788 = vand.u32 %v5787, 4294901760
        %5789 = vmatmul.f32.gmra.mxu0 %v5788
        %v5790 = vpop.f32.mrf.mxu0
        %v5791 = vadd.f32 %v5063, %v5790
        %v5792 = vand.u32 %v2943, 4294901760
        %v5793 = vsub.f32 %v2943, %v5792
        %v5794 = vand.u32 %v5793, 4294901760
        %5795 = vmatmul.f32.gmra.mxu0 %v5794
        %v5796 = vpop.f32.mrf.mxu0
        %v5797 = vadd.f32 %v5068, %v5796
        %v5798 = vand.u32 %v2946, 4294901760
        %v5799 = vsub.f32 %v2946, %v5798
        %v5800 = vand.u32 %v5799, 4294901760
        %5801 = vmatmul.f32.gmra.mxu0 %v5800
        %v5802 = vpop.f32.mrf.mxu0
        %v5803 = vadd.f32 %v5073, %v5802
        %v5804 = vand.u32 %v2949, 4294901760
        %v5805 = vsub.f32 %v2949, %v5804
        %v5806 = vand.u32 %v5805, 4294901760
        %5807 = vmatmul.f32.gmra.mxu0 %v5806
        %v5808 = vpop.f32.mrf.mxu0
        %v5809 = vadd.f32 %v5078, %v5808
        %v5810 = vand.u32 %v2952, 4294901760
        %v5811 = vsub.f32 %v2952, %v5810
        %v5812 = vand.u32 %v5811, 4294901760
        %5813 = vmatmul.f32.gmra.mxu0 %v5812
        %v5814 = vpop.f32.mrf.mxu0
        %v5815 = vadd.f32 %v5083, %v5814
        %v5816 = vand.u32 %v2955, 4294901760
        %v5817 = vsub.f32 %v2955, %v5816
        %v5818 = vand.u32 %v5817, 4294901760
        %5819 = vmatmul.f32.gmra.mxu0 %v5818
        %v5820 = vpop.f32.mrf.mxu0
        %v5821 = vadd.f32 %v5088, %v5820
        %v5822 = vand.u32 %v2958, 4294901760
        %v5823 = vsub.f32 %v2958, %v5822
        %v5824 = vand.u32 %v5823, 4294901760
        %5825 = vmatmul.f32.gmra.mxu0 %v5824
        %v5826 = vpop.f32.mrf.mxu0
        %v5827 = vadd.f32 %v5093, %v5826
        %v5828 = vand.u32 %v2961, 4294901760
        %v5829 = vsub.f32 %v2961, %v5828
        %v5830 = vand.u32 %v5829, 4294901760
        %5831 = vmatmul.f32.gmra.mxu0 %v5830
        %v5832 = vpop.f32.mrf.mxu0
        %v5833 = vadd.f32 %v5098, %v5832
        %v5834 = vand.u32 %v2964, 4294901760
        %v5835 = vsub.f32 %v2964, %v5834
        %v5836 = vand.u32 %v5835, 4294901760
        %5837 = vmatmul.f32.gmra.mxu0 %v5836
        %v5838 = vpop.f32.mrf.mxu0
        %v5839 = vadd.f32 %v5103, %v5838
        %v5840 = vand.u32 %v2967, 4294901760
        %v5841 = vsub.f32 %v2967, %v5840
        %v5842 = vand.u32 %v5841, 4294901760
        %5843 = vmatmul.f32.gmra.mxu0 %v5842
        %v5844 = vpop.f32.mrf.mxu0
        %v5845 = vadd.f32 %v5108, %v5844
        %v5846 = vand.u32 %v2970, 4294901760
        %v5847 = vsub.f32 %v2970, %v5846
        %v5848 = vand.u32 %v5847, 4294901760
        %5849 = vmatmul.f32.gmra.mxu0 %v5848
        %v5850 = vpop.f32.mrf.mxu0
        %v5851 = vadd.f32 %v5113, %v5850
        %v5852 = vand.u32 %v2973, 4294901760
        %v5853 = vsub.f32 %v2973, %v5852
        %v5854 = vand.u32 %v5853, 4294901760
        %5855 = vmatmul.f32.gmra.mxu0 %v5854
        %v5856 = vpop.f32.mrf.mxu0
        %v5857 = vadd.f32 %v5118, %v5856
        %v5858 = vand.u32 %v2976, 4294901760
        %v5859 = vsub.f32 %v2976, %v5858
        %v5860 = vand.u32 %v5859, 4294901760
        %5861 = vmatmul.f32.gmra.mxu0 %v5860
        %v5862 = vpop.f32.mrf.mxu0
        %v5863 = vadd.f32 %v5123, %v5862
        %v5864 = vand.u32 %v2979, 4294901760
        %v5865 = vsub.f32 %v2979, %v5864
        %v5866 = vand.u32 %v5865, 4294901760
        %5867 = vmatmul.f32.gmra.mxu0 %v5866
        %v5868 = vpop.f32.mrf.mxu0
        %v5869 = vadd.f32 %v5128, %v5868
        %v5870 = vand.u32 %v2982, 4294901760
        %v5871 = vsub.f32 %v2982, %v5870
        %v5872 = vand.u32 %v5871, 4294901760
        %5873 = vmatmul.f32.gmra.mxu0 %v5872
        %v5874 = vpop.f32.mrf.mxu0
        %v5875 = vadd.f32 %v5133, %v5874
        %v5876 = vand.u32 %v2985, 4294901760
        %v5877 = vsub.f32 %v2985, %v5876
        %v5878 = vand.u32 %v5877, 4294901760
        %5879 = vmatmul.f32.gmra.mxu0 %v5878
        %v5880 = vpop.f32.mrf.mxu0
        %v5881 = vadd.f32 %v5138, %v5880
        %v5882 = vand.u32 %v2988, 4294901760
        %v5883 = vsub.f32 %v2988, %v5882
        %v5884 = vand.u32 %v5883, 4294901760
        %5885 = vmatmul.f32.gmra.mxu0 %v5884
        %v5886 = vpop.f32.mrf.mxu0
        %v5887 = vadd.f32 %v5143, %v5886
        %v5888 = vand.u32 %v2991, 4294901760
        %v5889 = vsub.f32 %v2991, %v5888
        %v5890 = vand.u32 %v5889, 4294901760
        %5891 = vmatmul.f32.gmra.mxu0 %v5890
        %v5892 = vpop.f32.mrf.mxu0
        %v5893 = vadd.f32 %v5148, %v5892
        %v5894 = vand.u32 %v2994, 4294901760
        %v5895 = vsub.f32 %v2994, %v5894
        %v5896 = vand.u32 %v5895, 4294901760
        %5897 = vmatmul.f32.gmra.mxu0 %v5896
        %v5898 = vpop.f32.mrf.mxu0
        %v5899 = vadd.f32 %v5153, %v5898
        %v5900 = vand.u32 %v2997, 4294901760
        %v5901 = vsub.f32 %v2997, %v5900
        %v5902 = vand.u32 %v5901, 4294901760
        %5903 = vmatmul.f32.gmra.mxu0 %v5902
        %v5904 = vpop.f32.mrf.mxu0
        %v5905 = vadd.f32 %v5158, %v5904
        %v5906 = vand.u32 %v3000, 4294901760
        %v5907 = vsub.f32 %v3000, %v5906
        %v5908 = vand.u32 %v5907, 4294901760
        %5909 = vmatmul.f32.gmra.mxu0 %v5908
        %v5910 = vpop.f32.mrf.mxu0
        %v5911 = vadd.f32 %v5163, %v5910
        %v5912 = vand.u32 %v3003, 4294901760
        %v5913 = vsub.f32 %v3003, %v5912
        %v5914 = vand.u32 %v5913, 4294901760
        %5915 = vmatmul.f32.gmra.mxu0 %v5914
        %v5916 = vpop.f32.mrf.mxu0
        %v5917 = vadd.f32 %v5168, %v5916
        %v5918 = vand.u32 %v3006, 4294901760
        %v5919 = vsub.f32 %v3006, %v5918
        %v5920 = vand.u32 %v5919, 4294901760
        %5921 = vmatmul.f32.gmra.mxu0 %v5920
        %v5922 = vpop.f32.mrf.mxu0
        %v5923 = vadd.f32 %v5173, %v5922
        %v5924 = vand.u32 %v3009, 4294901760
        %v5925 = vsub.f32 %v3009, %v5924
        %v5926 = vand.u32 %v5925, 4294901760
        %5927 = vmatmul.f32.gmra.mxu0 %v5926
        %v5928 = vpop.f32.mrf.mxu0
        %v5929 = vadd.f32 %v5178, %v5928
        %v5930 = vand.u32 %v3012, 4294901760
        %v5931 = vsub.f32 %v3012, %v5930
        %v5932 = vand.u32 %v5931, 4294901760
        %5933 = vmatmul.f32.gmra.mxu0 %v5932
        %v5934 = vpop.f32.mrf.mxu0
        %v5935 = vadd.f32 %v5183, %v5934
        %v5936 = vand.u32 %v3015, 4294901760
        %v5937 = vsub.f32 %v3015, %v5936
        %v5938 = vand.u32 %v5937, 4294901760
        %5939 = vmatmul.f32.gmra.mxu0 %v5938
        %v5940 = vpop.f32.mrf.mxu0
        %v5941 = vadd.f32 %v5188, %v5940
        %v5942 = vand.u32 %v3018, 4294901760
        %v5943 = vsub.f32 %v3018, %v5942
        %v5944 = vand.u32 %v5943, 4294901760
        %5945 = vmatmul.f32.gmra.mxu0 %v5944
        %v5946 = vpop.f32.mrf.mxu0
        %v5947 = vadd.f32 %v5193, %v5946
        %v5948 = vand.u32 %v3021, 4294901760
        %v5949 = vsub.f32 %v3021, %v5948
        %v5950 = vand.u32 %v5949, 4294901760
        %5951 = vmatmul.f32.gmra.mxu0 %v5950
        %v5952 = vpop.f32.mrf.mxu0
        %v5953 = vadd.f32 %v5198, %v5952
        %v5954 = vand.u32 %v3024, 4294901760
        %v5955 = vsub.f32 %v3024, %v5954
        %v5956 = vand.u32 %v5955, 4294901760
        %5957 = vmatmul.f32.gmra.mxu0 %v5956
        %v5958 = vpop.f32.mrf.mxu0
        %v5959 = vadd.f32 %v5203, %v5958
        %v5960 = vand.u32 %v3027, 4294901760
        %v5961 = vsub.f32 %v3027, %v5960
        %v5962 = vand.u32 %v5961, 4294901760
        %5963 = vmatmul.f32.gmra.mxu0 %v5962
        %v5964 = vpop.f32.mrf.mxu0
        %v5965 = vadd.f32 %v5208, %v5964
        %v5966 = vand.u32 %v3030, 4294901760
        %v5967 = vsub.f32 %v3030, %v5966
        %v5968 = vand.u32 %v5967, 4294901760
        %5969 = vmatmul.f32.gmra.mxu0 %v5968
        %v5970 = vpop.f32.mrf.mxu0
        %v5971 = vadd.f32 %v5213, %v5970
        %v5972 = vand.u32 %v3033, 4294901760
        %v5973 = vsub.f32 %v3033, %v5972
        %v5974 = vand.u32 %v5973, 4294901760
        %5975 = vmatmul.f32.gmra.mxu0 %v5974
        %v5976 = vpop.f32.mrf.mxu0
        %v5977 = vadd.f32 %v5218, %v5976
        %v5978 = vand.u32 %v3036, 4294901760
        %v5979 = vsub.f32 %v3036, %v5978
        %v5980 = vand.u32 %v5979, 4294901760
        %5981 = vmatmul.f32.gmra.mxu0 %v5980
        %v5982 = vpop.f32.mrf.mxu0
        %v5983 = vadd.f32 %v5223, %v5982
        %v5984 = vand.u32 %v3039, 4294901760
        %v5985 = vsub.f32 %v3039, %v5984
        %v5986 = vand.u32 %v5985, 4294901760
        %5987 = vmatmul.f32.gmra.mxu0 %v5986
        %v5988 = vpop.f32.mrf.mxu0
        %v5989 = vadd.f32 %v5228, %v5988
        %v5990 = vand.u32 %v3042, 4294901760
        %v5991 = vsub.f32 %v3042, %v5990
        %v5992 = vand.u32 %v5991, 4294901760
        %5993 = vmatmul.f32.gmra.mxu0 %v5992
        %v5994 = vpop.f32.mrf.mxu0
        %v5995 = vadd.f32 %v5233, %v5994
        %v5996 = vand.u32 %v3045, 4294901760
        %v5997 = vsub.f32 %v3045, %v5996
        %v5998 = vand.u32 %v5997, 4294901760
        %5999 = vmatmul.f32.gmra.mxu0 %v5998
        %v6000 = vpop.f32.mrf.mxu0
        %v6001 = vadd.f32 %v5238, %v6000
        %v6002 = vand.u32 %v3048, 4294901760
        %v6003 = vsub.f32 %v3048, %v6002
        %v6004 = vand.u32 %v6003, 4294901760
        %6005 = vmatmul.f32.gmra.mxu0 %v6004
        %v6006 = vpop.f32.mrf.mxu0
        %v6007 = vadd.f32 %v5243, %v6006
        %v6008 = vand.u32 %v3051, 4294901760
        %v6009 = vsub.f32 %v3051, %v6008
        %v6010 = vand.u32 %v6009, 4294901760
        %6011 = vmatmul.f32.gmra.mxu0 %v6010
        %v6012 = vpop.f32.mrf.mxu0
        %v6013 = vadd.f32 %v5248, %v6012
        %v6014 = vand.u32 %v3054, 4294901760
        %v6015 = vsub.f32 %v3054, %v6014
        %v6016 = vand.u32 %v6015, 4294901760
        %6017 = vmatmul.f32.gmra.mxu0 %v6016
        %v6018 = vpop.f32.mrf.mxu0
        %v6019 = vadd.f32 %v5253, %v6018
        %v6020 = vand.u32 %v3057, 4294901760
        %v6021 = vsub.f32 %v3057, %v6020
        %v6022 = vand.u32 %v6021, 4294901760
        %6023 = vmatmul.f32.gmra.mxu0 %v6022
        %v6024 = vpop.f32.mrf.mxu0
        %v6025 = vadd.f32 %v5258, %v6024
        %v6026 = vand.u32 %v3060, 4294901760
        %v6027 = vsub.f32 %v3060, %v6026
        %v6028 = vand.u32 %v6027, 4294901760
        %6029 = vmatmul.f32.gmra.mxu0 %v6028
        %v6030 = vpop.f32.mrf.mxu0
        %v6031 = vadd.f32 %v5263, %v6030
        %v6032 = vand.u32 %v3063, 4294901760
        %v6033 = vsub.f32 %v3063, %v6032
        %v6034 = vand.u32 %v6033, 4294901760
        %6035 = vmatmul.f32.gmra.mxu0 %v6034
        %v6036 = vpop.f32.mrf.mxu0
        %v6037 = vadd.f32 %v5268, %v6036
        %v6038 = vand.u32 %v3066, 4294901760
        %v6039 = vsub.f32 %v3066, %v6038
        %v6040 = vand.u32 %v6039, 4294901760
        %6041 = vmatmul.f32.gmra.mxu0 %v6040
        %v6042 = vpop.f32.mrf.mxu0
        %v6043 = vadd.f32 %v5273, %v6042
        %v6044 = vand.u32 %v3069, 4294901760
        %v6045 = vsub.f32 %v3069, %v6044
        %v6046 = vand.u32 %v6045, 4294901760
        %6047 = vmatmul.f32.gmra.mxu0 %v6046
        %v6048 = vpop.f32.mrf.mxu0
        %v6049 = vadd.f32 %v5278, %v6048
        %v6050 = vand.u32 %v3072, 4294901760
        %v6051 = vsub.f32 %v3072, %v6050
        %v6052 = vand.u32 %v6051, 4294901760
        %6053 = vmatmul.f32.gmra.mxu0 %v6052
        %v6054 = vpop.f32.mrf.mxu0
        %v6055 = vadd.f32 %v5283, %v6054
        %v6056 = vand.u32 %v3075, 4294901760
        %v6057 = vsub.f32 %v3075, %v6056
        %v6058 = vand.u32 %v6057, 4294901760
        %6059 = vmatmul.f32.gmra.mxu0 %v6058
        %v6060 = vpop.f32.mrf.mxu0
        %v6061 = vadd.f32 %v5288, %v6060
        %v6062 = vand.u32 %v3078, 4294901760
        %v6063 = vsub.f32 %v3078, %v6062
        %v6064 = vand.u32 %v6063, 4294901760
        %6065 = vmatmul.f32.gmra.mxu0 %v6064
        %v6066 = vpop.f32.mrf.mxu0
        %v6067 = vadd.f32 %v5293, %v6066
        %v6068 = vand.u32 %v3081, 4294901760
        %v6069 = vsub.f32 %v3081, %v6068
        %v6070 = vand.u32 %v6069, 4294901760
        %6071 = vmatmul.f32.gmra.mxu0 %v6070
        %v6072 = vpop.f32.mrf.mxu0
        %v6073 = vadd.f32 %v5298, %v6072
        %v6074 = vand.u32 %v3084, 4294901760
        %v6075 = vsub.f32 %v3084, %v6074
        %v6076 = vand.u32 %v6075, 4294901760
        %6077 = vmatmul.f32.gmra.mxu0 %v6076
        %v6078 = vpop.f32.mrf.mxu0
        %v6079 = vadd.f32 %v5303, %v6078
        %v6080 = vand.u32 %v3087, 4294901760
        %v6081 = vsub.f32 %v3087, %v6080
        %v6082 = vand.u32 %v6081, 4294901760
        %6083 = vmatmul.f32.gmra.mxu0 %v6082
        %v6084 = vpop.f32.mrf.mxu0
        %v6085 = vadd.f32 %v5308, %v6084
        %v6086 = vand.u32 %v3090, 4294901760
        %v6087 = vsub.f32 %v3090, %v6086
        %v6088 = vand.u32 %v6087, 4294901760
        %6089 = vmatmul.f32.gmra.mxu0 %v6088
        %v6090 = vpop.f32.mrf.mxu0
        %v6091 = vadd.f32 %v5313, %v6090
        %v6092 = vand.u32 %v3093, 4294901760
        %v6093 = vsub.f32 %v3093, %v6092
        %v6094 = vand.u32 %v6093, 4294901760
        %6095 = vmatmul.f32.gmra.mxu0 %v6094
        %v6096 = vpop.f32.mrf.mxu0
        %v6097 = vadd.f32 %v5318, %v6096
        %v6098 = vand.u32 %v3096, 4294901760
        %v6099 = vsub.f32 %v3096, %v6098
        %v6100 = vand.u32 %v6099, 4294901760
        %6101 = vmatmul.f32.gmra.mxu0 %v6100
        %v6102 = vpop.f32.mrf.mxu0
        %v6103 = vadd.f32 %v5323, %v6102
        %v6104 = vand.u32 %v3099, 4294901760
        %v6105 = vsub.f32 %v3099, %v6104
        %v6106 = vand.u32 %v6105, 4294901760
        %6107 = vmatmul.f32.gmra.mxu0 %v6106
        %v6108 = vpop.f32.mrf.mxu0
        %v6109 = vadd.f32 %v5328, %v6108
        %v6110 = vand.u32 %v3102, 4294901760
        %v6111 = vsub.f32 %v3102, %v6110
        %v6112 = vand.u32 %v6111, 4294901760
        %6113 = vmatmul.f32.gmra.mxu0 %v6112
        %v6114 = vpop.f32.mrf.mxu0
        %v6115 = vadd.f32 %v5333, %v6114
        %v6116 = vand.u32 %v3105, 4294901760
        %v6117 = vsub.f32 %v3105, %v6116
        %v6118 = vand.u32 %v6117, 4294901760
        %6119 = vmatmul.f32.gmra.mxu0 %v6118
        %v6120 = vpop.f32.mrf.mxu0
        %v6121 = vadd.f32 %v5338, %v6120
        %v6122 = vand.u32 %v3108, 4294901760
        %v6123 = vsub.f32 %v3108, %v6122
        %v6124 = vand.u32 %v6123, 4294901760
        %6125 = vmatmul.f32.gmra.mxu0 %v6124
        %v6126 = vpop.f32.mrf.mxu0
        %v6127 = vadd.f32 %v5343, %v6126
        %v6128 = vand.u32 %v3111, 4294901760
        %v6129 = vsub.f32 %v3111, %v6128
        %v6130 = vand.u32 %v6129, 4294901760
        %6131 = vmatmul.f32.gmra.mxu0 %v6130
        %v6132 = vpop.f32.mrf.mxu0
        %v6133 = vadd.f32 %v5348, %v6132
        %v6134 = vand.u32 %v3114, 4294901760
        %v6135 = vsub.f32 %v3114, %v6134
        %v6136 = vand.u32 %v6135, 4294901760
        %6137 = vmatmul.f32.gmra.mxu0 %v6136
        %v6138 = vpop.f32.mrf.mxu0
        %v6139 = vadd.f32 %v5353, %v6138
        %6140 = vdwg.mxu0
        %6141 = vmatpush.msra.mxu0 0.0
        %6142 = vmatpush.msra.mxu0 0.0
        %6143 = vmatpush.msra.mxu0 0.0
        %6144 = vmatpush.msra.mxu0 0.0
        %6145 = vmatpush.msra.mxu0 0.0
        %6146 = vmatpush.msra.mxu0 0.0
        %6147 = vmatpush.msra.mxu0 0.0
        %6148 = vmatpush.msra.mxu0 0.0
        %6149 = vmatpush.msra.mxu0 0.0
        %6150 = vmatpush.msra.mxu0 0.0
        %6151 = vmatpush.msra.mxu0 0.0
        %6152 = vmatpush.msra.mxu0 0.0
        %6153 = vmatpush.msra.mxu0 0.0
        %6154 = vmatpush.msra.mxu0 0.0
        %6155 = vmatpush.msra.mxu0 0.0
        %v6156 = vand.u32 %v3118, 4294901760
        %v6157 = vsub.f32 %v3118, %v6156
        %v6158 = vand.u32 %v6157, 4294901760
        %6159 = vmatpush.msra.mxu0 %v6158
        %v6160 = vand.u32 %v2733, 4294901760
        %6161 = vmatmul.f32.gmra.mxu0 %v6160
        %v6162 = vpop.f32.mrf.mxu0
        %v6163 = vadd.f32 %v5377, %v6162
        %v6164 = vand.u32 %v2736, 4294901760
        %6165 = vmatmul.f32.gmra.mxu0 %v6164
        %v6166 = vpop.f32.mrf.mxu0
        %v6167 = vadd.f32 %v5383, %v6166
        %v6168 = vand.u32 %v2739, 4294901760
        %6169 = vmatmul.f32.gmra.mxu0 %v6168
        %v6170 = vpop.f32.mrf.mxu0
        %v6171 = vadd.f32 %v5389, %v6170
        %v6172 = vand.u32 %v2742, 4294901760
        %6173 = vmatmul.f32.gmra.mxu0 %v6172
        %v6174 = vpop.f32.mrf.mxu0
        %v6175 = vadd.f32 %v5395, %v6174
        %v6176 = vand.u32 %v2745, 4294901760
        %6177 = vmatmul.f32.gmra.mxu0 %v6176
        %v6178 = vpop.f32.mrf.mxu0
        %v6179 = vadd.f32 %v5401, %v6178
        %v6180 = vand.u32 %v2748, 4294901760
        %6181 = vmatmul.f32.gmra.mxu0 %v6180
        %v6182 = vpop.f32.mrf.mxu0
        %v6183 = vadd.f32 %v5407, %v6182
        %v6184 = vand.u32 %v2751, 4294901760
        %6185 = vmatmul.f32.gmra.mxu0 %v6184
        %v6186 = vpop.f32.mrf.mxu0
        %v6187 = vadd.f32 %v5413, %v6186
        %v6188 = vand.u32 %v2754, 4294901760
        %6189 = vmatmul.f32.gmra.mxu0 %v6188
        %v6190 = vpop.f32.mrf.mxu0
        %v6191 = vadd.f32 %v5419, %v6190
        %v6192 = vand.u32 %v2757, 4294901760
        %6193 = vmatmul.f32.gmra.mxu0 %v6192
        %v6194 = vpop.f32.mrf.mxu0
        %v6195 = vadd.f32 %v5425, %v6194
        %v6196 = vand.u32 %v2760, 4294901760
        %6197 = vmatmul.f32.gmra.mxu0 %v6196
        %v6198 = vpop.f32.mrf.mxu0
        %v6199 = vadd.f32 %v5431, %v6198
        %v6200 = vand.u32 %v2763, 4294901760
        %6201 = vmatmul.f32.gmra.mxu0 %v6200
        %v6202 = vpop.f32.mrf.mxu0
        %v6203 = vadd.f32 %v5437, %v6202
        %v6204 = vand.u32 %v2766, 4294901760
        %6205 = vmatmul.f32.gmra.mxu0 %v6204
        %v6206 = vpop.f32.mrf.mxu0
        %v6207 = vadd.f32 %v5443, %v6206
        %v6208 = vand.u32 %v2769, 4294901760
        %6209 = vmatmul.f32.gmra.mxu0 %v6208
        %v6210 = vpop.f32.mrf.mxu0
        %v6211 = vadd.f32 %v5449, %v6210
        %v6212 = vand.u32 %v2772, 4294901760
        %6213 = vmatmul.f32.gmra.mxu0 %v6212
        %v6214 = vpop.f32.mrf.mxu0
        %v6215 = vadd.f32 %v5455, %v6214
        %v6216 = vand.u32 %v2775, 4294901760
        %6217 = vmatmul.f32.gmra.mxu0 %v6216
        %v6218 = vpop.f32.mrf.mxu0
        %v6219 = vadd.f32 %v5461, %v6218
        %v6220 = vand.u32 %v2778, 4294901760
        %6221 = vmatmul.f32.gmra.mxu0 %v6220
        %v6222 = vpop.f32.mrf.mxu0
        %v6223 = vadd.f32 %v5467, %v6222
        %v6224 = vand.u32 %v2781, 4294901760
        %6225 = vmatmul.f32.gmra.mxu0 %v6224
        %v6226 = vpop.f32.mrf.mxu0
        %v6227 = vadd.f32 %v5473, %v6226
        %v6228 = vand.u32 %v2784, 4294901760
        %6229 = vmatmul.f32.gmra.mxu0 %v6228
        %v6230 = vpop.f32.mrf.mxu0
        %v6231 = vadd.f32 %v5479, %v6230
        %v6232 = vand.u32 %v2787, 4294901760
        %6233 = vmatmul.f32.gmra.mxu0 %v6232
        %v6234 = vpop.f32.mrf.mxu0
        %v6235 = vadd.f32 %v5485, %v6234
        %v6236 = vand.u32 %v2790, 4294901760
        %6237 = vmatmul.f32.gmra.mxu0 %v6236
        %v6238 = vpop.f32.mrf.mxu0
        %v6239 = vadd.f32 %v5491, %v6238
        %v6240 = vand.u32 %v2793, 4294901760
        %6241 = vmatmul.f32.gmra.mxu0 %v6240
        %v6242 = vpop.f32.mrf.mxu0
        %v6243 = vadd.f32 %v5497, %v6242
        %v6244 = vand.u32 %v2796, 4294901760
        %6245 = vmatmul.f32.gmra.mxu0 %v6244
        %v6246 = vpop.f32.mrf.mxu0
        %v6247 = vadd.f32 %v5503, %v6246
        %v6248 = vand.u32 %v2799, 4294901760
        %6249 = vmatmul.f32.gmra.mxu0 %v6248
        %v6250 = vpop.f32.mrf.mxu0
        %v6251 = vadd.f32 %v5509, %v6250
        %v6252 = vand.u32 %v2802, 4294901760
        %6253 = vmatmul.f32.gmra.mxu0 %v6252
        %v6254 = vpop.f32.mrf.mxu0
        %v6255 = vadd.f32 %v5515, %v6254
        %v6256 = vand.u32 %v2805, 4294901760
        %6257 = vmatmul.f32.gmra.mxu0 %v6256
        %v6258 = vpop.f32.mrf.mxu0
        %v6259 = vadd.f32 %v5521, %v6258
        %v6260 = vand.u32 %v2808, 4294901760
        %6261 = vmatmul.f32.gmra.mxu0 %v6260
        %v6262 = vpop.f32.mrf.mxu0
        %v6263 = vadd.f32 %v5527, %v6262
        %v6264 = vand.u32 %v2811, 4294901760
        %6265 = vmatmul.f32.gmra.mxu0 %v6264
        %v6266 = vpop.f32.mrf.mxu0
        %v6267 = vadd.f32 %v5533, %v6266
        %v6268 = vand.u32 %v2814, 4294901760
        %6269 = vmatmul.f32.gmra.mxu0 %v6268
        %v6270 = vpop.f32.mrf.mxu0
        %v6271 = vadd.f32 %v5539, %v6270
        %v6272 = vand.u32 %v2817, 4294901760
        %6273 = vmatmul.f32.gmra.mxu0 %v6272
        %v6274 = vpop.f32.mrf.mxu0
        %v6275 = vadd.f32 %v5545, %v6274
        %v6276 = vand.u32 %v2820, 4294901760
        %6277 = vmatmul.f32.gmra.mxu0 %v6276
        %v6278 = vpop.f32.mrf.mxu0
        %v6279 = vadd.f32 %v5551, %v6278
        %v6280 = vand.u32 %v2823, 4294901760
        %6281 = vmatmul.f32.gmra.mxu0 %v6280
        %v6282 = vpop.f32.mrf.mxu0
        %v6283 = vadd.f32 %v5557, %v6282
        %v6284 = vand.u32 %v2826, 4294901760
        %6285 = vmatmul.f32.gmra.mxu0 %v6284
        %v6286 = vpop.f32.mrf.mxu0
        %v6287 = vadd.f32 %v5563, %v6286
        %v6288 = vand.u32 %v2829, 4294901760
        %6289 = vmatmul.f32.gmra.mxu0 %v6288
        %v6290 = vpop.f32.mrf.mxu0
        %v6291 = vadd.f32 %v5569, %v6290
        %v6292 = vand.u32 %v2832, 4294901760
        %6293 = vmatmul.f32.gmra.mxu0 %v6292
        %v6294 = vpop.f32.mrf.mxu0
        %v6295 = vadd.f32 %v5575, %v6294
        %v6296 = vand.u32 %v2835, 4294901760
        %6297 = vmatmul.f32.gmra.mxu0 %v6296
        %v6298 = vpop.f32.mrf.mxu0
        %v6299 = vadd.f32 %v5581, %v6298
        %v6300 = vand.u32 %v2838, 4294901760
        %6301 = vmatmul.f32.gmra.mxu0 %v6300
        %v6302 = vpop.f32.mrf.mxu0
        %v6303 = vadd.f32 %v5587, %v6302
        %v6304 = vand.u32 %v2841, 4294901760
        %6305 = vmatmul.f32.gmra.mxu0 %v6304
        %v6306 = vpop.f32.mrf.mxu0
        %v6307 = vadd.f32 %v5593, %v6306
        %v6308 = vand.u32 %v2844, 4294901760
        %6309 = vmatmul.f32.gmra.mxu0 %v6308
        %v6310 = vpop.f32.mrf.mxu0
        %v6311 = vadd.f32 %v5599, %v6310
        %v6312 = vand.u32 %v2847, 4294901760
        %6313 = vmatmul.f32.gmra.mxu0 %v6312
        %v6314 = vpop.f32.mrf.mxu0
        %v6315 = vadd.f32 %v5605, %v6314
        %v6316 = vand.u32 %v2850, 4294901760
        %6317 = vmatmul.f32.gmra.mxu0 %v6316
        %v6318 = vpop.f32.mrf.mxu0
        %v6319 = vadd.f32 %v5611, %v6318
        %v6320 = vand.u32 %v2853, 4294901760
        %6321 = vmatmul.f32.gmra.mxu0 %v6320
        %v6322 = vpop.f32.mrf.mxu0
        %v6323 = vadd.f32 %v5617, %v6322
        %v6324 = vand.u32 %v2856, 4294901760
        %6325 = vmatmul.f32.gmra.mxu0 %v6324
        %v6326 = vpop.f32.mrf.mxu0
        %v6327 = vadd.f32 %v5623, %v6326
        %v6328 = vand.u32 %v2859, 4294901760
        %6329 = vmatmul.f32.gmra.mxu0 %v6328
        %v6330 = vpop.f32.mrf.mxu0
        %v6331 = vadd.f32 %v5629, %v6330
        %v6332 = vand.u32 %v2862, 4294901760
        %6333 = vmatmul.f32.gmra.mxu0 %v6332
        %v6334 = vpop.f32.mrf.mxu0
        %v6335 = vadd.f32 %v5635, %v6334
        %v6336 = vand.u32 %v2865, 4294901760
        %6337 = vmatmul.f32.gmra.mxu0 %v6336
        %v6338 = vpop.f32.mrf.mxu0
        %v6339 = vadd.f32 %v5641, %v6338
        %v6340 = vand.u32 %v2868, 4294901760
        %6341 = vmatmul.f32.gmra.mxu0 %v6340
        %v6342 = vpop.f32.mrf.mxu0
        %v6343 = vadd.f32 %v5647, %v6342
        %v6344 = vand.u32 %v2871, 4294901760
        %6345 = vmatmul.f32.gmra.mxu0 %v6344
        %v6346 = vpop.f32.mrf.mxu0
        %v6347 = vadd.f32 %v5653, %v6346
        %v6348 = vand.u32 %v2874, 4294901760
        %6349 = vmatmul.f32.gmra.mxu0 %v6348
        %v6350 = vpop.f32.mrf.mxu0
        %v6351 = vadd.f32 %v5659, %v6350
        %v6352 = vand.u32 %v2877, 4294901760
        %6353 = vmatmul.f32.gmra.mxu0 %v6352
        %v6354 = vpop.f32.mrf.mxu0
        %v6355 = vadd.f32 %v5665, %v6354
        %v6356 = vand.u32 %v2880, 4294901760
        %6357 = vmatmul.f32.gmra.mxu0 %v6356
        %v6358 = vpop.f32.mrf.mxu0
        %v6359 = vadd.f32 %v5671, %v6358
        %v6360 = vand.u32 %v2883, 4294901760
        %6361 = vmatmul.f32.gmra.mxu0 %v6360
        %v6362 = vpop.f32.mrf.mxu0
        %v6363 = vadd.f32 %v5677, %v6362
        %v6364 = vand.u32 %v2886, 4294901760
        %6365 = vmatmul.f32.gmra.mxu0 %v6364
        %v6366 = vpop.f32.mrf.mxu0
        %v6367 = vadd.f32 %v5683, %v6366
        %v6368 = vand.u32 %v2889, 4294901760
        %6369 = vmatmul.f32.gmra.mxu0 %v6368
        %v6370 = vpop.f32.mrf.mxu0
        %v6371 = vadd.f32 %v5689, %v6370
        %v6372 = vand.u32 %v2892, 4294901760
        %6373 = vmatmul.f32.gmra.mxu0 %v6372
        %v6374 = vpop.f32.mrf.mxu0
        %v6375 = vadd.f32 %v5695, %v6374
        %v6376 = vand.u32 %v2895, 4294901760
        %6377 = vmatmul.f32.gmra.mxu0 %v6376
        %v6378 = vpop.f32.mrf.mxu0
        %v6379 = vadd.f32 %v5701, %v6378
        %v6380 = vand.u32 %v2898, 4294901760
        %6381 = vmatmul.f32.gmra.mxu0 %v6380
        %v6382 = vpop.f32.mrf.mxu0
        %v6383 = vadd.f32 %v5707, %v6382
        %v6384 = vand.u32 %v2901, 4294901760
        %6385 = vmatmul.f32.gmra.mxu0 %v6384
        %v6386 = vpop.f32.mrf.mxu0
        %v6387 = vadd.f32 %v5713, %v6386
        %v6388 = vand.u32 %v2904, 4294901760
        %6389 = vmatmul.f32.gmra.mxu0 %v6388
        %v6390 = vpop.f32.mrf.mxu0
        %v6391 = vadd.f32 %v5719, %v6390
        %v6392 = vand.u32 %v2907, 4294901760
        %6393 = vmatmul.f32.gmra.mxu0 %v6392
        %v6394 = vpop.f32.mrf.mxu0
        %v6395 = vadd.f32 %v5725, %v6394
        %v6396 = vand.u32 %v2910, 4294901760
        %6397 = vmatmul.f32.gmra.mxu0 %v6396
        %v6398 = vpop.f32.mrf.mxu0
        %v6399 = vadd.f32 %v5731, %v6398
        %v6400 = vand.u32 %v2913, 4294901760
        %6401 = vmatmul.f32.gmra.mxu0 %v6400
        %v6402 = vpop.f32.mrf.mxu0
        %v6403 = vadd.f32 %v5737, %v6402
        %v6404 = vand.u32 %v2916, 4294901760
        %6405 = vmatmul.f32.gmra.mxu0 %v6404
        %v6406 = vpop.f32.mrf.mxu0
        %v6407 = vadd.f32 %v5743, %v6406
        %v6408 = vand.u32 %v2919, 4294901760
        %6409 = vmatmul.f32.gmra.mxu0 %v6408
        %v6410 = vpop.f32.mrf.mxu0
        %v6411 = vadd.f32 %v5749, %v6410
        %v6412 = vand.u32 %v2922, 4294901760
        %6413 = vmatmul.f32.gmra.mxu0 %v6412
        %v6414 = vpop.f32.mrf.mxu0
        %v6415 = vadd.f32 %v5755, %v6414
        %v6416 = vand.u32 %v2925, 4294901760
        %6417 = vmatmul.f32.gmra.mxu0 %v6416
        %v6418 = vpop.f32.mrf.mxu0
        %v6419 = vadd.f32 %v5761, %v6418
        %v6420 = vand.u32 %v2928, 4294901760
        %6421 = vmatmul.f32.gmra.mxu0 %v6420
        %v6422 = vpop.f32.mrf.mxu0
        %v6423 = vadd.f32 %v5767, %v6422
        %v6424 = vand.u32 %v2931, 4294901760
        %6425 = vmatmul.f32.gmra.mxu0 %v6424
        %v6426 = vpop.f32.mrf.mxu0
        %v6427 = vadd.f32 %v5773, %v6426
        %v6428 = vand.u32 %v2934, 4294901760
        %6429 = vmatmul.f32.gmra.mxu0 %v6428
        %v6430 = vpop.f32.mrf.mxu0
        %v6431 = vadd.f32 %v5779, %v6430
        %v6432 = vand.u32 %v2937, 4294901760
        %6433 = vmatmul.f32.gmra.mxu0 %v6432
        %v6434 = vpop.f32.mrf.mxu0
        %v6435 = vadd.f32 %v5785, %v6434
        %v6436 = vand.u32 %v2940, 4294901760
        %6437 = vmatmul.f32.gmra.mxu0 %v6436
        %v6438 = vpop.f32.mrf.mxu0
        %v6439 = vadd.f32 %v5791, %v6438
        %v6440 = vand.u32 %v2943, 4294901760
        %6441 = vmatmul.f32.gmra.mxu0 %v6440
        %v6442 = vpop.f32.mrf.mxu0
        %v6443 = vadd.f32 %v5797, %v6442
        %v6444 = vand.u32 %v2946, 4294901760
        %6445 = vmatmul.f32.gmra.mxu0 %v6444
        %v6446 = vpop.f32.mrf.mxu0
        %v6447 = vadd.f32 %v5803, %v6446
        %v6448 = vand.u32 %v2949, 4294901760
        %6449 = vmatmul.f32.gmra.mxu0 %v6448
        %v6450 = vpop.f32.mrf.mxu0
        %v6451 = vadd.f32 %v5809, %v6450
        %v6452 = vand.u32 %v2952, 4294901760
        %6453 = vmatmul.f32.gmra.mxu0 %v6452
        %v6454 = vpop.f32.mrf.mxu0
        %v6455 = vadd.f32 %v5815, %v6454
        %v6456 = vand.u32 %v2955, 4294901760
        %6457 = vmatmul.f32.gmra.mxu0 %v6456
        %v6458 = vpop.f32.mrf.mxu0
        %v6459 = vadd.f32 %v5821, %v6458
        %v6460 = vand.u32 %v2958, 4294901760
        %6461 = vmatmul.f32.gmra.mxu0 %v6460
        %v6462 = vpop.f32.mrf.mxu0
        %v6463 = vadd.f32 %v5827, %v6462
        %v6464 = vand.u32 %v2961, 4294901760
        %6465 = vmatmul.f32.gmra.mxu0 %v6464
        %v6466 = vpop.f32.mrf.mxu0
        %v6467 = vadd.f32 %v5833, %v6466
        %v6468 = vand.u32 %v2964, 4294901760
        %6469 = vmatmul.f32.gmra.mxu0 %v6468
        %v6470 = vpop.f32.mrf.mxu0
        %v6471 = vadd.f32 %v5839, %v6470
        %v6472 = vand.u32 %v2967, 4294901760
        %6473 = vmatmul.f32.gmra.mxu0 %v6472
        %v6474 = vpop.f32.mrf.mxu0
        %v6475 = vadd.f32 %v5845, %v6474
        %v6476 = vand.u32 %v2970, 4294901760
        %6477 = vmatmul.f32.gmra.mxu0 %v6476
        %v6478 = vpop.f32.mrf.mxu0
        %v6479 = vadd.f32 %v5851, %v6478
        %v6480 = vand.u32 %v2973, 4294901760
        %6481 = vmatmul.f32.gmra.mxu0 %v6480
        %v6482 = vpop.f32.mrf.mxu0
        %v6483 = vadd.f32 %v5857, %v6482
        %v6484 = vand.u32 %v2976, 4294901760
        %6485 = vmatmul.f32.gmra.mxu0 %v6484
        %v6486 = vpop.f32.mrf.mxu0
        %v6487 = vadd.f32 %v5863, %v6486
        %v6488 = vand.u32 %v2979, 4294901760
        %6489 = vmatmul.f32.gmra.mxu0 %v6488
        %v6490 = vpop.f32.mrf.mxu0
        %v6491 = vadd.f32 %v5869, %v6490
        %v6492 = vand.u32 %v2982, 4294901760
        %6493 = vmatmul.f32.gmra.mxu0 %v6492
        %v6494 = vpop.f32.mrf.mxu0
        %v6495 = vadd.f32 %v5875, %v6494
        %v6496 = vand.u32 %v2985, 4294901760
        %6497 = vmatmul.f32.gmra.mxu0 %v6496
        %v6498 = vpop.f32.mrf.mxu0
        %v6499 = vadd.f32 %v5881, %v6498
        %v6500 = vand.u32 %v2988, 4294901760
        %6501 = vmatmul.f32.gmra.mxu0 %v6500
        %v6502 = vpop.f32.mrf.mxu0
        %v6503 = vadd.f32 %v5887, %v6502
        %v6504 = vand.u32 %v2991, 4294901760
        %6505 = vmatmul.f32.gmra.mxu0 %v6504
        %v6506 = vpop.f32.mrf.mxu0
        %v6507 = vadd.f32 %v5893, %v6506
        %v6508 = vand.u32 %v2994, 4294901760
        %6509 = vmatmul.f32.gmra.mxu0 %v6508
        %v6510 = vpop.f32.mrf.mxu0
        %v6511 = vadd.f32 %v5899, %v6510
        %v6512 = vand.u32 %v2997, 4294901760
        %6513 = vmatmul.f32.gmra.mxu0 %v6512
        %v6514 = vpop.f32.mrf.mxu0
        %v6515 = vadd.f32 %v5905, %v6514
        %v6516 = vand.u32 %v3000, 4294901760
        %6517 = vmatmul.f32.gmra.mxu0 %v6516
        %v6518 = vpop.f32.mrf.mxu0
        %v6519 = vadd.f32 %v5911, %v6518
        %v6520 = vand.u32 %v3003, 4294901760
        %6521 = vmatmul.f32.gmra.mxu0 %v6520
        %v6522 = vpop.f32.mrf.mxu0
        %v6523 = vadd.f32 %v5917, %v6522
        %v6524 = vand.u32 %v3006, 4294901760
        %6525 = vmatmul.f32.gmra.mxu0 %v6524
        %v6526 = vpop.f32.mrf.mxu0
        %v6527 = vadd.f32 %v5923, %v6526
        %v6528 = vand.u32 %v3009, 4294901760
        %6529 = vmatmul.f32.gmra.mxu0 %v6528
        %v6530 = vpop.f32.mrf.mxu0
        %v6531 = vadd.f32 %v5929, %v6530
        %v6532 = vand.u32 %v3012, 4294901760
        %6533 = vmatmul.f32.gmra.mxu0 %v6532
        %v6534 = vpop.f32.mrf.mxu0
        %v6535 = vadd.f32 %v5935, %v6534
        %v6536 = vand.u32 %v3015, 4294901760
        %6537 = vmatmul.f32.gmra.mxu0 %v6536
        %v6538 = vpop.f32.mrf.mxu0
        %v6539 = vadd.f32 %v5941, %v6538
        %v6540 = vand.u32 %v3018, 4294901760
        %6541 = vmatmul.f32.gmra.mxu0 %v6540
        %v6542 = vpop.f32.mrf.mxu0
        %v6543 = vadd.f32 %v5947, %v6542
        %v6544 = vand.u32 %v3021, 4294901760
        %6545 = vmatmul.f32.gmra.mxu0 %v6544
        %v6546 = vpop.f32.mrf.mxu0
        %v6547 = vadd.f32 %v5953, %v6546
        %v6548 = vand.u32 %v3024, 4294901760
        %6549 = vmatmul.f32.gmra.mxu0 %v6548
        %v6550 = vpop.f32.mrf.mxu0
        %v6551 = vadd.f32 %v5959, %v6550
        %v6552 = vand.u32 %v3027, 4294901760
        %6553 = vmatmul.f32.gmra.mxu0 %v6552
        %v6554 = vpop.f32.mrf.mxu0
        %v6555 = vadd.f32 %v5965, %v6554
        %v6556 = vand.u32 %v3030, 4294901760
        %6557 = vmatmul.f32.gmra.mxu0 %v6556
        %v6558 = vpop.f32.mrf.mxu0
        %v6559 = vadd.f32 %v5971, %v6558
        %v6560 = vand.u32 %v3033, 4294901760
        %6561 = vmatmul.f32.gmra.mxu0 %v6560
        %v6562 = vpop.f32.mrf.mxu0
        %v6563 = vadd.f32 %v5977, %v6562
        %v6564 = vand.u32 %v3036, 4294901760
        %6565 = vmatmul.f32.gmra.mxu0 %v6564
        %v6566 = vpop.f32.mrf.mxu0
        %v6567 = vadd.f32 %v5983, %v6566
        %v6568 = vand.u32 %v3039, 4294901760
        %6569 = vmatmul.f32.gmra.mxu0 %v6568
        %v6570 = vpop.f32.mrf.mxu0
        %v6571 = vadd.f32 %v5989, %v6570
        %v6572 = vand.u32 %v3042, 4294901760
        %6573 = vmatmul.f32.gmra.mxu0 %v6572
        %v6574 = vpop.f32.mrf.mxu0
        %v6575 = vadd.f32 %v5995, %v6574
        %v6576 = vand.u32 %v3045, 4294901760
        %6577 = vmatmul.f32.gmra.mxu0 %v6576
        %v6578 = vpop.f32.mrf.mxu0
        %v6579 = vadd.f32 %v6001, %v6578
        %v6580 = vand.u32 %v3048, 4294901760
        %6581 = vmatmul.f32.gmra.mxu0 %v6580
        %v6582 = vpop.f32.mrf.mxu0
        %v6583 = vadd.f32 %v6007, %v6582
        %v6584 = vand.u32 %v3051, 4294901760
        %6585 = vmatmul.f32.gmra.mxu0 %v6584
        %v6586 = vpop.f32.mrf.mxu0
        %v6587 = vadd.f32 %v6013, %v6586
        %v6588 = vand.u32 %v3054, 4294901760
        %6589 = vmatmul.f32.gmra.mxu0 %v6588
        %v6590 = vpop.f32.mrf.mxu0
        %v6591 = vadd.f32 %v6019, %v6590
        %v6592 = vand.u32 %v3057, 4294901760
        %6593 = vmatmul.f32.gmra.mxu0 %v6592
        %v6594 = vpop.f32.mrf.mxu0
        %v6595 = vadd.f32 %v6025, %v6594
        %v6596 = vand.u32 %v3060, 4294901760
        %6597 = vmatmul.f32.gmra.mxu0 %v6596
        %v6598 = vpop.f32.mrf.mxu0
        %v6599 = vadd.f32 %v6031, %v6598
        %v6600 = vand.u32 %v3063, 4294901760
        %6601 = vmatmul.f32.gmra.mxu0 %v6600
        %v6602 = vpop.f32.mrf.mxu0
        %v6603 = vadd.f32 %v6037, %v6602
        %v6604 = vand.u32 %v3066, 4294901760
        %6605 = vmatmul.f32.gmra.mxu0 %v6604
        %v6606 = vpop.f32.mrf.mxu0
        %v6607 = vadd.f32 %v6043, %v6606
        %v6608 = vand.u32 %v3069, 4294901760
        %6609 = vmatmul.f32.gmra.mxu0 %v6608
        %v6610 = vpop.f32.mrf.mxu0
        %v6611 = vadd.f32 %v6049, %v6610
        %v6612 = vand.u32 %v3072, 4294901760
        %6613 = vmatmul.f32.gmra.mxu0 %v6612
        %v6614 = vpop.f32.mrf.mxu0
        %v6615 = vadd.f32 %v6055, %v6614
        %v6616 = vand.u32 %v3075, 4294901760
        %6617 = vmatmul.f32.gmra.mxu0 %v6616
        %v6618 = vpop.f32.mrf.mxu0
        %v6619 = vadd.f32 %v6061, %v6618
        %v6620 = vand.u32 %v3078, 4294901760
        %6621 = vmatmul.f32.gmra.mxu0 %v6620
        %v6622 = vpop.f32.mrf.mxu0
        %v6623 = vadd.f32 %v6067, %v6622
        %v6624 = vand.u32 %v3081, 4294901760
        %6625 = vmatmul.f32.gmra.mxu0 %v6624
        %v6626 = vpop.f32.mrf.mxu0
        %v6627 = vadd.f32 %v6073, %v6626
        %v6628 = vand.u32 %v3084, 4294901760
        %6629 = vmatmul.f32.gmra.mxu0 %v6628
        %v6630 = vpop.f32.mrf.mxu0
        %v6631 = vadd.f32 %v6079, %v6630
        %v6632 = vand.u32 %v3087, 4294901760
        %6633 = vmatmul.f32.gmra.mxu0 %v6632
        %v6634 = vpop.f32.mrf.mxu0
        %v6635 = vadd.f32 %v6085, %v6634
        %v6636 = vand.u32 %v3090, 4294901760
        %6637 = vmatmul.f32.gmra.mxu0 %v6636
        %v6638 = vpop.f32.mrf.mxu0
        %v6639 = vadd.f32 %v6091, %v6638
        %v6640 = vand.u32 %v3093, 4294901760
        %6641 = vmatmul.f32.gmra.mxu0 %v6640
        %v6642 = vpop.f32.mrf.mxu0
        %v6643 = vadd.f32 %v6097, %v6642
        %v6644 = vand.u32 %v3096, 4294901760
        %6645 = vmatmul.f32.gmra.mxu0 %v6644
        %v6646 = vpop.f32.mrf.mxu0
        %v6647 = vadd.f32 %v6103, %v6646
        %v6648 = vand.u32 %v3099, 4294901760
        %6649 = vmatmul.f32.gmra.mxu0 %v6648
        %v6650 = vpop.f32.mrf.mxu0
        %v6651 = vadd.f32 %v6109, %v6650
        %v6652 = vand.u32 %v3102, 4294901760
        %6653 = vmatmul.f32.gmra.mxu0 %v6652
        %v6654 = vpop.f32.mrf.mxu0
        %v6655 = vadd.f32 %v6115, %v6654
        %v6656 = vand.u32 %v3105, 4294901760
        %6657 = vmatmul.f32.gmra.mxu0 %v6656
        %v6658 = vpop.f32.mrf.mxu0
        %v6659 = vadd.f32 %v6121, %v6658
        %v6660 = vand.u32 %v3108, 4294901760
        %6661 = vmatmul.f32.gmra.mxu0 %v6660
        %v6662 = vpop.f32.mrf.mxu0
        %v6663 = vadd.f32 %v6127, %v6662
        %v6664 = vand.u32 %v3111, 4294901760
        %6665 = vmatmul.f32.gmra.mxu0 %v6664
        %v6666 = vpop.f32.mrf.mxu0
        %v6667 = vadd.f32 %v6133, %v6666
        %v6668 = vand.u32 %v3114, 4294901760
        %6669 = vmatmul.f32.gmra.mxu0 %v6668
        %v6670 = vpop.f32.mrf.mxu0
        %v6671 = vadd.f32 %v6139, %v6670
        %6672 = vdwg.mxu0
        %6673 = vmatpush.msra.mxu0 0.0
        %6674 = vmatpush.msra.mxu0 0.0
        %6675 = vmatpush.msra.mxu0 0.0
        %6676 = vmatpush.msra.mxu0 0.0
        %6677 = vmatpush.msra.mxu0 0.0
        %6678 = vmatpush.msra.mxu0 0.0
        %6679 = vmatpush.msra.mxu0 0.0
        %6680 = vmatpush.msra.mxu0 0.0
        %6681 = vmatpush.msra.mxu0 0.0
        %6682 = vmatpush.msra.mxu0 0.0
        %6683 = vmatpush.msra.mxu0 0.0
        %6684 = vmatpush.msra.mxu0 0.0
        %6685 = vmatpush.msra.mxu0 0.0
        %6686 = vmatpush.msra.mxu0 0.0
        %6687 = vmatpush.msra.mxu0 0.0
        %v6688 = vand.u32 %v3118, 4294901760
        %6689 = vmatpush.msra.mxu0 %v6688
        %v6690 = vand.u32 %v2733, 4294901760
        %6691 = vmatmul.f32.gmra.mxu0 %v6690
        %v6692 = vpop.f32.mrf.mxu0
        %v6693 = vadd.f32 %v6163, %v6692
        %v6694 = vand.u32 %v2736, 4294901760
        %6695 = vmatmul.f32.gmra.mxu0 %v6694
        %v6696 = vpop.f32.mrf.mxu0
        %v6697 = vadd.f32 %v6167, %v6696
        %v6698 = vand.u32 %v2739, 4294901760
        %6699 = vmatmul.f32.gmra.mxu0 %v6698
        %v6700 = vpop.f32.mrf.mxu0
        %v6701 = vadd.f32 %v6171, %v6700
        %v6702 = vand.u32 %v2742, 4294901760
        %6703 = vmatmul.f32.gmra.mxu0 %v6702
        %v6704 = vpop.f32.mrf.mxu0
        %v6705 = vadd.f32 %v6175, %v6704
        %v6706 = vand.u32 %v2745, 4294901760
        %6707 = vmatmul.f32.gmra.mxu0 %v6706
        %v6708 = vpop.f32.mrf.mxu0
        %v6709 = vadd.f32 %v6179, %v6708
        %v6710 = vand.u32 %v2748, 4294901760
        %6711 = vmatmul.f32.gmra.mxu0 %v6710
        %v6712 = vpop.f32.mrf.mxu0
        %v6713 = vadd.f32 %v6183, %v6712
        %v6714 = vand.u32 %v2751, 4294901760
        %6715 = vmatmul.f32.gmra.mxu0 %v6714
        %v6716 = vpop.f32.mrf.mxu0
        %v6717 = vadd.f32 %v6187, %v6716
        %v6718 = vand.u32 %v2754, 4294901760
        %6719 = vmatmul.f32.gmra.mxu0 %v6718
        %v6720 = vpop.f32.mrf.mxu0
        %v6721 = vadd.f32 %v6191, %v6720
        %v6722 = vand.u32 %v2757, 4294901760
        %6723 = vmatmul.f32.gmra.mxu0 %v6722
        %v6724 = vpop.f32.mrf.mxu0
        %v6725 = vadd.f32 %v6195, %v6724
        %v6726 = vand.u32 %v2760, 4294901760
        %6727 = vmatmul.f32.gmra.mxu0 %v6726
        %v6728 = vpop.f32.mrf.mxu0
        %v6729 = vadd.f32 %v6199, %v6728
        %v6730 = vand.u32 %v2763, 4294901760
        %6731 = vmatmul.f32.gmra.mxu0 %v6730
        %v6732 = vpop.f32.mrf.mxu0
        %v6733 = vadd.f32 %v6203, %v6732
        %v6734 = vand.u32 %v2766, 4294901760
        %6735 = vmatmul.f32.gmra.mxu0 %v6734
        %v6736 = vpop.f32.mrf.mxu0
        %v6737 = vadd.f32 %v6207, %v6736
        %v6738 = vand.u32 %v2769, 4294901760
        %6739 = vmatmul.f32.gmra.mxu0 %v6738
        %v6740 = vpop.f32.mrf.mxu0
        %v6741 = vadd.f32 %v6211, %v6740
        %v6742 = vand.u32 %v2772, 4294901760
        %6743 = vmatmul.f32.gmra.mxu0 %v6742
        %v6744 = vpop.f32.mrf.mxu0
        %v6745 = vadd.f32 %v6215, %v6744
        %v6746 = vand.u32 %v2775, 4294901760
        %6747 = vmatmul.f32.gmra.mxu0 %v6746
        %v6748 = vpop.f32.mrf.mxu0
        %v6749 = vadd.f32 %v6219, %v6748
        %v6750 = vand.u32 %v2778, 4294901760
        %6751 = vmatmul.f32.gmra.mxu0 %v6750
        %v6752 = vpop.f32.mrf.mxu0
        %v6753 = vadd.f32 %v6223, %v6752
        %v6754 = vand.u32 %v2781, 4294901760
        %6755 = vmatmul.f32.gmra.mxu0 %v6754
        %v6756 = vpop.f32.mrf.mxu0
        %v6757 = vadd.f32 %v6227, %v6756
        %v6758 = vand.u32 %v2784, 4294901760
        %6759 = vmatmul.f32.gmra.mxu0 %v6758
        %v6760 = vpop.f32.mrf.mxu0
        %v6761 = vadd.f32 %v6231, %v6760
        %v6762 = vand.u32 %v2787, 4294901760
        %6763 = vmatmul.f32.gmra.mxu0 %v6762
        %v6764 = vpop.f32.mrf.mxu0
        %v6765 = vadd.f32 %v6235, %v6764
        %v6766 = vand.u32 %v2790, 4294901760
        %6767 = vmatmul.f32.gmra.mxu0 %v6766
        %v6768 = vpop.f32.mrf.mxu0
        %v6769 = vadd.f32 %v6239, %v6768
        %v6770 = vand.u32 %v2793, 4294901760
        %6771 = vmatmul.f32.gmra.mxu0 %v6770
        %v6772 = vpop.f32.mrf.mxu0
        %v6773 = vadd.f32 %v6243, %v6772
        %v6774 = vand.u32 %v2796, 4294901760
        %6775 = vmatmul.f32.gmra.mxu0 %v6774
        %v6776 = vpop.f32.mrf.mxu0
        %v6777 = vadd.f32 %v6247, %v6776
        %v6778 = vand.u32 %v2799, 4294901760
        %6779 = vmatmul.f32.gmra.mxu0 %v6778
        %v6780 = vpop.f32.mrf.mxu0
        %v6781 = vadd.f32 %v6251, %v6780
        %v6782 = vand.u32 %v2802, 4294901760
        %6783 = vmatmul.f32.gmra.mxu0 %v6782
        %v6784 = vpop.f32.mrf.mxu0
        %v6785 = vadd.f32 %v6255, %v6784
        %v6786 = vand.u32 %v2805, 4294901760
        %6787 = vmatmul.f32.gmra.mxu0 %v6786
        %v6788 = vpop.f32.mrf.mxu0
        %v6789 = vadd.f32 %v6259, %v6788
        %v6790 = vand.u32 %v2808, 4294901760
        %6791 = vmatmul.f32.gmra.mxu0 %v6790
        %v6792 = vpop.f32.mrf.mxu0
        %v6793 = vadd.f32 %v6263, %v6792
        %v6794 = vand.u32 %v2811, 4294901760
        %6795 = vmatmul.f32.gmra.mxu0 %v6794
        %v6796 = vpop.f32.mrf.mxu0
        %v6797 = vadd.f32 %v6267, %v6796
        %v6798 = vand.u32 %v2814, 4294901760
        %6799 = vmatmul.f32.gmra.mxu0 %v6798
        %v6800 = vpop.f32.mrf.mxu0
        %v6801 = vadd.f32 %v6271, %v6800
        %v6802 = vand.u32 %v2817, 4294901760
        %6803 = vmatmul.f32.gmra.mxu0 %v6802
        %v6804 = vpop.f32.mrf.mxu0
        %v6805 = vadd.f32 %v6275, %v6804
        %v6806 = vand.u32 %v2820, 4294901760
        %6807 = vmatmul.f32.gmra.mxu0 %v6806
        %v6808 = vpop.f32.mrf.mxu0
        %v6809 = vadd.f32 %v6279, %v6808
        %v6810 = vand.u32 %v2823, 4294901760
        %6811 = vmatmul.f32.gmra.mxu0 %v6810
        %v6812 = vpop.f32.mrf.mxu0
        %v6813 = vadd.f32 %v6283, %v6812
        %v6814 = vand.u32 %v2826, 4294901760
        %6815 = vmatmul.f32.gmra.mxu0 %v6814
        %v6816 = vpop.f32.mrf.mxu0
        %v6817 = vadd.f32 %v6287, %v6816
        %v6818 = vand.u32 %v2829, 4294901760
        %6819 = vmatmul.f32.gmra.mxu0 %v6818
        %v6820 = vpop.f32.mrf.mxu0
        %v6821 = vadd.f32 %v6291, %v6820
        %v6822 = vand.u32 %v2832, 4294901760
        %6823 = vmatmul.f32.gmra.mxu0 %v6822
        %v6824 = vpop.f32.mrf.mxu0
        %v6825 = vadd.f32 %v6295, %v6824
        %v6826 = vand.u32 %v2835, 4294901760
        %6827 = vmatmul.f32.gmra.mxu0 %v6826
        %v6828 = vpop.f32.mrf.mxu0
        %v6829 = vadd.f32 %v6299, %v6828
        %v6830 = vand.u32 %v2838, 4294901760
        %6831 = vmatmul.f32.gmra.mxu0 %v6830
        %v6832 = vpop.f32.mrf.mxu0
        %v6833 = vadd.f32 %v6303, %v6832
        %v6834 = vand.u32 %v2841, 4294901760
        %6835 = vmatmul.f32.gmra.mxu0 %v6834
        %v6836 = vpop.f32.mrf.mxu0
        %v6837 = vadd.f32 %v6307, %v6836
        %v6838 = vand.u32 %v2844, 4294901760
        %6839 = vmatmul.f32.gmra.mxu0 %v6838
        %v6840 = vpop.f32.mrf.mxu0
        %v6841 = vadd.f32 %v6311, %v6840
        %v6842 = vand.u32 %v2847, 4294901760
        %6843 = vmatmul.f32.gmra.mxu0 %v6842
        %v6844 = vpop.f32.mrf.mxu0
        %v6845 = vadd.f32 %v6315, %v6844
        %v6846 = vand.u32 %v2850, 4294901760
        %6847 = vmatmul.f32.gmra.mxu0 %v6846
        %v6848 = vpop.f32.mrf.mxu0
        %v6849 = vadd.f32 %v6319, %v6848
        %v6850 = vand.u32 %v2853, 4294901760
        %6851 = vmatmul.f32.gmra.mxu0 %v6850
        %v6852 = vpop.f32.mrf.mxu0
        %v6853 = vadd.f32 %v6323, %v6852
        %v6854 = vand.u32 %v2856, 4294901760
        %6855 = vmatmul.f32.gmra.mxu0 %v6854
        %v6856 = vpop.f32.mrf.mxu0
        %v6857 = vadd.f32 %v6327, %v6856
        %v6858 = vand.u32 %v2859, 4294901760
        %6859 = vmatmul.f32.gmra.mxu0 %v6858
        %v6860 = vpop.f32.mrf.mxu0
        %v6861 = vadd.f32 %v6331, %v6860
        %v6862 = vand.u32 %v2862, 4294901760
        %6863 = vmatmul.f32.gmra.mxu0 %v6862
        %v6864 = vpop.f32.mrf.mxu0
        %v6865 = vadd.f32 %v6335, %v6864
        %v6866 = vand.u32 %v2865, 4294901760
        %6867 = vmatmul.f32.gmra.mxu0 %v6866
        %v6868 = vpop.f32.mrf.mxu0
        %v6869 = vadd.f32 %v6339, %v6868
        %v6870 = vand.u32 %v2868, 4294901760
        %6871 = vmatmul.f32.gmra.mxu0 %v6870
        %v6872 = vpop.f32.mrf.mxu0
        %v6873 = vadd.f32 %v6343, %v6872
        %v6874 = vand.u32 %v2871, 4294901760
        %6875 = vmatmul.f32.gmra.mxu0 %v6874
        %v6876 = vpop.f32.mrf.mxu0
        %v6877 = vadd.f32 %v6347, %v6876
        %v6878 = vand.u32 %v2874, 4294901760
        %6879 = vmatmul.f32.gmra.mxu0 %v6878
        %v6880 = vpop.f32.mrf.mxu0
        %v6881 = vadd.f32 %v6351, %v6880
        %v6882 = vand.u32 %v2877, 4294901760
        %6883 = vmatmul.f32.gmra.mxu0 %v6882
        %v6884 = vpop.f32.mrf.mxu0
        %v6885 = vadd.f32 %v6355, %v6884
        %v6886 = vand.u32 %v2880, 4294901760
        %6887 = vmatmul.f32.gmra.mxu0 %v6886
        %v6888 = vpop.f32.mrf.mxu0
        %v6889 = vadd.f32 %v6359, %v6888
        %v6890 = vand.u32 %v2883, 4294901760
        %6891 = vmatmul.f32.gmra.mxu0 %v6890
        %v6892 = vpop.f32.mrf.mxu0
        %v6893 = vadd.f32 %v6363, %v6892
        %v6894 = vand.u32 %v2886, 4294901760
        %6895 = vmatmul.f32.gmra.mxu0 %v6894
        %v6896 = vpop.f32.mrf.mxu0
        %v6897 = vadd.f32 %v6367, %v6896
        %v6898 = vand.u32 %v2889, 4294901760
        %6899 = vmatmul.f32.gmra.mxu0 %v6898
        %v6900 = vpop.f32.mrf.mxu0
        %v6901 = vadd.f32 %v6371, %v6900
        %v6902 = vand.u32 %v2892, 4294901760
        %6903 = vmatmul.f32.gmra.mxu0 %v6902
        %v6904 = vpop.f32.mrf.mxu0
        %v6905 = vadd.f32 %v6375, %v6904
        %v6906 = vand.u32 %v2895, 4294901760
        %6907 = vmatmul.f32.gmra.mxu0 %v6906
        %v6908 = vpop.f32.mrf.mxu0
        %v6909 = vadd.f32 %v6379, %v6908
        %v6910 = vand.u32 %v2898, 4294901760
        %6911 = vmatmul.f32.gmra.mxu0 %v6910
        %v6912 = vpop.f32.mrf.mxu0
        %v6913 = vadd.f32 %v6383, %v6912
        %v6914 = vand.u32 %v2901, 4294901760
        %6915 = vmatmul.f32.gmra.mxu0 %v6914
        %v6916 = vpop.f32.mrf.mxu0
        %v6917 = vadd.f32 %v6387, %v6916
        %v6918 = vand.u32 %v2904, 4294901760
        %6919 = vmatmul.f32.gmra.mxu0 %v6918
        %v6920 = vpop.f32.mrf.mxu0
        %v6921 = vadd.f32 %v6391, %v6920
        %v6922 = vand.u32 %v2907, 4294901760
        %6923 = vmatmul.f32.gmra.mxu0 %v6922
        %v6924 = vpop.f32.mrf.mxu0
        %v6925 = vadd.f32 %v6395, %v6924
        %v6926 = vand.u32 %v2910, 4294901760
        %6927 = vmatmul.f32.gmra.mxu0 %v6926
        %v6928 = vpop.f32.mrf.mxu0
        %v6929 = vadd.f32 %v6399, %v6928
        %v6930 = vand.u32 %v2913, 4294901760
        %6931 = vmatmul.f32.gmra.mxu0 %v6930
        %v6932 = vpop.f32.mrf.mxu0
        %v6933 = vadd.f32 %v6403, %v6932
        %v6934 = vand.u32 %v2916, 4294901760
        %6935 = vmatmul.f32.gmra.mxu0 %v6934
        %v6936 = vpop.f32.mrf.mxu0
        %v6937 = vadd.f32 %v6407, %v6936
        %v6938 = vand.u32 %v2919, 4294901760
        %6939 = vmatmul.f32.gmra.mxu0 %v6938
        %v6940 = vpop.f32.mrf.mxu0
        %v6941 = vadd.f32 %v6411, %v6940
        %v6942 = vand.u32 %v2922, 4294901760
        %6943 = vmatmul.f32.gmra.mxu0 %v6942
        %v6944 = vpop.f32.mrf.mxu0
        %v6945 = vadd.f32 %v6415, %v6944
        %v6946 = vand.u32 %v2925, 4294901760
        %6947 = vmatmul.f32.gmra.mxu0 %v6946
        %v6948 = vpop.f32.mrf.mxu0
        %v6949 = vadd.f32 %v6419, %v6948
        %v6950 = vand.u32 %v2928, 4294901760
        %6951 = vmatmul.f32.gmra.mxu0 %v6950
        %v6952 = vpop.f32.mrf.mxu0
        %v6953 = vadd.f32 %v6423, %v6952
        %v6954 = vand.u32 %v2931, 4294901760
        %6955 = vmatmul.f32.gmra.mxu0 %v6954
        %v6956 = vpop.f32.mrf.mxu0
        %v6957 = vadd.f32 %v6427, %v6956
        %v6958 = vand.u32 %v2934, 4294901760
        %6959 = vmatmul.f32.gmra.mxu0 %v6958
        %v6960 = vpop.f32.mrf.mxu0
        %v6961 = vadd.f32 %v6431, %v6960
        %v6962 = vand.u32 %v2937, 4294901760
        %6963 = vmatmul.f32.gmra.mxu0 %v6962
        %v6964 = vpop.f32.mrf.mxu0
        %v6965 = vadd.f32 %v6435, %v6964
        %v6966 = vand.u32 %v2940, 4294901760
        %6967 = vmatmul.f32.gmra.mxu0 %v6966
        %v6968 = vpop.f32.mrf.mxu0
        %v6969 = vadd.f32 %v6439, %v6968
        %v6970 = vand.u32 %v2943, 4294901760
        %6971 = vmatmul.f32.gmra.mxu0 %v6970
        %v6972 = vpop.f32.mrf.mxu0
        %v6973 = vadd.f32 %v6443, %v6972
        %v6974 = vand.u32 %v2946, 4294901760
        %6975 = vmatmul.f32.gmra.mxu0 %v6974
        %v6976 = vpop.f32.mrf.mxu0
        %v6977 = vadd.f32 %v6447, %v6976
        %v6978 = vand.u32 %v2949, 4294901760
        %6979 = vmatmul.f32.gmra.mxu0 %v6978
        %v6980 = vpop.f32.mrf.mxu0
        %v6981 = vadd.f32 %v6451, %v6980
        %v6982 = vand.u32 %v2952, 4294901760
        %6983 = vmatmul.f32.gmra.mxu0 %v6982
        %v6984 = vpop.f32.mrf.mxu0
        %v6985 = vadd.f32 %v6455, %v6984
        %v6986 = vand.u32 %v2955, 4294901760
        %6987 = vmatmul.f32.gmra.mxu0 %v6986
        %v6988 = vpop.f32.mrf.mxu0
        %v6989 = vadd.f32 %v6459, %v6988
        %v6990 = vand.u32 %v2958, 4294901760
        %6991 = vmatmul.f32.gmra.mxu0 %v6990
        %v6992 = vpop.f32.mrf.mxu0
        %v6993 = vadd.f32 %v6463, %v6992
        %v6994 = vand.u32 %v2961, 4294901760
        %6995 = vmatmul.f32.gmra.mxu0 %v6994
        %v6996 = vpop.f32.mrf.mxu0
        %v6997 = vadd.f32 %v6467, %v6996
        %v6998 = vand.u32 %v2964, 4294901760
        %6999 = vmatmul.f32.gmra.mxu0 %v6998
        %v7000 = vpop.f32.mrf.mxu0
        %v7001 = vadd.f32 %v6471, %v7000
        %v7002 = vand.u32 %v2967, 4294901760
        %7003 = vmatmul.f32.gmra.mxu0 %v7002
        %v7004 = vpop.f32.mrf.mxu0
        %v7005 = vadd.f32 %v6475, %v7004
        %v7006 = vand.u32 %v2970, 4294901760
        %7007 = vmatmul.f32.gmra.mxu0 %v7006
        %v7008 = vpop.f32.mrf.mxu0
        %v7009 = vadd.f32 %v6479, %v7008
        %v7010 = vand.u32 %v2973, 4294901760
        %7011 = vmatmul.f32.gmra.mxu0 %v7010
        %v7012 = vpop.f32.mrf.mxu0
        %v7013 = vadd.f32 %v6483, %v7012
        %v7014 = vand.u32 %v2976, 4294901760
        %7015 = vmatmul.f32.gmra.mxu0 %v7014
        %v7016 = vpop.f32.mrf.mxu0
        %v7017 = vadd.f32 %v6487, %v7016
        %v7018 = vand.u32 %v2979, 4294901760
        %7019 = vmatmul.f32.gmra.mxu0 %v7018
        %v7020 = vpop.f32.mrf.mxu0
        %v7021 = vadd.f32 %v6491, %v7020
        %v7022 = vand.u32 %v2982, 4294901760
        %7023 = vmatmul.f32.gmra.mxu0 %v7022
        %v7024 = vpop.f32.mrf.mxu0
        %v7025 = vadd.f32 %v6495, %v7024
        %v7026 = vand.u32 %v2985, 4294901760
        %7027 = vmatmul.f32.gmra.mxu0 %v7026
        %v7028 = vpop.f32.mrf.mxu0
        %v7029 = vadd.f32 %v6499, %v7028
        %v7030 = vand.u32 %v2988, 4294901760
        %7031 = vmatmul.f32.gmra.mxu0 %v7030
        %v7032 = vpop.f32.mrf.mxu0
        %v7033 = vadd.f32 %v6503, %v7032
        %v7034 = vand.u32 %v2991, 4294901760
        %7035 = vmatmul.f32.gmra.mxu0 %v7034
        %v7036 = vpop.f32.mrf.mxu0
        %v7037 = vadd.f32 %v6507, %v7036
        %v7038 = vand.u32 %v2994, 4294901760
        %7039 = vmatmul.f32.gmra.mxu0 %v7038
        %v7040 = vpop.f32.mrf.mxu0
        %v7041 = vadd.f32 %v6511, %v7040
        %v7042 = vand.u32 %v2997, 4294901760
        %7043 = vmatmul.f32.gmra.mxu0 %v7042
        %v7044 = vpop.f32.mrf.mxu0
        %v7045 = vadd.f32 %v6515, %v7044
        %v7046 = vand.u32 %v3000, 4294901760
        %7047 = vmatmul.f32.gmra.mxu0 %v7046
        %v7048 = vpop.f32.mrf.mxu0
        %v7049 = vadd.f32 %v6519, %v7048
        %v7050 = vand.u32 %v3003, 4294901760
        %7051 = vmatmul.f32.gmra.mxu0 %v7050
        %v7052 = vpop.f32.mrf.mxu0
        %v7053 = vadd.f32 %v6523, %v7052
        %v7054 = vand.u32 %v3006, 4294901760
        %7055 = vmatmul.f32.gmra.mxu0 %v7054
        %v7056 = vpop.f32.mrf.mxu0
        %v7057 = vadd.f32 %v6527, %v7056
        %v7058 = vand.u32 %v3009, 4294901760
        %7059 = vmatmul.f32.gmra.mxu0 %v7058
        %v7060 = vpop.f32.mrf.mxu0
        %v7061 = vadd.f32 %v6531, %v7060
        %v7062 = vand.u32 %v3012, 4294901760
        %7063 = vmatmul.f32.gmra.mxu0 %v7062
        %v7064 = vpop.f32.mrf.mxu0
        %v7065 = vadd.f32 %v6535, %v7064
        %v7066 = vand.u32 %v3015, 4294901760
        %7067 = vmatmul.f32.gmra.mxu0 %v7066
        %v7068 = vpop.f32.mrf.mxu0
        %v7069 = vadd.f32 %v6539, %v7068
        %v7070 = vand.u32 %v3018, 4294901760
        %7071 = vmatmul.f32.gmra.mxu0 %v7070
        %v7072 = vpop.f32.mrf.mxu0
        %v7073 = vadd.f32 %v6543, %v7072
        %v7074 = vand.u32 %v3021, 4294901760
        %7075 = vmatmul.f32.gmra.mxu0 %v7074
        %v7076 = vpop.f32.mrf.mxu0
        %v7077 = vadd.f32 %v6547, %v7076
        %v7078 = vand.u32 %v3024, 4294901760
        %7079 = vmatmul.f32.gmra.mxu0 %v7078
        %v7080 = vpop.f32.mrf.mxu0
        %v7081 = vadd.f32 %v6551, %v7080
        %v7082 = vand.u32 %v3027, 4294901760
        %7083 = vmatmul.f32.gmra.mxu0 %v7082
        %v7084 = vpop.f32.mrf.mxu0
        %v7085 = vadd.f32 %v6555, %v7084
        %v7086 = vand.u32 %v3030, 4294901760
        %7087 = vmatmul.f32.gmra.mxu0 %v7086
        %v7088 = vpop.f32.mrf.mxu0
        %v7089 = vadd.f32 %v6559, %v7088
        %v7090 = vand.u32 %v3033, 4294901760
        %7091 = vmatmul.f32.gmra.mxu0 %v7090
        %v7092 = vpop.f32.mrf.mxu0
        %v7093 = vadd.f32 %v6563, %v7092
        %v7094 = vand.u32 %v3036, 4294901760
        %7095 = vmatmul.f32.gmra.mxu0 %v7094
        %v7096 = vpop.f32.mrf.mxu0
        %v7097 = vadd.f32 %v6567, %v7096
        %v7098 = vand.u32 %v3039, 4294901760
        %7099 = vmatmul.f32.gmra.mxu0 %v7098
        %v7100 = vpop.f32.mrf.mxu0
        %v7101 = vadd.f32 %v6571, %v7100
        %v7102 = vand.u32 %v3042, 4294901760
        %7103 = vmatmul.f32.gmra.mxu0 %v7102
        %v7104 = vpop.f32.mrf.mxu0
        %v7105 = vadd.f32 %v6575, %v7104
        %v7106 = vand.u32 %v3045, 4294901760
        %7107 = vmatmul.f32.gmra.mxu0 %v7106
        %v7108 = vpop.f32.mrf.mxu0
        %v7109 = vadd.f32 %v6579, %v7108
        %v7110 = vand.u32 %v3048, 4294901760
        %7111 = vmatmul.f32.gmra.mxu0 %v7110
        %v7112 = vpop.f32.mrf.mxu0
        %v7113 = vadd.f32 %v6583, %v7112
        %v7114 = vand.u32 %v3051, 4294901760
        %7115 = vmatmul.f32.gmra.mxu0 %v7114
        %v7116 = vpop.f32.mrf.mxu0
        %v7117 = vadd.f32 %v6587, %v7116
        %v7118 = vand.u32 %v3054, 4294901760
        %7119 = vmatmul.f32.gmra.mxu0 %v7118
        %v7120 = vpop.f32.mrf.mxu0
        %v7121 = vadd.f32 %v6591, %v7120
        %v7122 = vand.u32 %v3057, 4294901760
        %7123 = vmatmul.f32.gmra.mxu0 %v7122
        %v7124 = vpop.f32.mrf.mxu0
        %v7125 = vadd.f32 %v6595, %v7124
        %v7126 = vand.u32 %v3060, 4294901760
        %7127 = vmatmul.f32.gmra.mxu0 %v7126
        %v7128 = vpop.f32.mrf.mxu0
        %v7129 = vadd.f32 %v6599, %v7128
        %v7130 = vand.u32 %v3063, 4294901760
        %7131 = vmatmul.f32.gmra.mxu0 %v7130
        %v7132 = vpop.f32.mrf.mxu0
        %v7133 = vadd.f32 %v6603, %v7132
        %v7134 = vand.u32 %v3066, 4294901760
        %7135 = vmatmul.f32.gmra.mxu0 %v7134
        %v7136 = vpop.f32.mrf.mxu0
        %v7137 = vadd.f32 %v6607, %v7136
        %v7138 = vand.u32 %v3069, 4294901760
        %7139 = vmatmul.f32.gmra.mxu0 %v7138
        %v7140 = vpop.f32.mrf.mxu0
        %v7141 = vadd.f32 %v6611, %v7140
        %v7142 = vand.u32 %v3072, 4294901760
        %7143 = vmatmul.f32.gmra.mxu0 %v7142
        %v7144 = vpop.f32.mrf.mxu0
        %v7145 = vadd.f32 %v6615, %v7144
        %v7146 = vand.u32 %v3075, 4294901760
        %7147 = vmatmul.f32.gmra.mxu0 %v7146
        %v7148 = vpop.f32.mrf.mxu0
        %v7149 = vadd.f32 %v6619, %v7148
        %v7150 = vand.u32 %v3078, 4294901760
        %7151 = vmatmul.f32.gmra.mxu0 %v7150
        %v7152 = vpop.f32.mrf.mxu0
        %v7153 = vadd.f32 %v6623, %v7152
        %v7154 = vand.u32 %v3081, 4294901760
        %7155 = vmatmul.f32.gmra.mxu0 %v7154
        %v7156 = vpop.f32.mrf.mxu0
        %v7157 = vadd.f32 %v6627, %v7156
        %v7158 = vand.u32 %v3084, 4294901760
        %7159 = vmatmul.f32.gmra.mxu0 %v7158
        %v7160 = vpop.f32.mrf.mxu0
        %v7161 = vadd.f32 %v6631, %v7160
        %v7162 = vand.u32 %v3087, 4294901760
        %7163 = vmatmul.f32.gmra.mxu0 %v7162
        %v7164 = vpop.f32.mrf.mxu0
        %v7165 = vadd.f32 %v6635, %v7164
        %v7166 = vand.u32 %v3090, 4294901760
        %7167 = vmatmul.f32.gmra.mxu0 %v7166
        %v7168 = vpop.f32.mrf.mxu0
        %v7169 = vadd.f32 %v6639, %v7168
        %v7170 = vand.u32 %v3093, 4294901760
        %7171 = vmatmul.f32.gmra.mxu0 %v7170
        %v7172 = vpop.f32.mrf.mxu0
        %v7173 = vadd.f32 %v6643, %v7172
        %v7174 = vand.u32 %v3096, 4294901760
        %7175 = vmatmul.f32.gmra.mxu0 %v7174
        %v7176 = vpop.f32.mrf.mxu0
        %v7177 = vadd.f32 %v6647, %v7176
        %v7178 = vand.u32 %v3099, 4294901760
        %7179 = vmatmul.f32.gmra.mxu0 %v7178
        %v7180 = vpop.f32.mrf.mxu0
        %v7181 = vadd.f32 %v6651, %v7180
        %v7182 = vand.u32 %v3102, 4294901760
        %7183 = vmatmul.f32.gmra.mxu0 %v7182
        %v7184 = vpop.f32.mrf.mxu0
        %v7185 = vadd.f32 %v6655, %v7184
        %v7186 = vand.u32 %v3105, 4294901760
        %7187 = vmatmul.f32.gmra.mxu0 %v7186
        %v7188 = vpop.f32.mrf.mxu0
        %v7189 = vadd.f32 %v6659, %v7188
        %v7190 = vand.u32 %v3108, 4294901760
        %7191 = vmatmul.f32.gmra.mxu0 %v7190
        %v7192 = vpop.f32.mrf.mxu0
        %v7193 = vadd.f32 %v6663, %v7192
        %v7194 = vand.u32 %v3111, 4294901760
        %7195 = vmatmul.f32.gmra.mxu0 %v7194
        %v7196 = vpop.f32.mrf.mxu0
        %v7197 = vadd.f32 %v6667, %v7196
        %v7198 = vand.u32 %v3114, 4294901760
        %7199 = vmatmul.f32.gmra.mxu0 %v7198
        %v7200 = vpop.f32.mrf.mxu0
        %v7201 = vadd.f32 %v6671, %v7200
        %7202 = vdwg.mxu0
        %7203 = vxpose.xlu0.b32.start [1/16] %v6693, 128
        %7204 = vxpose.xlu0.b32.cont [2/16] %v6697, 128
        %7205 = vxpose.xlu0.b32.cont [3/16] %v6701, 128
        %7206 = vxpose.xlu0.b32.cont [4/16] %v6705, 128
        %7207 = vxpose.xlu0.b32.cont [5/16] %v6709, 128
        %7208 = vxpose.xlu0.b32.cont [6/16] %v6713, 128
        %7209 = vxpose.xlu0.b32.cont [7/16] %v6717, 128
        %7210 = vxpose.xlu0.b32.cont [8/16] %v6721, 128
        %7211 = vxpose.xlu0.b32.cont [9/16] %v6725, 128
        %7212 = vxpose.xlu0.b32.cont [10/16] %v6729, 128
        %7213 = vxpose.xlu0.b32.cont [11/16] %v6733, 128
        %7214 = vxpose.xlu0.b32.cont [12/16] %v6737, 128
        %7215 = vxpose.xlu0.b32.cont [13/16] %v6741, 128
        %7216 = vxpose.xlu0.b32.cont [14/16] %v6745, 128
        %7217 = vxpose.xlu0.b32.cont [15/16] %v6749, 128
        %7218 = vxpose.xlu0.b32.end [16/16] %v6753, 128
        %v7219 = vpop.trf.xlu0
        %v7220 = vpop.trf.xlu0
        %v7221 = vpop.trf.xlu0
        %v7222 = vpop.trf.xlu0
        %v7223 = vpop.trf.xlu0
        %v7224 = vpop.trf.xlu0
        %v7225 = vpop.trf.xlu0
        %v7226 = vpop.trf.xlu0
        %v7227 = vpop.trf.xlu0
        %v7228 = vpop.trf.xlu0
        %v7229 = vpop.trf.xlu0
        %v7230 = vpop.trf.xlu0
        %v7231 = vpop.trf.xlu0
        %v7232 = vpop.trf.xlu0
        %v7233 = vpop.trf.xlu0
        %v7234 = vpop.trf.xlu0
        %7235 = vxpose.xlu0.b32.start [1/16] %v6757, 128
        %7236 = vxpose.xlu0.b32.cont [2/16] %v6761, 128
        %7237 = vxpose.xlu0.b32.cont [3/16] %v6765, 128
        %7238 = vxpose.xlu0.b32.cont [4/16] %v6769, 128
        %7239 = vxpose.xlu0.b32.cont [5/16] %v6773, 128
        %7240 = vxpose.xlu0.b32.cont [6/16] %v6777, 128
        %7241 = vxpose.xlu0.b32.cont [7/16] %v6781, 128
        %7242 = vxpose.xlu0.b32.cont [8/16] %v6785, 128
        %7243 = vxpose.xlu0.b32.cont [9/16] %v6789, 128
        %7244 = vxpose.xlu0.b32.cont [10/16] %v6793, 128
        %7245 = vxpose.xlu0.b32.cont [11/16] %v6797, 128
        %7246 = vxpose.xlu0.b32.cont [12/16] %v6801, 128
        %7247 = vxpose.xlu0.b32.cont [13/16] %v6805, 128
        %7248 = vxpose.xlu0.b32.cont [14/16] %v6809, 128
        %7249 = vxpose.xlu0.b32.cont [15/16] %v6813, 128
        %7250 = vxpose.xlu0.b32.end [16/16] %v6817, 128
        %v7251 = vpop.trf.xlu0
        %v7252 = vpop.trf.xlu0
        %v7253 = vpop.trf.xlu0
        %v7254 = vpop.trf.xlu0
        %v7255 = vpop.trf.xlu0
        %v7256 = vpop.trf.xlu0
        %v7257 = vpop.trf.xlu0
        %v7258 = vpop.trf.xlu0
        %v7259 = vpop.trf.xlu0
        %v7260 = vpop.trf.xlu0
        %v7261 = vpop.trf.xlu0
        %v7262 = vpop.trf.xlu0
        %v7263 = vpop.trf.xlu0
        %v7264 = vpop.trf.xlu0
        %v7265 = vpop.trf.xlu0
        %v7266 = vpop.trf.xlu0
        %7267 = vxpose.xlu0.b32.start [1/16] %v6821, 128
        %7268 = vxpose.xlu0.b32.cont [2/16] %v6825, 128
        %7269 = vxpose.xlu0.b32.cont [3/16] %v6829, 128
        %7270 = vxpose.xlu0.b32.cont [4/16] %v6833, 128
        %7271 = vxpose.xlu0.b32.cont [5/16] %v6837, 128
        %7272 = vxpose.xlu0.b32.cont [6/16] %v6841, 128
        %7273 = vxpose.xlu0.b32.cont [7/16] %v6845, 128
        %7274 = vxpose.xlu0.b32.cont [8/16] %v6849, 128
        %7275 = vxpose.xlu0.b32.cont [9/16] %v6853, 128
        %7276 = vxpose.xlu0.b32.cont [10/16] %v6857, 128
        %7277 = vxpose.xlu0.b32.cont [11/16] %v6861, 128
        %7278 = vxpose.xlu0.b32.cont [12/16] %v6865, 128
        %7279 = vxpose.xlu0.b32.cont [13/16] %v6869, 128
        %7280 = vxpose.xlu0.b32.cont [14/16] %v6873, 128
        %7281 = vxpose.xlu0.b32.cont [15/16] %v6877, 128
        %7282 = vxpose.xlu0.b32.end [16/16] %v6881, 128
        %v7283 = vpop.trf.xlu0
        %v7284 = vpop.trf.xlu0
        %v7285 = vpop.trf.xlu0
        %v7286 = vpop.trf.xlu0
        %v7287 = vpop.trf.xlu0
        %v7288 = vpop.trf.xlu0
        %v7289 = vpop.trf.xlu0
        %v7290 = vpop.trf.xlu0
        %v7291 = vpop.trf.xlu0
        %v7292 = vpop.trf.xlu0
        %v7293 = vpop.trf.xlu0
        %v7294 = vpop.trf.xlu0
        %v7295 = vpop.trf.xlu0
        %v7296 = vpop.trf.xlu0
        %v7297 = vpop.trf.xlu0
        %v7298 = vpop.trf.xlu0
        %7299 = vxpose.xlu0.b32.start [1/16] %v6885, 128
        %7300 = vxpose.xlu0.b32.cont [2/16] %v6889, 128
        %7301 = vxpose.xlu0.b32.cont [3/16] %v6893, 128
        %7302 = vxpose.xlu0.b32.cont [4/16] %v6897, 128
        %7303 = vxpose.xlu0.b32.cont [5/16] %v6901, 128
        %7304 = vxpose.xlu0.b32.cont [6/16] %v6905, 128
        %7305 = vxpose.xlu0.b32.cont [7/16] %v6909, 128
        %7306 = vxpose.xlu0.b32.cont [8/16] %v6913, 128
        %7307 = vxpose.xlu0.b32.cont [9/16] %v6917, 128
        %7308 = vxpose.xlu0.b32.cont [10/16] %v6921, 128
        %7309 = vxpose.xlu0.b32.cont [11/16] %v6925, 128
        %7310 = vxpose.xlu0.b32.cont [12/16] %v6929, 128
        %7311 = vxpose.xlu0.b32.cont [13/16] %v6933, 128
        %7312 = vxpose.xlu0.b32.cont [14/16] %v6937, 128
        %7313 = vxpose.xlu0.b32.cont [15/16] %v6941, 128
        %7314 = vxpose.xlu0.b32.end [16/16] %v6945, 128
        %v7315 = vpop.trf.xlu0
        %v7316 = vpop.trf.xlu0
        %v7317 = vpop.trf.xlu0
        %v7318 = vpop.trf.xlu0
        %v7319 = vpop.trf.xlu0
        %v7320 = vpop.trf.xlu0
        %v7321 = vpop.trf.xlu0
        %v7322 = vpop.trf.xlu0
        %v7323 = vpop.trf.xlu0
        %v7324 = vpop.trf.xlu0
        %v7325 = vpop.trf.xlu0
        %v7326 = vpop.trf.xlu0
        %v7327 = vpop.trf.xlu0
        %v7328 = vpop.trf.xlu0
        %v7329 = vpop.trf.xlu0
        %v7330 = vpop.trf.xlu0
        %7331 = vxpose.xlu0.b32.start [1/16] %v6949, 128
        %7332 = vxpose.xlu0.b32.cont [2/16] %v6953, 128
        %7333 = vxpose.xlu0.b32.cont [3/16] %v6957, 128
        %7334 = vxpose.xlu0.b32.cont [4/16] %v6961, 128
        %7335 = vxpose.xlu0.b32.cont [5/16] %v6965, 128
        %7336 = vxpose.xlu0.b32.cont [6/16] %v6969, 128
        %7337 = vxpose.xlu0.b32.cont [7/16] %v6973, 128
        %7338 = vxpose.xlu0.b32.cont [8/16] %v6977, 128
        %7339 = vxpose.xlu0.b32.cont [9/16] %v6981, 128
        %7340 = vxpose.xlu0.b32.cont [10/16] %v6985, 128
        %7341 = vxpose.xlu0.b32.cont [11/16] %v6989, 128
        %7342 = vxpose.xlu0.b32.cont [12/16] %v6993, 128
        %7343 = vxpose.xlu0.b32.cont [13/16] %v6997, 128
        %7344 = vxpose.xlu0.b32.cont [14/16] %v7001, 128
        %7345 = vxpose.xlu0.b32.cont [15/16] %v7005, 128
        %7346 = vxpose.xlu0.b32.end [16/16] %v7009, 128
        %v7347 = vpop.trf.xlu0
        %v7348 = vpop.trf.xlu0
        %v7349 = vpop.trf.xlu0
        %v7350 = vpop.trf.xlu0
        %v7351 = vpop.trf.xlu0
        %v7352 = vpop.trf.xlu0
        %v7353 = vpop.trf.xlu0
        %v7354 = vpop.trf.xlu0
        %v7355 = vpop.trf.xlu0
        %v7356 = vpop.trf.xlu0
        %v7357 = vpop.trf.xlu0
        %v7358 = vpop.trf.xlu0
        %v7359 = vpop.trf.xlu0
        %v7360 = vpop.trf.xlu0
        %v7361 = vpop.trf.xlu0
        %v7362 = vpop.trf.xlu0
        %7363 = vxpose.xlu0.b32.start [1/16] %v7013, 128
        %7364 = vxpose.xlu0.b32.cont [2/16] %v7017, 128
        %7365 = vxpose.xlu0.b32.cont [3/16] %v7021, 128
        %7366 = vxpose.xlu0.b32.cont [4/16] %v7025, 128
        %7367 = vxpose.xlu0.b32.cont [5/16] %v7029, 128
        %7368 = vxpose.xlu0.b32.cont [6/16] %v7033, 128
        %7369 = vxpose.xlu0.b32.cont [7/16] %v7037, 128
        %7370 = vxpose.xlu0.b32.cont [8/16] %v7041, 128
        %7371 = vxpose.xlu0.b32.cont [9/16] %v7045, 128
        %7372 = vxpose.xlu0.b32.cont [10/16] %v7049, 128
        %7373 = vxpose.xlu0.b32.cont [11/16] %v7053, 128
        %7374 = vxpose.xlu0.b32.cont [12/16] %v7057, 128
        %7375 = vxpose.xlu0.b32.cont [13/16] %v7061, 128
        %7376 = vxpose.xlu0.b32.cont [14/16] %v7065, 128
        %7377 = vxpose.xlu0.b32.cont [15/16] %v7069, 128
        %7378 = vxpose.xlu0.b32.end [16/16] %v7073, 128
        %v7379 = vpop.trf.xlu0
        %v7380 = vpop.trf.xlu0
        %v7381 = vpop.trf.xlu0
        %v7382 = vpop.trf.xlu0
        %v7383 = vpop.trf.xlu0
        %v7384 = vpop.trf.xlu0
        %v7385 = vpop.trf.xlu0
        %v7386 = vpop.trf.xlu0
        %v7387 = vpop.trf.xlu0
        %v7388 = vpop.trf.xlu0
        %v7389 = vpop.trf.xlu0
        %v7390 = vpop.trf.xlu0
        %v7391 = vpop.trf.xlu0
        %v7392 = vpop.trf.xlu0
        %v7393 = vpop.trf.xlu0
        %v7394 = vpop.trf.xlu0
        %7395 = vxpose.xlu0.b32.start [1/16] %v7077, 128
        %7396 = vxpose.xlu0.b32.cont [2/16] %v7081, 128
        %7397 = vxpose.xlu0.b32.cont [3/16] %v7085, 128
        %7398 = vxpose.xlu0.b32.cont [4/16] %v7089, 128
        %7399 = vxpose.xlu0.b32.cont [5/16] %v7093, 128
        %7400 = vxpose.xlu0.b32.cont [6/16] %v7097, 128
        %7401 = vxpose.xlu0.b32.cont [7/16] %v7101, 128
        %7402 = vxpose.xlu0.b32.cont [8/16] %v7105, 128
        %7403 = vxpose.xlu0.b32.cont [9/16] %v7109, 128
        %7404 = vxpose.xlu0.b32.cont [10/16] %v7113, 128
        %7405 = vxpose.xlu0.b32.cont [11/16] %v7117, 128
        %7406 = vxpose.xlu0.b32.cont [12/16] %v7121, 128
        %7407 = vxpose.xlu0.b32.cont [13/16] %v7125, 128
        %7408 = vxpose.xlu0.b32.cont [14/16] %v7129, 128
        %7409 = vxpose.xlu0.b32.cont [15/16] %v7133, 128
        %7410 = vxpose.xlu0.b32.end [16/16] %v7137, 128
        %v7411 = vpop.trf.xlu0
        %v7412 = vpop.trf.xlu0
        %v7413 = vpop.trf.xlu0
        %v7414 = vpop.trf.xlu0
        %v7415 = vpop.trf.xlu0
        %v7416 = vpop.trf.xlu0
        %v7417 = vpop.trf.xlu0
        %v7418 = vpop.trf.xlu0
        %v7419 = vpop.trf.xlu0
        %v7420 = vpop.trf.xlu0
        %v7421 = vpop.trf.xlu0
        %v7422 = vpop.trf.xlu0
        %v7423 = vpop.trf.xlu0
        %v7424 = vpop.trf.xlu0
        %v7425 = vpop.trf.xlu0
        %v7426 = vpop.trf.xlu0
        %7427 = vxpose.xlu0.b32.start [1/16] %v7141, 128
        %7428 = vxpose.xlu0.b32.cont [2/16] %v7145, 128
        %7429 = vxpose.xlu0.b32.cont [3/16] %v7149, 128
        %7430 = vxpose.xlu0.b32.cont [4/16] %v7153, 128
        %7431 = vxpose.xlu0.b32.cont [5/16] %v7157, 128
        %7432 = vxpose.xlu0.b32.cont [6/16] %v7161, 128
        %7433 = vxpose.xlu0.b32.cont [7/16] %v7165, 128
        %7434 = vxpose.xlu0.b32.cont [8/16] %v7169, 128
        %7435 = vxpose.xlu0.b32.cont [9/16] %v7173, 128
        %7436 = vxpose.xlu0.b32.cont [10/16] %v7177, 128
        %7437 = vxpose.xlu0.b32.cont [11/16] %v7181, 128
        %7438 = vxpose.xlu0.b32.cont [12/16] %v7185, 128
        %7439 = vxpose.xlu0.b32.cont [13/16] %v7189, 128
        %7440 = vxpose.xlu0.b32.cont [14/16] %v7193, 128
        %7441 = vxpose.xlu0.b32.cont [15/16] %v7197, 128
        %7442 = vxpose.xlu0.b32.end [16/16] %v7201, 128
        %v7443 = vpop.trf.xlu0
        %v7444 = vpop.trf.xlu0
        %v7445 = vpop.trf.xlu0
        %v7446 = vpop.trf.xlu0
        %v7447 = vpop.trf.xlu0
        %v7448 = vpop.trf.xlu0
        %v7449 = vpop.trf.xlu0
        %v7450 = vpop.trf.xlu0
        %v7451 = vpop.trf.xlu0
        %v7452 = vpop.trf.xlu0
        %v7453 = vpop.trf.xlu0
        %v7454 = vpop.trf.xlu0
        %v7455 = vpop.trf.xlu0
        %v7456 = vpop.trf.xlu0
        %v7457 = vpop.trf.xlu0
        %v7458 = vpop.trf.xlu0
        %7459 = vst [vmem:[%s190] sm:$0xff] %v7219
        %7460 = vst [vmem:[%s190 + $0x8] sm:$0xff] %v7251
        %7461 = vst [vmem:[%s190 + $0x10] sm:$0xff] %v7283
        %7462 = vst [vmem:[%s190 + $0x18] sm:$0xff] %v7315
        %7463 = vst [vmem:[%s190 + $0x20] sm:$0xff] %v7347
        %7464 = vst [vmem:[%s190 + $0x28] sm:$0xff] %v7379
        %7465 = vst [vmem:[%s190 + $0x30] sm:$0xff] %v7411
        %7466 = vst [vmem:[%s190 + $0x38] sm:$0xff] %v7443
        %s7467 = sand.u32 %s115, 1
        %s7468 = scalar_lea.sflag [#allocation3], %s7467
        %s7469 = sand.u32 %s115, 1
        %s7470 = smul.addr %s7469, 64
        %s7471 = scalar_lea.vmem [#allocation2], %s7470
        // Predicated region
        $region37: #{tpu_custom_call.1} parent=35 // pred_check
          %p7472 = pneg %p125
        $region38: #{tpu_custom_call.1} parent=35 // pred_check_branch
          %7474 = sbr.rel (%p7472) target = $region40
        $region39: #{tpu_custom_call.1} parent=35 // pred_region
          %7476 = vsyncadd %s7468, 0
          %s7477 = smul.addr %s18, 8
          %s7478 = smul.addr %s7477, 8
          %s7479 = scalar_lea.hbm %s4, %s7478
          %s7481 = sshll.u32 %s7471, 4
          %s7482 = int_to_ptr.vmem [resolvable:$true] %s7481
          %s7483 = sshll.u32 %s7479, 4
          %s7484 = int_to_ptr.hbm [resolvable:$true] %s7483
          %7486 = dma.vmem_to_hbm [thread:$0]  %s7482, 1024, %s7484, %s7468
        $region40: #{tpu_custom_call.1} parent=35 // pred_fallthru
          _
      $region36: #{tpu_custom_call.1} parent=5 // pred_fallthru
        _
      %p7487 = scmp.le.s32.totalorder 2, %s13
      // Predicated region
      $region41: #{tpu_custom_call.1} parent=5 // pred_check
        %p7488 = pneg %p7487
      $region42: #{tpu_custom_call.1} parent=5 // pred_check_branch
        %7490 = sbr.rel (%p7488) target = $region44
      $region43: #{tpu_custom_call.1} parent=5 // pred_region
        %s7491 = ssub.s32 %s13, 2
        // Predicated region
        $region45: #{tpu_custom_call.1} parent=43 // pred_check
          %p7492 = pneg %p131
        $region46: #{tpu_custom_call.1} parent=43 // pred_check_branch
          %7494 = sbr.rel (%p7492) target = $region48
        $region47: #{tpu_custom_call.1} parent=43 // pred_region
          %s7495 = sand.u32 %s116, 1
          %s7496 = scalar_lea.sflag [#allocation3], %s7495
          %s7497 = sand.u32 %s116, 1
          %s7498 = smul.addr %s7497, 64
          %s7499 = scalar_lea.vmem [#allocation2], %s7498
          %7501 = dma.done %s7496, 1024
        $region48: #{tpu_custom_call.1} parent=43 // pred_fallthru
          _
      $region44: #{tpu_custom_call.1} parent=5 // pred_fallthru
        _
    $region6: #{tpu_custom_call.1} parent=1 // loop_footer
      %s17 = sadd.s32 1, %s13
    $region7: #{tpu_custom_call.1} parent=1 // loop_footer_branch
      %12 = sbr.rel target = $region3
    $region8: #{tpu_custom_call.1} parent=1 // loop_exit
      _
    %7502 = vsyncpa [#allocation3], 1
    %s7503 = scalar_lea.sflag [#allocation3], 1
    %7504 = vsyncpa %s7503, 1

</llo_original>
